<compile_context>
chip_gen: v7x
topology: tpu7x:2x2x1
jax: 0.10.0
libtpu: 0.0.40
codegen_flags: <defaults>
</compile_context>

<pallas_src>
import functools
import math

import jax
import jax.numpy as jnp
from jax.experimental import pallas as pl
from jax.experimental.pallas import tpu as pltpu


# ---- synthetic model hyper-parameters (small, consistent with the module) ----
B = 2             # batch
C_IN = 4          # io_channels (latent channels)
T = 16            # latent sequence length
D = 64            # embed dim
NUM_HEADS = 2
L_COND = 8        # cross-attention sequence length
COND_DIM = 32     # cross-attention token dim
MLP_RATIO = 4
DEPTH = 4                       # DiffusionTransformer depth
CONTROLNET_DEPTH_FACTOR = 0.5   # controlnet depth = int(0.5 * DEPTH) = 2

_BLOCK_WEIGHT_KEYS = (
    'ln1_g', 'ln1_b', 'w_qkv', 'w_o',
    'ln2_g', 'ln2_b', 'w_qc', 'w_kvc', 'w_oc',
    'ln3_g', 'ln3_b', 'w_mlp1', 'b_mlp1', 'w_mlp2', 'b_mlp2',
)


# ============================ in-kernel math helpers ============================

def _layer_norm(x, g, b, eps=1e-5):
    mu = jnp.mean(x, axis=-1, keepdims=True)
    xc = x - mu
    var = jnp.mean(xc * xc, axis=-1, keepdims=True)
    return xc * jax.lax.rsqrt(var + eps) * g + b


def _silu(x):
    # EUP exp + approximate reciprocal (EUP) instead of a VALU divide chain.
    return x * pl.reciprocal(1.0 + jnp.exp(-x), approx=True)


def _mha_into(out_ref, q, k, v, num_heads, bias=None):
    """q: (Tq, D), k/v: (Tk, D).  Per-head results written straight into a (Tq, D)
    VMEM scratch (static column slices) — no jnp.concatenate in-kernel."""
    d = q.shape[-1]
    hd = d // num_heads
    scale = 1.0 / math.sqrt(hd)
    for h in range(num_heads):
        sl = slice(h * hd, (h + 1) * hd)
        s = jnp.dot(q[:, sl], k[:, sl].T, preferred_element_type=jnp.float32) * scale
        if bias is not None:
            s = s + bias
        s = s - jnp.max(s, axis=-1, keepdims=True)
        p = jnp.exp(s)
        p = p * pl.reciprocal(jnp.sum(p, axis=-1, keepdims=True), approx=True)
        out_ref[:, sl] = jnp.dot(p, v[:, sl], preferred_element_type=jnp.float32)
    return out_ref[...]


def _block_compute(x, ctx, mask_bias, attn_sc,
                   ln1_g, ln1_b, w_qkv, w_o,
                   ln2_g, ln2_b, w_qc, w_kvc, w_oc,
                   ln3_g, ln3_b, w_mlp1, b_mlp1, w_mlp2, b_mlp2,
                   *, num_heads):
    """One transformer block: LN -> self-attn -> LN -> cross-attn -> LN -> MLP.
    Weight refs are the (1, ...) per-layer slices of the stacked weights."""
    d = x.shape[-1]

    # --- self attention ---
    h = _layer_norm(x, ln1_g[0], ln1_b[0])
    qkv = jnp.dot(h, w_qkv[0], preferred_element_type=jnp.float32)     # (T, 3D)
    q, k, v = qkv[:, :d], qkv[:, d:2 * d], qkv[:, 2 * d:]
    attn = _mha_into(attn_sc, q, k, v, num_heads)
    x = x + jnp.dot(attn, w_o[0], preferred_element_type=jnp.float32)

    # --- cross attention (mask applied as additive bias) ---
    h = _layer_norm(x, ln2_g[0], ln2_b[0])
    qc = jnp.dot(h, w_qc[0], preferred_element_type=jnp.float32)       # (T, D)
    kvc = jnp.dot(ctx, w_kvc[0], preferred_element_type=jnp.float32)   # (L, 2D)
    kc, vc = kvc[:, :d], kvc[:, d:]
    cattn = _mha_into(attn_sc, qc, kc, vc, num_heads, bias=mask_bias)
    x = x + jnp.dot(cattn, w_oc[0], preferred_element_type=jnp.float32)

    # --- MLP ---
    h = _layer_norm(x, ln3_g[0], ln3_b[0])
    u = jnp.dot(h, w_mlp1[0], preferred_element_type=jnp.float32) + b_mlp1[0]
    # TODO(synk): PyTorch nn.GELU defaults to exact erf; tanh approximation kept for
    # guaranteed Mosaic lowering (small numeric mismatch).
    u = jax.nn.gelu(u, approximate=True)
    x = x + jnp.dot(u, w_mlp2[0], preferred_element_type=jnp.float32) + b_mlp2[0]
    return x


# ============================ fused Pallas kernels ============================

def _dit_fused_kernel(
    # per-batch / per-layer data
    x_ref, tfeat_ref, ctx_in_ref, mask_ref, cemb_ref,
    # shared (VMEM-resident) projection weights
    t_w1, t_b1, t_w2, t_b2, in_w, in_b, ctx_w, ctx_b, out_w, out_b,
    # stacked per-layer block weights (one layer slice per grid step)
    ln1_g, ln1_b, w_qkv, w_o,
    ln2_g, ln2_b, w_qc, w_kvc, w_oc,
    ln3_g, ln3_b, w_mlp1, b_mlp1, w_mlp2, b_mlp2,
    # output
    o_ref,
    # scratch
    h_sc, ctx_sc, attn_sc,
    *, num_heads):
    layer = pl.program_id(1)

    @pl.when(layer == 0)
    def _():
        # fused pre-processing: timestep MLP (Fourier feats -> Linear -> SiLU -> Linear),
        # input projection, timestep conditioning, context projection.
        e = jnp.dot(tfeat_ref[0], t_w1[...], preferred_element_type=jnp.float32) + t_b1[...]
        e = _silu(e)
        t_emb = jnp.dot(e, t_w2[...], preferred_element_type=jnp.float32) + t_b2[...]   # (1, D)
        h = jnp.dot(x_ref[0], in_w[...], preferred_element_type=jnp.float32) + in_b[...] + t_emb
        h_sc[...] = h
        ctx_sc[...] = (jnp.dot(ctx_in_ref[0], ctx_w[...],
                               preferred_element_type=jnp.float32) + ctx_b[...])

    mask_bias = (mask_ref[0] - 1.0) * 1e9                 # (1, L): 0 keep, -1e9 masked
    x = h_sc[...] + cemb_ref[0, 0]                        # fused controlnet-embed add
    x = _block_compute(
        x, ctx_sc[...], mask_bias, attn_sc,
        ln1_g, ln1_b, w_qkv, w_o,
        ln2_g, ln2_b, w_qc, w_kvc, w_oc,
        ln3_g, ln3_b, w_mlp1, b_mlp1, w_mlp2, b_mlp2,
        num_heads=num_heads)
    h_sc[...] = x

    @pl.when(layer == pl.num_programs(1) - 1)
    def _():
        # fused output projection D -> io_channels
        o_ref[0] = (jnp.dot(x, out_w[...], preferred_element_type=jnp.float32)
                    + out_b[...]).astype(o_ref.dtype)


def _cnet_fused_kernel(
    x_ref, cond_ref, tfeat_ref, ctx_in_ref, mask_ref,
    t_w1, t_b1, t_w2, t_b2, in_w, in_b, cond_w, cond_b, ctx_w, ctx_b,
    ln1_g, ln1_b, w_qkv, w_o,
    ln2_g, ln2_b, w_qc, w_kvc, w_oc,
    ln3_g, ln3_b, w_mlp1, b_mlp1, w_mlp2, b_mlp2,
    zero_w, zero_b,
    emb_ref,
    h_sc, ctx_sc, attn_sc,
    *, num_heads):
    layer = pl.program_id(1)

    @pl.when(layer == 0)
    def _():
        e = jnp.dot(tfeat_ref[0], t_w1[...], preferred_element_type=jnp.float32) + t_b1[...]
        e = _silu(e)
        t_emb = jnp.dot(e, t_w2[...], preferred_element_type=jnp.float32) + t_b2[...]
        h = jnp.dot(x_ref[0], in_w[...], preferred_element_type=jnp.float32) + in_b[...] + t_emb
        h = h + jnp.dot(cond_ref[0], cond_w[...], preferred_element_type=jnp.float32) + cond_b[...]
        h_sc[...] = h
        ctx_sc[...] = (jnp.dot(ctx_in_ref[0], ctx_w[...],
                               preferred_element_type=jnp.float32) + ctx_b[...])

    mask_bias = (mask_ref[0] - 1.0) * 1e9
    x = _block_compute(
        h_sc[...], ctx_sc[...], mask_bias, attn_sc,
        ln1_g, ln1_b, w_qkv, w_o,
        ln2_g, ln2_b, w_qc, w_kvc, w_oc,
        ln3_g, ln3_b, w_mlp1, b_mlp1, w_mlp2, b_mlp2,
        num_heads=num_heads)
    h_sc[...] = x
    # fused zero-conv projection -> per-layer controlnet embedding
    emb_ref[0, 0] = (jnp.dot(x, zero_w[0], preferred_element_type=jnp.float32)
                     + zero_b[0]).astype(emb_ref.dtype)


# ============================ cost estimate ============================

def _cost_estimate(batch, tt, l, d, depth, args, out_shape):
    hidden = MLP_RATIO * d
    blk_flops = (2 * tt * d * (3 * d)       # qkv proj
                 + 4 * tt * tt * d          # self-attn scores + PV
                 + 2 * tt * d * d           # self-attn out proj
                 + 2 * tt * d * d           # cross q proj
                 + 2 * l * d * (2 * d)      # cross kv proj
                 + 4 * tt * l * d           # cross scores + PV
                 + 2 * tt * d * d           # cross out proj
                 + 4 * tt * d * hidden)     # MLP
    pre_flops = 4 * d * d + 2 * tt * C_IN * d + 2 * l * COND_DIM * d + 2 * tt * d * d
    flops = batch * (depth * (blk_flops + 2 * tt * d * d) + pre_flops)
    transc = batch * (depth * (NUM_HEADS * tt * tt + NUM_HEADS * tt * l + tt * hidden) + d)
    nbytes = sum(int(a.size) * int(a.dtype.itemsize) for a in args)
    nbytes += int(math.prod(out_shape)) * 4
    return pl.CostEstimate(flops=int(flops), transcendentals=int(transc),
                           bytes_accessed=int(nbytes))


# ============================ parameter init ============================

def _w(key, kin, kout, scale=0.02):
    return jax.random.normal(key, (kin, kout), jnp.float32) * scale


def init_block_stack(key, depth, d, mlp_ratio):
    """All per-layer block weights stacked along a leading depth axis."""
    ks = jax.random.split(key, 7)

    def w(k, kin, kout):
        return jax.random.normal(k, (depth, kin, kout), jnp.float32) * 0.02

    hidden = mlp_ratio * d
    return dict(
        ln1_g=jnp.ones((depth, 1, d), jnp.float32), ln1_b=jnp.zeros((depth, 1, d), jnp.float32),
        w_qkv=w(ks[0], d, 3 * d), w_o=w(ks[1], d, d),
        ln2_g=jnp.ones((depth, 1, d), jnp.float32), ln2_b=jnp.zeros((depth, 1, d), jnp.float32),
        w_qc=w(ks[2], d, d), w_kvc=w(ks[3], d, 2 * d), w_oc=w(ks[4], d, d),
        ln3_g=jnp.ones((depth, 1, d), jnp.float32), ln3_b=jnp.zeros((depth, 1, d), jnp.float32),
        w_mlp1=w(ks[5], d, hidden), b_mlp1=jnp.zeros((depth, 1, hidden), jnp.float32),
        w_mlp2=w(ks[6], hidden, d), b_mlp2=jnp.zeros((depth, 1, d), jnp.float32),
    )


def init_dit(key, io_ch, d, depth, cond_dim, is_controlnet=False):
    ks = jax.random.split(key, 10)
    p = dict(
        t_freqs=jax.random.normal(ks[0], (d // 2,), jnp.float32),
        t_w1=_w(ks[1], d, d), t_b1=jnp.zeros((1, d), jnp.float32),
        t_w2=_w(ks[2], d, d), t_b2=jnp.zeros((1, d), jnp.float32),
        in_w=_w(ks[3], io_ch, d), in_b=jnp.zeros((1, d), jnp.float32),
        ctx_w=_w(ks[4], cond_dim, d), ctx_b=jnp.zeros((1, d), jnp.float32),
        out_w=_w(ks[5], d, io_ch), out_b=jnp.zeros((1, io_ch), jnp.float32),
        blocks=init_block_stack(ks[6], depth, d, MLP_RATIO),
    )
    if is_controlnet:
        # NOTE: real impl zero-inits these projections; small nonzero values here so the
        # controlnet path is actually exercised numerically.
        p['cond_w'] = _w(ks[7], io_ch, d)
        p['cond_b'] = jnp.zeros((1, d), jnp.float32)
        p['zero_w'] = jax.random.normal(ks[8], (depth, d, d), jnp.float32) * 0.02
        p['zero_b'] = jnp.zeros((depth, 1, d), jnp.float32)
    return p


def init_params(key):
    k_model, k_cnet = jax.random.split(key)
    return dict(
        model=init_dit(k_model, C_IN, D, DEPTH, COND_DIM, is_controlnet=False),
        controlnet=init_dit(k_cnet, C_IN, D, int(CONTROLNET_DEPTH_FACTOR * DEPTH),
                            COND_DIM, is_controlnet=True),
    )


# ============================ forward passes ============================

def _fourier_feats(p, t):
    # Fourier timestep features (glue: cos/sin on a (B, D/2) array)
    angles = 2.0 * math.pi * t[:, None] * p['t_freqs'][None, :]          # (B, D/2)
    return jnp.concatenate([jnp.cos(angles), jnp.sin(angles)], axis=-1)  # (B, D)


def _make_mask(cross_attn_mask, b, l):
    if cross_attn_mask is None:
        m = jnp.ones((b, l), jnp.float32)
    else:
        m = cross_attn_mask.astype(jnp.float32)
    return m.reshape(b, 1, l)


def controlnet_forward(p, x, t, controlnet_cond, cross_attn_cond, cross_attn_mask):
    b, c, tt = x.shape
    l = cross_attn_cond.shape[1]
    depth = p['blocks']['w_qkv'].shape[0]

    x_tok = jnp.transpose(x, (0, 2, 1))                   # (B, T, C)
    cond_tok = jnp.transpose(controlnet_cond, (0, 2, 1))  # (B, T, C)
    tfeat = _fourier_feats(p, t)[:, None, :]              # (B, 1, D)
    mask = _make_mask(cross_attn_mask, b, l)               # (B, 1, L)

    preproc = [p['t_w1'], p['t_b1'], p['t_w2'], p['t_b2'],
               p['in_w'], p['in_b'], p['cond_w'], p['cond_b'],
               p['ctx_w'], p['ctx_b']]
    blk = [p['blocks'][k] for k in _BLOCK_WEIGHT_KEYS]
    zero = [p['zero_w'], p['zero_b']]

    in_specs = [
        pl.BlockSpec((1, tt, c), lambda i, j: (i, 0, 0)),                       # x_tok
        pl.BlockSpec((1, tt, c), lambda i, j: (i, 0, 0)),                       # cond_tok
        pl.BlockSpec((1, 1, D), lambda i, j: (i, 0, 0)),                        # tfeat
        pl.BlockSpec((1, l, cross_attn_cond.shape[2]), lambda i, j: (i, 0, 0)),  # cross cond
        pl.BlockSpec((1, 1, l), lambda i, j: (i, 0, 0)),                        # mask
    ]
    in_specs += [pl.BlockSpec(w.shape, lambda i, j: (0, 0)) for w in preproc]
    in_specs += [pl.BlockSpec((1,) + w.shape[1:], lambda i, j: (j, 0, 0)) for w in blk + zero]

    args = [x_tok, cond_tok, tfeat, cross_attn_cond, mask] + preproc + blk + zero
    out_shape = (depth, b, tt, D)

    embeds = pl.pallas_call(
        functools.partial(_cnet_fused_kernel, num_heads=NUM_HEADS),
        out_shape=jax.ShapeDtypeStruct(out_shape, jnp.float32),
        grid=(b, depth),
        in_specs=in_specs,
        out_specs=pl.BlockSpec((1, 1, tt, D), lambda i, j: (j, i, 0, 0)),
        scratch_shapes=[pltpu.VMEM((tt, D), jnp.float32),   # residual stream
                        pltpu.VMEM((l, D), jnp.float32),    # projected context
                        pltpu.VMEM((tt, D), jnp.float32)],  # attention head scratch
        compiler_params=pltpu.CompilerParams(
            dimension_semantics=("parallel", "arbitrary")),
        cost_estimate=_cost_estimate(b, tt, l, D, depth, args, out_shape),
    )(*args)
    # cfg dropout masks are None for cfg_dropout_prob == 0.0
    return embeds, None, None


def dit_forward(p, x, t, cross_attn_cond, cross_attn_mask, controlnet_embeds=None):
    b, c, tt = x.shape
    l = cross_attn_cond.shape[1]
    depth = p['blocks']['w_qkv'].shape[0]

    x_tok = jnp.transpose(x, (0, 2, 1))                   # (B, T, C)
    tfeat = _fourier_feats(p, t)[:, None, :]              # (B, 1, D)
    mask = _make_mask(cross_attn_mask, b, l)               # (B, 1, L)

    if controlnet_embeds is None:
        cemb = jnp.zeros((depth, b, tt, D), jnp.float32)
    else:
        cemb = controlnet_embeds.astype(jnp.float32)
        n = cemb.shape[0]
        if n < depth:   # layers past controlnet depth get a zero residual
            cemb = jnp.concatenate(
                [cemb, jnp.zeros((depth - n, b, tt, D), jnp.float32)], axis=0)

    preproc = [p['t_w1'], p['t_b1'], p['t_w2'], p['t_b2'],
               p['in_w'], p['in_b'], p['ctx_w'], p['ctx_b'],
               p['out_w'], p['out_b']]
    blk = [p['blocks'][k] for k in _BLOCK_WEIGHT_KEYS]

    in_specs = [
        pl.BlockSpec((1, tt, c), lambda i, j: (i, 0, 0)),                       # x_tok
        pl.BlockSpec((1, 1, D), lambda i, j: (i, 0, 0)),                        # tfeat
        pl.BlockSpec((1, l, cross_attn_cond.shape[2]), lambda i, j: (i, 0, 0)),  # cross cond
        pl.BlockSpec((1, 1, l), lambda i, j: (i, 0, 0)),                        # mask
        pl.BlockSpec((1, 1, tt, D), lambda i, j: (j, i, 0, 0)),                 # cnet embeds
    ]
    in_specs += [pl.BlockSpec(w.shape, lambda i, j: (0, 0)) for w in preproc]
    in_specs += [pl.BlockSpec((1,) + w.shape[1:], lambda i, j: (j, 0, 0)) for w in blk]

    args = [x_tok, tfeat, cross_attn_cond, mask, cemb] + preproc + blk
    out_shape = (b, tt, c)

    out_tok = pl.pallas_call(
        functools.partial(_dit_fused_kernel, num_heads=NUM_HEADS),
        out_shape=jax.ShapeDtypeStruct(out_shape, jnp.float32),
        grid=(b, depth),
        in_specs=in_specs,
        # same output block index across the depth axis -> VMEM-resident accumulator
        out_specs=pl.BlockSpec((1, tt, c), lambda i, j: (i, 0, 0)),
        scratch_shapes=[pltpu.VMEM((tt, D), jnp.float32),
                        pltpu.VMEM((l, D), jnp.float32),
                        pltpu.VMEM((tt, D), jnp.float32)],
        compiler_params=pltpu.CompilerParams(
            dimension_semantics=("parallel", "arbitrary")),
        cost_estimate=_cost_estimate(b, tt, l, D, depth, args, out_shape),
    )(*args)
    return jnp.transpose(out_tok, (0, 2, 1))              # back to NCL


def dit_controlnet_wrapper_forward(params, x, t, controlnet_cond=None,
                                   cross_attn_cond=None, cross_attn_mask=None,
                                   batch_cfg=True, rescale_cfg=False,
                                   cfg_scale=1.0, cfg_dropout_prob=0.0,
                                   scale_phi=0.0,
                                   scale_controlnet_embeds=1.0,
                                   scale_controlnet_cond=1.0):
    assert batch_cfg, 'batch_cfg must be True for DiTWrapper'
    # TODO(synk): batched-CFG doubling (cfg_scale != 1) and cfg dropout masks
    # (cfg_dropout_prob > 0) are not implemented in this synthetic kernel.
    embeds, cfg_ca_mask, cfg_pp_mask = controlnet_forward(
        params['controlnet'], x, t,
        scale_controlnet_cond * controlnet_cond, cross_attn_cond, cross_attn_mask)
    embeds = embeds * scale_controlnet_embeds
    return dit_forward(params['model'], x, t, cross_attn_cond, cross_attn_mask,
                       controlnet_embeds=embeds)


# ============================ main ============================

if __name__ == "__main__":
    key = jax.random.PRNGKey(0)
    k_par, k_x, k_cc, k_ca, k_t = jax.random.split(key, 5)

    params = init_params(k_par)

    x = jax.random.normal(k_x, (B, C_IN, T), jnp.float32)
    controlnet_cond = jax.random.normal(k_cc, (B, C_IN, T), jnp.float32)
    cross_attn_cond = jax.random.normal(k_ca, (B, L_COND, COND_DIM), jnp.float32)
    t = jax.random.uniform(k_t, (B,), jnp.float32)

    @jax.jit
    def fwd(params, x, t, controlnet_cond, cross_attn_cond):
        return dit_controlnet_wrapper_forward(
            params, x, t,
            controlnet_cond=controlnet_cond,
            cross_attn_cond=cross_attn_cond,
            cross_attn_mask=None,
            batch_cfg=True,
            cfg_scale=1.0,
            cfg_dropout_prob=0.0,
            scale_controlnet_embeds=1.0,
            scale_controlnet_cond=1.0,
        )

    out = fwd(params, x, t, controlnet_cond, cross_attn_cond)
    out = jax.block_until_ready(out)
    assert out.shape == (B, C_IN, T), out.shape
    assert bool(jnp.all(jnp.isfinite(out)))
    print("KERNEL_OK")
</pallas_src>

<mosaic_0001>
module attributes {stable_mosaic.version = 11 : i64} {
  func.func @_cnet_fused_kernel(%arg0: i32, %arg1: i32, %arg2: memref<1x16x4xf32, #tpu.memory_space<vmem>>, %arg3: memref<1x16x4xf32, #tpu.memory_space<vmem>>, %arg4: memref<1x1x64xf32, #tpu.memory_space<vmem>>, %arg5: memref<1x8x32xf32, #tpu.memory_space<vmem>>, %arg6: memref<1x1x8xf32, #tpu.memory_space<vmem>>, %arg7: memref<64x64xf32, #tpu.memory_space<vmem>>, %arg8: memref<1x64xf32, #tpu.memory_space<vmem>>, %arg9: memref<64x64xf32, #tpu.memory_space<vmem>>, %arg10: memref<1x64xf32, #tpu.memory_space<vmem>>, %arg11: memref<4x64xf32, #tpu.memory_space<vmem>>, %arg12: memref<1x64xf32, #tpu.memory_space<vmem>>, %arg13: memref<4x64xf32, #tpu.memory_space<vmem>>, %arg14: memref<1x64xf32, #tpu.memory_space<vmem>>, %arg15: memref<32x64xf32, #tpu.memory_space<vmem>>, %arg16: memref<1x64xf32, #tpu.memory_space<vmem>>, %arg17: memref<1x1x64xf32, #tpu.memory_space<vmem>>, %arg18: memref<1x1x64xf32, #tpu.memory_space<vmem>>, %arg19: memref<1x64x192xf32, #tpu.memory_space<vmem>>, %arg20: memref<1x64x64xf32, #tpu.memory_space<vmem>>, %arg21: memref<1x1x64xf32, #tpu.memory_space<vmem>>, %arg22: memref<1x1x64xf32, #tpu.memory_space<vmem>>, %arg23: memref<1x64x64xf32, #tpu.memory_space<vmem>>, %arg24: memref<1x64x128xf32, #tpu.memory_space<vmem>>, %arg25: memref<1x64x64xf32, #tpu.memory_space<vmem>>, %arg26: memref<1x1x64xf32, #tpu.memory_space<vmem>>, %arg27: memref<1x1x64xf32, #tpu.memory_space<vmem>>, %arg28: memref<1x64x256xf32, #tpu.memory_space<vmem>>, %arg29: memref<1x1x256xf32, #tpu.memory_space<vmem>>, %arg30: memref<1x256x64xf32, #tpu.memory_space<vmem>>, %arg31: memref<1x1x64xf32, #tpu.memory_space<vmem>>, %arg32: memref<1x64x64xf32, #tpu.memory_space<vmem>>, %arg33: memref<1x1x64xf32, #tpu.memory_space<vmem>>, %arg34: memref<1x1x16x64xf32, #tpu.memory_space<vmem>>, %arg35: memref<16x64xf32, #tpu.memory_space<vmem>>, %arg36: memref<8x64xf32, #tpu.memory_space<vmem>>, %arg37: memref<16x64xf32, #tpu.memory_space<vmem>>) attributes {dimension_semantics = [#tpu.dimension_semantics<parallel>, #tpu.dimension_semantics<arbitrary>], iteration_bounds = array<i64: 2, 2>, scalar_prefetch = 0 : i64, scratch_operands = 3 : i64, tpu.core_type = #tpu.core_type<tc>, window_params = [{transform_indices = @transform_0, window_bounds = array<i64: 1, 16, 4>}, {transform_indices = @transform_1, window_bounds = array<i64: 1, 16, 4>}, {transform_indices = @transform_2, window_bounds = array<i64: 1, 1, 64>}, {transform_indices = @transform_3, window_bounds = array<i64: 1, 8, 32>}, {transform_indices = @transform_4, window_bounds = array<i64: 1, 1, 8>}, {pipeline_mode = #tpu.pipeline_mode<synchronous>, transform_indices = @transform_5, window_bounds = array<i64: 64, 64>}, {pipeline_mode = #tpu.pipeline_mode<synchronous>, transform_indices = @transform_6, window_bounds = array<i64: 1, 64>}, {pipeline_mode = #tpu.pipeline_mode<synchronous>, transform_indices = @transform_7, window_bounds = array<i64: 64, 64>}, {pipeline_mode = #tpu.pipeline_mode<synchronous>, transform_indices = @transform_8, window_bounds = array<i64: 1, 64>}, {pipeline_mode = #tpu.pipeline_mode<synchronous>, transform_indices = @transform_9, window_bounds = array<i64: 4, 64>}, {pipeline_mode = #tpu.pipeline_mode<synchronous>, transform_indices = @transform_10, window_bounds = array<i64: 1, 64>}, {pipeline_mode = #tpu.pipeline_mode<synchronous>, transform_indices = @transform_11, window_bounds = array<i64: 4, 64>}, {pipeline_mode = #tpu.pipeline_mode<synchronous>, transform_indices = @transform_12, window_bounds = array<i64: 1, 64>}, {pipeline_mode = #tpu.pipeline_mode<synchronous>, transform_indices = @transform_13, window_bounds = array<i64: 32, 64>}, {pipeline_mode = #tpu.pipeline_mode<synchronous>, transform_indices = @transform_14, window_bounds = array<i64: 1, 64>}, {transform_indices = @transform_15, window_bounds = array<i64: 1, 1, 64>}, {transform_indices = @transform_16, window_bounds = array<i64: 1, 1, 64>}, {transform_indices = @transform_17, window_bounds = array<i64: 1, 64, 192>}, {transform_indices = @transform_18, window_bounds = array<i64: 1, 64, 64>}, {transform_indices = @transform_19, window_bounds = array<i64: 1, 1, 64>}, {transform_indices = @transform_20, window_bounds = array<i64: 1, 1, 64>}, {transform_indices = @transform_21, window_bounds = array<i64: 1, 64, 64>}, {transform_indices = @transform_22, window_bounds = array<i64: 1, 64, 128>}, {transform_indices = @transform_23, window_bounds = array<i64: 1, 64, 64>}, {transform_indices = @transform_24, window_bounds = array<i64: 1, 1, 64>}, {transform_indices = @transform_25, window_bounds = array<i64: 1, 1, 64>}, {transform_indices = @transform_26, window_bounds = array<i64: 1, 64, 256>}, {transform_indices = @transform_27, window_bounds = array<i64: 1, 1, 256>}, {transform_indices = @transform_28, window_bounds = array<i64: 1, 256, 64>}, {transform_indices = @transform_29, window_bounds = array<i64: 1, 1, 64>}, {transform_indices = @transform_30, window_bounds = array<i64: 1, 64, 64>}, {transform_indices = @transform_31, window_bounds = array<i64: 1, 1, 64>}, {transform_indices = @transform_32, window_bounds = array<i64: 1, 1, 16, 64>}]} {
    %c0_i32 = arith.constant 0 : i32
    %0 = arith.cmpi eq, %arg1, %c0_i32 : i32
    %1 = arith.extui %0 : i1 to i32
    %c0_i32_0 = arith.constant 0 : i32
    %2 = arith.cmpi ne, %1, %c0_i32_0 : i32
    scf.if %2 {
      %c0_123 = arith.constant 0 : index
      %c0_124 = arith.constant 0 : index
      %c0_125 = arith.constant 0 : index
      %226 = vector.load %arg4[%c0_123, %c0_124, %c0_125] : memref<1x1x64xf32, #tpu.memory_space<vmem>>, vector<1x1x64xf32>
      %227 = vector.shape_cast %226 : vector<1x1x64xf32> to vector<1x64xf32>
      %c0_126 = arith.constant 0 : index
      %c0_127 = arith.constant 0 : index
      %228 = vector.load %arg7[%c0_126, %c0_127] : memref<64x64xf32, #tpu.memory_space<vmem>>, vector<64x64xf32>
      %cst_128 = arith.constant dense<0.000000e+00> : vector<1x64xf32>
      %229 = tpu.matmul %227, %228, %cst_128 {dimension_numbers = #tpu.dot_dimension_numbers<[1], [0], [0], [1], [0, 0, 1, 1], [], []>} : vector<1x64xf32>, vector<64x64xf32>, vector<1x64xf32> -> vector<1x64xf32>
      %c0_129 = arith.constant 0 : index
      %c0_130 = arith.constant 0 : index
      %230 = vector.load %arg8[%c0_129, %c0_130] : memref<1x64xf32, #tpu.memory_space<vmem>>, vector<1x64xf32>
      %231 = arith.addf %229, %230 : vector<1x64xf32>
      %cst_131 = arith.constant 0.000000e+00 : f32
      %232 = vector.broadcast %cst_131 : f32 to vector<1x64xf32>
      %233 = arith.subf %232, %231 : vector<1x64xf32>
      %234 = math.exp %233 : vector<1x64xf32>
      %cst_132 = arith.constant 1.000000e+00 : f32
      %235 = vector.broadcast %cst_132 : f32 to vector<1x64xf32>
      %236 = arith.addf %235, %234 : vector<1x64xf32>
      %237 = tpu.reciprocal %236 {approx = true} : vector<1x64xf32> -> vector<1x64xf32>
      %238 = arith.mulf %231, %237 : vector<1x64xf32>
      %c0_133 = arith.constant 0 : index
      %c0_134 = arith.constant 0 : index
      %239 = vector.load %arg9[%c0_133, %c0_134] : memref<64x64xf32, #tpu.memory_space<vmem>>, vector<64x64xf32>
      %cst_135 = arith.constant dense<0.000000e+00> : vector<1x64xf32>
      %240 = tpu.matmul %238, %239, %cst_135 {dimension_numbers = #tpu.dot_dimension_numbers<[1], [0], [0], [1], [0, 0, 1, 1], [], []>} : vector<1x64xf32>, vector<64x64xf32>, vector<1x64xf32> -> vector<1x64xf32>
      %c0_136 = arith.constant 0 : index
      %c0_137 = arith.constant 0 : index
      %241 = vector.load %arg10[%c0_136, %c0_137] : memref<1x64xf32, #tpu.memory_space<vmem>>, vector<1x64xf32>
      %242 = arith.addf %240, %241 : vector<1x64xf32>
      %c0_138 = arith.constant 0 : index
      %c0_139 = arith.constant 0 : index
      %c0_140 = arith.constant 0 : index
      %243 = vector.load %arg2[%c0_138, %c0_139, %c0_140] : memref<1x16x4xf32, #tpu.memory_space<vmem>>, vector<1x16x4xf32>
      %244 = vector.shape_cast %243 : vector<1x16x4xf32> to vector<16x4xf32>
      %c0_141 = arith.constant 0 : index
      %c0_142 = arith.constant 0 : index
      %245 = vector.load %arg11[%c0_141, %c0_142] : memref<4x64xf32, #tpu.memory_space<vmem>>, vector<4x64xf32>
      %cst_143 = arith.constant dense<0.000000e+00> : vector<16x64xf32>
      %246 = tpu.matmul %244, %245, %cst_143 {dimension_numbers = #tpu.dot_dimension_numbers<[1], [0], [0], [1], [0, 0, 1, 1], [], []>} : vector<16x4xf32>, vector<4x64xf32>, vector<16x64xf32> -> vector<16x64xf32>
      %c0_144 = arith.constant 0 : index
      %c0_145 = arith.constant 0 : index
      %247 = vector.load %arg12[%c0_144, %c0_145] : memref<1x64xf32, #tpu.memory_space<vmem>>, vector<1x64xf32>
      %248 = vector.broadcast %247 : vector<1x64xf32> to vector<16x64xf32>
      %249 = arith.addf %246, %248 : vector<16x64xf32>
      %250 = vector.broadcast %242 : vector<1x64xf32> to vector<16x64xf32>
      %251 = arith.addf %249, %250 : vector<16x64xf32>
      %c0_146 = arith.constant 0 : index
      %c0_147 = arith.constant 0 : index
      %c0_148 = arith.constant 0 : index
      %252 = vector.load %arg3[%c0_146, %c0_147, %c0_148] : memref<1x16x4xf32, #tpu.memory_space<vmem>>, vector<1x16x4xf32>
      %253 = vector.shape_cast %252 : vector<1x16x4xf32> to vector<16x4xf32>
      %c0_149 = arith.constant 0 : index
      %c0_150 = arith.constant 0 : index
      %254 = vector.load %arg13[%c0_149, %c0_150] : memref<4x64xf32, #tpu.memory_space<vmem>>, vector<4x64xf32>
      %cst_151 = arith.constant dense<0.000000e+00> : vector<16x64xf32>
      %255 = tpu.matmul %253, %254, %cst_151 {dimension_numbers = #tpu.dot_dimension_numbers<[1], [0], [0], [1], [0, 0, 1, 1], [], []>} : vector<16x4xf32>, vector<4x64xf32>, vector<16x64xf32> -> vector<16x64xf32>
      %256 = arith.addf %251, %255 : vector<16x64xf32>
      %c0_152 = arith.constant 0 : index
      %c0_153 = arith.constant 0 : index
      %257 = vector.load %arg14[%c0_152, %c0_153] : memref<1x64xf32, #tpu.memory_space<vmem>>, vector<1x64xf32>
      %258 = vector.broadcast %257 : vector<1x64xf32> to vector<16x64xf32>
      %259 = arith.addf %256, %258 : vector<16x64xf32>
      %c0_154 = arith.constant 0 : index
      %c0_155 = arith.constant 0 : index
      %260 = vector.load %arg35[%c0_154, %c0_155] : memref<16x64xf32, #tpu.memory_space<vmem>>, vector<16x64xf32>
      tpu.vector_store %arg35[%c0_154, %c0_155], %259 {strides = array<i32>} : memref<16x64xf32, #tpu.memory_space<vmem>>, vector<16x64xf32>,
      %c0_156 = arith.constant 0 : index
      %c0_157 = arith.constant 0 : index
      %c0_158 = arith.constant 0 : index
      %261 = vector.load %arg5[%c0_156, %c0_157, %c0_158] : memref<1x8x32xf32, #tpu.memory_space<vmem>>, vector<1x8x32xf32>
      %262 = vector.shape_cast %261 : vector<1x8x32xf32> to vector<8x32xf32>
      %c0_159 = arith.constant 0 : index
      %c0_160 = arith.constant 0 : index
      %263 = vector.load %arg15[%c0_159, %c0_160] : memref<32x64xf32, #tpu.memory_space<vmem>>, vector<32x64xf32>
      %cst_161 = arith.constant dense<0.000000e+00> : vector<8x64xf32>
      %264 = tpu.matmul %262, %263, %cst_161 {dimension_numbers = #tpu.dot_dimension_numbers<[1], [0], [0], [1], [0, 0, 1, 1], [], []>} : vector<8x32xf32>, vector<32x64xf32>, vector<8x64xf32> -> vector<8x64xf32>
      %c0_162 = arith.constant 0 : index
      %c0_163 = arith.constant 0 : index
      %265 = vector.load %arg16[%c0_162, %c0_163] : memref<1x64xf32, #tpu.memory_space<vmem>>, vector<1x64xf32>
      %266 = vector.broadcast %265 : vector<1x64xf32> to vector<8x64xf32>
      %267 = arith.addf %264, %266 : vector<8x64xf32>
      %c0_164 = arith.constant 0 : index
      %c0_165 = arith.constant 0 : index
      %268 = vector.load %arg36[%c0_164, %c0_165] : memref<8x64xf32, #tpu.memory_space<vmem>>, vector<8x64xf32>
      tpu.vector_store %arg36[%c0_164, %c0_165], %267 {strides = array<i32>} : memref<8x64xf32, #tpu.memory_space<vmem>>, vector<8x64xf32>,
    } else {
    }
    %c0 = arith.constant 0 : index
    %c0_1 = arith.constant 0 : index
    %c0_2 = arith.constant 0 : index
    %3 = vector.load %arg6[%c0, %c0_1, %c0_2] : memref<1x1x8xf32, #tpu.memory_space<vmem>>, vector<1x1x8xf32>
    %4 = vector.shape_cast %3 : vector<1x1x8xf32> to vector<1x8xf32>
    %cst = arith.constant 1.000000e+00 : f32
    %5 = vector.broadcast %cst : f32 to vector<1x8xf32>
    %6 = arith.subf %4, %5 : vector<1x8xf32>
    %cst_3 = arith.constant 1.000000e+09 : f32
    %7 = vector.broadcast %cst_3 : f32 to vector<1x8xf32>
    %8 = arith.mulf %6, %7 : vector<1x8xf32>
    %c0_4 = arith.constant 0 : index
    %c0_5 = arith.constant 0 : index
    %9 = vector.load %arg35[%c0_4, %c0_5] : memref<16x64xf32, #tpu.memory_space<vmem>>, vector<16x64xf32>
    %c0_6 = arith.constant 0 : index
    %c0_7 = arith.constant 0 : index
    %10 = vector.load %arg36[%c0_6, %c0_7] : memref<8x64xf32, #tpu.memory_space<vmem>>, vector<8x64xf32>
    %c0_8 = arith.constant 0 : index
    %c0_9 = arith.constant 0 : index
    %c0_10 = arith.constant 0 : index
    %11 = vector.load %arg17[%c0_8, %c0_9, %c0_10] : memref<1x1x64xf32, #tpu.memory_space<vmem>>, vector<1x1x64xf32>
    %12 = vector.shape_cast %11 : vector<1x1x64xf32> to vector<1x64xf32>
    %c0_11 = arith.constant 0 : index
    %c0_12 = arith.constant 0 : index
    %c0_13 = arith.constant 0 : index
    %13 = vector.load %arg18[%c0_11, %c0_12, %c0_13] : memref<1x1x64xf32, #tpu.memory_space<vmem>>, vector<1x1x64xf32>
    %14 = vector.shape_cast %13 : vector<1x1x64xf32> to vector<1x64xf32>
    %cst_14 = arith.constant dense<0.000000e+00> : vector<16xf32>
    %15 = vector.multi_reduction <add>, %9, %cst_14 [1] : vector<16x64xf32> to vector<16xf32>
    %16 = vector.shape_cast %15 : vector<16xf32> to vector<16x1xf32>
    %cst_15 = arith.constant 6.400000e+01 : f32
    %17 = vector.broadcast %cst_15 : f32 to vector<16x1xf32>
    %18 = arith.divf %16, %17 : vector<16x1xf32>
    %19 = vector.broadcast %18 : vector<16x1xf32> to vector<16x64xf32>
    %20 = arith.subf %9, %19 : vector<16x64xf32>
    %21 = arith.mulf %20, %20 : vector<16x64xf32>
    %cst_16 = arith.constant dense<0.000000e+00> : vector<16xf32>
    %22 = vector.multi_reduction <add>, %21, %cst_16 [1] : vector<16x64xf32> to vector<16xf32>
    %23 = vector.shape_cast %22 : vector<16xf32> to vector<16x1xf32>
    %cst_17 = arith.constant 6.400000e+01 : f32
    %24 = vector.broadcast %cst_17 : f32 to vector<16x1xf32>
    %25 = arith.divf %23, %24 : vector<16x1xf32>
    %cst_18 = arith.constant 9.99999974E-6 : f32
    %26 = vector.broadcast %cst_18 : f32 to vector<16x1xf32>
    %27 = arith.addf %25, %26 : vector<16x1xf32>
    %28 = math.rsqrt %27 : vector<16x1xf32>
    %29 = vector.broadcast %28 : vector<16x1xf32> to vector<16x64xf32>
    %30 = arith.mulf %20, %29 : vector<16x64xf32>
    %31 = vector.broadcast %12 : vector<1x64xf32> to vector<16x64xf32>
    %32 = arith.mulf %30, %31 : vector<16x64xf32>
    %33 = vector.broadcast %14 : vector<1x64xf32> to vector<16x64xf32>
    %34 = arith.addf %32, %33 : vector<16x64xf32>
    %c0_19 = arith.constant 0 : index
    %c0_20 = arith.constant 0 : index
    %c0_21 = arith.constant 0 : index
    %35 = vector.load %arg19[%c0_19, %c0_20, %c0_21] : memref<1x64x192xf32, #tpu.memory_space<vmem>>, vector<1x64x192xf32>
    %36 = vector.shape_cast %35 : vector<1x64x192xf32> to vector<64x192xf32>
    %cst_22 = arith.constant dense<0.000000e+00> : vector<16x192xf32>
    %37 = tpu.matmul %34, %36, %cst_22 {dimension_numbers = #tpu.dot_dimension_numbers<[1], [0], [0], [1], [0, 0, 1, 1], [], []>} : vector<16x64xf32>, vector<64x192xf32>, vector<16x192xf32> -> vector<16x192xf32>
    %38 = vector.extract_strided_slice %37 {offsets = [0, 0], sizes = [16, 64], strides = [1, 1]} : vector<16x192xf32> to vector<16x64xf32>
    %39 = vector.extract_strided_slice %37 {offsets = [0, 64], sizes = [16, 64], strides = [1, 1]} : vector<16x192xf32> to vector<16x64xf32>
    %40 = vector.extract_strided_slice %37 {offsets = [0, 128], sizes = [16, 64], strides = [1, 1]} : vector<16x192xf32> to vector<16x64xf32>
    %41 = vector.extract_strided_slice %38 {offsets = [0, 0], sizes = [16, 32], strides = [1, 1]} : vector<16x64xf32> to vector<16x32xf32>
    %42 = vector.extract_strided_slice %39 {offsets = [0, 0], sizes = [16, 32], strides = [1, 1]} : vector<16x64xf32> to vector<16x32xf32>
    %43 = tpu.transpose %42, [1, 0] : vector<16x32xf32> -> vector<32x16xf32>
    %cst_23 = arith.constant dense<0.000000e+00> : vector<16x16xf32>
    %44 = tpu.matmul %41, %43, %cst_23 {dimension_numbers = #tpu.dot_dimension_numbers<[1], [0], [0], [1], [0, 0, 1, 1], [], []>} : vector<16x32xf32>, vector<32x16xf32>, vector<16x16xf32> -> vector<16x16xf32>
    %cst_24 = arith.constant 0.176776692 : f32
    %45 = vector.broadcast %cst_24 : f32 to vector<16x16xf32>
    %46 = arith.mulf %44, %45 : vector<16x16xf32>
    %cst_25 = arith.constant dense<0xFF800000> : vector<16xf32>
    %47 = vector.multi_reduction <maximumf>, %46, %cst_25 [1] : vector<16x16xf32> to vector<16xf32>
    %48 = vector.shape_cast %47 : vector<16xf32> to vector<16x1xf32>
    %49 = vector.broadcast %48 : vector<16x1xf32> to vector<16x16xf32>
    %50 = arith.subf %46, %49 : vector<16x16xf32>
    %51 = math.exp %50 : vector<16x16xf32>
    %cst_26 = arith.constant dense<0.000000e+00> : vector<16xf32>
    %52 = vector.multi_reduction <add>, %51, %cst_26 [1] : vector<16x16xf32> to vector<16xf32>
    %53 = vector.shape_cast %52 : vector<16xf32> to vector<16x1xf32>
    %54 = tpu.reciprocal %53 {approx = true} : vector<16x1xf32> -> vector<16x1xf32>
    %55 = vector.broadcast %54 : vector<16x1xf32> to vector<16x16xf32>
    %56 = arith.mulf %51, %55 : vector<16x16xf32>
    %57 = vector.extract_strided_slice %40 {offsets = [0, 0], sizes = [16, 32], strides = [1, 1]} : vector<16x64xf32> to vector<16x32xf32>
    %cst_27 = arith.constant dense<0.000000e+00> : vector<16x32xf32>
    %58 = tpu.matmul %56, %57, %cst_27 {dimension_numbers = #tpu.dot_dimension_numbers<[1], [0], [0], [1], [0, 0, 1, 1], [], []>} : vector<16x16xf32>, vector<16x32xf32>, vector<16x32xf32> -> vector<16x32xf32>
    %c0_28 = arith.constant 0 : index
    %c0_29 = arith.constant 0 : index
    %59 = vector.load %arg37[%c0_28, %c0_29] : memref<16x64xf32, #tpu.memory_space<vmem>>, vector<16x32xf32>
    tpu.vector_store %arg37[%c0_28, %c0_29], %58 {strides = array<i32>} : memref<16x64xf32, #tpu.memory_space<vmem>>, vector<16x32xf32>,
    %60 = vector.extract_strided_slice %38 {offsets = [0, 32], sizes = [16, 32], strides = [1, 1]} : vector<16x64xf32> to vector<16x32xf32>
    %61 = vector.extract_strided_slice %39 {offsets = [0, 32], sizes = [16, 32], strides = [1, 1]} : vector<16x64xf32> to vector<16x32xf32>
    %62 = tpu.transpose %61, [1, 0] : vector<16x32xf32> -> vector<32x16xf32>
    %cst_30 = arith.constant dense<0.000000e+00> : vector<16x16xf32>
    %63 = tpu.matmul %60, %62, %cst_30 {dimension_numbers = #tpu.dot_dimension_numbers<[1], [0], [0], [1], [0, 0, 1, 1], [], []>} : vector<16x32xf32>, vector<32x16xf32>, vector<16x16xf32> -> vector<16x16xf32>
    %cst_31 = arith.constant 0.176776692 : f32
    %64 = vector.broadcast %cst_31 : f32 to vector<16x16xf32>
    %65 = arith.mulf %63, %64 : vector<16x16xf32>
    %cst_32 = arith.constant dense<0xFF800000> : vector<16xf32>
    %66 = vector.multi_reduction <maximumf>, %65, %cst_32 [1] : vector<16x16xf32> to vector<16xf32>
    %67 = vector.shape_cast %66 : vector<16xf32> to vector<16x1xf32>
    %68 = vector.broadcast %67 : vector<16x1xf32> to vector<16x16xf32>
    %69 = arith.subf %65, %68 : vector<16x16xf32>
    %70 = math.exp %69 : vector<16x16xf32>
    %cst_33 = arith.constant dense<0.000000e+00> : vector<16xf32>
    %71 = vector.multi_reduction <add>, %70, %cst_33 [1] : vector<16x16xf32> to vector<16xf32>
    %72 = vector.shape_cast %71 : vector<16xf32> to vector<16x1xf32>
    %73 = tpu.reciprocal %72 {approx = true} : vector<16x1xf32> -> vector<16x1xf32>
    %74 = vector.broadcast %73 : vector<16x1xf32> to vector<16x16xf32>
    %75 = arith.mulf %70, %74 : vector<16x16xf32>
    %76 = vector.extract_strided_slice %40 {offsets = [0, 32], sizes = [16, 32], strides = [1, 1]} : vector<16x64xf32> to vector<16x32xf32>
    %cst_34 = arith.constant dense<0.000000e+00> : vector<16x32xf32>
    %77 = tpu.matmul %75, %76, %cst_34 {dimension_numbers = #tpu.dot_dimension_numbers<[1], [0], [0], [1], [0, 0, 1, 1], [], []>} : vector<16x16xf32>, vector<16x32xf32>, vector<16x32xf32> -> vector<16x32xf32>
    %c0_35 = arith.constant 0 : index
    %c32 = arith.constant 32 : index
    %78 = vector.load %arg37[%c0_35, %c32] : memref<16x64xf32, #tpu.memory_space<vmem>>, vector<16x32xf32>
    tpu.vector_store %arg37[%c0_35, %c32], %77 {strides = array<i32>} : memref<16x64xf32, #tpu.memory_space<vmem>>, vector<16x32xf32>,
    %c0_36 = arith.constant 0 : index
    %c0_37 = arith.constant 0 : index
    %79 = vector.load %arg37[%c0_36, %c0_37] : memref<16x64xf32, #tpu.memory_space<vmem>>, vector<16x64xf32>
    %c0_38 = arith.constant 0 : index
    %c0_39 = arith.constant 0 : index
    %c0_40 = arith.constant 0 : index
    %80 = vector.load %arg20[%c0_38, %c0_39, %c0_40] : memref<1x64x64xf32, #tpu.memory_space<vmem>>, vector<1x64x64xf32>
    %81 = vector.shape_cast %80 : vector<1x64x64xf32> to vector<64x64xf32>
    %cst_41 = arith.constant dense<0.000000e+00> : vector<16x64xf32>
    %82 = tpu.matmul %79, %81, %cst_41 {dimension_numbers = #tpu.dot_dimension_numbers<[1], [0], [0], [1], [0, 0, 1, 1], [], []>} : vector<16x64xf32>, vector<64x64xf32>, vector<16x64xf32> -> vector<16x64xf32>
    %83 = arith.addf %9, %82 : vector<16x64xf32>
    %c0_42 = arith.constant 0 : index
    %c0_43 = arith.constant 0 : index
    %c0_44 = arith.constant 0 : index
    %84 = vector.load %arg21[%c0_42, %c0_43, %c0_44] : memref<1x1x64xf32, #tpu.memory_space<vmem>>, vector<1x1x64xf32>
    %85 = vector.shape_cast %84 : vector<1x1x64xf32> to vector<1x64xf32>
    %c0_45 = arith.constant 0 : index
    %c0_46 = arith.constant 0 : index
    %c0_47 = arith.constant 0 : index
    %86 = vector.load %arg22[%c0_45, %c0_46, %c0_47] : memref<1x1x64xf32, #tpu.memory_space<vmem>>, vector<1x1x64xf32>
    %87 = vector.shape_cast %86 : vector<1x1x64xf32> to vector<1x64xf32>
    %cst_48 = arith.constant dense<0.000000e+00> : vector<16xf32>
    %88 = vector.multi_reduction <add>, %83, %cst_48 [1] : vector<16x64xf32> to vector<16xf32>
    %89 = vector.shape_cast %88 : vector<16xf32> to vector<16x1xf32>
    %cst_49 = arith.constant 6.400000e+01 : f32
    %90 = vector.broadcast %cst_49 : f32 to vector<16x1xf32>
    %91 = arith.divf %89, %90 : vector<16x1xf32>
    %92 = vector.broadcast %91 : vector<16x1xf32> to vector<16x64xf32>
    %93 = arith.subf %83, %92 : vector<16x64xf32>
    %94 = arith.mulf %93, %93 : vector<16x64xf32>
    %cst_50 = arith.constant dense<0.000000e+00> : vector<16xf32>
    %95 = vector.multi_reduction <add>, %94, %cst_50 [1] : vector<16x64xf32> to vector<16xf32>
    %96 = vector.shape_cast %95 : vector<16xf32> to vector<16x1xf32>
    %cst_51 = arith.constant 6.400000e+01 : f32
    %97 = vector.broadcast %cst_51 : f32 to vector<16x1xf32>
    %98 = arith.divf %96, %97 : vector<16x1xf32>
    %cst_52 = arith.constant 9.99999974E-6 : f32
    %99 = vector.broadcast %cst_52 : f32 to vector<16x1xf32>
    %100 = arith.addf %98, %99 : vector<16x1xf32>
    %101 = math.rsqrt %100 : vector<16x1xf32>
    %102 = vector.broadcast %101 : vector<16x1xf32> to vector<16x64xf32>
    %103 = arith.mulf %93, %102 : vector<16x64xf32>
    %104 = vector.broadcast %85 : vector<1x64xf32> to vector<16x64xf32>
    %105 = arith.mulf %103, %104 : vector<16x64xf32>
    %106 = vector.broadcast %87 : vector<1x64xf32> to vector<16x64xf32>
    %107 = arith.addf %105, %106 : vector<16x64xf32>
    %c0_53 = arith.constant 0 : index
    %c0_54 = arith.constant 0 : index
    %c0_55 = arith.constant 0 : index
    %108 = vector.load %arg23[%c0_53, %c0_54, %c0_55] : memref<1x64x64xf32, #tpu.memory_space<vmem>>, vector<1x64x64xf32>
    %109 = vector.shape_cast %108 : vector<1x64x64xf32> to vector<64x64xf32>
    %cst_56 = arith.constant dense<0.000000e+00> : vector<16x64xf32>
    %110 = tpu.matmul %107, %109, %cst_56 {dimension_numbers = #tpu.dot_dimension_numbers<[1], [0], [0], [1], [0, 0, 1, 1], [], []>} : vector<16x64xf32>, vector<64x64xf32>, vector<16x64xf32> -> vector<16x64xf32>
    %c0_57 = arith.constant 0 : index
    %c0_58 = arith.constant 0 : index
    %c0_59 = arith.constant 0 : index
    %111 = vector.load %arg24[%c0_57, %c0_58, %c0_59] : memref<1x64x128xf32, #tpu.memory_space<vmem>>, vector<1x64x128xf32>
    %112 = vector.shape_cast %111 : vector<1x64x128xf32> to vector<64x128xf32>
    %cst_60 = arith.constant dense<0.000000e+00> : vector<8x128xf32>
    %113 = tpu.matmul %10, %112, %cst_60 {dimension_numbers = #tpu.dot_dimension_numbers<[1], [0], [0], [1], [0, 0, 1, 1], [], []>} : vector<8x64xf32>, vector<64x128xf32>, vector<8x128xf32> -> vector<8x128xf32>
    %114 = vector.extract_strided_slice %113 {offsets = [0, 0], sizes = [8, 64], strides = [1, 1]} : vector<8x128xf32> to vector<8x64xf32>
    %115 = vector.extract_strided_slice %113 {offsets = [0, 64], sizes = [8, 64], strides = [1, 1]} : vector<8x128xf32> to vector<8x64xf32>
    %116 = vector.extract_strided_slice %110 {offsets = [0, 0], sizes = [16, 32], strides = [1, 1]} : vector<16x64xf32> to vector<16x32xf32>
    %117 = vector.extract_strided_slice %114 {offsets = [0, 0], sizes = [8, 32], strides = [1, 1]} : vector<8x64xf32> to vector<8x32xf32>
    %118 = tpu.transpose %117, [1, 0] : vector<8x32xf32> -> vector<32x8xf32>
    %cst_61 = arith.constant dense<0.000000e+00> : vector<16x8xf32>
    %119 = tpu.matmul %116, %118, %cst_61 {dimension_numbers = #tpu.dot_dimension_numbers<[1], [0], [0], [1], [0, 0, 1, 1], [], []>} : vector<16x32xf32>, vector<32x8xf32>, vector<16x8xf32> -> vector<16x8xf32>
    %cst_62 = arith.constant 0.176776692 : f32
    %120 = vector.broadcast %cst_62 : f32 to vector<16x8xf32>
    %121 = arith.mulf %119, %120 : vector<16x8xf32>
    %122 = vector.broadcast %8 : vector<1x8xf32> to vector<16x8xf32>
    %123 = arith.addf %121, %122 : vector<16x8xf32>
    %cst_63 = arith.constant dense<0xFF800000> : vector<16xf32>
    %124 = vector.multi_reduction <maximumf>, %123, %cst_63 [1] : vector<16x8xf32> to vector<16xf32>
    %125 = vector.shape_cast %124 : vector<16xf32> to vector<16x1xf32>
    %126 = vector.broadcast %125 : vector<16x1xf32> to vector<16x8xf32>
    %127 = arith.subf %123, %126 : vector<16x8xf32>
    %128 = math.exp %127 : vector<16x8xf32>
    %cst_64 = arith.constant dense<0.000000e+00> : vector<16xf32>
    %129 = vector.multi_reduction <add>, %128, %cst_64 [1] : vector<16x8xf32> to vector<16xf32>
    %130 = vector.shape_cast %129 : vector<16xf32> to vector<16x1xf32>
    %131 = tpu.reciprocal %130 {approx = true} : vector<16x1xf32> -> vector<16x1xf32>
    %132 = vector.broadcast %131 : vector<16x1xf32> to vector<16x8xf32>
    %133 = arith.mulf %128, %132 : vector<16x8xf32>
    %134 = vector.extract_strided_slice %115 {offsets = [0, 0], sizes = [8, 32], strides = [1, 1]} : vector<8x64xf32> to vector<8x32xf32>
    %cst_65 = arith.constant dense<0.000000e+00> : vector<16x32xf32>
    %135 = tpu.matmul %133, %134, %cst_65 {dimension_numbers = #tpu.dot_dimension_numbers<[1], [0], [0], [1], [0, 0, 1, 1], [], []>} : vector<16x8xf32>, vector<8x32xf32>, vector<16x32xf32> -> vector<16x32xf32>
    %c0_66 = arith.constant 0 : index
    %c0_67 = arith.constant 0 : index
    %136 = vector.load %arg37[%c0_66, %c0_67] : memref<16x64xf32, #tpu.memory_space<vmem>>, vector<16x32xf32>
    tpu.vector_store %arg37[%c0_66, %c0_67], %135 {strides = array<i32>} : memref<16x64xf32, #tpu.memory_space<vmem>>, vector<16x32xf32>,
    %137 = vector.extract_strided_slice %110 {offsets = [0, 32], sizes = [16, 32], strides = [1, 1]} : vector<16x64xf32> to vector<16x32xf32>
    %138 = vector.extract_strided_slice %114 {offsets = [0, 32], sizes = [8, 32], strides = [1, 1]} : vector<8x64xf32> to vector<8x32xf32>
    %139 = tpu.transpose %138, [1, 0] : vector<8x32xf32> -> vector<32x8xf32>
    %cst_68 = arith.constant dense<0.000000e+00> : vector<16x8xf32>
    %140 = tpu.matmul %137, %139, %cst_68 {dimension_numbers = #tpu.dot_dimension_numbers<[1], [0], [0], [1], [0, 0, 1, 1], [], []>} : vector<16x32xf32>, vector<32x8xf32>, vector<16x8xf32> -> vector<16x8xf32>
    %cst_69 = arith.constant 0.176776692 : f32
    %141 = vector.broadcast %cst_69 : f32 to vector<16x8xf32>
    %142 = arith.mulf %140, %141 : vector<16x8xf32>
    %143 = vector.broadcast %8 : vector<1x8xf32> to vector<16x8xf32>
    %144 = arith.addf %142, %143 : vector<16x8xf32>
    %cst_70 = arith.constant dense<0xFF800000> : vector<16xf32>
    %145 = vector.multi_reduction <maximumf>, %144, %cst_70 [1] : vector<16x8xf32> to vector<16xf32>
    %146 = vector.shape_cast %145 : vector<16xf32> to vector<16x1xf32>
    %147 = vector.broadcast %146 : vector<16x1xf32> to vector<16x8xf32>
    %148 = arith.subf %144, %147 : vector<16x8xf32>
    %149 = math.exp %148 : vector<16x8xf32>
    %cst_71 = arith.constant dense<0.000000e+00> : vector<16xf32>
    %150 = vector.multi_reduction <add>, %149, %cst_71 [1] : vector<16x8xf32> to vector<16xf32>
    %151 = vector.shape_cast %150 : vector<16xf32> to vector<16x1xf32>
    %152 = tpu.reciprocal %151 {approx = true} : vector<16x1xf32> -> vector<16x1xf32>
    %153 = vector.broadcast %152 : vector<16x1xf32> to vector<16x8xf32>
    %154 = arith.mulf %149, %153 : vector<16x8xf32>
    %155 = vector.extract_strided_slice %115 {offsets = [0, 32], sizes = [8, 32], strides = [1, 1]} : vector<8x64xf32> to vector<8x32xf32>
    %cst_72 = arith.constant dense<0.000000e+00> : vector<16x32xf32>
    %156 = tpu.matmul %154, %155, %cst_72 {dimension_numbers = #tpu.dot_dimension_numbers<[1], [0], [0], [1], [0, 0, 1, 1], [], []>} : vector<16x8xf32>, vector<8x32xf32>, vector<16x32xf32> -> vector<16x32xf32>
    %c0_73 = arith.constant 0 : index
    %c32_74 = arith.constant 32 : index
    %157 = vector.load %arg37[%c0_73, %c32_74] : memref<16x64xf32, #tpu.memory_space<vmem>>, vector<16x32xf32>
    tpu.vector_store %arg37[%c0_73, %c32_74], %156 {strides = array<i32>} : memref<16x64xf32, #tpu.memory_space<vmem>>, vector<16x32xf32>,
    %c0_75 = arith.constant 0 : index
    %c0_76 = arith.constant 0 : index
    %158 = vector.load %arg37[%c0_75, %c0_76] : memref<16x64xf32, #tpu.memory_space<vmem>>, vector<16x64xf32>
    %c0_77 = arith.constant 0 : index
    %c0_78 = arith.constant 0 : index
    %c0_79 = arith.constant 0 : index
    %159 = vector.load %arg25[%c0_77, %c0_78, %c0_79] : memref<1x64x64xf32, #tpu.memory_space<vmem>>, vector<1x64x64xf32>
    %160 = vector.shape_cast %159 : vector<1x64x64xf32> to vector<64x64xf32>
    %cst_80 = arith.constant dense<0.000000e+00> : vector<16x64xf32>
    %161 = tpu.matmul %158, %160, %cst_80 {dimension_numbers = #tpu.dot_dimension_numbers<[1], [0], [0], [1], [0, 0, 1, 1], [], []>} : vector<16x64xf32>, vector<64x64xf32>, vector<16x64xf32> -> vector<16x64xf32>
    %162 = arith.addf %83, %161 : vector<16x64xf32>
    %c0_81 = arith.constant 0 : index
    %c0_82 = arith.constant 0 : index
    %c0_83 = arith.constant 0 : index
    %163 = vector.load %arg26[%c0_81, %c0_82, %c0_83] : memref<1x1x64xf32, #tpu.memory_space<vmem>>, vector<1x1x64xf32>
    %164 = vector.shape_cast %163 : vector<1x1x64xf32> to vector<1x64xf32>
    %c0_84 = arith.constant 0 : index
    %c0_85 = arith.constant 0 : index
    %c0_86 = arith.constant 0 : index
    %165 = vector.load %arg27[%c0_84, %c0_85, %c0_86] : memref<1x1x64xf32, #tpu.memory_space<vmem>>, vector<1x1x64xf32>
    %166 = vector.shape_cast %165 : vector<1x1x64xf32> to vector<1x64xf32>
    %cst_87 = arith.constant dense<0.000000e+00> : vector<16xf32>
    %167 = vector.multi_reduction <add>, %162, %cst_87 [1] : vector<16x64xf32> to vector<16xf32>
    %168 = vector.shape_cast %167 : vector<16xf32> to vector<16x1xf32>
    %cst_88 = arith.constant 6.400000e+01 : f32
    %169 = vector.broadcast %cst_88 : f32 to vector<16x1xf32>
    %170 = arith.divf %168, %169 : vector<16x1xf32>
    %171 = vector.broadcast %170 : vector<16x1xf32> to vector<16x64xf32>
    %172 = arith.subf %162, %171 : vector<16x64xf32>
    %173 = arith.mulf %172, %172 : vector<16x64xf32>
    %cst_89 = arith.constant dense<0.000000e+00> : vector<16xf32>
    %174 = vector.multi_reduction <add>, %173, %cst_89 [1] : vector<16x64xf32> to vector<16xf32>
    %175 = vector.shape_cast %174 : vector<16xf32> to vector<16x1xf32>
    %cst_90 = arith.constant 6.400000e+01 : f32
    %176 = vector.broadcast %cst_90 : f32 to vector<16x1xf32>
    %177 = arith.divf %175, %176 : vector<16x1xf32>
    %cst_91 = arith.constant 9.99999974E-6 : f32
    %178 = vector.broadcast %cst_91 : f32 to vector<16x1xf32>
    %179 = arith.addf %177, %178 : vector<16x1xf32>
    %180 = math.rsqrt %179 : vector<16x1xf32>
    %181 = vector.broadcast %180 : vector<16x1xf32> to vector<16x64xf32>
    %182 = arith.mulf %172, %181 : vector<16x64xf32>
    %183 = vector.broadcast %164 : vector<1x64xf32> to vector<16x64xf32>
    %184 = arith.mulf %182, %183 : vector<16x64xf32>
    %185 = vector.broadcast %166 : vector<1x64xf32> to vector<16x64xf32>
    %186 = arith.addf %184, %185 : vector<16x64xf32>
    %c0_92 = arith.constant 0 : index
    %c0_93 = arith.constant 0 : index
    %c0_94 = arith.constant 0 : index
    %187 = vector.load %arg28[%c0_92, %c0_93, %c0_94] : memref<1x64x256xf32, #tpu.memory_space<vmem>>, vector<1x64x256xf32>
    %188 = vector.shape_cast %187 : vector<1x64x256xf32> to vector<64x256xf32>
    %cst_95 = arith.constant dense<0.000000e+00> : vector<16x256xf32>
    %189 = tpu.matmul %186, %188, %cst_95 {dimension_numbers = #tpu.dot_dimension_numbers<[1], [0], [0], [1], [0, 0, 1, 1], [], []>} : vector<16x64xf32>, vector<64x256xf32>, vector<16x256xf32> -> vector<16x256xf32>
    %c0_96 = arith.constant 0 : index
    %c0_97 = arith.constant 0 : index
    %c0_98 = arith.constant 0 : index
    %190 = vector.load %arg29[%c0_96, %c0_97, %c0_98] : memref<1x1x256xf32, #tpu.memory_space<vmem>>, vector<1x1x256xf32>
    %191 = vector.shape_cast %190 : vector<1x1x256xf32> to vector<1x256xf32>
    %192 = vector.broadcast %191 : vector<1x256xf32> to vector<16x256xf32>
    %193 = arith.addf %189, %192 : vector<16x256xf32>
    %194 = arith.mulf %193, %193 : vector<16x256xf32>
    %195 = arith.mulf %193, %194 : vector<16x256xf32>
    %cst_99 = arith.constant 4.471500e-02 : f32
    %196 = vector.broadcast %cst_99 : f32 to vector<16x256xf32>
    %197 = arith.mulf %196, %195 : vector<16x256xf32>
    %198 = arith.addf %193, %197 : vector<16x256xf32>
    %cst_100 = arith.constant 0.797884583 : f32
    %199 = vector.broadcast %cst_100 : f32 to vector<16x256xf32>
    %200 = arith.mulf %199, %198 : vector<16x256xf32>
    %201 = math.tanh %200 : vector<16x256xf32>
    %cst_101 = arith.constant 1.000000e+00 : f32
    %202 = vector.broadcast %cst_101 : f32 to vector<16x256xf32>
    %203 = arith.addf %202, %201 : vector<16x256xf32>
    %cst_102 = arith.constant 5.000000e-01 : f32
    %204 = vector.broadcast %cst_102 : f32 to vector<16x256xf32>
    %205 = arith.mulf %204, %203 : vector<16x256xf32>
    %206 = arith.mulf %193, %205 : vector<16x256xf32>
    %c0_103 = arith.constant 0 : index
    %c0_104 = arith.constant 0 : index
    %c0_105 = arith.constant 0 : index
    %207 = vector.load %arg30[%c0_103, %c0_104, %c0_105] : memref<1x256x64xf32, #tpu.memory_space<vmem>>, vector<1x256x64xf32>
    %208 = vector.shape_cast %207 : vector<1x256x64xf32> to vector<256x64xf32>
    %cst_106 = arith.constant dense<0.000000e+00> : vector<16x64xf32>
    %209 = tpu.matmul %206, %208, %cst_106 {dimension_numbers = #tpu.dot_dimension_numbers<[1], [0], [0], [1], [0, 0, 1, 1], [], []>} : vector<16x256xf32>, vector<256x64xf32>, vector<16x64xf32> -> vector<16x64xf32>
    %210 = arith.addf %162, %209 : vector<16x64xf32>
    %c0_107 = arith.constant 0 : index
    %c0_108 = arith.constant 0 : index
    %c0_109 = arith.constant 0 : index
    %211 = vector.load %arg31[%c0_107, %c0_108, %c0_109] : memref<1x1x64xf32, #tpu.memory_space<vmem>>, vector<1x1x64xf32>
    %212 = vector.shape_cast %211 : vector<1x1x64xf32> to vector<1x64xf32>
    %213 = vector.broadcast %212 : vector<1x64xf32> to vector<16x64xf32>
    %214 = arith.addf %210, %213 : vector<16x64xf32>
    %c0_110 = arith.constant 0 : index
    %c0_111 = arith.constant 0 : index
    %215 = vector.load %arg35[%c0_110, %c0_111] : memref<16x64xf32, #tpu.memory_space<vmem>>, vector<16x64xf32>
    tpu.vector_store %arg35[%c0_110, %c0_111], %214 {strides = array<i32>} : memref<16x64xf32, #tpu.memory_space<vmem>>, vector<16x64xf32>,
    %c0_112 = arith.constant 0 : index
    %c0_113 = arith.constant 0 : index
    %c0_114 = arith.constant 0 : index
    %216 = vector.load %arg32[%c0_112, %c0_113, %c0_114] : memref<1x64x64xf32, #tpu.memory_space<vmem>>, vector<1x64x64xf32>
    %217 = vector.shape_cast %216 : vector<1x64x64xf32> to vector<64x64xf32>
    %cst_115 = arith.constant dense<0.000000e+00> : vector<16x64xf32>
    %218 = tpu.matmul %214, %217, %cst_115 {dimension_numbers = #tpu.dot_dimension_numbers<[1], [0], [0], [1], [0, 0, 1, 1], [], []>} : vector<16x64xf32>, vector<64x64xf32>, vector<16x64xf32> -> vector<16x64xf32>
    %c0_116 = arith.constant 0 : index
    %c0_117 = arith.constant 0 : index
    %c0_118 = arith.constant 0 : index
    %219 = vector.load %arg33[%c0_116, %c0_117, %c0_118] : memref<1x1x64xf32, #tpu.memory_space<vmem>>, vector<1x1x64xf32>
    %220 = vector.shape_cast %219 : vector<1x1x64xf32> to vector<1x64xf32>
    %221 = vector.broadcast %220 : vector<1x64xf32> to vector<16x64xf32>
    %222 = arith.addf %218, %221 : vector<16x64xf32>
    %c0_119 = arith.constant 0 : index
    %c0_120 = arith.constant 0 : index
    %c0_121 = arith.constant 0 : index
    %c0_122 = arith.constant 0 : index
    %223 = vector.load %arg34[%c0_119, %c0_120, %c0_121, %c0_122] : memref<1x1x16x64xf32, #tpu.memory_space<vmem>>, vector<1x1x16x64xf32>
    %224 = vector.shape_cast %223 : vector<1x1x16x64xf32> to vector<16x64xf32>
    %225 = vector.shape_cast %222 : vector<16x64xf32> to vector<1x1x16x64xf32>
    tpu.vector_store %arg34[%c0_119, %c0_120, %c0_121, %c0_122], %225 {strides = array<i32>} : memref<1x1x16x64xf32, #tpu.memory_space<vmem>>, vector<1x1x16x64xf32>,
    return
  }
  func.func @transform_0(%arg0: i32, %arg1: i32) -> (i32, i32, i32) {
    %c0_i32 = arith.constant 0 : i32
    %c0_i32_0 = arith.constant 0 : i32
    %c0_i32_1 = arith.constant 0 : i32
    return %arg0, %c0_i32, %c0_i32_0 : i32, i32, i32
  }
  func.func @transform_1(%arg0: i32, %arg1: i32) -> (i32, i32, i32) {
    %c0_i32 = arith.constant 0 : i32
    %c0_i32_0 = arith.constant 0 : i32
    %c0_i32_1 = arith.constant 0 : i32
    return %arg0, %c0_i32, %c0_i32_0 : i32, i32, i32
  }
  func.func @transform_2(%arg0: i32, %arg1: i32) -> (i32, i32, i32) {
    %c0_i32 = arith.constant 0 : i32
    %c0_i32_0 = arith.constant 0 : i32
    %c0_i32_1 = arith.constant 0 : i32
    return %arg0, %c0_i32, %c0_i32_0 : i32, i32, i32
  }
  func.func @transform_3(%arg0: i32, %arg1: i32) -> (i32, i32, i32) {
    %c0_i32 = arith.constant 0 : i32
    %c0_i32_0 = arith.constant 0 : i32
    %c0_i32_1 = arith.constant 0 : i32
    return %arg0, %c0_i32, %c0_i32_0 : i32, i32, i32
  }
  func.func @transform_4(%arg0: i32, %arg1: i32) -> (i32, i32, i32) {
    %c0_i32 = arith.constant 0 : i32
    %c0_i32_0 = arith.constant 0 : i32
    %c0_i32_1 = arith.constant 0 : i32
    return %arg0, %c0_i32, %c0_i32_0 : i32, i32, i32
  }
  func.func @transform_5(%arg0: i32, %arg1: i32) -> (i32, i32) {
    %c0_i32 = arith.constant 0 : i32
    %c0_i32_0 = arith.constant 0 : i32
    %c0_i32_1 = arith.constant 0 : i32
    return %c0_i32, %c0_i32_0 : i32, i32
  }
  func.func @transform_6(%arg0: i32, %arg1: i32) -> (i32, i32) {
    %c0_i32 = arith.constant 0 : i32
    %c0_i32_0 = arith.constant 0 : i32
    %c0_i32_1 = arith.constant 0 : i32
    return %c0_i32, %c0_i32_0 : i32, i32
  }
  func.func @transform_7(%arg0: i32, %arg1: i32) -> (i32, i32) {
    %c0_i32 = arith.constant 0 : i32
    %c0_i32_0 = arith.constant 0 : i32
    %c0_i32_1 = arith.constant 0 : i32
    return %c0_i32, %c0_i32_0 : i32, i32
  }
  func.func @transform_8(%arg0: i32, %arg1: i32) -> (i32, i32) {
    %c0_i32 = arith.constant 0 : i32
    %c0_i32_0 = arith.constant 0 : i32
    %c0_i32_1 = arith.constant 0 : i32
    return %c0_i32, %c0_i32_0 : i32, i32
  }
  func.func @transform_9(%arg0: i32, %arg1: i32) -> (i32, i32) {
    %c0_i32 = arith.constant 0 : i32
    %c0_i32_0 = arith.constant 0 : i32
    %c0_i32_1 = arith.constant 0 : i32
    return %c0_i32, %c0_i32_0 : i32, i32
  }
  func.func @transform_10(%arg0: i32, %arg1: i32) -> (i32, i32) {
    %c0_i32 = arith.constant 0 : i32
    %c0_i32_0 = arith.constant 0 : i32
    %c0_i32_1 = arith.constant 0 : i32
    return %c0_i32, %c0_i32_0 : i32, i32
  }
  func.func @transform_11(%arg0: i32, %arg1: i32) -> (i32, i32) {
    %c0_i32 = arith.constant 0 : i32
    %c0_i32_0 = arith.constant 0 : i32
    %c0_i32_1 = arith.constant 0 : i32
    return %c0_i32, %c0_i32_0 : i32, i32
  }
  func.func @transform_12(%arg0: i32, %arg1: i32) -> (i32, i32) {
    %c0_i32 = arith.constant 0 : i32
    %c0_i32_0 = arith.constant 0 : i32
    %c0_i32_1 = arith.constant 0 : i32
    return %c0_i32, %c0_i32_0 : i32, i32
  }
  func.func @transform_13(%arg0: i32, %arg1: i32) -> (i32, i32) {
    %c0_i32 = arith.constant 0 : i32
    %c0_i32_0 = arith.constant 0 : i32
    %c0_i32_1 = arith.constant 0 : i32
    return %c0_i32, %c0_i32_0 : i32, i32
  }
  func.func @transform_14(%arg0: i32, %arg1: i32) -> (i32, i32) {
    %c0_i32 = arith.constant 0 : i32
    %c0_i32_0 = arith.constant 0 : i32
    %c0_i32_1 = arith.constant 0 : i32
    return %c0_i32, %c0_i32_0 : i32, i32
  }
  func.func @transform_15(%arg0: i32, %arg1: i32) -> (i32, i32, i32) {
    %c0_i32 = arith.constant 0 : i32
    %c0_i32_0 = arith.constant 0 : i32
    %c0_i32_1 = arith.constant 0 : i32
    return %arg1, %c0_i32, %c0_i32_0 : i32, i32, i32
  }
  func.func @transform_16(%arg0: i32, %arg1: i32) -> (i32, i32, i32) {
    %c0_i32 = arith.constant 0 : i32
    %c0_i32_0 = arith.constant 0 : i32
    %c0_i32_1 = arith.constant 0 : i32
    return %arg1, %c0_i32, %c0_i32_0 : i32, i32, i32
  }
  func.func @transform_17(%arg0: i32, %arg1: i32) -> (i32, i32, i32) {
    %c0_i32 = arith.constant 0 : i32
    %c0_i32_0 = arith.constant 0 : i32
    %c0_i32_1 = arith.constant 0 : i32
    return %arg1, %c0_i32, %c0_i32_0 : i32, i32, i32
  }
  func.func @transform_18(%arg0: i32, %arg1: i32) -> (i32, i32, i32) {
    %c0_i32 = arith.constant 0 : i32
    %c0_i32_0 = arith.constant 0 : i32
    %c0_i32_1 = arith.constant 0 : i32
    return %arg1, %c0_i32, %c0_i32_0 : i32, i32, i32
  }
  func.func @transform_19(%arg0: i32, %arg1: i32) -> (i32, i32, i32) {
    %c0_i32 = arith.constant 0 : i32
    %c0_i32_0 = arith.constant 0 : i32
    %c0_i32_1 = arith.constant 0 : i32
    return %arg1, %c0_i32, %c0_i32_0 : i32, i32, i32
  }
  func.func @transform_20(%arg0: i32, %arg1: i32) -> (i32, i32, i32) {
    %c0_i32 = arith.constant 0 : i32
    %c0_i32_0 = arith.constant 0 : i32
    %c0_i32_1 = arith.constant 0 : i32
    return %arg1, %c0_i32, %c0_i32_0 : i32, i32, i32
  }
  func.func @transform_21(%arg0: i32, %arg1: i32) -> (i32, i32, i32) {
    %c0_i32 = arith.constant 0 : i32
    %c0_i32_0 = arith.constant 0 : i32
    %c0_i32_1 = arith.constant 0 : i32
    return %arg1, %c0_i32, %c0_i32_0 : i32, i32, i32
  }
  func.func @transform_22(%arg0: i32, %arg1: i32) -> (i32, i32, i32) {
    %c0_i32 = arith.constant 0 : i32
    %c0_i32_0 = arith.constant 0 : i32
    %c0_i32_1 = arith.constant 0 : i32
    return %arg1, %c0_i32, %c0_i32_0 : i32, i32, i32
  }
  func.func @transform_23(%arg0: i32, %arg1: i32) -> (i32, i32, i32) {
    %c0_i32 = arith.constant 0 : i32
    %c0_i32_0 = arith.constant 0 : i32
    %c0_i32_1 = arith.constant 0 : i32
    return %arg1, %c0_i32, %c0_i32_0 : i32, i32, i32
  }
  func.func @transform_24(%arg0: i32, %arg1: i32) -> (i32, i32, i32) {
    %c0_i32 = arith.constant 0 : i32
    %c0_i32_0 = arith.constant 0 : i32
    %c0_i32_1 = arith.constant 0 : i32
    return %arg1, %c0_i32, %c0_i32_0 : i32, i32, i32
  }
  func.func @transform_25(%arg0: i32, %arg1: i32) -> (i32, i32, i32) {
    %c0_i32 = arith.constant 0 : i32
    %c0_i32_0 = arith.constant 0 : i32
    %c0_i32_1 = arith.constant 0 : i32
    return %arg1, %c0_i32, %c0_i32_0 : i32, i32, i32
  }
  func.func @transform_26(%arg0: i32, %arg1: i32) -> (i32, i32, i32) {
    %c0_i32 = arith.constant 0 : i32
    %c0_i32_0 = arith.constant 0 : i32
    %c0_i32_1 = arith.constant 0 : i32
    return %arg1, %c0_i32, %c0_i32_0 : i32, i32, i32
  }
  func.func @transform_27(%arg0: i32, %arg1: i32) -> (i32, i32, i32) {
    %c0_i32 = arith.constant 0 : i32
    %c0_i32_0 = arith.constant 0 : i32
    %c0_i32_1 = arith.constant 0 : i32
    return %arg1, %c0_i32, %c0_i32_0 : i32, i32, i32
  }
  func.func @transform_28(%arg0: i32, %arg1: i32) -> (i32, i32, i32) {
    %c0_i32 = arith.constant 0 : i32
    %c0_i32_0 = arith.constant 0 : i32
    %c0_i32_1 = arith.constant 0 : i32
    return %arg1, %c0_i32, %c0_i32_0 : i32, i32, i32
  }
  func.func @transform_29(%arg0: i32, %arg1: i32) -> (i32, i32, i32) {
    %c0_i32 = arith.constant 0 : i32
    %c0_i32_0 = arith.constant 0 : i32
    %c0_i32_1 = arith.constant 0 : i32
    return %arg1, %c0_i32, %c0_i32_0 : i32, i32, i32
  }
  func.func @transform_30(%arg0: i32, %arg1: i32) -> (i32, i32, i32) {
    %c0_i32 = arith.constant 0 : i32
    %c0_i32_0 = arith.constant 0 : i32
    %c0_i32_1 = arith.constant 0 : i32
    return %arg1, %c0_i32, %c0_i32_0 : i32, i32, i32
  }
  func.func @transform_31(%arg0: i32, %arg1: i32) -> (i32, i32, i32) {
    %c0_i32 = arith.constant 0 : i32
    %c0_i32_0 = arith.constant 0 : i32
    %c0_i32_1 = arith.constant 0 : i32
    return %arg1, %c0_i32, %c0_i32_0 : i32, i32, i32
  }
  func.func @transform_32(%arg0: i32, %arg1: i32) -> (i32, i32, i32, i32) {
    %c0_i32 = arith.constant 0 : i32
    %c0_i32_0 = arith.constant 0 : i32
    %c0_i32_1 = arith.constant 0 : i32
    return %arg1, %arg0, %c0_i32, %c0_i32_0 : i32, i32, i32, i32
  }
}

module attributes {stable_mosaic.version = 11 : i64} {
  func.func @_dit_fused_kernel(%arg0: i32, %arg1: i32, %arg2: memref<1x16x4xf32, #tpu.memory_space<vmem>>, %arg3: memref<1x1x64xf32, #tpu.memory_space<vmem>>, %arg4: memref<1x8x32xf32, #tpu.memory_space<vmem>>, %arg5: memref<1x1x8xf32, #tpu.memory_space<vmem>>, %arg6: memref<1x1x16x64xf32, #tpu.memory_space<vmem>>, %arg7: memref<64x64xf32, #tpu.memory_space<vmem>>, %arg8: memref<1x64xf32, #tpu.memory_space<vmem>>, %arg9: memref<64x64xf32, #tpu.memory_space<vmem>>, %arg10: memref<1x64xf32, #tpu.memory_space<vmem>>, %arg11: memref<4x64xf32, #tpu.memory_space<vmem>>, %arg12: memref<1x64xf32, #tpu.memory_space<vmem>>, %arg13: memref<32x64xf32, #tpu.memory_space<vmem>>, %arg14: memref<1x64xf32, #tpu.memory_space<vmem>>, %arg15: memref<64x4xf32, #tpu.memory_space<vmem>>, %arg16: memref<1x4xf32, #tpu.memory_space<vmem>>, %arg17: memref<1x1x64xf32, #tpu.memory_space<vmem>>, %arg18: memref<1x1x64xf32, #tpu.memory_space<vmem>>, %arg19: memref<1x64x192xf32, #tpu.memory_space<vmem>>, %arg20: memref<1x64x64xf32, #tpu.memory_space<vmem>>, %arg21: memref<1x1x64xf32, #tpu.memory_space<vmem>>, %arg22: memref<1x1x64xf32, #tpu.memory_space<vmem>>, %arg23: memref<1x64x64xf32, #tpu.memory_space<vmem>>, %arg24: memref<1x64x128xf32, #tpu.memory_space<vmem>>, %arg25: memref<1x64x64xf32, #tpu.memory_space<vmem>>, %arg26: memref<1x1x64xf32, #tpu.memory_space<vmem>>, %arg27: memref<1x1x64xf32, #tpu.memory_space<vmem>>, %arg28: memref<1x64x256xf32, #tpu.memory_space<vmem>>, %arg29: memref<1x1x256xf32, #tpu.memory_space<vmem>>, %arg30: memref<1x256x64xf32, #tpu.memory_space<vmem>>, %arg31: memref<1x1x64xf32, #tpu.memory_space<vmem>>, %arg32: memref<1x16x4xf32, #tpu.memory_space<vmem>>, %arg33: memref<16x64xf32, #tpu.memory_space<vmem>>, %arg34: memref<8x64xf32, #tpu.memory_space<vmem>>, %arg35: memref<16x64xf32, #tpu.memory_space<vmem>>) attributes {dimension_semantics = [#tpu.dimension_semantics<parallel>, #tpu.dimension_semantics<arbitrary>], iteration_bounds = array<i64: 2, 4>, scalar_prefetch = 0 : i64, scratch_operands = 3 : i64, tpu.core_type = #tpu.core_type<tc>, window_params = [{transform_indices = @transform_0, window_bounds = array<i64: 1, 16, 4>}, {transform_indices = @transform_1, window_bounds = array<i64: 1, 1, 64>}, {transform_indices = @transform_2, window_bounds = array<i64: 1, 8, 32>}, {transform_indices = @transform_3, window_bounds = array<i64: 1, 1, 8>}, {transform_indices = @transform_4, window_bounds = array<i64: 1, 1, 16, 64>}, {pipeline_mode = #tpu.pipeline_mode<synchronous>, transform_indices = @transform_5, window_bounds = array<i64: 64, 64>}, {pipeline_mode = #tpu.pipeline_mode<synchronous>, transform_indices = @transform_6, window_bounds = array<i64: 1, 64>}, {pipeline_mode = #tpu.pipeline_mode<synchronous>, transform_indices = @transform_7, window_bounds = array<i64: 64, 64>}, {pipeline_mode = #tpu.pipeline_mode<synchronous>, transform_indices = @transform_8, window_bounds = array<i64: 1, 64>}, {pipeline_mode = #tpu.pipeline_mode<synchronous>, transform_indices = @transform_9, window_bounds = array<i64: 4, 64>}, {pipeline_mode = #tpu.pipeline_mode<synchronous>, transform_indices = @transform_10, window_bounds = array<i64: 1, 64>}, {pipeline_mode = #tpu.pipeline_mode<synchronous>, transform_indices = @transform_11, window_bounds = array<i64: 32, 64>}, {pipeline_mode = #tpu.pipeline_mode<synchronous>, transform_indices = @transform_12, window_bounds = array<i64: 1, 64>}, {pipeline_mode = #tpu.pipeline_mode<synchronous>, transform_indices = @transform_13, window_bounds = array<i64: 64, 4>}, {pipeline_mode = #tpu.pipeline_mode<synchronous>, transform_indices = @transform_14, window_bounds = array<i64: 1, 4>}, {transform_indices = @transform_15, window_bounds = array<i64: 1, 1, 64>}, {transform_indices = @transform_16, window_bounds = array<i64: 1, 1, 64>}, {transform_indices = @transform_17, window_bounds = array<i64: 1, 64, 192>}, {transform_indices = @transform_18, window_bounds = array<i64: 1, 64, 64>}, {transform_indices = @transform_19, window_bounds = array<i64: 1, 1, 64>}, {transform_indices = @transform_20, window_bounds = array<i64: 1, 1, 64>}, {transform_indices = @transform_21, window_bounds = array<i64: 1, 64, 64>}, {transform_indices = @transform_22, window_bounds = array<i64: 1, 64, 128>}, {transform_indices = @transform_23, window_bounds = array<i64: 1, 64, 64>}, {transform_indices = @transform_24, window_bounds = array<i64: 1, 1, 64>}, {transform_indices = @transform_25, window_bounds = array<i64: 1, 1, 64>}, {transform_indices = @transform_26, window_bounds = array<i64: 1, 64, 256>}, {transform_indices = @transform_27, window_bounds = array<i64: 1, 1, 256>}, {transform_indices = @transform_28, window_bounds = array<i64: 1, 256, 64>}, {transform_indices = @transform_29, window_bounds = array<i64: 1, 1, 64>}, {transform_indices = @transform_30, window_bounds = array<i64: 1, 16, 4>}]} {
    %c0_i32 = arith.constant 0 : i32
    %0 = arith.cmpi eq, %arg1, %c0_i32 : i32
    %1 = arith.extui %0 : i1 to i32
    %c0_i32_0 = arith.constant 0 : i32
    %2 = arith.cmpi ne, %1, %c0_i32_0 : i32
    scf.if %2 {
      %c0_117 = arith.constant 0 : index
      %c0_118 = arith.constant 0 : index
      %c0_119 = arith.constant 0 : index
      %222 = vector.load %arg3[%c0_117, %c0_118, %c0_119] : memref<1x1x64xf32, #tpu.memory_space<vmem>>, vector<1x1x64xf32>
      %223 = vector.shape_cast %222 : vector<1x1x64xf32> to vector<1x64xf32>
      %c0_120 = arith.constant 0 : index
      %c0_121 = arith.constant 0 : index
      %224 = vector.load %arg7[%c0_120, %c0_121] : memref<64x64xf32, #tpu.memory_space<vmem>>, vector<64x64xf32>
      %cst_122 = arith.constant dense<0.000000e+00> : vector<1x64xf32>
      %225 = tpu.matmul %223, %224, %cst_122 {dimension_numbers = #tpu.dot_dimension_numbers<[1], [0], [0], [1], [0, 0, 1, 1], [], []>} : vector<1x64xf32>, vector<64x64xf32>, vector<1x64xf32> -> vector<1x64xf32>
      %c0_123 = arith.constant 0 : index
      %c0_124 = arith.constant 0 : index
      %226 = vector.load %arg8[%c0_123, %c0_124] : memref<1x64xf32, #tpu.memory_space<vmem>>, vector<1x64xf32>
      %227 = arith.addf %225, %226 : vector<1x64xf32>
      %cst_125 = arith.constant 0.000000e+00 : f32
      %228 = vector.broadcast %cst_125 : f32 to vector<1x64xf32>
      %229 = arith.subf %228, %227 : vector<1x64xf32>
      %230 = math.exp %229 : vector<1x64xf32>
      %cst_126 = arith.constant 1.000000e+00 : f32
      %231 = vector.broadcast %cst_126 : f32 to vector<1x64xf32>
      %232 = arith.addf %231, %230 : vector<1x64xf32>
      %233 = tpu.reciprocal %232 {approx = true} : vector<1x64xf32> -> vector<1x64xf32>
      %234 = arith.mulf %227, %233 : vector<1x64xf32>
      %c0_127 = arith.constant 0 : index
      %c0_128 = arith.constant 0 : index
      %235 = vector.load %arg9[%c0_127, %c0_128] : memref<64x64xf32, #tpu.memory_space<vmem>>, vector<64x64xf32>
      %cst_129 = arith.constant dense<0.000000e+00> : vector<1x64xf32>
      %236 = tpu.matmul %234, %235, %cst_129 {dimension_numbers = #tpu.dot_dimension_numbers<[1], [0], [0], [1], [0, 0, 1, 1], [], []>} : vector<1x64xf32>, vector<64x64xf32>, vector<1x64xf32> -> vector<1x64xf32>
      %c0_130 = arith.constant 0 : index
      %c0_131 = arith.constant 0 : index
      %237 = vector.load %arg10[%c0_130, %c0_131] : memref<1x64xf32, #tpu.memory_space<vmem>>, vector<1x64xf32>
      %238 = arith.addf %236, %237 : vector<1x64xf32>
      %c0_132 = arith.constant 0 : index
      %c0_133 = arith.constant 0 : index
      %c0_134 = arith.constant 0 : index
      %239 = vector.load %arg2[%c0_132, %c0_133, %c0_134] : memref<1x16x4xf32, #tpu.memory_space<vmem>>, vector<1x16x4xf32>
      %240 = vector.shape_cast %239 : vector<1x16x4xf32> to vector<16x4xf32>
      %c0_135 = arith.constant 0 : index
      %c0_136 = arith.constant 0 : index
      %241 = vector.load %arg11[%c0_135, %c0_136] : memref<4x64xf32, #tpu.memory_space<vmem>>, vector<4x64xf32>
      %cst_137 = arith.constant dense<0.000000e+00> : vector<16x64xf32>
      %242 = tpu.matmul %240, %241, %cst_137 {dimension_numbers = #tpu.dot_dimension_numbers<[1], [0], [0], [1], [0, 0, 1, 1], [], []>} : vector<16x4xf32>, vector<4x64xf32>, vector<16x64xf32> -> vector<16x64xf32>
      %c0_138 = arith.constant 0 : index
      %c0_139 = arith.constant 0 : index
      %243 = vector.load %arg12[%c0_138, %c0_139] : memref<1x64xf32, #tpu.memory_space<vmem>>, vector<1x64xf32>
      %244 = vector.broadcast %243 : vector<1x64xf32> to vector<16x64xf32>
      %245 = arith.addf %242, %244 : vector<16x64xf32>
      %246 = vector.broadcast %238 : vector<1x64xf32> to vector<16x64xf32>
      %247 = arith.addf %245, %246 : vector<16x64xf32>
      %c0_140 = arith.constant 0 : index
      %c0_141 = arith.constant 0 : index
      %248 = vector.load %arg33[%c0_140, %c0_141] : memref<16x64xf32, #tpu.memory_space<vmem>>, vector<16x64xf32>
      tpu.vector_store %arg33[%c0_140, %c0_141], %247 {strides = array<i32>} : memref<16x64xf32, #tpu.memory_space<vmem>>, vector<16x64xf32>,
      %c0_142 = arith.constant 0 : index
      %c0_143 = arith.constant 0 : index
      %c0_144 = arith.constant 0 : index
      %249 = vector.load %arg4[%c0_142, %c0_143, %c0_144] : memref<1x8x32xf32, #tpu.memory_space<vmem>>, vector<1x8x32xf32>
      %250 = vector.shape_cast %249 : vector<1x8x32xf32> to vector<8x32xf32>
      %c0_145 = arith.constant 0 : index
      %c0_146 = arith.constant 0 : index
      %251 = vector.load %arg13[%c0_145, %c0_146] : memref<32x64xf32, #tpu.memory_space<vmem>>, vector<32x64xf32>
      %cst_147 = arith.constant dense<0.000000e+00> : vector<8x64xf32>
      %252 = tpu.matmul %250, %251, %cst_147 {dimension_numbers = #tpu.dot_dimension_numbers<[1], [0], [0], [1], [0, 0, 1, 1], [], []>} : vector<8x32xf32>, vector<32x64xf32>, vector<8x64xf32> -> vector<8x64xf32>
      %c0_148 = arith.constant 0 : index
      %c0_149 = arith.constant 0 : index
      %253 = vector.load %arg14[%c0_148, %c0_149] : memref<1x64xf32, #tpu.memory_space<vmem>>, vector<1x64xf32>
      %254 = vector.broadcast %253 : vector<1x64xf32> to vector<8x64xf32>
      %255 = arith.addf %252, %254 : vector<8x64xf32>
      %c0_150 = arith.constant 0 : index
      %c0_151 = arith.constant 0 : index
      %256 = vector.load %arg34[%c0_150, %c0_151] : memref<8x64xf32, #tpu.memory_space<vmem>>, vector<8x64xf32>
      tpu.vector_store %arg34[%c0_150, %c0_151], %255 {strides = array<i32>} : memref<8x64xf32, #tpu.memory_space<vmem>>, vector<8x64xf32>,
    } else {
    }
    %c0 = arith.constant 0 : index
    %c0_1 = arith.constant 0 : index
    %c0_2 = arith.constant 0 : index
    %3 = vector.load %arg5[%c0, %c0_1, %c0_2] : memref<1x1x8xf32, #tpu.memory_space<vmem>>, vector<1x1x8xf32>
    %4 = vector.shape_cast %3 : vector<1x1x8xf32> to vector<1x8xf32>
    %cst = arith.constant 1.000000e+00 : f32
    %5 = vector.broadcast %cst : f32 to vector<1x8xf32>
    %6 = arith.subf %4, %5 : vector<1x8xf32>
    %cst_3 = arith.constant 1.000000e+09 : f32
    %7 = vector.broadcast %cst_3 : f32 to vector<1x8xf32>
    %8 = arith.mulf %6, %7 : vector<1x8xf32>
    %c0_4 = arith.constant 0 : index
    %c0_5 = arith.constant 0 : index
    %9 = vector.load %arg33[%c0_4, %c0_5] : memref<16x64xf32, #tpu.memory_space<vmem>>, vector<16x64xf32>
    %c0_6 = arith.constant 0 : index
    %c0_7 = arith.constant 0 : index
    %c0_8 = arith.constant 0 : index
    %c0_9 = arith.constant 0 : index
    %10 = vector.load %arg6[%c0_6, %c0_7, %c0_8, %c0_9] : memref<1x1x16x64xf32, #tpu.memory_space<vmem>>, vector<1x1x16x64xf32>
    %11 = vector.shape_cast %10 : vector<1x1x16x64xf32> to vector<16x64xf32>
    %12 = arith.addf %9, %11 : vector<16x64xf32>
    %c0_10 = arith.constant 0 : index
    %c0_11 = arith.constant 0 : index
    %13 = vector.load %arg34[%c0_10, %c0_11] : memref<8x64xf32, #tpu.memory_space<vmem>>, vector<8x64xf32>
    %c0_12 = arith.constant 0 : index
    %c0_13 = arith.constant 0 : index
    %c0_14 = arith.constant 0 : index
    %14 = vector.load %arg17[%c0_12, %c0_13, %c0_14] : memref<1x1x64xf32, #tpu.memory_space<vmem>>, vector<1x1x64xf32>
    %15 = vector.shape_cast %14 : vector<1x1x64xf32> to vector<1x64xf32>
    %c0_15 = arith.constant 0 : index
    %c0_16 = arith.constant 0 : index
    %c0_17 = arith.constant 0 : index
    %16 = vector.load %arg18[%c0_15, %c0_16, %c0_17] : memref<1x1x64xf32, #tpu.memory_space<vmem>>, vector<1x1x64xf32>
    %17 = vector.shape_cast %16 : vector<1x1x64xf32> to vector<1x64xf32>
    %cst_18 = arith.constant dense<0.000000e+00> : vector<16xf32>
    %18 = vector.multi_reduction <add>, %12, %cst_18 [1] : vector<16x64xf32> to vector<16xf32>
    %19 = vector.shape_cast %18 : vector<16xf32> to vector<16x1xf32>
    %cst_19 = arith.constant 6.400000e+01 : f32
    %20 = vector.broadcast %cst_19 : f32 to vector<16x1xf32>
    %21 = arith.divf %19, %20 : vector<16x1xf32>
    %22 = vector.broadcast %21 : vector<16x1xf32> to vector<16x64xf32>
    %23 = arith.subf %12, %22 : vector<16x64xf32>
    %24 = arith.mulf %23, %23 : vector<16x64xf32>
    %cst_20 = arith.constant dense<0.000000e+00> : vector<16xf32>
    %25 = vector.multi_reduction <add>, %24, %cst_20 [1] : vector<16x64xf32> to vector<16xf32>
    %26 = vector.shape_cast %25 : vector<16xf32> to vector<16x1xf32>
    %cst_21 = arith.constant 6.400000e+01 : f32
    %27 = vector.broadcast %cst_21 : f32 to vector<16x1xf32>
    %28 = arith.divf %26, %27 : vector<16x1xf32>
    %cst_22 = arith.constant 9.99999974E-6 : f32
    %29 = vector.broadcast %cst_22 : f32 to vector<16x1xf32>
    %30 = arith.addf %28, %29 : vector<16x1xf32>
    %31 = math.rsqrt %30 : vector<16x1xf32>
    %32 = vector.broadcast %31 : vector<16x1xf32> to vector<16x64xf32>
    %33 = arith.mulf %23, %32 : vector<16x64xf32>
    %34 = vector.broadcast %15 : vector<1x64xf32> to vector<16x64xf32>
    %35 = arith.mulf %33, %34 : vector<16x64xf32>
    %36 = vector.broadcast %17 : vector<1x64xf32> to vector<16x64xf32>
    %37 = arith.addf %35, %36 : vector<16x64xf32>
    %c0_23 = arith.constant 0 : index
    %c0_24 = arith.constant 0 : index
    %c0_25 = arith.constant 0 : index
    %38 = vector.load %arg19[%c0_23, %c0_24, %c0_25] : memref<1x64x192xf32, #tpu.memory_space<vmem>>, vector<1x64x192xf32>
    %39 = vector.shape_cast %38 : vector<1x64x192xf32> to vector<64x192xf32>
    %cst_26 = arith.constant dense<0.000000e+00> : vector<16x192xf32>
    %40 = tpu.matmul %37, %39, %cst_26 {dimension_numbers = #tpu.dot_dimension_numbers<[1], [0], [0], [1], [0, 0, 1, 1], [], []>} : vector<16x64xf32>, vector<64x192xf32>, vector<16x192xf32> -> vector<16x192xf32>
    %41 = vector.extract_strided_slice %40 {offsets = [0, 0], sizes = [16, 64], strides = [1, 1]} : vector<16x192xf32> to vector<16x64xf32>
    %42 = vector.extract_strided_slice %40 {offsets = [0, 64], sizes = [16, 64], strides = [1, 1]} : vector<16x192xf32> to vector<16x64xf32>
    %43 = vector.extract_strided_slice %40 {offsets = [0, 128], sizes = [16, 64], strides = [1, 1]} : vector<16x192xf32> to vector<16x64xf32>
    %44 = vector.extract_strided_slice %41 {offsets = [0, 0], sizes = [16, 32], strides = [1, 1]} : vector<16x64xf32> to vector<16x32xf32>
    %45 = vector.extract_strided_slice %42 {offsets = [0, 0], sizes = [16, 32], strides = [1, 1]} : vector<16x64xf32> to vector<16x32xf32>
    %46 = tpu.transpose %45, [1, 0] : vector<16x32xf32> -> vector<32x16xf32>
    %cst_27 = arith.constant dense<0.000000e+00> : vector<16x16xf32>
    %47 = tpu.matmul %44, %46, %cst_27 {dimension_numbers = #tpu.dot_dimension_numbers<[1], [0], [0], [1], [0, 0, 1, 1], [], []>} : vector<16x32xf32>, vector<32x16xf32>, vector<16x16xf32> -> vector<16x16xf32>
    %cst_28 = arith.constant 0.176776692 : f32
    %48 = vector.broadcast %cst_28 : f32 to vector<16x16xf32>
    %49 = arith.mulf %47, %48 : vector<16x16xf32>
    %cst_29 = arith.constant dense<0xFF800000> : vector<16xf32>
    %50 = vector.multi_reduction <maximumf>, %49, %cst_29 [1] : vector<16x16xf32> to vector<16xf32>
    %51 = vector.shape_cast %50 : vector<16xf32> to vector<16x1xf32>
    %52 = vector.broadcast %51 : vector<16x1xf32> to vector<16x16xf32>
    %53 = arith.subf %49, %52 : vector<16x16xf32>
    %54 = math.exp %53 : vector<16x16xf32>
    %cst_30 = arith.constant dense<0.000000e+00> : vector<16xf32>
    %55 = vector.multi_reduction <add>, %54, %cst_30 [1] : vector<16x16xf32> to vector<16xf32>
    %56 = vector.shape_cast %55 : vector<16xf32> to vector<16x1xf32>
    %57 = tpu.reciprocal %56 {approx = true} : vector<16x1xf32> -> vector<16x1xf32>
    %58 = vector.broadcast %57 : vector<16x1xf32> to vector<16x16xf32>
    %59 = arith.mulf %54, %58 : vector<16x16xf32>
    %60 = vector.extract_strided_slice %43 {offsets = [0, 0], sizes = [16, 32], strides = [1, 1]} : vector<16x64xf32> to vector<16x32xf32>
    %cst_31 = arith.constant dense<0.000000e+00> : vector<16x32xf32>
    %61 = tpu.matmul %59, %60, %cst_31 {dimension_numbers = #tpu.dot_dimension_numbers<[1], [0], [0], [1], [0, 0, 1, 1], [], []>} : vector<16x16xf32>, vector<16x32xf32>, vector<16x32xf32> -> vector<16x32xf32>
    %c0_32 = arith.constant 0 : index
    %c0_33 = arith.constant 0 : index
    %62 = vector.load %arg35[%c0_32, %c0_33] : memref<16x64xf32, #tpu.memory_space<vmem>>, vector<16x32xf32>
    tpu.vector_store %arg35[%c0_32, %c0_33], %61 {strides = array<i32>} : memref<16x64xf32, #tpu.memory_space<vmem>>, vector<16x32xf32>,
    %63 = vector.extract_strided_slice %41 {offsets = [0, 32], sizes = [16, 32], strides = [1, 1]} : vector<16x64xf32> to vector<16x32xf32>
    %64 = vector.extract_strided_slice %42 {offsets = [0, 32], sizes = [16, 32], strides = [1, 1]} : vector<16x64xf32> to vector<16x32xf32>
    %65 = tpu.transpose %64, [1, 0] : vector<16x32xf32> -> vector<32x16xf32>
    %cst_34 = arith.constant dense<0.000000e+00> : vector<16x16xf32>
    %66 = tpu.matmul %63, %65, %cst_34 {dimension_numbers = #tpu.dot_dimension_numbers<[1], [0], [0], [1], [0, 0, 1, 1], [], []>} : vector<16x32xf32>, vector<32x16xf32>, vector<16x16xf32> -> vector<16x16xf32>
    %cst_35 = arith.constant 0.176776692 : f32
    %67 = vector.broadcast %cst_35 : f32 to vector<16x16xf32>
    %68 = arith.mulf %66, %67 : vector<16x16xf32>
    %cst_36 = arith.constant dense<0xFF800000> : vector<16xf32>
    %69 = vector.multi_reduction <maximumf>, %68, %cst_36 [1] : vector<16x16xf32> to vector<16xf32>
    %70 = vector.shape_cast %69 : vector<16xf32> to vector<16x1xf32>
    %71 = vector.broadcast %70 : vector<16x1xf32> to vector<16x16xf32>
    %72 = arith.subf %68, %71 : vector<16x16xf32>
    %73 = math.exp %72 : vector<16x16xf32>
    %cst_37 = arith.constant dense<0.000000e+00> : vector<16xf32>
    %74 = vector.multi_reduction <add>, %73, %cst_37 [1] : vector<16x16xf32> to vector<16xf32>
    %75 = vector.shape_cast %74 : vector<16xf32> to vector<16x1xf32>
    %76 = tpu.reciprocal %75 {approx = true} : vector<16x1xf32> -> vector<16x1xf32>
    %77 = vector.broadcast %76 : vector<16x1xf32> to vector<16x16xf32>
    %78 = arith.mulf %73, %77 : vector<16x16xf32>
    %79 = vector.extract_strided_slice %43 {offsets = [0, 32], sizes = [16, 32], strides = [1, 1]} : vector<16x64xf32> to vector<16x32xf32>
    %cst_38 = arith.constant dense<0.000000e+00> : vector<16x32xf32>
    %80 = tpu.matmul %78, %79, %cst_38 {dimension_numbers = #tpu.dot_dimension_numbers<[1], [0], [0], [1], [0, 0, 1, 1], [], []>} : vector<16x16xf32>, vector<16x32xf32>, vector<16x32xf32> -> vector<16x32xf32>
    %c0_39 = arith.constant 0 : index
    %c32 = arith.constant 32 : index
    %81 = vector.load %arg35[%c0_39, %c32] : memref<16x64xf32, #tpu.memory_space<vmem>>, vector<16x32xf32>
    tpu.vector_store %arg35[%c0_39, %c32], %80 {strides = array<i32>} : memref<16x64xf32, #tpu.memory_space<vmem>>, vector<16x32xf32>,
    %c0_40 = arith.constant 0 : index
    %c0_41 = arith.constant 0 : index
    %82 = vector.load %arg35[%c0_40, %c0_41] : memref<16x64xf32, #tpu.memory_space<vmem>>, vector<16x64xf32>
    %c0_42 = arith.constant 0 : index
    %c0_43 = arith.constant 0 : index
    %c0_44 = arith.constant 0 : index
    %83 = vector.load %arg20[%c0_42, %c0_43, %c0_44] : memref<1x64x64xf32, #tpu.memory_space<vmem>>, vector<1x64x64xf32>
    %84 = vector.shape_cast %83 : vector<1x64x64xf32> to vector<64x64xf32>
    %cst_45 = arith.constant dense<0.000000e+00> : vector<16x64xf32>
    %85 = tpu.matmul %82, %84, %cst_45 {dimension_numbers = #tpu.dot_dimension_numbers<[1], [0], [0], [1], [0, 0, 1, 1], [], []>} : vector<16x64xf32>, vector<64x64xf32>, vector<16x64xf32> -> vector<16x64xf32>
    %86 = arith.addf %12, %85 : vector<16x64xf32>
    %c0_46 = arith.constant 0 : index
    %c0_47 = arith.constant 0 : index
    %c0_48 = arith.constant 0 : index
    %87 = vector.load %arg21[%c0_46, %c0_47, %c0_48] : memref<1x1x64xf32, #tpu.memory_space<vmem>>, vector<1x1x64xf32>
    %88 = vector.shape_cast %87 : vector<1x1x64xf32> to vector<1x64xf32>
    %c0_49 = arith.constant 0 : index
    %c0_50 = arith.constant 0 : index
    %c0_51 = arith.constant 0 : index
    %89 = vector.load %arg22[%c0_49, %c0_50, %c0_51] : memref<1x1x64xf32, #tpu.memory_space<vmem>>, vector<1x1x64xf32>
    %90 = vector.shape_cast %89 : vector<1x1x64xf32> to vector<1x64xf32>
    %cst_52 = arith.constant dense<0.000000e+00> : vector<16xf32>
    %91 = vector.multi_reduction <add>, %86, %cst_52 [1] : vector<16x64xf32> to vector<16xf32>
    %92 = vector.shape_cast %91 : vector<16xf32> to vector<16x1xf32>
    %cst_53 = arith.constant 6.400000e+01 : f32
    %93 = vector.broadcast %cst_53 : f32 to vector<16x1xf32>
    %94 = arith.divf %92, %93 : vector<16x1xf32>
    %95 = vector.broadcast %94 : vector<16x1xf32> to vector<16x64xf32>
    %96 = arith.subf %86, %95 : vector<16x64xf32>
    %97 = arith.mulf %96, %96 : vector<16x64xf32>
    %cst_54 = arith.constant dense<0.000000e+00> : vector<16xf32>
    %98 = vector.multi_reduction <add>, %97, %cst_54 [1] : vector<16x64xf32> to vector<16xf32>
    %99 = vector.shape_cast %98 : vector<16xf32> to vector<16x1xf32>
    %cst_55 = arith.constant 6.400000e+01 : f32
    %100 = vector.broadcast %cst_55 : f32 to vector<16x1xf32>
    %101 = arith.divf %99, %100 : vector<16x1xf32>
    %cst_56 = arith.constant 9.99999974E-6 : f32
    %102 = vector.broadcast %cst_56 : f32 to vector<16x1xf32>
    %103 = arith.addf %101, %102 : vector<16x1xf32>
    %104 = math.rsqrt %103 : vector<16x1xf32>
    %105 = vector.broadcast %104 : vector<16x1xf32> to vector<16x64xf32>
    %106 = arith.mulf %96, %105 : vector<16x64xf32>
    %107 = vector.broadcast %88 : vector<1x64xf32> to vector<16x64xf32>
    %108 = arith.mulf %106, %107 : vector<16x64xf32>
    %109 = vector.broadcast %90 : vector<1x64xf32> to vector<16x64xf32>
    %110 = arith.addf %108, %109 : vector<16x64xf32>
    %c0_57 = arith.constant 0 : index
    %c0_58 = arith.constant 0 : index
    %c0_59 = arith.constant 0 : index
    %111 = vector.load %arg23[%c0_57, %c0_58, %c0_59] : memref<1x64x64xf32, #tpu.memory_space<vmem>>, vector<1x64x64xf32>
    %112 = vector.shape_cast %111 : vector<1x64x64xf32> to vector<64x64xf32>
    %cst_60 = arith.constant dense<0.000000e+00> : vector<16x64xf32>
    %113 = tpu.matmul %110, %112, %cst_60 {dimension_numbers = #tpu.dot_dimension_numbers<[1], [0], [0], [1], [0, 0, 1, 1], [], []>} : vector<16x64xf32>, vector<64x64xf32>, vector<16x64xf32> -> vector<16x64xf32>
    %c0_61 = arith.constant 0 : index
    %c0_62 = arith.constant 0 : index
    %c0_63 = arith.constant 0 : index
    %114 = vector.load %arg24[%c0_61, %c0_62, %c0_63] : memref<1x64x128xf32, #tpu.memory_space<vmem>>, vector<1x64x128xf32>
    %115 = vector.shape_cast %114 : vector<1x64x128xf32> to vector<64x128xf32>
    %cst_64 = arith.constant dense<0.000000e+00> : vector<8x128xf32>
    %116 = tpu.matmul %13, %115, %cst_64 {dimension_numbers = #tpu.dot_dimension_numbers<[1], [0], [0], [1], [0, 0, 1, 1], [], []>} : vector<8x64xf32>, vector<64x128xf32>, vector<8x128xf32> -> vector<8x128xf32>
    %117 = vector.extract_strided_slice %116 {offsets = [0, 0], sizes = [8, 64], strides = [1, 1]} : vector<8x128xf32> to vector<8x64xf32>
    %118 = vector.extract_strided_slice %116 {offsets = [0, 64], sizes = [8, 64], strides = [1, 1]} : vector<8x128xf32> to vector<8x64xf32>
    %119 = vector.extract_strided_slice %113 {offsets = [0, 0], sizes = [16, 32], strides = [1, 1]} : vector<16x64xf32> to vector<16x32xf32>
    %120 = vector.extract_strided_slice %117 {offsets = [0, 0], sizes = [8, 32], strides = [1, 1]} : vector<8x64xf32> to vector<8x32xf32>
    %121 = tpu.transpose %120, [1, 0] : vector<8x32xf32> -> vector<32x8xf32>
    %cst_65 = arith.constant dense<0.000000e+00> : vector<16x8xf32>
    %122 = tpu.matmul %119, %121, %cst_65 {dimension_numbers = #tpu.dot_dimension_numbers<[1], [0], [0], [1], [0, 0, 1, 1], [], []>} : vector<16x32xf32>, vector<32x8xf32>, vector<16x8xf32> -> vector<16x8xf32>
    %cst_66 = arith.constant 0.176776692 : f32
    %123 = vector.broadcast %cst_66 : f32 to vector<16x8xf32>
    %124 = arith.mulf %122, %123 : vector<16x8xf32>
    %125 = vector.broadcast %8 : vector<1x8xf32> to vector<16x8xf32>
    %126 = arith.addf %124, %125 : vector<16x8xf32>
    %cst_67 = arith.constant dense<0xFF800000> : vector<16xf32>
    %127 = vector.multi_reduction <maximumf>, %126, %cst_67 [1] : vector<16x8xf32> to vector<16xf32>
    %128 = vector.shape_cast %127 : vector<16xf32> to vector<16x1xf32>
    %129 = vector.broadcast %128 : vector<16x1xf32> to vector<16x8xf32>
    %130 = arith.subf %126, %129 : vector<16x8xf32>
    %131 = math.exp %130 : vector<16x8xf32>
    %cst_68 = arith.constant dense<0.000000e+00> : vector<16xf32>
    %132 = vector.multi_reduction <add>, %131, %cst_68 [1] : vector<16x8xf32> to vector<16xf32>
    %133 = vector.shape_cast %132 : vector<16xf32> to vector<16x1xf32>
    %134 = tpu.reciprocal %133 {approx = true} : vector<16x1xf32> -> vector<16x1xf32>
    %135 = vector.broadcast %134 : vector<16x1xf32> to vector<16x8xf32>
    %136 = arith.mulf %131, %135 : vector<16x8xf32>
    %137 = vector.extract_strided_slice %118 {offsets = [0, 0], sizes = [8, 32], strides = [1, 1]} : vector<8x64xf32> to vector<8x32xf32>
    %cst_69 = arith.constant dense<0.000000e+00> : vector<16x32xf32>
    %138 = tpu.matmul %136, %137, %cst_69 {dimension_numbers = #tpu.dot_dimension_numbers<[1], [0], [0], [1], [0, 0, 1, 1], [], []>} : vector<16x8xf32>, vector<8x32xf32>, vector<16x32xf32> -> vector<16x32xf32>
    %c0_70 = arith.constant 0 : index
    %c0_71 = arith.constant 0 : index
    %139 = vector.load %arg35[%c0_70, %c0_71] : memref<16x64xf32, #tpu.memory_space<vmem>>, vector<16x32xf32>
    tpu.vector_store %arg35[%c0_70, %c0_71], %138 {strides = array<i32>} : memref<16x64xf32, #tpu.memory_space<vmem>>, vector<16x32xf32>,
    %140 = vector.extract_strided_slice %113 {offsets = [0, 32], sizes = [16, 32], strides = [1, 1]} : vector<16x64xf32> to vector<16x32xf32>
    %141 = vector.extract_strided_slice %117 {offsets = [0, 32], sizes = [8, 32], strides = [1, 1]} : vector<8x64xf32> to vector<8x32xf32>
    %142 = tpu.transpose %141, [1, 0] : vector<8x32xf32> -> vector<32x8xf32>
    %cst_72 = arith.constant dense<0.000000e+00> : vector<16x8xf32>
    %143 = tpu.matmul %140, %142, %cst_72 {dimension_numbers = #tpu.dot_dimension_numbers<[1], [0], [0], [1], [0, 0, 1, 1], [], []>} : vector<16x32xf32>, vector<32x8xf32>, vector<16x8xf32> -> vector<16x8xf32>
    %cst_73 = arith.constant 0.176776692 : f32
    %144 = vector.broadcast %cst_73 : f32 to vector<16x8xf32>
    %145 = arith.mulf %143, %144 : vector<16x8xf32>
    %146 = vector.broadcast %8 : vector<1x8xf32> to vector<16x8xf32>
    %147 = arith.addf %145, %146 : vector<16x8xf32>
    %cst_74 = arith.constant dense<0xFF800000> : vector<16xf32>
    %148 = vector.multi_reduction <maximumf>, %147, %cst_74 [1] : vector<16x8xf32> to vector<16xf32>
    %149 = vector.shape_cast %148 : vector<16xf32> to vector<16x1xf32>
    %150 = vector.broadcast %149 : vector<16x1xf32> to vector<16x8xf32>
    %151 = arith.subf %147, %150 : vector<16x8xf32>
    %152 = math.exp %151 : vector<16x8xf32>
    %cst_75 = arith.constant dense<0.000000e+00> : vector<16xf32>
    %153 = vector.multi_reduction <add>, %152, %cst_75 [1] : vector<16x8xf32> to vector<16xf32>
    %154 = vector.shape_cast %153 : vector<16xf32> to vector<16x1xf32>
    %155 = tpu.reciprocal %154 {approx = true} : vector<16x1xf32> -> vector<16x1xf32>
    %156 = vector.broadcast %155 : vector<16x1xf32> to vector<16x8xf32>
    %157 = arith.mulf %152, %156 : vector<16x8xf32>
    %158 = vector.extract_strided_slice %118 {offsets = [0, 32], sizes = [8, 32], strides = [1, 1]} : vector<8x64xf32> to vector<8x32xf32>
    %cst_76 = arith.constant dense<0.000000e+00> : vector<16x32xf32>
    %159 = tpu.matmul %157, %158, %cst_76 {dimension_numbers = #tpu.dot_dimension_numbers<[1], [0], [0], [1], [0, 0, 1, 1], [], []>} : vector<16x8xf32>, vector<8x32xf32>, vector<16x32xf32> -> vector<16x32xf32>
    %c0_77 = arith.constant 0 : index
    %c32_78 = arith.constant 32 : index
    %160 = vector.load %arg35[%c0_77, %c32_78] : memref<16x64xf32, #tpu.memory_space<vmem>>, vector<16x32xf32>
    tpu.vector_store %arg35[%c0_77, %c32_78], %159 {strides = array<i32>} : memref<16x64xf32, #tpu.memory_space<vmem>>, vector<16x32xf32>,
    %c0_79 = arith.constant 0 : index
    %c0_80 = arith.constant 0 : index
    %161 = vector.load %arg35[%c0_79, %c0_80] : memref<16x64xf32, #tpu.memory_space<vmem>>, vector<16x64xf32>
    %c0_81 = arith.constant 0 : index
    %c0_82 = arith.constant 0 : index
    %c0_83 = arith.constant 0 : index
    %162 = vector.load %arg25[%c0_81, %c0_82, %c0_83] : memref<1x64x64xf32, #tpu.memory_space<vmem>>, vector<1x64x64xf32>
    %163 = vector.shape_cast %162 : vector<1x64x64xf32> to vector<64x64xf32>
    %cst_84 = arith.constant dense<0.000000e+00> : vector<16x64xf32>
    %164 = tpu.matmul %161, %163, %cst_84 {dimension_numbers = #tpu.dot_dimension_numbers<[1], [0], [0], [1], [0, 0, 1, 1], [], []>} : vector<16x64xf32>, vector<64x64xf32>, vector<16x64xf32> -> vector<16x64xf32>
    %165 = arith.addf %86, %164 : vector<16x64xf32>
    %c0_85 = arith.constant 0 : index
    %c0_86 = arith.constant 0 : index
    %c0_87 = arith.constant 0 : index
    %166 = vector.load %arg26[%c0_85, %c0_86, %c0_87] : memref<1x1x64xf32, #tpu.memory_space<vmem>>, vector<1x1x64xf32>
    %167 = vector.shape_cast %166 : vector<1x1x64xf32> to vector<1x64xf32>
    %c0_88 = arith.constant 0 : index
    %c0_89 = arith.constant 0 : index
    %c0_90 = arith.constant 0 : index
    %168 = vector.load %arg27[%c0_88, %c0_89, %c0_90] : memref<1x1x64xf32, #tpu.memory_space<vmem>>, vector<1x1x64xf32>
    %169 = vector.shape_cast %168 : vector<1x1x64xf32> to vector<1x64xf32>
    %cst_91 = arith.constant dense<0.000000e+00> : vector<16xf32>
    %170 = vector.multi_reduction <add>, %165, %cst_91 [1] : vector<16x64xf32> to vector<16xf32>
    %171 = vector.shape_cast %170 : vector<16xf32> to vector<16x1xf32>
    %cst_92 = arith.constant 6.400000e+01 : f32
    %172 = vector.broadcast %cst_92 : f32 to vector<16x1xf32>
    %173 = arith.divf %171, %172 : vector<16x1xf32>
    %174 = vector.broadcast %173 : vector<16x1xf32> to vector<16x64xf32>
    %175 = arith.subf %165, %174 : vector<16x64xf32>
    %176 = arith.mulf %175, %175 : vector<16x64xf32>
    %cst_93 = arith.constant dense<0.000000e+00> : vector<16xf32>
    %177 = vector.multi_reduction <add>, %176, %cst_93 [1] : vector<16x64xf32> to vector<16xf32>
    %178 = vector.shape_cast %177 : vector<16xf32> to vector<16x1xf32>
    %cst_94 = arith.constant 6.400000e+01 : f32
    %179 = vector.broadcast %cst_94 : f32 to vector<16x1xf32>
    %180 = arith.divf %178, %179 : vector<16x1xf32>
    %cst_95 = arith.constant 9.99999974E-6 : f32
    %181 = vector.broadcast %cst_95 : f32 to vector<16x1xf32>
    %182 = arith.addf %180, %181 : vector<16x1xf32>
    %183 = math.rsqrt %182 : vector<16x1xf32>
    %184 = vector.broadcast %183 : vector<16x1xf32> to vector<16x64xf32>
    %185 = arith.mulf %175, %184 : vector<16x64xf32>
    %186 = vector.broadcast %167 : vector<1x64xf32> to vector<16x64xf32>
    %187 = arith.mulf %185, %186 : vector<16x64xf32>
    %188 = vector.broadcast %169 : vector<1x64xf32> to vector<16x64xf32>
    %189 = arith.addf %187, %188 : vector<16x64xf32>
    %c0_96 = arith.constant 0 : index
    %c0_97 = arith.constant 0 : index
    %c0_98 = arith.constant 0 : index
    %190 = vector.load %arg28[%c0_96, %c0_97, %c0_98] : memref<1x64x256xf32, #tpu.memory_space<vmem>>, vector<1x64x256xf32>
    %191 = vector.shape_cast %190 : vector<1x64x256xf32> to vector<64x256xf32>
    %cst_99 = arith.constant dense<0.000000e+00> : vector<16x256xf32>
    %192 = tpu.matmul %189, %191, %cst_99 {dimension_numbers = #tpu.dot_dimension_numbers<[1], [0], [0], [1], [0, 0, 1, 1], [], []>} : vector<16x64xf32>, vector<64x256xf32>, vector<16x256xf32> -> vector<16x256xf32>
    %c0_100 = arith.constant 0 : index
    %c0_101 = arith.constant 0 : index
    %c0_102 = arith.constant 0 : index
    %193 = vector.load %arg29[%c0_100, %c0_101, %c0_102] : memref<1x1x256xf32, #tpu.memory_space<vmem>>, vector<1x1x256xf32>
    %194 = vector.shape_cast %193 : vector<1x1x256xf32> to vector<1x256xf32>
    %195 = vector.broadcast %194 : vector<1x256xf32> to vector<16x256xf32>
    %196 = arith.addf %192, %195 : vector<16x256xf32>
    %197 = arith.mulf %196, %196 : vector<16x256xf32>
    %198 = arith.mulf %196, %197 : vector<16x256xf32>
    %cst_103 = arith.constant 4.471500e-02 : f32
    %199 = vector.broadcast %cst_103 : f32 to vector<16x256xf32>
    %200 = arith.mulf %199, %198 : vector<16x256xf32>
    %201 = arith.addf %196, %200 : vector<16x256xf32>
    %cst_104 = arith.constant 0.797884583 : f32
    %202 = vector.broadcast %cst_104 : f32 to vector<16x256xf32>
    %203 = arith.mulf %202, %201 : vector<16x256xf32>
    %204 = math.tanh %203 : vector<16x256xf32>
    %cst_105 = arith.constant 1.000000e+00 : f32
    %205 = vector.broadcast %cst_105 : f32 to vector<16x256xf32>
    %206 = arith.addf %205, %204 : vector<16x256xf32>
    %cst_106 = arith.constant 5.000000e-01 : f32
    %207 = vector.broadcast %cst_106 : f32 to vector<16x256xf32>
    %208 = arith.mulf %207, %206 : vector<16x256xf32>
    %209 = arith.mulf %196, %208 : vector<16x256xf32>
    %c0_107 = arith.constant 0 : index
    %c0_108 = arith.constant 0 : index
    %c0_109 = arith.constant 0 : index
    %210 = vector.load %arg30[%c0_107, %c0_108, %c0_109] : memref<1x256x64xf32, #tpu.memory_space<vmem>>, vector<1x256x64xf32>
    %211 = vector.shape_cast %210 : vector<1x256x64xf32> to vector<256x64xf32>
    %cst_110 = arith.constant dense<0.000000e+00> : vector<16x64xf32>
    %212 = tpu.matmul %209, %211, %cst_110 {dimension_numbers = #tpu.dot_dimension_numbers<[1], [0], [0], [1], [0, 0, 1, 1], [], []>} : vector<16x256xf32>, vector<256x64xf32>, vector<16x64xf32> -> vector<16x64xf32>
    %213 = arith.addf %165, %212 : vector<16x64xf32>
    %c0_111 = arith.constant 0 : index
    %c0_112 = arith.constant 0 : index
    %c0_113 = arith.constant 0 : index
    %214 = vector.load %arg31[%c0_111, %c0_112, %c0_113] : memref<1x1x64xf32, #tpu.memory_space<vmem>>, vector<1x1x64xf32>
    %215 = vector.shape_cast %214 : vector<1x1x64xf32> to vector<1x64xf32>
    %216 = vector.broadcast %215 : vector<1x64xf32> to vector<16x64xf32>
    %217 = arith.addf %213, %216 : vector<16x64xf32>
    %c0_114 = arith.constant 0 : index
    %c0_115 = arith.constant 0 : index
    %218 = vector.load %arg33[%c0_114, %c0_115] : memref<16x64xf32, #tpu.memory_space<vmem>>, vector<16x64xf32>
    tpu.vector_store %arg33[%c0_114, %c0_115], %217 {strides = array<i32>} : memref<16x64xf32, #tpu.memory_space<vmem>>, vector<16x64xf32>,
    %c3_i32 = arith.constant 3 : i32
    %219 = arith.cmpi eq, %arg1, %c3_i32 : i32
    %220 = arith.extui %219 : i1 to i32
    %c0_i32_116 = arith.constant 0 : i32
    %221 = arith.cmpi ne, %220, %c0_i32_116 : i32
    scf.if %221 {
      %c0_117 = arith.constant 0 : index
      %c0_118 = arith.constant 0 : index
      %222 = vector.load %arg15[%c0_117, %c0_118] : memref<64x4xf32, #tpu.memory_space<vmem>>, vector<64x4xf32>
      %cst_119 = arith.constant dense<0.000000e+00> : vector<16x4xf32>
      %223 = tpu.matmul %217, %222, %cst_119 {dimension_numbers = #tpu.dot_dimension_numbers<[1], [0], [0], [1], [0, 0, 1, 1], [], []>} : vector<16x64xf32>, vector<64x4xf32>, vector<16x4xf32> -> vector<16x4xf32>
      %c0_120 = arith.constant 0 : index
      %c0_121 = arith.constant 0 : index
      %224 = vector.load %arg16[%c0_120, %c0_121] : memref<1x4xf32, #tpu.memory_space<vmem>>, vector<1x4xf32>
      %225 = vector.broadcast %224 : vector<1x4xf32> to vector<16x4xf32>
      %226 = arith.addf %223, %225 : vector<16x4xf32>
      %c0_122 = arith.constant 0 : index
      %c0_123 = arith.constant 0 : index
      %c0_124 = arith.constant 0 : index
      %227 = vector.load %arg32[%c0_122, %c0_123, %c0_124] : memref<1x16x4xf32, #tpu.memory_space<vmem>>, vector<1x16x4xf32>
      %228 = vector.shape_cast %227 : vector<1x16x4xf32> to vector<16x4xf32>
      %229 = vector.shape_cast %226 : vector<16x4xf32> to vector<1x16x4xf32>
      tpu.vector_store %arg32[%c0_122, %c0_123, %c0_124], %229 {strides = array<i32>} : memref<1x16x4xf32, #tpu.memory_space<vmem>>, vector<1x16x4xf32>,
    } else {
    }
    return
  }
  func.func @transform_0(%arg0: i32, %arg1: i32) -> (i32, i32, i32) {
    %c0_i32 = arith.constant 0 : i32
    %c0_i32_0 = arith.constant 0 : i32
    %c0_i32_1 = arith.constant 0 : i32
    return %arg0, %c0_i32, %c0_i32_0 : i32, i32, i32
  }
  func.func @transform_1(%arg0: i32, %arg1: i32) -> (i32, i32, i32) {
    %c0_i32 = arith.constant 0 : i32
    %c0_i32_0 = arith.constant 0 : i32
    %c0_i32_1 = arith.constant 0 : i32
    return %arg0, %c0_i32, %c0_i32_0 : i32, i32, i32
  }
  func.func @transform_2(%arg0: i32, %arg1: i32) -> (i32, i32, i32) {
    %c0_i32 = arith.constant 0 : i32
    %c0_i32_0 = arith.constant 0 : i32
    %c0_i32_1 = arith.constant 0 : i32
    return %arg0, %c0_i32, %c0_i32_0 : i32, i32, i32
  }
  func.func @transform_3(%arg0: i32, %arg1: i32) -> (i32, i32, i32) {
    %c0_i32 = arith.constant 0 : i32
    %c0_i32_0 = arith.constant 0 : i32
    %c0_i32_1 = arith.constant 0 : i32
    return %arg0, %c0_i32, %c0_i32_0 : i32, i32, i32
  }
  func.func @transform_4(%arg0: i32, %arg1: i32) -> (i32, i32, i32, i32) {
    %c0_i32 = arith.constant 0 : i32
    %c0_i32_0 = arith.constant 0 : i32
    %c0_i32_1 = arith.constant 0 : i32
    return %arg1, %arg0, %c0_i32, %c0_i32_0 : i32, i32, i32, i32
  }
  func.func @transform_5(%arg0: i32, %arg1: i32) -> (i32, i32) {
    %c0_i32 = arith.constant 0 : i32
    %c0_i32_0 = arith.constant 0 : i32
    %c0_i32_1 = arith.constant 0 : i32
    return %c0_i32, %c0_i32_0 : i32, i32
  }
  func.func @transform_6(%arg0: i32, %arg1: i32) -> (i32, i32) {
    %c0_i32 = arith.constant 0 : i32
    %c0_i32_0 = arith.constant 0 : i32
    %c0_i32_1 = arith.constant 0 : i32
    return %c0_i32, %c0_i32_0 : i32, i32
  }
  func.func @transform_7(%arg0: i32, %arg1: i32) -> (i32, i32) {
    %c0_i32 = arith.constant 0 : i32
    %c0_i32_0 = arith.constant 0 : i32
    %c0_i32_1 = arith.constant 0 : i32
    return %c0_i32, %c0_i32_0 : i32, i32
  }
  func.func @transform_8(%arg0: i32, %arg1: i32) -> (i32, i32) {
    %c0_i32 = arith.constant 0 : i32
    %c0_i32_0 = arith.constant 0 : i32
    %c0_i32_1 = arith.constant 0 : i32
    return %c0_i32, %c0_i32_0 : i32, i32
  }
  func.func @transform_9(%arg0: i32, %arg1: i32) -> (i32, i32) {
    %c0_i32 = arith.constant 0 : i32
    %c0_i32_0 = arith.constant 0 : i32
    %c0_i32_1 = arith.constant 0 : i32
    return %c0_i32, %c0_i32_0 : i32, i32
  }
  func.func @transform_10(%arg0: i32, %arg1: i32) -> (i32, i32) {
    %c0_i32 = arith.constant 0 : i32
    %c0_i32_0 = arith.constant 0 : i32
    %c0_i32_1 = arith.constant 0 : i32
    return %c0_i32, %c0_i32_0 : i32, i32
  }
  func.func @transform_11(%arg0: i32, %arg1: i32) -> (i32, i32) {
    %c0_i32 = arith.constant 0 : i32
    %c0_i32_0 = arith.constant 0 : i32
    %c0_i32_1 = arith.constant 0 : i32
    return %c0_i32, %c0_i32_0 : i32, i32
  }
  func.func @transform_12(%arg0: i32, %arg1: i32) -> (i32, i32) {
    %c0_i32 = arith.constant 0 : i32
    %c0_i32_0 = arith.constant 0 : i32
    %c0_i32_1 = arith.constant 0 : i32
    return %c0_i32, %c0_i32_0 : i32, i32
  }
  func.func @transform_13(%arg0: i32, %arg1: i32) -> (i32, i32) {
    %c0_i32 = arith.constant 0 : i32
    %c0_i32_0 = arith.constant 0 : i32
    %c0_i32_1 = arith.constant 0 : i32
    return %c0_i32, %c0_i32_0 : i32, i32
  }
  func.func @transform_14(%arg0: i32, %arg1: i32) -> (i32, i32) {
    %c0_i32 = arith.constant 0 : i32
    %c0_i32_0 = arith.constant 0 : i32
    %c0_i32_1 = arith.constant 0 : i32
    return %c0_i32, %c0_i32_0 : i32, i32
  }
  func.func @transform_15(%arg0: i32, %arg1: i32) -> (i32, i32, i32) {
    %c0_i32 = arith.constant 0 : i32
    %c0_i32_0 = arith.constant 0 : i32
    %c0_i32_1 = arith.constant 0 : i32
    return %arg1, %c0_i32, %c0_i32_0 : i32, i32, i32
  }
  func.func @transform_16(%arg0: i32, %arg1: i32) -> (i32, i32, i32) {
    %c0_i32 = arith.constant 0 : i32
    %c0_i32_0 = arith.constant 0 : i32
    %c0_i32_1 = arith.constant 0 : i32
    return %arg1, %c0_i32, %c0_i32_0 : i32, i32, i32
  }
  func.func @transform_17(%arg0: i32, %arg1: i32) -> (i32, i32, i32) {
    %c0_i32 = arith.constant 0 : i32
    %c0_i32_0 = arith.constant 0 : i32
    %c0_i32_1 = arith.constant 0 : i32
    return %arg1, %c0_i32, %c0_i32_0 : i32, i32, i32
  }
  func.func @transform_18(%arg0: i32, %arg1: i32) -> (i32, i32, i32) {
    %c0_i32 = arith.constant 0 : i32
    %c0_i32_0 = arith.constant 0 : i32
    %c0_i32_1 = arith.constant 0 : i32
    return %arg1, %c0_i32, %c0_i32_0 : i32, i32, i32
  }
  func.func @transform_19(%arg0: i32, %arg1: i32) -> (i32, i32, i32) {
    %c0_i32 = arith.constant 0 : i32
    %c0_i32_0 = arith.constant 0 : i32
    %c0_i32_1 = arith.constant 0 : i32
    return %arg1, %c0_i32, %c0_i32_0 : i32, i32, i32
  }
  func.func @transform_20(%arg0: i32, %arg1: i32) -> (i32, i32, i32) {
    %c0_i32 = arith.constant 0 : i32
    %c0_i32_0 = arith.constant 0 : i32
    %c0_i32_1 = arith.constant 0 : i32
    return %arg1, %c0_i32, %c0_i32_0 : i32, i32, i32
  }
  func.func @transform_21(%arg0: i32, %arg1: i32) -> (i32, i32, i32) {
    %c0_i32 = arith.constant 0 : i32
    %c0_i32_0 = arith.constant 0 : i32
    %c0_i32_1 = arith.constant 0 : i32
    return %arg1, %c0_i32, %c0_i32_0 : i32, i32, i32
  }
  func.func @transform_22(%arg0: i32, %arg1: i32) -> (i32, i32, i32) {
    %c0_i32 = arith.constant 0 : i32
    %c0_i32_0 = arith.constant 0 : i32
    %c0_i32_1 = arith.constant 0 : i32
    return %arg1, %c0_i32, %c0_i32_0 : i32, i32, i32
  }
  func.func @transform_23(%arg0: i32, %arg1: i32) -> (i32, i32, i32) {
    %c0_i32 = arith.constant 0 : i32
    %c0_i32_0 = arith.constant 0 : i32
    %c0_i32_1 = arith.constant 0 : i32
    return %arg1, %c0_i32, %c0_i32_0 : i32, i32, i32
  }
  func.func @transform_24(%arg0: i32, %arg1: i32) -> (i32, i32, i32) {
    %c0_i32 = arith.constant 0 : i32
    %c0_i32_0 = arith.constant 0 : i32
    %c0_i32_1 = arith.constant 0 : i32
    return %arg1, %c0_i32, %c0_i32_0 : i32, i32, i32
  }
  func.func @transform_25(%arg0: i32, %arg1: i32) -> (i32, i32, i32) {
    %c0_i32 = arith.constant 0 : i32
    %c0_i32_0 = arith.constant 0 : i32
    %c0_i32_1 = arith.constant 0 : i32
    return %arg1, %c0_i32, %c0_i32_0 : i32, i32, i32
  }
  func.func @transform_26(%arg0: i32, %arg1: i32) -> (i32, i32, i32) {
    %c0_i32 = arith.constant 0 : i32
    %c0_i32_0 = arith.constant 0 : i32
    %c0_i32_1 = arith.constant 0 : i32
    return %arg1, %c0_i32, %c0_i32_0 : i32, i32, i32
  }
  func.func @transform_27(%arg0: i32, %arg1: i32) -> (i32, i32, i32) {
    %c0_i32 = arith.constant 0 : i32
    %c0_i32_0 = arith.constant 0 : i32
    %c0_i32_1 = arith.constant 0 : i32
    return %arg1, %c0_i32, %c0_i32_0 : i32, i32, i32
  }
  func.func @transform_28(%arg0: i32, %arg1: i32) -> (i32, i32, i32) {
    %c0_i32 = arith.constant 0 : i32
    %c0_i32_0 = arith.constant 0 : i32
    %c0_i32_1 = arith.constant 0 : i32
    return %arg1, %c0_i32, %c0_i32_0 : i32, i32, i32
  }
  func.func @transform_29(%arg0: i32, %arg1: i32) -> (i32, i32, i32) {
    %c0_i32 = arith.constant 0 : i32
    %c0_i32_0 = arith.constant 0 : i32
    %c0_i32_1 = arith.constant 0 : i32
    return %arg1, %c0_i32, %c0_i32_0 : i32, i32, i32
  }
  func.func @transform_30(%arg0: i32, %arg1: i32) -> (i32, i32, i32) {
    %c0_i32 = arith.constant 0 : i32
    %c0_i32_0 = arith.constant 0 : i32
    %c0_i32_1 = arith.constant 0 : i32
    return %arg0, %c0_i32, %c0_i32_0 : i32, i32, i32
  }
}

</mosaic_0001>

<llo_original>
// kernel: fwd.3
$region0: #{fwd.3}
  #allocation0 [shape = 'u32[]', space=smem, size = 0x4, offset = 0x4, fixed_abs, tag = 'smem constant byte address 0x4 - core index']
  #allocation1 [shape = 'u32[144,128]{1,0:T(1,128)}', space=vmem, size = 0x12000, scoped, tag = 'internal scratch']
  #allocation2 [shape = 'f32[16,64]{1,0:T(8,128)}', space=vmem, size = 0x2000, scoped, tag = 'scratch operand']
  #allocation3 [shape = 'f32[8,64]{1,0:T(8,128)}', space=vmem, size = 0x1000, scoped, tag = 'scratch operand']
  #allocation4 [shape = 'f32[16,64]{1,0:T(8,128)}', space=vmem, size = 0x2000, scoped, tag = 'scratch operand']
  %s0 = inlined_call_operand.smem [shape: u32[31], index: -1, kind: input, shape index: {}]
  %s1 = sld [smem:[%s0]]
  %s2 = scalar_lea.smem %s0, 1
  %s3 = sld [smem:[%s2]]
  %s4 = scalar_lea.smem %s0, 2
  %s5 = sld [smem:[%s4]]
  %s6 = scalar_lea.smem %s0, 3
  %s7 = sld [smem:[%s6]]
  %s8 = scalar_lea.smem %s0, 4
  %s9 = sld [smem:[%s8]]
  %s10 = scalar_lea.smem %s0, 5
  %s11 = sld [smem:[%s10]]
  %s12 = scalar_lea.smem %s0, 6
  %s13 = sld [smem:[%s12]]
  %s14 = scalar_lea.smem %s0, 7
  %s15 = sld [smem:[%s14]]
  %s16 = scalar_lea.smem %s0, 8
  %s17 = sld [smem:[%s16]]
  %s18 = scalar_lea.smem %s0, 9
  %s19 = sld [smem:[%s18]]
  %s20 = scalar_lea.smem %s0, 10
  %s21 = sld [smem:[%s20]]
  %s22 = scalar_lea.smem %s0, 11
  %s23 = sld [smem:[%s22]]
  %s24 = scalar_lea.smem %s0, 12
  %s25 = sld [smem:[%s24]]
  %s26 = scalar_lea.smem %s0, 13
  %s27 = sld [smem:[%s26]]
  %s28 = scalar_lea.smem %s0, 14
  %s29 = sld [smem:[%s28]]
  %s30 = scalar_lea.smem %s0, 15
  %s31 = sld [smem:[%s30]]
  %s32 = scalar_lea.smem %s0, 16
  %s33 = sld [smem:[%s32]]
  %s34 = scalar_lea.smem %s0, 17
  %s35 = sld [smem:[%s34]]
  %s36 = scalar_lea.smem %s0, 18
  %s37 = sld [smem:[%s36]]
  %s38 = scalar_lea.smem %s0, 19
  %s39 = sld [smem:[%s38]]
  %s40 = scalar_lea.smem %s0, 20
  %s41 = sld [smem:[%s40]]
  %s42 = scalar_lea.smem %s0, 21
  %s43 = sld [smem:[%s42]]
  %s44 = scalar_lea.smem %s0, 22
  %s45 = sld [smem:[%s44]]
  %s46 = scalar_lea.smem %s0, 23
  %s47 = sld [smem:[%s46]]
  %s48 = scalar_lea.smem %s0, 24
  %s49 = sld [smem:[%s48]]
  %s50 = scalar_lea.smem %s0, 25
  %s51 = sld [smem:[%s50]]
  %s52 = scalar_lea.smem %s0, 26
  %s53 = sld [smem:[%s52]]
  %s54 = scalar_lea.smem %s0, 27
  %s55 = sld [smem:[%s54]]
  %s56 = scalar_lea.smem %s0, 28
  %s57 = sld [smem:[%s56]]
  %s58 = scalar_lea.smem %s0, 29
  %s59 = sld [smem:[%s58]]
  %s60 = scalar_lea.smem %s0, 30
  %s61 = sld [smem:[%s60]]
  %s62 = sld [smem:[#allocation0]]
  $region161: #{fwd.3} parent=0
    _
  %s64 = ssub.s32 1, %s62
  %s65 = scalar_select 0, %s64, %s62
  loop: start=0, step=1, limit=10
  $region2: #{fwd.3} parent=0 // loop_pre_header
    _
  $region3: #{fwd.3} parent=0 // loop_header
    %s67 = sphi 0, %s71
    %p68 = scmp.ge.s32.totalorder %s67, 10
    %s74 = sphi 0, %s86
    %s75 = sphi 0, %s82
    %s76 = sphi 0, %s74
    %s77 = sphi 0, %s75
    %s78 = sphi 0, %s76
    %s79 = sphi 0, %s77
    %s89 = sphi 0, %s91
    %s92 = sphi 0, %s89
    %s93 = sphi 0, %s92
    %s109 = sphi 0, %s93
    %s115 = sphi 0, %s117
    %s118 = sphi 0, %s115
    %s119 = sphi 0, %s118
    %s135 = sphi 0, %s119
    %s141 = sphi 0, %s143
    %s144 = sphi 0, %s141
    %s145 = sphi 0, %s144
    %s161 = sphi 0, %s145
    %s167 = sphi 0, %s169
    %s170 = sphi 0, %s167
    %s171 = sphi 0, %s170
    %s187 = sphi 0, %s171
    %s195 = sphi 0, %s197
    %s198 = sphi 0, %s195
    %s199 = sphi 0, %s198
    %s215 = sphi 0, %s199
    %s219 = sphi 0, %s219
    %s221 = sphi 0, %s219
    %s222 = sphi 0, %s221
    %s236 = sphi 0, %s222
    %s240 = sphi 0, %s240
    %s242 = sphi 0, %s240
    %s243 = sphi 0, %s242
    %s257 = sphi 0, %s243
    %s261 = sphi 0, %s261
    %s263 = sphi 0, %s261
    %s264 = sphi 0, %s263
    %s278 = sphi 0, %s264
    %s282 = sphi 0, %s282
    %s284 = sphi 0, %s282
    %s285 = sphi 0, %s284
    %s299 = sphi 0, %s285
    %s303 = sphi 0, %s303
    %s305 = sphi 0, %s303
    %s306 = sphi 0, %s305
    %s320 = sphi 0, %s306
    %s324 = sphi 0, %s324
    %s326 = sphi 0, %s324
    %s327 = sphi 0, %s326
    %s341 = sphi 0, %s327
    %s345 = sphi 0, %s345
    %s347 = sphi 0, %s345
    %s348 = sphi 0, %s347
    %s362 = sphi 0, %s348
    %s366 = sphi 0, %s366
    %s368 = sphi 0, %s366
    %s369 = sphi 0, %s368
    %s383 = sphi 0, %s369
    %s387 = sphi 0, %s387
    %s389 = sphi 0, %s387
    %s390 = sphi 0, %s389
    %s404 = sphi 0, %s390
    %s408 = sphi 0, %s408
    %s410 = sphi 0, %s408
    %s411 = sphi 0, %s410
    %s425 = sphi 0, %s411
    %s431 = sphi 0, %s433
    %s434 = sphi 0, %s431
    %s435 = sphi 0, %s434
    %s451 = sphi 0, %s435
    %s457 = sphi 0, %s459
    %s460 = sphi 0, %s457
    %s461 = sphi 0, %s460
    %s477 = sphi 0, %s461
    %s483 = sphi 0, %s485
    %s486 = sphi 0, %s483
    %s487 = sphi 0, %s486
    %s503 = sphi 0, %s487
    %s509 = sphi 0, %s511
    %s512 = sphi 0, %s509
    %s513 = sphi 0, %s512
    %s529 = sphi 0, %s513
    %s535 = sphi 0, %s537
    %s538 = sphi 0, %s535
    %s539 = sphi 0, %s538
    %s555 = sphi 0, %s539
    %s561 = sphi 0, %s563
    %s564 = sphi 0, %s561
    %s565 = sphi 0, %s564
    %s581 = sphi 0, %s565
    %s587 = sphi 0, %s589
    %s590 = sphi 0, %s587
    %s591 = sphi 0, %s590
    %s607 = sphi 0, %s591
    %s613 = sphi 0, %s615
    %s616 = sphi 0, %s613
    %s617 = sphi 0, %s616
    %s633 = sphi 0, %s617
    %s639 = sphi 0, %s641
    %s642 = sphi 0, %s639
    %s643 = sphi 0, %s642
    %s659 = sphi 0, %s643
    %s665 = sphi 0, %s667
    %s668 = sphi 0, %s665
    %s669 = sphi 0, %s668
    %s685 = sphi 0, %s669
    %s691 = sphi 0, %s693
    %s694 = sphi 0, %s691
    %s695 = sphi 0, %s694
    %s711 = sphi 0, %s695
    %s717 = sphi 0, %s719
    %s720 = sphi 0, %s717
    %s721 = sphi 0, %s720
    %s737 = sphi 0, %s721
    %s743 = sphi 0, %s745
    %s746 = sphi 0, %s743
    %s747 = sphi 0, %s746
    %s763 = sphi 0, %s747
    %s769 = sphi 0, %s771
    %s772 = sphi 0, %s769
    %s773 = sphi 0, %s772
    %s789 = sphi 0, %s773
    %s795 = sphi 0, %s797
    %s798 = sphi 0, %s795
    %s799 = sphi 0, %s798
    %s815 = sphi 0, %s799
    %s821 = sphi 0, %s823
    %s824 = sphi 0, %s821
    %s825 = sphi 0, %s824
    %s841 = sphi 0, %s825
  $region4: #{fwd.3} parent=0 // loop_header_branch
    %70 = sbr.rel (%p68) target = $region8
  $region5: #{fwd.3} parent=0 // loop_body
    %s72 = ssub.s32 %s67, 1
    %s73 = ssub.s32 %s67, 2
    %s80 = sadd.s32 1, %s75
    %p81 = scmp.ge.s32.totalorder %s80, 4
    %s82 = scalar_select %p81, 0, %s80
    %s83 = sadd.s32 1, %s74
    %s84 = scalar_select %p81, %s83, %s74
    %p85 = scmp.ge.s32.totalorder %s84, 2
    %s86 = scalar_select %p85, 0, %s84
    %s87 = ssub.s32 %s74, %s86
    %p88 = scmp.eq.s32.totalorder %s87, 0
    %s90 = sadd.s32 %s89, 1
    %s91 = scalar_select %p88, %s89, %s90
    %p94 = pneg %p88
    %p95 = scmp.eq.s32.totalorder %s67, 7
    %p96 = por %p94, %p95
    %p97 = scmp.ne.s32.totalorder %s89, %s92
    %p98 = scmp.eq.s32.totalorder %s67, 0
    %p99 = por %p97, %p98
    %p100 = scmp.ne.s32.totalorder %s89, %s92
    %p101 = scmp.eq.s32.totalorder %s72, 7
    %p102 = por %p100, %p101
    %p103 = scmp.ne.s32.totalorder %s92, %s93
    %p104 = scmp.eq.s32.totalorder %s72, 0
    %p105 = por %p103, %p104
    %p106 = scmp.ne.s32.totalorder %s92, %s93
    %p107 = scmp.eq.s32.totalorder %s73, 7
    %p108 = por %p106, %p107
    %p110 = scmp.ne.s32.totalorder %s93, %s109
    %p111 = scmp.eq.s32.totalorder %s73, 0
    %p112 = por %p110, %p111
    %s113 = ssub.s32 %s74, %s86
    %p114 = scmp.eq.s32.totalorder %s113, 0
    %s116 = sadd.s32 %s115, 1
    %s117 = scalar_select %p114, %s115, %s116
    %p120 = pneg %p114
    %p121 = scmp.eq.s32.totalorder %s67, 7
    %p122 = por %p120, %p121
    %p123 = scmp.ne.s32.totalorder %s115, %s118
    %p124 = scmp.eq.s32.totalorder %s67, 0
    %p125 = por %p123, %p124
    %p126 = scmp.ne.s32.totalorder %s115, %s118
    %p127 = scmp.eq.s32.totalorder %s72, 7
    %p128 = por %p126, %p127
    %p129 = scmp.ne.s32.totalorder %s118, %s119
    %p130 = scmp.eq.s32.totalorder %s72, 0
    %p131 = por %p129, %p130
    %p132 = scmp.ne.s32.totalorder %s118, %s119
    %p133 = scmp.eq.s32.totalorder %s73, 7
    %p134 = por %p132, %p133
    %p136 = scmp.ne.s32.totalorder %s119, %s135
    %p137 = scmp.eq.s32.totalorder %s73, 0
    %p138 = por %p136, %p137
    %s139 = ssub.s32 %s74, %s86
    %p140 = scmp.eq.s32.totalorder %s139, 0
    %s142 = sadd.s32 %s141, 1
    %s143 = scalar_select %p140, %s141, %s142
    %p146 = pneg %p140
    %p147 = scmp.eq.s32.totalorder %s67, 7
    %p148 = por %p146, %p147
    %p149 = scmp.ne.s32.totalorder %s141, %s144
    %p150 = scmp.eq.s32.totalorder %s67, 0
    %p151 = por %p149, %p150
    %p152 = scmp.ne.s32.totalorder %s141, %s144
    %p153 = scmp.eq.s32.totalorder %s72, 7
    %p154 = por %p152, %p153
    %p155 = scmp.ne.s32.totalorder %s144, %s145
    %p156 = scmp.eq.s32.totalorder %s72, 0
    %p157 = por %p155, %p156
    %p158 = scmp.ne.s32.totalorder %s144, %s145
    %p159 = scmp.eq.s32.totalorder %s73, 7
    %p160 = por %p158, %p159
    %p162 = scmp.ne.s32.totalorder %s145, %s161
    %p163 = scmp.eq.s32.totalorder %s73, 0
    %p164 = por %p162, %p163
    %s165 = ssub.s32 %s74, %s86
    %p166 = scmp.eq.s32.totalorder %s165, 0
    %s168 = sadd.s32 %s167, 1
    %s169 = scalar_select %p166, %s167, %s168
    %p172 = pneg %p166
    %p173 = scmp.eq.s32.totalorder %s67, 7
    %p174 = por %p172, %p173
    %p175 = scmp.ne.s32.totalorder %s167, %s170
    %p176 = scmp.eq.s32.totalorder %s67, 0
    %p177 = por %p175, %p176
    %p178 = scmp.ne.s32.totalorder %s167, %s170
    %p179 = scmp.eq.s32.totalorder %s72, 7
    %p180 = por %p178, %p179
    %p181 = scmp.ne.s32.totalorder %s170, %s171
    %p182 = scmp.eq.s32.totalorder %s72, 0
    %p183 = por %p181, %p182
    %p184 = scmp.ne.s32.totalorder %s170, %s171
    %p185 = scmp.eq.s32.totalorder %s73, 7
    %p186 = por %p184, %p185
    %p188 = scmp.ne.s32.totalorder %s171, %s187
    %p189 = scmp.eq.s32.totalorder %s73, 0
    %p190 = por %p188, %p189
    %s191 = ssub.s32 %s75, %s82
    %s192 = ssub.s32 %s74, %s86
    %s193 = sor.u32 %s191, %s192
    %p194 = scmp.eq.s32.totalorder %s193, 0
    %s196 = sadd.s32 %s195, 1
    %s197 = scalar_select %p194, %s195, %s196
    %p200 = pneg %p194
    %p201 = scmp.eq.s32.totalorder %s67, 7
    %p202 = por %p200, %p201
    %p203 = scmp.ne.s32.totalorder %s195, %s198
    %p204 = scmp.eq.s32.totalorder %s67, 0
    %p205 = por %p203, %p204
    %p206 = scmp.ne.s32.totalorder %s195, %s198
    %p207 = scmp.eq.s32.totalorder %s72, 7
    %p208 = por %p206, %p207
    %p209 = scmp.ne.s32.totalorder %s198, %s199
    %p210 = scmp.eq.s32.totalorder %s72, 0
    %p211 = por %p209, %p210
    %p212 = scmp.ne.s32.totalorder %s198, %s199
    %p213 = scmp.eq.s32.totalorder %s73, 7
    %p214 = por %p212, %p213
    %p216 = scmp.ne.s32.totalorder %s199, %s215
    %p217 = scmp.eq.s32.totalorder %s73, 0
    %p218 = por %p216, %p217
    %s220 = sadd.s32 %s219, 1
    %p223 = scmp.eq.s32.totalorder %s67, 7
    %p224 = scmp.ne.s32.totalorder %s219, %s221
    %p225 = scmp.eq.s32.totalorder %s67, 0
    %p226 = por %p224, %p225
    %p227 = scmp.ne.s32.totalorder %s219, %s221
    %p228 = scmp.eq.s32.totalorder %s72, 7
    %p229 = por %p227, %p228
    %p230 = scmp.ne.s32.totalorder %s221, %s222
    %p231 = scmp.eq.s32.totalorder %s72, 0
    %p232 = por %p230, %p231
    %p233 = scmp.ne.s32.totalorder %s221, %s222
    %p234 = scmp.eq.s32.totalorder %s73, 7
    %p235 = por %p233, %p234
    %p237 = scmp.ne.s32.totalorder %s222, %s236
    %p238 = scmp.eq.s32.totalorder %s73, 0
    %p239 = por %p237, %p238
    %s241 = sadd.s32 %s240, 1
    %p244 = scmp.eq.s32.totalorder %s67, 7
    %p245 = scmp.ne.s32.totalorder %s240, %s242
    %p246 = scmp.eq.s32.totalorder %s67, 0
    %p247 = por %p245, %p246
    %p248 = scmp.ne.s32.totalorder %s240, %s242
    %p249 = scmp.eq.s32.totalorder %s72, 7
    %p250 = por %p248, %p249
    %p251 = scmp.ne.s32.totalorder %s242, %s243
    %p252 = scmp.eq.s32.totalorder %s72, 0
    %p253 = por %p251, %p252
    %p254 = scmp.ne.s32.totalorder %s242, %s243
    %p255 = scmp.eq.s32.totalorder %s73, 7
    %p256 = por %p254, %p255
    %p258 = scmp.ne.s32.totalorder %s243, %s257
    %p259 = scmp.eq.s32.totalorder %s73, 0
    %p260 = por %p258, %p259
    %s262 = sadd.s32 %s261, 1
    %p265 = scmp.eq.s32.totalorder %s67, 7
    %p266 = scmp.ne.s32.totalorder %s261, %s263
    %p267 = scmp.eq.s32.totalorder %s67, 0
    %p268 = por %p266, %p267
    %p269 = scmp.ne.s32.totalorder %s261, %s263
    %p270 = scmp.eq.s32.totalorder %s72, 7
    %p271 = por %p269, %p270
    %p272 = scmp.ne.s32.totalorder %s263, %s264
    %p273 = scmp.eq.s32.totalorder %s72, 0
    %p274 = por %p272, %p273
    %p275 = scmp.ne.s32.totalorder %s263, %s264
    %p276 = scmp.eq.s32.totalorder %s73, 7
    %p277 = por %p275, %p276
    %p279 = scmp.ne.s32.totalorder %s264, %s278
    %p280 = scmp.eq.s32.totalorder %s73, 0
    %p281 = por %p279, %p280
    %s283 = sadd.s32 %s282, 1
    %p286 = scmp.eq.s32.totalorder %s67, 7
    %p287 = scmp.ne.s32.totalorder %s282, %s284
    %p288 = scmp.eq.s32.totalorder %s67, 0
    %p289 = por %p287, %p288
    %p290 = scmp.ne.s32.totalorder %s282, %s284
    %p291 = scmp.eq.s32.totalorder %s72, 7
    %p292 = por %p290, %p291
    %p293 = scmp.ne.s32.totalorder %s284, %s285
    %p294 = scmp.eq.s32.totalorder %s72, 0
    %p295 = por %p293, %p294
    %p296 = scmp.ne.s32.totalorder %s284, %s285
    %p297 = scmp.eq.s32.totalorder %s73, 7
    %p298 = por %p296, %p297
    %p300 = scmp.ne.s32.totalorder %s285, %s299
    %p301 = scmp.eq.s32.totalorder %s73, 0
    %p302 = por %p300, %p301
    %s304 = sadd.s32 %s303, 1
    %p307 = scmp.eq.s32.totalorder %s67, 7
    %p308 = scmp.ne.s32.totalorder %s303, %s305
    %p309 = scmp.eq.s32.totalorder %s67, 0
    %p310 = por %p308, %p309
    %p311 = scmp.ne.s32.totalorder %s303, %s305
    %p312 = scmp.eq.s32.totalorder %s72, 7
    %p313 = por %p311, %p312
    %p314 = scmp.ne.s32.totalorder %s305, %s306
    %p315 = scmp.eq.s32.totalorder %s72, 0
    %p316 = por %p314, %p315
    %p317 = scmp.ne.s32.totalorder %s305, %s306
    %p318 = scmp.eq.s32.totalorder %s73, 7
    %p319 = por %p317, %p318
    %p321 = scmp.ne.s32.totalorder %s306, %s320
    %p322 = scmp.eq.s32.totalorder %s73, 0
    %p323 = por %p321, %p322
    %s325 = sadd.s32 %s324, 1
    %p328 = scmp.eq.s32.totalorder %s67, 7
    %p329 = scmp.ne.s32.totalorder %s324, %s326
    %p330 = scmp.eq.s32.totalorder %s67, 0
    %p331 = por %p329, %p330
    %p332 = scmp.ne.s32.totalorder %s324, %s326
    %p333 = scmp.eq.s32.totalorder %s72, 7
    %p334 = por %p332, %p333
    %p335 = scmp.ne.s32.totalorder %s326, %s327
    %p336 = scmp.eq.s32.totalorder %s72, 0
    %p337 = por %p335, %p336
    %p338 = scmp.ne.s32.totalorder %s326, %s327
    %p339 = scmp.eq.s32.totalorder %s73, 7
    %p340 = por %p338, %p339
    %p342 = scmp.ne.s32.totalorder %s327, %s341
    %p343 = scmp.eq.s32.totalorder %s73, 0
    %p344 = por %p342, %p343
    %s346 = sadd.s32 %s345, 1
    %p349 = scmp.eq.s32.totalorder %s67, 7
    %p350 = scmp.ne.s32.totalorder %s345, %s347
    %p351 = scmp.eq.s32.totalorder %s67, 0
    %p352 = por %p350, %p351
    %p353 = scmp.ne.s32.totalorder %s345, %s347
    %p354 = scmp.eq.s32.totalorder %s72, 7
    %p355 = por %p353, %p354
    %p356 = scmp.ne.s32.totalorder %s347, %s348
    %p357 = scmp.eq.s32.totalorder %s72, 0
    %p358 = por %p356, %p357
    %p359 = scmp.ne.s32.totalorder %s347, %s348
    %p360 = scmp.eq.s32.totalorder %s73, 7
    %p361 = por %p359, %p360
    %p363 = scmp.ne.s32.totalorder %s348, %s362
    %p364 = scmp.eq.s32.totalorder %s73, 0
    %p365 = por %p363, %p364
    %s367 = sadd.s32 %s366, 1
    %p370 = scmp.eq.s32.totalorder %s67, 7
    %p371 = scmp.ne.s32.totalorder %s366, %s368
    %p372 = scmp.eq.s32.totalorder %s67, 0
    %p373 = por %p371, %p372
    %p374 = scmp.ne.s32.totalorder %s366, %s368
    %p375 = scmp.eq.s32.totalorder %s72, 7
    %p376 = por %p374, %p375
    %p377 = scmp.ne.s32.totalorder %s368, %s369
    %p378 = scmp.eq.s32.totalorder %s72, 0
    %p379 = por %p377, %p378
    %p380 = scmp.ne.s32.totalorder %s368, %s369
    %p381 = scmp.eq.s32.totalorder %s73, 7
    %p382 = por %p380, %p381
    %p384 = scmp.ne.s32.totalorder %s369, %s383
    %p385 = scmp.eq.s32.totalorder %s73, 0
    %p386 = por %p384, %p385
    %s388 = sadd.s32 %s387, 1
    %p391 = scmp.eq.s32.totalorder %s67, 7
    %p392 = scmp.ne.s32.totalorder %s387, %s389
    %p393 = scmp.eq.s32.totalorder %s67, 0
    %p394 = por %p392, %p393
    %p395 = scmp.ne.s32.totalorder %s387, %s389
    %p396 = scmp.eq.s32.totalorder %s72, 7
    %p397 = por %p395, %p396
    %p398 = scmp.ne.s32.totalorder %s389, %s390
    %p399 = scmp.eq.s32.totalorder %s72, 0
    %p400 = por %p398, %p399
    %p401 = scmp.ne.s32.totalorder %s389, %s390
    %p402 = scmp.eq.s32.totalorder %s73, 7
    %p403 = por %p401, %p402
    %p405 = scmp.ne.s32.totalorder %s390, %s404
    %p406 = scmp.eq.s32.totalorder %s73, 0
    %p407 = por %p405, %p406
    %s409 = sadd.s32 %s408, 1
    %p412 = scmp.eq.s32.totalorder %s67, 7
    %p413 = scmp.ne.s32.totalorder %s408, %s410
    %p414 = scmp.eq.s32.totalorder %s67, 0
    %p415 = por %p413, %p414
    %p416 = scmp.ne.s32.totalorder %s408, %s410
    %p417 = scmp.eq.s32.totalorder %s72, 7
    %p418 = por %p416, %p417
    %p419 = scmp.ne.s32.totalorder %s410, %s411
    %p420 = scmp.eq.s32.totalorder %s72, 0
    %p421 = por %p419, %p420
    %p422 = scmp.ne.s32.totalorder %s410, %s411
    %p423 = scmp.eq.s32.totalorder %s73, 7
    %p424 = por %p422, %p423
    %p426 = scmp.ne.s32.totalorder %s411, %s425
    %p427 = scmp.eq.s32.totalorder %s73, 0
    %p428 = por %p426, %p427
    %s429 = ssub.s32 %s75, %s82
    %p430 = scmp.eq.s32.totalorder %s429, 0
    %s432 = sadd.s32 %s431, 1
    %s433 = scalar_select %p430, %s431, %s432
    %p436 = pneg %p430
    %p437 = scmp.eq.s32.totalorder %s67, 7
    %p438 = por %p436, %p437
    %p439 = scmp.ne.s32.totalorder %s431, %s434
    %p440 = scmp.eq.s32.totalorder %s67, 0
    %p441 = por %p439, %p440
    %p442 = scmp.ne.s32.totalorder %s431, %s434
    %p443 = scmp.eq.s32.totalorder %s72, 7
    %p444 = por %p442, %p443
    %p445 = scmp.ne.s32.totalorder %s434, %s435
    %p446 = scmp.eq.s32.totalorder %s72, 0
    %p447 = por %p445, %p446
    %p448 = scmp.ne.s32.totalorder %s434, %s435
    %p449 = scmp.eq.s32.totalorder %s73, 7
    %p450 = por %p448, %p449
    %p452 = scmp.ne.s32.totalorder %s435, %s451
    %p453 = scmp.eq.s32.totalorder %s73, 0
    %p454 = por %p452, %p453
    %s455 = ssub.s32 %s75, %s82
    %p456 = scmp.eq.s32.totalorder %s455, 0
    %s458 = sadd.s32 %s457, 1
    %s459 = scalar_select %p456, %s457, %s458
    %p462 = pneg %p456
    %p463 = scmp.eq.s32.totalorder %s67, 7
    %p464 = por %p462, %p463
    %p465 = scmp.ne.s32.totalorder %s457, %s460
    %p466 = scmp.eq.s32.totalorder %s67, 0
    %p467 = por %p465, %p466
    %p468 = scmp.ne.s32.totalorder %s457, %s460
    %p469 = scmp.eq.s32.totalorder %s72, 7
    %p470 = por %p468, %p469
    %p471 = scmp.ne.s32.totalorder %s460, %s461
    %p472 = scmp.eq.s32.totalorder %s72, 0
    %p473 = por %p471, %p472
    %p474 = scmp.ne.s32.totalorder %s460, %s461
    %p475 = scmp.eq.s32.totalorder %s73, 7
    %p476 = por %p474, %p475
    %p478 = scmp.ne.s32.totalorder %s461, %s477
    %p479 = scmp.eq.s32.totalorder %s73, 0
    %p480 = por %p478, %p479
    %s481 = ssub.s32 %s75, %s82
    %p482 = scmp.eq.s32.totalorder %s481, 0
    %s484 = sadd.s32 %s483, 1
    %s485 = scalar_select %p482, %s483, %s484
    %p488 = pneg %p482
    %p489 = scmp.eq.s32.totalorder %s67, 7
    %p490 = por %p488, %p489
    %p491 = scmp.ne.s32.totalorder %s483, %s486
    %p492 = scmp.eq.s32.totalorder %s67, 0
    %p493 = por %p491, %p492
    %p494 = scmp.ne.s32.totalorder %s483, %s486
    %p495 = scmp.eq.s32.totalorder %s72, 7
    %p496 = por %p494, %p495
    %p497 = scmp.ne.s32.totalorder %s486, %s487
    %p498 = scmp.eq.s32.totalorder %s72, 0
    %p499 = por %p497, %p498
    %p500 = scmp.ne.s32.totalorder %s486, %s487
    %p501 = scmp.eq.s32.totalorder %s73, 7
    %p502 = por %p500, %p501
    %p504 = scmp.ne.s32.totalorder %s487, %s503
    %p505 = scmp.eq.s32.totalorder %s73, 0
    %p506 = por %p504, %p505
    %s507 = ssub.s32 %s75, %s82
    %p508 = scmp.eq.s32.totalorder %s507, 0
    %s510 = sadd.s32 %s509, 1
    %s511 = scalar_select %p508, %s509, %s510
    %p514 = pneg %p508
    %p515 = scmp.eq.s32.totalorder %s67, 7
    %p516 = por %p514, %p515
    %p517 = scmp.ne.s32.totalorder %s509, %s512
    %p518 = scmp.eq.s32.totalorder %s67, 0
    %p519 = por %p517, %p518
    %p520 = scmp.ne.s32.totalorder %s509, %s512
    %p521 = scmp.eq.s32.totalorder %s72, 7
    %p522 = por %p520, %p521
    %p523 = scmp.ne.s32.totalorder %s512, %s513
    %p524 = scmp.eq.s32.totalorder %s72, 0
    %p525 = por %p523, %p524
    %p526 = scmp.ne.s32.totalorder %s512, %s513
    %p527 = scmp.eq.s32.totalorder %s73, 7
    %p528 = por %p526, %p527
    %p530 = scmp.ne.s32.totalorder %s513, %s529
    %p531 = scmp.eq.s32.totalorder %s73, 0
    %p532 = por %p530, %p531
    %s533 = ssub.s32 %s75, %s82
    %p534 = scmp.eq.s32.totalorder %s533, 0
    %s536 = sadd.s32 %s535, 1
    %s537 = scalar_select %p534, %s535, %s536
    %p540 = pneg %p534
    %p541 = scmp.eq.s32.totalorder %s67, 7
    %p542 = por %p540, %p541
    %p543 = scmp.ne.s32.totalorder %s535, %s538
    %p544 = scmp.eq.s32.totalorder %s67, 0
    %p545 = por %p543, %p544
    %p546 = scmp.ne.s32.totalorder %s535, %s538
    %p547 = scmp.eq.s32.totalorder %s72, 7
    %p548 = por %p546, %p547
    %p549 = scmp.ne.s32.totalorder %s538, %s539
    %p550 = scmp.eq.s32.totalorder %s72, 0
    %p551 = por %p549, %p550
    %p552 = scmp.ne.s32.totalorder %s538, %s539
    %p553 = scmp.eq.s32.totalorder %s73, 7
    %p554 = por %p552, %p553
    %p556 = scmp.ne.s32.totalorder %s539, %s555
    %p557 = scmp.eq.s32.totalorder %s73, 0
    %p558 = por %p556, %p557
    %s559 = ssub.s32 %s75, %s82
    %p560 = scmp.eq.s32.totalorder %s559, 0
    %s562 = sadd.s32 %s561, 1
    %s563 = scalar_select %p560, %s561, %s562
    %p566 = pneg %p560
    %p567 = scmp.eq.s32.totalorder %s67, 7
    %p568 = por %p566, %p567
    %p569 = scmp.ne.s32.totalorder %s561, %s564
    %p570 = scmp.eq.s32.totalorder %s67, 0
    %p571 = por %p569, %p570
    %p572 = scmp.ne.s32.totalorder %s561, %s564
    %p573 = scmp.eq.s32.totalorder %s72, 7
    %p574 = por %p572, %p573
    %p575 = scmp.ne.s32.totalorder %s564, %s565
    %p576 = scmp.eq.s32.totalorder %s72, 0
    %p577 = por %p575, %p576
    %p578 = scmp.ne.s32.totalorder %s564, %s565
    %p579 = scmp.eq.s32.totalorder %s73, 7
    %p580 = por %p578, %p579
    %p582 = scmp.ne.s32.totalorder %s565, %s581
    %p583 = scmp.eq.s32.totalorder %s73, 0
    %p584 = por %p582, %p583
    %s585 = ssub.s32 %s75, %s82
    %p586 = scmp.eq.s32.totalorder %s585, 0
    %s588 = sadd.s32 %s587, 1
    %s589 = scalar_select %p586, %s587, %s588
    %p592 = pneg %p586
    %p593 = scmp.eq.s32.totalorder %s67, 7
    %p594 = por %p592, %p593
    %p595 = scmp.ne.s32.totalorder %s587, %s590
    %p596 = scmp.eq.s32.totalorder %s67, 0
    %p597 = por %p595, %p596
    %p598 = scmp.ne.s32.totalorder %s587, %s590
    %p599 = scmp.eq.s32.totalorder %s72, 7
    %p600 = por %p598, %p599
    %p601 = scmp.ne.s32.totalorder %s590, %s591
    %p602 = scmp.eq.s32.totalorder %s72, 0
    %p603 = por %p601, %p602
    %p604 = scmp.ne.s32.totalorder %s590, %s591
    %p605 = scmp.eq.s32.totalorder %s73, 7
    %p606 = por %p604, %p605
    %p608 = scmp.ne.s32.totalorder %s591, %s607
    %p609 = scmp.eq.s32.totalorder %s73, 0
    %p610 = por %p608, %p609
    %s611 = ssub.s32 %s75, %s82
    %p612 = scmp.eq.s32.totalorder %s611, 0
    %s614 = sadd.s32 %s613, 1
    %s615 = scalar_select %p612, %s613, %s614
    %p618 = pneg %p612
    %p619 = scmp.eq.s32.totalorder %s67, 7
    %p620 = por %p618, %p619
    %p621 = scmp.ne.s32.totalorder %s613, %s616
    %p622 = scmp.eq.s32.totalorder %s67, 0
    %p623 = por %p621, %p622
    %p624 = scmp.ne.s32.totalorder %s613, %s616
    %p625 = scmp.eq.s32.totalorder %s72, 7
    %p626 = por %p624, %p625
    %p627 = scmp.ne.s32.totalorder %s616, %s617
    %p628 = scmp.eq.s32.totalorder %s72, 0
    %p629 = por %p627, %p628
    %p630 = scmp.ne.s32.totalorder %s616, %s617
    %p631 = scmp.eq.s32.totalorder %s73, 7
    %p632 = por %p630, %p631
    %p634 = scmp.ne.s32.totalorder %s617, %s633
    %p635 = scmp.eq.s32.totalorder %s73, 0
    %p636 = por %p634, %p635
    %s637 = ssub.s32 %s75, %s82
    %p638 = scmp.eq.s32.totalorder %s637, 0
    %s640 = sadd.s32 %s639, 1
    %s641 = scalar_select %p638, %s639, %s640
    %p644 = pneg %p638
    %p645 = scmp.eq.s32.totalorder %s67, 7
    %p646 = por %p644, %p645
    %p647 = scmp.ne.s32.totalorder %s639, %s642
    %p648 = scmp.eq.s32.totalorder %s67, 0
    %p649 = por %p647, %p648
    %p650 = scmp.ne.s32.totalorder %s639, %s642
    %p651 = scmp.eq.s32.totalorder %s72, 7
    %p652 = por %p650, %p651
    %p653 = scmp.ne.s32.totalorder %s642, %s643
    %p654 = scmp.eq.s32.totalorder %s72, 0
    %p655 = por %p653, %p654
    %p656 = scmp.ne.s32.totalorder %s642, %s643
    %p657 = scmp.eq.s32.totalorder %s73, 7
    %p658 = por %p656, %p657
    %p660 = scmp.ne.s32.totalorder %s643, %s659
    %p661 = scmp.eq.s32.totalorder %s73, 0
    %p662 = por %p660, %p661
    %s663 = ssub.s32 %s75, %s82
    %p664 = scmp.eq.s32.totalorder %s663, 0
    %s666 = sadd.s32 %s665, 1
    %s667 = scalar_select %p664, %s665, %s666
    %p670 = pneg %p664
    %p671 = scmp.eq.s32.totalorder %s67, 7
    %p672 = por %p670, %p671
    %p673 = scmp.ne.s32.totalorder %s665, %s668
    %p674 = scmp.eq.s32.totalorder %s67, 0
    %p675 = por %p673, %p674
    %p676 = scmp.ne.s32.totalorder %s665, %s668
    %p677 = scmp.eq.s32.totalorder %s72, 7
    %p678 = por %p676, %p677
    %p679 = scmp.ne.s32.totalorder %s668, %s669
    %p680 = scmp.eq.s32.totalorder %s72, 0
    %p681 = por %p679, %p680
    %p682 = scmp.ne.s32.totalorder %s668, %s669
    %p683 = scmp.eq.s32.totalorder %s73, 7
    %p684 = por %p682, %p683
    %p686 = scmp.ne.s32.totalorder %s669, %s685
    %p687 = scmp.eq.s32.totalorder %s73, 0
    %p688 = por %p686, %p687
    %s689 = ssub.s32 %s75, %s82
    %p690 = scmp.eq.s32.totalorder %s689, 0
    %s692 = sadd.s32 %s691, 1
    %s693 = scalar_select %p690, %s691, %s692
    %p696 = pneg %p690
    %p697 = scmp.eq.s32.totalorder %s67, 7
    %p698 = por %p696, %p697
    %p699 = scmp.ne.s32.totalorder %s691, %s694
    %p700 = scmp.eq.s32.totalorder %s67, 0
    %p701 = por %p699, %p700
    %p702 = scmp.ne.s32.totalorder %s691, %s694
    %p703 = scmp.eq.s32.totalorder %s72, 7
    %p704 = por %p702, %p703
    %p705 = scmp.ne.s32.totalorder %s694, %s695
    %p706 = scmp.eq.s32.totalorder %s72, 0
    %p707 = por %p705, %p706
    %p708 = scmp.ne.s32.totalorder %s694, %s695
    %p709 = scmp.eq.s32.totalorder %s73, 7
    %p710 = por %p708, %p709
    %p712 = scmp.ne.s32.totalorder %s695, %s711
    %p713 = scmp.eq.s32.totalorder %s73, 0
    %p714 = por %p712, %p713
    %s715 = ssub.s32 %s75, %s82
    %p716 = scmp.eq.s32.totalorder %s715, 0
    %s718 = sadd.s32 %s717, 1
    %s719 = scalar_select %p716, %s717, %s718
    %p722 = pneg %p716
    %p723 = scmp.eq.s32.totalorder %s67, 7
    %p724 = por %p722, %p723
    %p725 = scmp.ne.s32.totalorder %s717, %s720
    %p726 = scmp.eq.s32.totalorder %s67, 0
    %p727 = por %p725, %p726
    %p728 = scmp.ne.s32.totalorder %s717, %s720
    %p729 = scmp.eq.s32.totalorder %s72, 7
    %p730 = por %p728, %p729
    %p731 = scmp.ne.s32.totalorder %s720, %s721
    %p732 = scmp.eq.s32.totalorder %s72, 0
    %p733 = por %p731, %p732
    %p734 = scmp.ne.s32.totalorder %s720, %s721
    %p735 = scmp.eq.s32.totalorder %s73, 7
    %p736 = por %p734, %p735
    %p738 = scmp.ne.s32.totalorder %s721, %s737
    %p739 = scmp.eq.s32.totalorder %s73, 0
    %p740 = por %p738, %p739
    %s741 = ssub.s32 %s75, %s82
    %p742 = scmp.eq.s32.totalorder %s741, 0
    %s744 = sadd.s32 %s743, 1
    %s745 = scalar_select %p742, %s743, %s744
    %p748 = pneg %p742
    %p749 = scmp.eq.s32.totalorder %s67, 7
    %p750 = por %p748, %p749
    %p751 = scmp.ne.s32.totalorder %s743, %s746
    %p752 = scmp.eq.s32.totalorder %s67, 0
    %p753 = por %p751, %p752
    %p754 = scmp.ne.s32.totalorder %s743, %s746
    %p755 = scmp.eq.s32.totalorder %s72, 7
    %p756 = por %p754, %p755
    %p757 = scmp.ne.s32.totalorder %s746, %s747
    %p758 = scmp.eq.s32.totalorder %s72, 0
    %p759 = por %p757, %p758
    %p760 = scmp.ne.s32.totalorder %s746, %s747
    %p761 = scmp.eq.s32.totalorder %s73, 7
    %p762 = por %p760, %p761
    %p764 = scmp.ne.s32.totalorder %s747, %s763
    %p765 = scmp.eq.s32.totalorder %s73, 0
    %p766 = por %p764, %p765
    %s767 = ssub.s32 %s75, %s82
    %p768 = scmp.eq.s32.totalorder %s767, 0
    %s770 = sadd.s32 %s769, 1
    %s771 = scalar_select %p768, %s769, %s770
    %p774 = pneg %p768
    %p775 = scmp.eq.s32.totalorder %s67, 7
    %p776 = por %p774, %p775
    %p777 = scmp.ne.s32.totalorder %s769, %s772
    %p778 = scmp.eq.s32.totalorder %s67, 0
    %p779 = por %p777, %p778
    %p780 = scmp.ne.s32.totalorder %s769, %s772
    %p781 = scmp.eq.s32.totalorder %s72, 7
    %p782 = por %p780, %p781
    %p783 = scmp.ne.s32.totalorder %s772, %s773
    %p784 = scmp.eq.s32.totalorder %s72, 0
    %p785 = por %p783, %p784
    %p786 = scmp.ne.s32.totalorder %s772, %s773
    %p787 = scmp.eq.s32.totalorder %s73, 7
    %p788 = por %p786, %p787
    %p790 = scmp.ne.s32.totalorder %s773, %s789
    %p791 = scmp.eq.s32.totalorder %s73, 0
    %p792 = por %p790, %p791
    %s793 = ssub.s32 %s75, %s82
    %p794 = scmp.eq.s32.totalorder %s793, 0
    %s796 = sadd.s32 %s795, 1
    %s797 = scalar_select %p794, %s795, %s796
    %p800 = pneg %p794
    %p801 = scmp.eq.s32.totalorder %s67, 7
    %p802 = por %p800, %p801
    %p803 = scmp.ne.s32.totalorder %s795, %s798
    %p804 = scmp.eq.s32.totalorder %s67, 0
    %p805 = por %p803, %p804
    %p806 = scmp.ne.s32.totalorder %s795, %s798
    %p807 = scmp.eq.s32.totalorder %s72, 7
    %p808 = por %p806, %p807
    %p809 = scmp.ne.s32.totalorder %s798, %s799
    %p810 = scmp.eq.s32.totalorder %s72, 0
    %p811 = por %p809, %p810
    %p812 = scmp.ne.s32.totalorder %s798, %s799
    %p813 = scmp.eq.s32.totalorder %s73, 7
    %p814 = por %p812, %p813
    %p816 = scmp.ne.s32.totalorder %s799, %s815
    %p817 = scmp.eq.s32.totalorder %s73, 0
    %p818 = por %p816, %p817
    %s819 = ssub.s32 %s74, %s86
    %p820 = scmp.eq.s32.totalorder %s819, 0
    %s822 = sadd.s32 %s821, 1
    %s823 = scalar_select %p820, %s821, %s822
    %p826 = pneg %p820
    %p827 = scmp.eq.s32.totalorder %s67, 7
    %p828 = por %p826, %p827
    %p829 = scmp.ne.s32.totalorder %s821, %s824
    %p830 = scmp.eq.s32.totalorder %s67, 0
    %p831 = por %p829, %p830
    %p832 = scmp.ne.s32.totalorder %s821, %s824
    %p833 = scmp.eq.s32.totalorder %s72, 7
    %p834 = por %p832, %p833
    %p835 = scmp.ne.s32.totalorder %s824, %s825
    %p836 = scmp.eq.s32.totalorder %s72, 0
    %p837 = por %p835, %p836
    %p838 = scmp.ne.s32.totalorder %s824, %s825
    %p839 = scmp.eq.s32.totalorder %s73, 7
    %p840 = por %p838, %p839
    %p842 = scmp.ne.s32.totalorder %s825, %s841
    %p843 = scmp.eq.s32.totalorder %s73, 0
    %p844 = por %p842, %p843
    %p845 = scmp.le.s32.totalorder 1, %s67
    %p846 = scmp.lt.s32.totalorder %s67, 9
    %p847 = pnand %p845, %p846
    %p848 = pneg %p847
    // Predicated region
    $region9: #{fwd.3} parent=5 // pred_check
      _
    $region10: #{fwd.3} parent=5 // pred_check_branch
      %850 = sbr.rel (%p847) target = $region12
    $region11: #{fwd.3} parent=5 // pred_region
      %s851 = ssub.s32 %s67, 1
      // Predicated region
      $region13: #{fwd.3} parent=11 // pred_check
        %p852 = pneg %p232
      $region14: #{fwd.3} parent=11 // pred_check_branch
        %854 = sbr.rel (%p852) target = $region16
      $region15: #{fwd.3} parent=11 // pred_region
        _
      $region16: #{fwd.3} parent=11 // pred_fallthru
        _
      // Predicated region
      $region17: #{fwd.3} parent=11 // pred_check
        %p855 = pneg %p253
      $region18: #{fwd.3} parent=11 // pred_check_branch
        %857 = sbr.rel (%p855) target = $region20
      $region19: #{fwd.3} parent=11 // pred_region
        _
      $region20: #{fwd.3} parent=11 // pred_fallthru
        _
      // Predicated region
      $region21: #{fwd.3} parent=11 // pred_check
        %p858 = pneg %p274
      $region22: #{fwd.3} parent=11 // pred_check_branch
        %860 = sbr.rel (%p858) target = $region24
      $region23: #{fwd.3} parent=11 // pred_region
        _
      $region24: #{fwd.3} parent=11 // pred_fallthru
        _
      // Predicated region
      $region25: #{fwd.3} parent=11 // pred_check
        %p861 = pneg %p295
      $region26: #{fwd.3} parent=11 // pred_check_branch
        %863 = sbr.rel (%p861) target = $region28
      $region27: #{fwd.3} parent=11 // pred_region
        _
      $region28: #{fwd.3} parent=11 // pred_fallthru
        _
      // Predicated region
      $region29: #{fwd.3} parent=11 // pred_check
        %p864 = pneg %p316
      $region30: #{fwd.3} parent=11 // pred_check_branch
        %866 = sbr.rel (%p864) target = $region32
      $region31: #{fwd.3} parent=11 // pred_region
        _
      $region32: #{fwd.3} parent=11 // pred_fallthru
        _
      // Predicated region
      $region33: #{fwd.3} parent=11 // pred_check
        %p867 = pneg %p337
      $region34: #{fwd.3} parent=11 // pred_check_branch
        %869 = sbr.rel (%p867) target = $region36
      $region35: #{fwd.3} parent=11 // pred_region
        _
      $region36: #{fwd.3} parent=11 // pred_fallthru
        _
      // Predicated region
      $region37: #{fwd.3} parent=11 // pred_check
        %p870 = pneg %p358
      $region38: #{fwd.3} parent=11 // pred_check_branch
        %872 = sbr.rel (%p870) target = $region40
      $region39: #{fwd.3} parent=11 // pred_region
        _
      $region40: #{fwd.3} parent=11 // pred_fallthru
        _
      // Predicated region
      $region41: #{fwd.3} parent=11 // pred_check
        %p873 = pneg %p379
      $region42: #{fwd.3} parent=11 // pred_check_branch
        %875 = sbr.rel (%p873) target = $region44
      $region43: #{fwd.3} parent=11 // pred_region
        _
      $region44: #{fwd.3} parent=11 // pred_fallthru
        _
      // Predicated region
      $region45: #{fwd.3} parent=11 // pred_check
        %p876 = pneg %p400
      $region46: #{fwd.3} parent=11 // pred_check_branch
        %878 = sbr.rel (%p876) target = $region48
      $region47: #{fwd.3} parent=11 // pred_region
        _
      $region48: #{fwd.3} parent=11 // pred_fallthru
        _
      // Predicated region
      $region49: #{fwd.3} parent=11 // pred_check
        %p879 = pneg %p421
      $region50: #{fwd.3} parent=11 // pred_check_branch
        %881 = sbr.rel (%p879) target = $region52
      $region51: #{fwd.3} parent=11 // pred_region
        _
      $region52: #{fwd.3} parent=11 // pred_fallthru
        _
    $region12: #{fwd.3} parent=5 // pred_fallthru
      _
    %p882 = scmp.lt.s32.totalorder %s67, 8
    // Predicated region
    $region53: #{fwd.3} parent=5 // pred_check
      %p883 = pneg %p882
    $region54: #{fwd.3} parent=5 // pred_check_branch
      %885 = sbr.rel (%p883) target = $region56
    $region55: #{fwd.3} parent=5 // pred_region
      // Predicated region
      $region57: #{fwd.3} parent=55 // pred_check
        %p886 = pneg %p99
      $region58: #{fwd.3} parent=55 // pred_check_branch
        %888 = sbr.rel (%p886) target = $region60
      $region59: #{fwd.3} parent=55 // pred_region
        %p889 = scmp.lt.s32.totalorder %s74, 1
        %s890 = scalar_select %p889, %s74, 1
        %s891 = smul.addr %s890, 2
        %s892 = smul.addr %s891, 8
        %s893 = scalar_lea.vmem %s1, %s892
      $region60: #{fwd.3} parent=55 // pred_fallthru
        _
      // Predicated region
      $region61: #{fwd.3} parent=55 // pred_check
        %p894 = pneg %p125
      $region62: #{fwd.3} parent=55 // pred_check_branch
        %896 = sbr.rel (%p894) target = $region64
      $region63: #{fwd.3} parent=55 // pred_region
        %p897 = scmp.lt.s32.totalorder %s74, 1
        %s898 = scalar_select %p897, %s74, 1
        %s899 = scalar_lea.vmem %s3, %s898
      $region64: #{fwd.3} parent=55 // pred_fallthru
        _
      // Predicated region
      $region65: #{fwd.3} parent=55 // pred_check
        %p900 = pneg %p151
      $region66: #{fwd.3} parent=55 // pred_check_branch
        %902 = sbr.rel (%p900) target = $region68
      $region67: #{fwd.3} parent=55 // pred_region
        %p903 = scmp.lt.s32.totalorder %s74, 1
        %s904 = scalar_select %p903, %s74, 1
        %s905 = smul.addr %s904, 8
        %s906 = scalar_lea.vmem %s5, %s905
      $region68: #{fwd.3} parent=55 // pred_fallthru
        _
      // Predicated region
      $region69: #{fwd.3} parent=55 // pred_check
        %p907 = pneg %p177
      $region70: #{fwd.3} parent=55 // pred_check_branch
        %909 = sbr.rel (%p907) target = $region72
      $region71: #{fwd.3} parent=55 // pred_region
        %p910 = scmp.lt.s32.totalorder %s74, 1
        %s911 = scalar_select %p910, %s74, 1
        %s912 = scalar_lea.vmem %s7, %s911
      $region72: #{fwd.3} parent=55 // pred_fallthru
        _
      // Predicated region
      $region73: #{fwd.3} parent=55 // pred_check
        %p913 = pneg %p205
      $region74: #{fwd.3} parent=55 // pred_check_branch
        %915 = sbr.rel (%p913) target = $region76
      $region75: #{fwd.3} parent=55 // pred_region
        %p916 = scmp.lt.s32.totalorder %s75, 3
        %s917 = scalar_select %p916, %s75, 3
        %p918 = scmp.lt.s32.totalorder %s74, 1
        %s919 = scalar_select %p918, %s74, 1
        %s920 = smul.addr %s919, 2
        %s921 = smul.addr %s917, 4
        %s922 = sadd.s32 %s920, %s921
        %s923 = smul.addr %s922, 8
        %s924 = scalar_lea.vmem %s9, %s923
      $region76: #{fwd.3} parent=55 // pred_fallthru
        _
      // Predicated region
      $region77: #{fwd.3} parent=55 // pred_check
        %p925 = pneg %p441
      $region78: #{fwd.3} parent=55 // pred_check_branch
        %927 = sbr.rel (%p925) target = $region80
      $region79: #{fwd.3} parent=55 // pred_region
        %p928 = scmp.lt.s32.totalorder %s75, 3
        %s929 = scalar_select %p928, %s75, 3
        %s930 = scalar_lea.vmem %s31, %s929
      $region80: #{fwd.3} parent=55 // pred_fallthru
        _
      // Predicated region
      $region81: #{fwd.3} parent=55 // pred_check
        %p931 = pneg %p467
      $region82: #{fwd.3} parent=55 // pred_check_branch
        %933 = sbr.rel (%p931) target = $region84
      $region83: #{fwd.3} parent=55 // pred_region
        %p934 = scmp.lt.s32.totalorder %s75, 3
        %s935 = scalar_select %p934, %s75, 3
        %s936 = scalar_lea.vmem %s33, %s935
      $region84: #{fwd.3} parent=55 // pred_fallthru
        _
      // Predicated region
      $region85: #{fwd.3} parent=55 // pred_check
        %p937 = pneg %p493
      $region86: #{fwd.3} parent=55 // pred_check_branch
        %939 = sbr.rel (%p937) target = $region88
      $region87: #{fwd.3} parent=55 // pred_region
        %p940 = scmp.lt.s32.totalorder %s75, 3
        %s941 = scalar_select %p940, %s75, 3
        %s942 = smul.addr %s941, 16
        %s943 = smul.addr %s942, 8
        %s944 = scalar_lea.vmem %s35, %s943
      $region88: #{fwd.3} parent=55 // pred_fallthru
        _
      // Predicated region
      $region89: #{fwd.3} parent=55 // pred_check
        %p945 = pneg %p519
      $region90: #{fwd.3} parent=55 // pred_check_branch
        %947 = sbr.rel (%p945) target = $region92
      $region91: #{fwd.3} parent=55 // pred_region
        %p948 = scmp.lt.s32.totalorder %s75, 3
        %s949 = scalar_select %p948, %s75, 3
        %s950 = smul.addr %s949, 8
        %s951 = smul.addr %s950, 8
        %s952 = scalar_lea.vmem %s37, %s951
      $region92: #{fwd.3} parent=55 // pred_fallthru
        _
      // Predicated region
      $region93: #{fwd.3} parent=55 // pred_check
        %p953 = pneg %p545
      $region94: #{fwd.3} parent=55 // pred_check_branch
        %955 = sbr.rel (%p953) target = $region96
      $region95: #{fwd.3} parent=55 // pred_region
        %p956 = scmp.lt.s32.totalorder %s75, 3
        %s957 = scalar_select %p956, %s75, 3
        %s958 = scalar_lea.vmem %s39, %s957
      $region96: #{fwd.3} parent=55 // pred_fallthru
        _
      // Predicated region
      $region97: #{fwd.3} parent=55 // pred_check
        %p959 = pneg %p571
      $region98: #{fwd.3} parent=55 // pred_check_branch
        %961 = sbr.rel (%p959) target = $region100
      $region99: #{fwd.3} parent=55 // pred_region
        %p962 = scmp.lt.s32.totalorder %s75, 3
        %s963 = scalar_select %p962, %s75, 3
        %s964 = scalar_lea.vmem %s41, %s963
      $region100: #{fwd.3} parent=55 // pred_fallthru
        _
      // Predicated region
      $region101: #{fwd.3} parent=55 // pred_check
        %p965 = pneg %p597
      $region102: #{fwd.3} parent=55 // pred_check_branch
        %967 = sbr.rel (%p965) target = $region104
      $region103: #{fwd.3} parent=55 // pred_region
        %p968 = scmp.lt.s32.totalorder %s75, 3
        %s969 = scalar_select %p968, %s75, 3
        %s970 = smul.addr %s969, 8
        %s971 = smul.addr %s970, 8
        %s972 = scalar_lea.vmem %s43, %s971
      $region104: #{fwd.3} parent=55 // pred_fallthru
        _
      // Predicated region
      $region105: #{fwd.3} parent=55 // pred_check
        %p973 = pneg %p623
      $region106: #{fwd.3} parent=55 // pred_check_branch
        %975 = sbr.rel (%p973) target = $region108
      $region107: #{fwd.3} parent=55 // pred_region
        %p976 = scmp.lt.s32.totalorder %s75, 3
        %s977 = scalar_select %p976, %s75, 3
        %s978 = smul.addr %s977, 8
        %s979 = smul.addr %s978, 8
        %s980 = scalar_lea.vmem %s45, %s979
      $region108: #{fwd.3} parent=55 // pred_fallthru
        _
      // Predicated region
      $region109: #{fwd.3} parent=55 // pred_check
        %p981 = pneg %p649
      $region110: #{fwd.3} parent=55 // pred_check_branch
        %983 = sbr.rel (%p981) target = $region112
      $region111: #{fwd.3} parent=55 // pred_region
        %p984 = scmp.lt.s32.totalorder %s75, 3
        %s985 = scalar_select %p984, %s75, 3
        %s986 = smul.addr %s985, 8
        %s987 = smul.addr %s986, 8
        %s988 = scalar_lea.vmem %s47, %s987
      $region112: #{fwd.3} parent=55 // pred_fallthru
        _
      // Predicated region
      $region113: #{fwd.3} parent=55 // pred_check
        %p989 = pneg %p675
      $region114: #{fwd.3} parent=55 // pred_check_branch
        %991 = sbr.rel (%p989) target = $region116
      $region115: #{fwd.3} parent=55 // pred_region
        %p992 = scmp.lt.s32.totalorder %s75, 3
        %s993 = scalar_select %p992, %s75, 3
        %s994 = scalar_lea.vmem %s49, %s993
      $region116: #{fwd.3} parent=55 // pred_fallthru
        _
      // Predicated region
      $region117: #{fwd.3} parent=55 // pred_check
        %p995 = pneg %p701
      $region118: #{fwd.3} parent=55 // pred_check_branch
        %997 = sbr.rel (%p995) target = $region120
      $region119: #{fwd.3} parent=55 // pred_region
        %p998 = scmp.lt.s32.totalorder %s75, 3
        %s999 = scalar_select %p998, %s75, 3
        %s1000 = scalar_lea.vmem %s51, %s999
      $region120: #{fwd.3} parent=55 // pred_fallthru
        _
      // Predicated region
      $region121: #{fwd.3} parent=55 // pred_check
        %p1001 = pneg %p727
      $region122: #{fwd.3} parent=55 // pred_check_branch
        %1003 = sbr.rel (%p1001) target = $region124
      $region123: #{fwd.3} parent=55 // pred_region
        %p1004 = scmp.lt.s32.totalorder %s75, 3
        %s1005 = scalar_select %p1004, %s75, 3
        %s1006 = smul.addr %s1005, 16
        %s1007 = smul.addr %s1006, 8
        %s1008 = scalar_lea.vmem %s53, %s1007
      $region124: #{fwd.3} parent=55 // pred_fallthru
        _
      // Predicated region
      $region125: #{fwd.3} parent=55 // pred_check
        %p1009 = pneg %p753
      $region126: #{fwd.3} parent=55 // pred_check_branch
        %1011 = sbr.rel (%p1009) target = $region128
      $region127: #{fwd.3} parent=55 // pred_region
        %p1012 = scmp.lt.s32.totalorder %s75, 3
        %s1013 = scalar_select %p1012, %s75, 3
        %s1014 = smul.addr %s1013, 2
        %s1015 = scalar_lea.vmem %s55, %s1014
      $region128: #{fwd.3} parent=55 // pred_fallthru
        _
      // Predicated region
      $region129: #{fwd.3} parent=55 // pred_check
        %p1016 = pneg %p779
      $region130: #{fwd.3} parent=55 // pred_check_branch
        %1018 = sbr.rel (%p1016) target = $region132
      $region131: #{fwd.3} parent=55 // pred_region
        %p1019 = scmp.lt.s32.totalorder %s75, 3
        %s1020 = scalar_select %p1019, %s75, 3
        %s1021 = smul.addr %s1020, 32
        %s1022 = smul.addr %s1021, 8
        %s1023 = scalar_lea.vmem %s57, %s1022
      $region132: #{fwd.3} parent=55 // pred_fallthru
        _
      // Predicated region
      $region133: #{fwd.3} parent=55 // pred_check
        %p1024 = pneg %p805
      $region134: #{fwd.3} parent=55 // pred_check_branch
        %1026 = sbr.rel (%p1024) target = $region136
      $region135: #{fwd.3} parent=55 // pred_region
        %p1027 = scmp.lt.s32.totalorder %s75, 3
        %s1028 = scalar_select %p1027, %s75, 3
        %s1029 = scalar_lea.vmem %s59, %s1028
      $region136: #{fwd.3} parent=55 // pred_fallthru
        _
    $region56: #{fwd.3} parent=5 // pred_fallthru
      _
    %p1030 = scmp.le.s32.totalorder 1, %s67
    %p1031 = scmp.lt.s32.totalorder %s67, 9
    %p1032 = pnand %p1030, %p1031
    %p1033 = pneg %p1032
    // Predicated region
    $region137: #{fwd.3} parent=5 // pred_check
      _
    $region138: #{fwd.3} parent=5 // pred_check_branch
      %1035 = sbr.rel (%p1032) target = $region140
    $region139: #{fwd.3} parent=5 // pred_region
      %s1036 = ssub.s32 %s67, 1
      %p1037 = scmp.lt.s32.totalorder %s76, 1
      %s1038 = scalar_select %p1037, %s76, 1
      %s1039 = smul.addr %s1038, 2
      %s1040 = smul.addr %s1039, 8
      %s1041 = scalar_lea.vmem %s1, %s1040
      %p1042 = pneg %p105
      %p1043 = pneg %p102
      %p1044 = scmp.lt.s32.totalorder %s76, 1
      %s1045 = scalar_select %p1044, %s76, 1
      %s1046 = scalar_lea.vmem %s3, %s1045
      %p1047 = pneg %p131
      %p1048 = pneg %p128
      %p1049 = scmp.lt.s32.totalorder %s76, 1
      %s1050 = scalar_select %p1049, %s76, 1
      %s1051 = smul.addr %s1050, 8
      %s1052 = scalar_lea.vmem %s5, %s1051
      %p1053 = pneg %p157
      %p1054 = pneg %p154
      %p1055 = scmp.lt.s32.totalorder %s76, 1
      %s1056 = scalar_select %p1055, %s76, 1
      %s1057 = scalar_lea.vmem %s7, %s1056
      %p1058 = pneg %p183
      %p1059 = pneg %p180
      %p1060 = scmp.lt.s32.totalorder %s77, 3
      %s1061 = scalar_select %p1060, %s77, 3
      %p1062 = scmp.lt.s32.totalorder %s76, 1
      %s1063 = scalar_select %p1062, %s76, 1
      %s1064 = smul.addr %s1063, 2
      %s1065 = smul.addr %s1061, 4
      %s1066 = sadd.s32 %s1064, %s1065
      %s1067 = smul.addr %s1066, 8
      %s1068 = scalar_lea.vmem %s9, %s1067
      %p1069 = pneg %p211
      %p1070 = pneg %p208
      %p1071 = pneg %p232
      %p1072 = pneg %p229
      %p1073 = pneg %p253
      %p1074 = pneg %p250
      %p1075 = pneg %p274
      %p1076 = pneg %p271
      %p1077 = pneg %p295
      %p1078 = pneg %p292
      %p1079 = pneg %p316
      %p1080 = pneg %p313
      %p1081 = pneg %p337
      %p1082 = pneg %p334
      %p1083 = pneg %p358
      %p1084 = pneg %p355
      %p1085 = pneg %p379
      %p1086 = pneg %p376
      %p1087 = pneg %p400
      %p1088 = pneg %p397
      %p1089 = pneg %p421
      %p1090 = pneg %p418
      %p1091 = scmp.lt.s32.totalorder %s77, 3
      %s1092 = scalar_select %p1091, %s77, 3
      %s1093 = scalar_lea.vmem %s31, %s1092
      %p1094 = pneg %p447
      %p1095 = pneg %p444
      %p1096 = scmp.lt.s32.totalorder %s77, 3
      %s1097 = scalar_select %p1096, %s77, 3
      %s1098 = scalar_lea.vmem %s33, %s1097
      %p1099 = pneg %p473
      %p1100 = pneg %p470
      %p1101 = scmp.lt.s32.totalorder %s77, 3
      %s1102 = scalar_select %p1101, %s77, 3
      %s1103 = smul.addr %s1102, 16
      %s1104 = smul.addr %s1103, 8
      %s1105 = scalar_lea.vmem %s35, %s1104
      %p1106 = pneg %p499
      %p1107 = pneg %p496
      %p1108 = scmp.lt.s32.totalorder %s77, 3
      %s1109 = scalar_select %p1108, %s77, 3
      %s1110 = smul.addr %s1109, 8
      %s1111 = smul.addr %s1110, 8
      %s1112 = scalar_lea.vmem %s37, %s1111
      %p1113 = pneg %p525
      %p1114 = pneg %p522
      %p1115 = scmp.lt.s32.totalorder %s77, 3
      %s1116 = scalar_select %p1115, %s77, 3
      %s1117 = scalar_lea.vmem %s39, %s1116
      %p1118 = pneg %p551
      %p1119 = pneg %p548
      %p1120 = scmp.lt.s32.totalorder %s77, 3
      %s1121 = scalar_select %p1120, %s77, 3
      %s1122 = scalar_lea.vmem %s41, %s1121
      %p1123 = pneg %p577
      %p1124 = pneg %p574
      %p1125 = scmp.lt.s32.totalorder %s77, 3
      %s1126 = scalar_select %p1125, %s77, 3
      %s1127 = smul.addr %s1126, 8
      %s1128 = smul.addr %s1127, 8
      %s1129 = scalar_lea.vmem %s43, %s1128
      %p1130 = pneg %p603
      %p1131 = pneg %p600
      %p1132 = scmp.lt.s32.totalorder %s77, 3
      %s1133 = scalar_select %p1132, %s77, 3
      %s1134 = smul.addr %s1133, 8
      %s1135 = smul.addr %s1134, 8
      %s1136 = scalar_lea.vmem %s45, %s1135
      %p1137 = pneg %p629
      %p1138 = pneg %p626
      %p1139 = scmp.lt.s32.totalorder %s77, 3
      %s1140 = scalar_select %p1139, %s77, 3
      %s1141 = smul.addr %s1140, 8
      %s1142 = smul.addr %s1141, 8
      %s1143 = scalar_lea.vmem %s47, %s1142
      %p1144 = pneg %p655
      %p1145 = pneg %p652
      %p1146 = scmp.lt.s32.totalorder %s77, 3
      %s1147 = scalar_select %p1146, %s77, 3
      %s1148 = scalar_lea.vmem %s49, %s1147
      %p1149 = pneg %p681
      %p1150 = pneg %p678
      %p1151 = scmp.lt.s32.totalorder %s77, 3
      %s1152 = scalar_select %p1151, %s77, 3
      %s1153 = scalar_lea.vmem %s51, %s1152
      %p1154 = pneg %p707
      %p1155 = pneg %p704
      %p1156 = scmp.lt.s32.totalorder %s77, 3
      %s1157 = scalar_select %p1156, %s77, 3
      %s1158 = smul.addr %s1157, 16
      %s1159 = smul.addr %s1158, 8
      %s1160 = scalar_lea.vmem %s53, %s1159
      %p1161 = pneg %p733
      %p1162 = pneg %p730
      %p1163 = scmp.lt.s32.totalorder %s77, 3
      %s1164 = scalar_select %p1163, %s77, 3
      %s1165 = smul.addr %s1164, 2
      %s1166 = scalar_lea.vmem %s55, %s1165
      %p1167 = pneg %p759
      %p1168 = pneg %p756
      %p1169 = scmp.lt.s32.totalorder %s77, 3
      %s1170 = scalar_select %p1169, %s77, 3
      %s1171 = smul.addr %s1170, 32
      %s1172 = smul.addr %s1171, 8
      %s1173 = scalar_lea.vmem %s57, %s1172
      %p1174 = pneg %p785
      %p1175 = pneg %p782
      %p1176 = scmp.lt.s32.totalorder %s77, 3
      %s1177 = scalar_select %p1176, %s77, 3
      %s1178 = scalar_lea.vmem %s59, %s1177
      %p1179 = pneg %p811
      %p1180 = pneg %p808
      %p1181 = pneg %p837
      %p1182 = pneg %p834
      %p1183 = scmp.lt.s32.totalorder %s76, 1
      %s1184 = scalar_select %p1183, %s76, 1
      %s1185 = smul.addr %s1184, 2
      %s1186 = smul.addr %s1185, 8
      %s1187 = scalar_lea.vmem %s61, %s1186
      %p1188 = scmp.lt.s32.totalorder %s76, 1
      %s1189 = scalar_select %p1188, %s76, 1
      %s1190 = smul.addr %s1189, 2
      %s1191 = smul.addr %s1190, 8
      %s1192 = scalar_lea.vmem %s1, %s1191
      %p1193 = scmp.lt.s32.totalorder %s76, 1
      %s1194 = scalar_select %p1193, %s76, 1
      %s1195 = scalar_lea.vmem %s3, %s1194
      %p1196 = scmp.lt.s32.totalorder %s76, 1
      %s1197 = scalar_select %p1196, %s76, 1
      %s1198 = smul.addr %s1197, 8
      %s1199 = scalar_lea.vmem %s5, %s1198
      %p1200 = scmp.lt.s32.totalorder %s76, 1
      %s1201 = scalar_select %p1200, %s76, 1
      %s1202 = scalar_lea.vmem %s7, %s1201
      %p1203 = scmp.lt.s32.totalorder %s77, 3
      %s1204 = scalar_select %p1203, %s77, 3
      %p1205 = scmp.lt.s32.totalorder %s76, 1
      %s1206 = scalar_select %p1205, %s76, 1
      %s1207 = smul.addr %s1206, 2
      %s1208 = smul.addr %s1204, 4
      %s1209 = sadd.s32 %s1207, %s1208
      %s1210 = smul.addr %s1209, 8
      %s1211 = scalar_lea.vmem %s9, %s1210
      %p1212 = scmp.lt.s32.totalorder %s77, 3
      %s1213 = scalar_select %p1212, %s77, 3
      %s1214 = scalar_lea.vmem %s31, %s1213
      %p1215 = scmp.lt.s32.totalorder %s77, 3
      %s1216 = scalar_select %p1215, %s77, 3
      %s1217 = scalar_lea.vmem %s33, %s1216
      %p1218 = scmp.lt.s32.totalorder %s77, 3
      %s1219 = scalar_select %p1218, %s77, 3
      %s1220 = smul.addr %s1219, 16
      %s1221 = smul.addr %s1220, 8
      %s1222 = scalar_lea.vmem %s35, %s1221
      %p1223 = scmp.lt.s32.totalorder %s77, 3
      %s1224 = scalar_select %p1223, %s77, 3
      %s1225 = smul.addr %s1224, 8
      %s1226 = smul.addr %s1225, 8
      %s1227 = scalar_lea.vmem %s37, %s1226
      %p1228 = scmp.lt.s32.totalorder %s77, 3
      %s1229 = scalar_select %p1228, %s77, 3
      %s1230 = scalar_lea.vmem %s39, %s1229
      %p1231 = scmp.lt.s32.totalorder %s77, 3
      %s1232 = scalar_select %p1231, %s77, 3
      %s1233 = scalar_lea.vmem %s41, %s1232
      %p1234 = scmp.lt.s32.totalorder %s77, 3
      %s1235 = scalar_select %p1234, %s77, 3
      %s1236 = smul.addr %s1235, 8
      %s1237 = smul.addr %s1236, 8
      %s1238 = scalar_lea.vmem %s43, %s1237
      %p1239 = scmp.lt.s32.totalorder %s77, 3
      %s1240 = scalar_select %p1239, %s77, 3
      %s1241 = smul.addr %s1240, 8
      %s1242 = smul.addr %s1241, 8
      %s1243 = scalar_lea.vmem %s45, %s1242
      %p1244 = scmp.lt.s32.totalorder %s77, 3
      %s1245 = scalar_select %p1244, %s77, 3
      %s1246 = smul.addr %s1245, 8
      %s1247 = smul.addr %s1246, 8
      %s1248 = scalar_lea.vmem %s47, %s1247
      %p1249 = scmp.lt.s32.totalorder %s77, 3
      %s1250 = scalar_select %p1249, %s77, 3
      %s1251 = scalar_lea.vmem %s49, %s1250
      %p1252 = scmp.lt.s32.totalorder %s77, 3
      %s1253 = scalar_select %p1252, %s77, 3
      %s1254 = scalar_lea.vmem %s51, %s1253
      %p1255 = scmp.lt.s32.totalorder %s77, 3
      %s1256 = scalar_select %p1255, %s77, 3
      %s1257 = smul.addr %s1256, 16
      %s1258 = smul.addr %s1257, 8
      %s1259 = scalar_lea.vmem %s53, %s1258
      %p1260 = scmp.lt.s32.totalorder %s77, 3
      %s1261 = scalar_select %p1260, %s77, 3
      %s1262 = smul.addr %s1261, 2
      %s1263 = scalar_lea.vmem %s55, %s1262
      %p1264 = scmp.lt.s32.totalorder %s77, 3
      %s1265 = scalar_select %p1264, %s77, 3
      %s1266 = smul.addr %s1265, 32
      %s1267 = smul.addr %s1266, 8
      %s1268 = scalar_lea.vmem %s57, %s1267
      %p1269 = scmp.lt.s32.totalorder %s77, 3
      %s1270 = scalar_select %p1269, %s77, 3
      %s1271 = scalar_lea.vmem %s59, %s1270
      %p1272 = scmp.lt.s32.totalorder %s76, 1
      %s1273 = scalar_select %p1272, %s76, 1
      %s1274 = smul.addr %s1273, 2
      %s1275 = smul.addr %s1274, 8
      %s1276 = scalar_lea.vmem %s61, %s1275
      %p1277 = scmp.eq.s32.totalorder %s77, 0
      // Predicated region
      $region141: #{fwd.3} parent=139 // pred_check
        %p1278 = pneg %p1277
      $region142: #{fwd.3} parent=139 // pred_check_branch
        %1280 = sbr.rel (%p1278) target = $region144
      $region143: #{fwd.3} parent=139 // pred_region
        %v1281 = vld [vmem:[%s1195] sm:$0x1]
        %v1282 = vld [vmem:[%s11] sm:$0xff]
        %v1283 = vld [vmem:[%s11 + $0x8] sm:$0xff]
        %v1284 = vld [vmem:[%s11 + $0x10] sm:$0xff]
        %v1285 = vld [vmem:[%s11 + $0x18] sm:$0xff]
        %v1286 = vld [vmem:[%s11 + $0x20] sm:$0xff]
        %v1287 = vld [vmem:[%s11 + $0x28] sm:$0xff]
        %v1288 = vld [vmem:[%s11 + $0x30] sm:$0xff]
        %v1289 = vld [vmem:[%s11 + $0x38] sm:$0xff]
        %v1290 = vld [vmem:[%s13] sm:$0x1]
        %vm1291 = vcmask 523264
        %v1293 = vsel %vm1291, %v1281, 0
        %1295 = vmatprep.subr.mxu0 0.0
        %1296 = vmatpush1.msra.mxu0 %v1282
        %1297 = vmatprep.subr.mxu0 0.0
        %1298 = vmatpush1.msra.mxu0 %v1283
        %1299 = vmatprep.subr.mxu0 0.0
        %1300 = vmatpush1.msra.mxu0 %v1284
        %1301 = vmatprep.subr.mxu0 0.0
        %1302 = vmatpush1.msra.mxu0 %v1285
        %1303 = vmatprep.subr.mxu0 0.0
        %1304 = vmatpush1.msra.mxu0 %v1286
        %1305 = vmatprep.subr.mxu0 0.0
        %1306 = vmatpush1.msra.mxu0 %v1287
        %1307 = vmatprep.subr.mxu0 0.0
        %1308 = vmatpush1.msra.mxu0 %v1288
        %1309 = vmatprep.subr.mxu0 0.0
        %1310 = vmatpush1.msra.mxu0 %v1289
        %1311 = vmatprep.subr.mxu0 0.0
        %1312 = vmatpush1.msra.mxu0 0.0
        %1313 = vmatprep.subr.mxu0 0.0
        %1314 = vmatpush1.msra.mxu0 0.0
        %1315 = vmatprep.subr.mxu0 0.0
        %1316 = vmatpush1.msra.mxu0 0.0
        %1317 = vmatprep.subr.mxu0 0.0
        %1318 = vmatpush1.msra.mxu0 0.0
        %1319 = vmatprep.subr.mxu0 0.0
        %1320 = vmatpush1.msra.mxu0 0.0
        %1321 = vmatprep.subr.mxu0 0.0
        %1322 = vmatpush1.msra.mxu0 0.0
        %1323 = vmatprep.subr.mxu0 0.0
        %1324 = vmatpush1.msra.mxu0 0.0
        %1325 = vmatprep.subr.mxu0 0.0
        %1326 = vmatpush1.msra.mxu0 0.0
        %1327 = vmatprep.subr.mxu0 0.0
        %1328 = vmatpush1.msra.mxu0 0.0
        %1329 = vmatprep.subr.mxu0 0.0
        %1330 = vmatpush1.msra.mxu0 0.0
        %1331 = vmatprep.subr.mxu0 0.0
        %1332 = vmatpush1.msra.mxu0 0.0
        %1333 = vmatprep.subr.mxu0 0.0
        %1334 = vmatpush1.msra.mxu0 0.0
        %1335 = vmatprep.subr.mxu0 0.0
        %1336 = vmatpush1.msra.mxu0 0.0
        %1337 = vmatprep.subr.mxu0 0.0
        %1338 = vmatpush1.msra.mxu0 0.0
        %1339 = vmatprep.subr.mxu0 0.0
        %1340 = vmatpush1.msra.mxu0 0.0
        %1341 = vmatprep.subr.mxu0 0.0
        %1342 = vmatpush1.msra.mxu0 0.0
        %1343 = vmatprep.subr.mxu0 0.0
        %1344 = vmatpush1.msra.mxu0 0.0
        %1345 = vmatprep.subr.mxu0 0.0
        %1346 = vmatpush1.msra.mxu0 0.0
        %1347 = vmatprep.subr.mxu0 0.0
        %1348 = vmatpush1.msra.mxu0 0.0
        %1349 = vmatprep.subr.mxu0 0.0
        %1350 = vmatpush1.msra.mxu0 0.0
        %1351 = vmatprep.subr.mxu0 0.0
        %1352 = vmatpush1.msra.mxu0 0.0
        %1353 = vmatprep.subr.mxu0 0.0
        %1354 = vmatpush1.msra.mxu0 0.0
        %1355 = vmatprep.subr.mxu0 0.0
        %1356 = vmatpush1.msra.mxu0 0.0
        %1357 = vmatprep.subr.mxu0 0.0
        %1358 = vmatpush1.msra.mxu0 0.0
        %1359 = vmatprep.mubr.f32.mxu0 0.0
        %1360 = vmatmul.mubr.f32.gmra.mrb[0].mxu0 %v1293
        %v1361 = vpop.f32.mrb[0].mxu0
        %v1362 = vadd.f32 %v1290, %v1361
        %v1363 = vpop.f32.mrb[0].mxu0
        %1364 = vdwg.mxu0
        %v1365 = vsub.f32 0.0, %v1362
        %v1366 = vmul.f32 %v1365, 1.442695
        %v1367 = vpow.pop %v1366
        %v1368 = vadd.f32 %v1367, 1.0
        %v1369 = vrcp.pop %v1368
        %v1370 = vmul.f32 %v1362, %v1369
        %v1371 = vld [vmem:[%s15] sm:$0xff]
        %v1372 = vld [vmem:[%s15 + $0x8] sm:$0xff]
        %v1373 = vld [vmem:[%s15 + $0x10] sm:$0xff]
        %v1374 = vld [vmem:[%s15 + $0x18] sm:$0xff]
        %v1375 = vld [vmem:[%s15 + $0x20] sm:$0xff]
        %v1376 = vld [vmem:[%s15 + $0x28] sm:$0xff]
        %v1377 = vld [vmem:[%s15 + $0x30] sm:$0xff]
        %v1378 = vld [vmem:[%s15 + $0x38] sm:$0xff]
        %v1379 = vld [vmem:[%s17] sm:$0x1]
        %v1381 = vsel %vm1291, %v1370, 0
        %1383 = vmatprep.subr.mxu0 0.0
        %1384 = vmatpush1.msra.mxu0 %v1371
        %1385 = vmatprep.subr.mxu0 0.0
        %1386 = vmatpush1.msra.mxu0 %v1372
        %1387 = vmatprep.subr.mxu0 0.0
        %1388 = vmatpush1.msra.mxu0 %v1373
        %1389 = vmatprep.subr.mxu0 0.0
        %1390 = vmatpush1.msra.mxu0 %v1374
        %1391 = vmatprep.subr.mxu0 0.0
        %1392 = vmatpush1.msra.mxu0 %v1375
        %1393 = vmatprep.subr.mxu0 0.0
        %1394 = vmatpush1.msra.mxu0 %v1376
        %1395 = vmatprep.subr.mxu0 0.0
        %1396 = vmatpush1.msra.mxu0 %v1377
        %1397 = vmatprep.subr.mxu0 0.0
        %1398 = vmatpush1.msra.mxu0 %v1378
        %1399 = vmatprep.subr.mxu0 0.0
        %1400 = vmatpush1.msra.mxu0 0.0
        %1401 = vmatprep.subr.mxu0 0.0
        %1402 = vmatpush1.msra.mxu0 0.0
        %1403 = vmatprep.subr.mxu0 0.0
        %1404 = vmatpush1.msra.mxu0 0.0
        %1405 = vmatprep.subr.mxu0 0.0
        %1406 = vmatpush1.msra.mxu0 0.0
        %1407 = vmatprep.subr.mxu0 0.0
        %1408 = vmatpush1.msra.mxu0 0.0
        %1409 = vmatprep.subr.mxu0 0.0
        %1410 = vmatpush1.msra.mxu0 0.0
        %1411 = vmatprep.subr.mxu0 0.0
        %1412 = vmatpush1.msra.mxu0 0.0
        %1413 = vmatprep.subr.mxu0 0.0
        %1414 = vmatpush1.msra.mxu0 0.0
        %1415 = vmatprep.subr.mxu0 0.0
        %1416 = vmatpush1.msra.mxu0 0.0
        %1417 = vmatprep.subr.mxu0 0.0
        %1418 = vmatpush1.msra.mxu0 0.0
        %1419 = vmatprep.subr.mxu0 0.0
        %1420 = vmatpush1.msra.mxu0 0.0
        %1421 = vmatprep.subr.mxu0 0.0
        %1422 = vmatpush1.msra.mxu0 0.0
        %1423 = vmatprep.subr.mxu0 0.0
        %1424 = vmatpush1.msra.mxu0 0.0
        %1425 = vmatprep.subr.mxu0 0.0
        %1426 = vmatpush1.msra.mxu0 0.0
        %1427 = vmatprep.subr.mxu0 0.0
        %1428 = vmatpush1.msra.mxu0 0.0
        %1429 = vmatprep.subr.mxu0 0.0
        %1430 = vmatpush1.msra.mxu0 0.0
        %1431 = vmatprep.subr.mxu0 0.0
        %1432 = vmatpush1.msra.mxu0 0.0
        %1433 = vmatprep.subr.mxu0 0.0
        %1434 = vmatpush1.msra.mxu0 0.0
        %1435 = vmatprep.subr.mxu0 0.0
        %1436 = vmatpush1.msra.mxu0 0.0
        %1437 = vmatprep.subr.mxu0 0.0
        %1438 = vmatpush1.msra.mxu0 0.0
        %1439 = vmatprep.subr.mxu0 0.0
        %1440 = vmatpush1.msra.mxu0 0.0
        %1441 = vmatprep.subr.mxu0 0.0
        %1442 = vmatpush1.msra.mxu0 0.0
        %1443 = vmatprep.subr.mxu0 0.0
        %1444 = vmatpush1.msra.mxu0 0.0
        %1445 = vmatprep.subr.mxu0 0.0
        %1446 = vmatpush1.msra.mxu0 0.0
        %1447 = vmatprep.mubr.f32.mxu0 0.0
        %1448 = vmatmul.mubr.f32.gmra.mrb[0].mxu0 %v1381
        %v1449 = vpop.f32.mrb[0].mxu0
        %v1450 = vadd.f32 %v1379, %v1449
        %v1451 = vpop.f32.mrb[0].mxu0
        %1452 = vdwg.mxu0
        %v1453 = vld [vmem:[%s1192] sm:$0xff]
        %v1454 = vld [vmem:[%s1192 + $0x8] sm:$0xff]
        %v1455 = vld [vmem:[%s19] sm:$0xf]
        %v1456 = vld [vmem:[%s21] sm:$0x1]
        %v1458 = vlaneseq
        %v1459 = vshrl.u32 %v1458, 7
        %v1460 = vsub.s32 0, %v1459
        %v1461 = vrot.slane %v1456, %v1460
        %vm1463 = vcmask 31744
        %v1465 = vsel %vm1463, %v1453, 0
        %v1468 = vsel %vm1463, %v1454, 0
        %vm1470 = vcmask 1043456
        %v1472 = vsel %vm1470, %v1455, 0
        %1474 = vmatprep.subr.mxu0 0.0
        %1475 = vmatpush1.msra.mxu0 %v1472
        %1476 = vmatprep.subr.mxu0 0.0
        %1477 = vmatpush1.msra.mxu0 0.0
        %1478 = vmatprep.subr.mxu0 0.0
        %1479 = vmatpush1.msra.mxu0 0.0
        %1480 = vmatprep.subr.mxu0 0.0
        %1481 = vmatpush1.msra.mxu0 0.0
        %1482 = vmatprep.subr.mxu0 0.0
        %1483 = vmatpush1.msra.mxu0 0.0
        %1484 = vmatprep.subr.mxu0 0.0
        %1485 = vmatpush1.msra.mxu0 0.0
        %1486 = vmatprep.subr.mxu0 0.0
        %1487 = vmatpush1.msra.mxu0 0.0
        %1488 = vmatprep.subr.mxu0 0.0
        %1489 = vmatpush1.msra.mxu0 0.0
        %1490 = vmatprep.subr.mxu0 0.0
        %1491 = vmatpush1.msra.mxu0 0.0
        %1492 = vmatprep.subr.mxu0 0.0
        %1493 = vmatpush1.msra.mxu0 0.0
        %1494 = vmatprep.subr.mxu0 0.0
        %1495 = vmatpush1.msra.mxu0 0.0
        %1496 = vmatprep.subr.mxu0 0.0
        %1497 = vmatpush1.msra.mxu0 0.0
        %1498 = vmatprep.subr.mxu0 0.0
        %1499 = vmatpush1.msra.mxu0 0.0
        %1500 = vmatprep.subr.mxu0 0.0
        %1501 = vmatpush1.msra.mxu0 0.0
        %1502 = vmatprep.subr.mxu0 0.0
        %1503 = vmatpush1.msra.mxu0 0.0
        %1504 = vmatprep.subr.mxu0 0.0
        %1505 = vmatpush1.msra.mxu0 0.0
        %1506 = vmatprep.subr.mxu0 0.0
        %1507 = vmatpush1.msra.mxu0 0.0
        %1508 = vmatprep.subr.mxu0 0.0
        %1509 = vmatpush1.msra.mxu0 0.0
        %1510 = vmatprep.subr.mxu0 0.0
        %1511 = vmatpush1.msra.mxu0 0.0
        %1512 = vmatprep.subr.mxu0 0.0
        %1513 = vmatpush1.msra.mxu0 0.0
        %1514 = vmatprep.subr.mxu0 0.0
        %1515 = vmatpush1.msra.mxu0 0.0
        %1516 = vmatprep.subr.mxu0 0.0
        %1517 = vmatpush1.msra.mxu0 0.0
        %1518 = vmatprep.subr.mxu0 0.0
        %1519 = vmatpush1.msra.mxu0 0.0
        %1520 = vmatprep.subr.mxu0 0.0
        %1521 = vmatpush1.msra.mxu0 0.0
        %1522 = vmatprep.subr.mxu0 0.0
        %1523 = vmatpush1.msra.mxu0 0.0
        %1524 = vmatprep.subr.mxu0 0.0
        %1525 = vmatpush1.msra.mxu0 0.0
        %1526 = vmatprep.subr.mxu0 0.0
        %1527 = vmatpush1.msra.mxu0 0.0
        %1528 = vmatprep.subr.mxu0 0.0
        %1529 = vmatpush1.msra.mxu0 0.0
        %1530 = vmatprep.subr.mxu0 0.0
        %1531 = vmatpush1.msra.mxu0 0.0
        %1532 = vmatprep.subr.mxu0 0.0
        %1533 = vmatpush1.msra.mxu0 0.0
        %1534 = vmatprep.subr.mxu0 0.0
        %1535 = vmatpush1.msra.mxu0 0.0
        %1536 = vmatprep.subr.mxu0 0.0
        %1537 = vmatpush1.msra.mxu0 0.0
        %1538 = vmatprep.mubr.f32.mxu0 0.0
        %1539 = vmatmul.mubr.f32.gmra.mrb[0].mxu0 %v1465
        %v1540 = vpop.f32.mrb[0].mxu0
        %v1541 = vadd.f32 %v1461, %v1540
        %v1542 = vpop.f32.mrb[0].mxu0
        %1543 = vmatprep.mubr.f32.mxu0 0.0
        %1544 = vmatmul.mubr.f32.gmra.mrb[0].mxu0 %v1468
        %v1545 = vpop.f32.mrb[0].mxu0
        %v1546 = vadd.f32 %v1461, %v1545
        %v1547 = vpop.f32.mrb[0].mxu0
        %1548 = vdwg.mxu0
        %v1549 = vlaneseq
        %v1550 = vshrl.u32 %v1549, 7
        %v1551 = vsub.s32 0, %v1550
        %v1552 = vrot.slane %v1450, %v1551
        %v1553 = vadd.f32 %v1541, %v1552
        %v1554 = vadd.f32 %v1546, %v1552
        %1555 = vst.msk [vmem:[#allocation2] sm:$0xff] %vm1291, %v1553
        %1556 = vst.msk [vmem:[#allocation2 + $0x8] sm:$0xff] %vm1291, %v1554
        %v1557 = vld [vmem:[%s1199] sm:$0xff]
        %v1558 = vld [vmem:[%s23] sm:$0xff]
        %v1559 = vld [vmem:[%s23 + $0x8] sm:$0xff]
        %v1560 = vld [vmem:[%s23 + $0x10] sm:$0xff]
        %v1561 = vld [vmem:[%s23 + $0x18] sm:$0xff]
        %v1562 = vld [vmem:[%s25] sm:$0x1]
        %v1564 = vlaneseq
        %v1565 = vshrl.u32 %v1564, 7
        %v1566 = vsub.s32 0, %v1565
        %v1567 = vrot.slane %v1562, %v1566
        %vm1569 = vcmask 261120
        %v1571 = vsel %vm1569, %v1557, 0
        %1573 = vmatprep.subr.mxu0 0.0
        %1574 = vmatpush1.msra.mxu0 %v1558
        %1575 = vmatprep.subr.mxu0 0.0
        %1576 = vmatpush1.msra.mxu0 %v1559
        %1577 = vmatprep.subr.mxu0 0.0
        %1578 = vmatpush1.msra.mxu0 %v1560
        %1579 = vmatprep.subr.mxu0 0.0
        %1580 = vmatpush1.msra.mxu0 %v1561
        %1581 = vmatprep.subr.mxu0 0.0
        %1582 = vmatpush1.msra.mxu0 0.0
        %1583 = vmatprep.subr.mxu0 0.0
        %1584 = vmatpush1.msra.mxu0 0.0
        %1585 = vmatprep.subr.mxu0 0.0
        %1586 = vmatpush1.msra.mxu0 0.0
        %1587 = vmatprep.subr.mxu0 0.0
        %1588 = vmatpush1.msra.mxu0 0.0
        %1589 = vmatprep.subr.mxu0 0.0
        %1590 = vmatpush1.msra.mxu0 0.0
        %1591 = vmatprep.subr.mxu0 0.0
        %1592 = vmatpush1.msra.mxu0 0.0
        %1593 = vmatprep.subr.mxu0 0.0
        %1594 = vmatpush1.msra.mxu0 0.0
        %1595 = vmatprep.subr.mxu0 0.0
        %1596 = vmatpush1.msra.mxu0 0.0
        %1597 = vmatprep.subr.mxu0 0.0
        %1598 = vmatpush1.msra.mxu0 0.0
        %1599 = vmatprep.subr.mxu0 0.0
        %1600 = vmatpush1.msra.mxu0 0.0
        %1601 = vmatprep.subr.mxu0 0.0
        %1602 = vmatpush1.msra.mxu0 0.0
        %1603 = vmatprep.subr.mxu0 0.0
        %1604 = vmatpush1.msra.mxu0 0.0
        %1605 = vmatprep.subr.mxu0 0.0
        %1606 = vmatpush1.msra.mxu0 0.0
        %1607 = vmatprep.subr.mxu0 0.0
        %1608 = vmatpush1.msra.mxu0 0.0
        %1609 = vmatprep.subr.mxu0 0.0
        %1610 = vmatpush1.msra.mxu0 0.0
        %1611 = vmatprep.subr.mxu0 0.0
        %1612 = vmatpush1.msra.mxu0 0.0
        %1613 = vmatprep.subr.mxu0 0.0
        %1614 = vmatpush1.msra.mxu0 0.0
        %1615 = vmatprep.subr.mxu0 0.0
        %1616 = vmatpush1.msra.mxu0 0.0
        %1617 = vmatprep.subr.mxu0 0.0
        %1618 = vmatpush1.msra.mxu0 0.0
        %1619 = vmatprep.subr.mxu0 0.0
        %1620 = vmatpush1.msra.mxu0 0.0
        %1621 = vmatprep.subr.mxu0 0.0
        %1622 = vmatpush1.msra.mxu0 0.0
        %1623 = vmatprep.subr.mxu0 0.0
        %1624 = vmatpush1.msra.mxu0 0.0
        %1625 = vmatprep.subr.mxu0 0.0
        %1626 = vmatpush1.msra.mxu0 0.0
        %1627 = vmatprep.subr.mxu0 0.0
        %1628 = vmatpush1.msra.mxu0 0.0
        %1629 = vmatprep.subr.mxu0 0.0
        %1630 = vmatpush1.msra.mxu0 0.0
        %1631 = vmatprep.subr.mxu0 0.0
        %1632 = vmatpush1.msra.mxu0 0.0
        %1633 = vmatprep.subr.mxu0 0.0
        %1634 = vmatpush1.msra.mxu0 0.0
        %1635 = vmatprep.subr.mxu0 0.0
        %1636 = vmatpush1.msra.mxu0 0.0
        %1637 = vmatprep.mubr.f32.mxu0 0.0
        %1638 = vmatmul.mubr.f32.gmra.mrb[0].mxu0 %v1571
        %v1639 = vpop.f32.mrb[0].mxu0
        %v1640 = vadd.f32 %v1567, %v1639
        %v1641 = vpop.f32.mrb[0].mxu0
        %1642 = vdwg.mxu0
        %1643 = vst.msk [vmem:[#allocation3] sm:$0xff] %vm1291, %v1640
      $region144: #{fwd.3} parent=139 // pred_fallthru
        _
      %v1644 = vld [vmem:[%s1202] sm:$0x1]
      %v1645 = vsub.f32 %v1644, 1.0
      %v1646 = vmul.f32 %v1645, 1e+09
      %v1647 = vld [vmem:[#allocation2] sm:$0xff]
      %v1648 = vld [vmem:[#allocation2 + $0x8] sm:$0xff]
      %v1649 = vld [vmem:[%s1211] sm:$0xff]
      %v1650 = vld [vmem:[%s1211 + $0x8] sm:$0xff]
      %v1651 = vadd.f32 %v1647, %v1649
      %v1652 = vadd.f32 %v1648, %v1650
      %v1653 = vld [vmem:[#allocation3] sm:$0xff]
      %v1654 = vld [vmem:[%s1214] sm:$0x1]
      %v1655 = vld [vmem:[%s1217] sm:$0x1]
      %vm1656 = vcmask 523264
      %v1657 = vsel %vm1656, %v1651, 0.0
      %1658 = vadd.xlane.f32.xlu0 %v1657
      %v1659 = vpop.xlane.xlu0 %1658
      %v1660 = vsel %vm1656, %v1652, 0.0
      %1661 = vadd.xlane.f32.xlu0 %v1660
      %v1662 = vpop.xlane.xlu0 %1661
      %v1663 = vrcp.pop 64.0
      %v1664 = vmul.f32 %v1659, %v1663
      %v1665 = vmul.f32 %v1662, %v1663
      %v1666 = vsub.f32 %v1651, %v1664
      %v1667 = vsub.f32 %v1652, %v1665
      %v1668 = vmul.f32 %v1666, %v1666
      %v1669 = vmul.f32 %v1667, %v1667
      %v1670 = vsel %vm1656, %v1668, 0.0
      %1671 = vadd.xlane.f32.xlu0 %v1670
      %v1672 = vpop.xlane.xlu0 %1671
      %v1673 = vsel %vm1656, %v1669, 0.0
      %1674 = vadd.xlane.f32.xlu0 %v1673
      %v1675 = vpop.xlane.xlu0 %1674
      %v1676 = vmul.f32 %v1672, %v1663
      %v1677 = vmul.f32 %v1675, %v1663
      %v1678 = vadd.f32 %v1676, 1e-05
      %v1679 = vadd.f32 %v1677, 1e-05
      %v1680 = vrsqrt.pop %v1678
      %v1681 = vrsqrt.pop %v1679
      %v1682 = vmul.f32 %v1666, %v1680
      %v1683 = vmul.f32 %v1667, %v1681
      %v1685 = vlaneseq
      %v1686 = vshrl.u32 %v1685, 7
      %v1687 = vsub.s32 0, %v1686
      %v1688 = vrot.slane %v1654, %v1687
      %v1690 = vmul.f32 %v1682, %v1688
      %v1691 = vmul.f32 %v1683, %v1688
      %v1693 = vlaneseq
      %v1694 = vshrl.u32 %v1693, 7
      %v1695 = vsub.s32 0, %v1694
      %v1696 = vrot.slane %v1655, %v1695
      %v1698 = vadd.f32 %v1690, %v1696
      %v1699 = vadd.f32 %v1691, %v1696
      %v1700 = vld [vmem:[%s1222] sm:$0xff]
      %v1701 = vld [vmem:[%s1222 + $0x8] sm:$0xff]
      %v1702 = vld [vmem:[%s1222 + $0x10] sm:$0xff]
      %v1703 = vld [vmem:[%s1222 + $0x18] sm:$0xff]
      %v1704 = vld [vmem:[%s1222 + $0x20] sm:$0xff]
      %v1705 = vld [vmem:[%s1222 + $0x28] sm:$0xff]
      %v1706 = vld [vmem:[%s1222 + $0x30] sm:$0xff]
      %v1707 = vld [vmem:[%s1222 + $0x38] sm:$0xff]
      %v1708 = vld [vmem:[%s1222 + $0x40] sm:$0xff]
      %v1709 = vld [vmem:[%s1222 + $0x48] sm:$0xff]
      %v1710 = vld [vmem:[%s1222 + $0x50] sm:$0xff]
      %v1711 = vld [vmem:[%s1222 + $0x58] sm:$0xff]
      %v1712 = vld [vmem:[%s1222 + $0x60] sm:$0xff]
      %v1713 = vld [vmem:[%s1222 + $0x68] sm:$0xff]
      %v1714 = vld [vmem:[%s1222 + $0x70] sm:$0xff]
      %v1715 = vld [vmem:[%s1222 + $0x78] sm:$0xff]
      %v1717 = vsel %vm1656, %v1698, 0
      %v1720 = vsel %vm1656, %v1699, 0
      %1722 = vmatprep.subr.mxu0 %v1701
      %1723 = vmatpush1.msra.mxu0 %v1700
      %1724 = vmatprep.subr.mxu0 %v1703
      %1725 = vmatpush1.msra.mxu0 %v1702
      %1726 = vmatprep.subr.mxu0 %v1705
      %1727 = vmatpush1.msra.mxu0 %v1704
      %1728 = vmatprep.subr.mxu0 %v1707
      %1729 = vmatpush1.msra.mxu0 %v1706
      %1730 = vmatprep.subr.mxu0 %v1709
      %1731 = vmatpush1.msra.mxu0 %v1708
      %1732 = vmatprep.subr.mxu0 %v1711
      %1733 = vmatpush1.msra.mxu0 %v1710
      %1734 = vmatprep.subr.mxu0 %v1713
      %1735 = vmatpush1.msra.mxu0 %v1712
      %1736 = vmatprep.subr.mxu0 %v1715
      %1737 = vmatpush1.msra.mxu0 %v1714
      %1738 = vmatprep.subr.mxu0 0.0
      %1739 = vmatpush1.msra.mxu0 0.0
      %1740 = vmatprep.subr.mxu0 0.0
      %1741 = vmatpush1.msra.mxu0 0.0
      %1742 = vmatprep.subr.mxu0 0.0
      %1743 = vmatpush1.msra.mxu0 0.0
      %1744 = vmatprep.subr.mxu0 0.0
      %1745 = vmatpush1.msra.mxu0 0.0
      %1746 = vmatprep.subr.mxu0 0.0
      %1747 = vmatpush1.msra.mxu0 0.0
      %1748 = vmatprep.subr.mxu0 0.0
      %1749 = vmatpush1.msra.mxu0 0.0
      %1750 = vmatprep.subr.mxu0 0.0
      %1751 = vmatpush1.msra.mxu0 0.0
      %1752 = vmatprep.subr.mxu0 0.0
      %1753 = vmatpush1.msra.mxu0 0.0
      %1754 = vmatprep.subr.mxu0 0.0
      %1755 = vmatpush1.msra.mxu0 0.0
      %1756 = vmatprep.subr.mxu0 0.0
      %1757 = vmatpush1.msra.mxu0 0.0
      %1758 = vmatprep.subr.mxu0 0.0
      %1759 = vmatpush1.msra.mxu0 0.0
      %1760 = vmatprep.subr.mxu0 0.0
      %1761 = vmatpush1.msra.mxu0 0.0
      %1762 = vmatprep.subr.mxu0 0.0
      %1763 = vmatpush1.msra.mxu0 0.0
      %1764 = vmatprep.subr.mxu0 0.0
      %1765 = vmatpush1.msra.mxu0 0.0
      %1766 = vmatprep.subr.mxu0 0.0
      %1767 = vmatpush1.msra.mxu0 0.0
      %1768 = vmatprep.subr.mxu0 0.0
      %1769 = vmatpush1.msra.mxu0 0.0
      %1770 = vmatprep.subr.mxu0 0.0
      %1771 = vmatpush1.msra.mxu0 0.0
      %1772 = vmatprep.subr.mxu0 0.0
      %1773 = vmatpush1.msra.mxu0 0.0
      %1774 = vmatprep.subr.mxu0 0.0
      %1775 = vmatpush1.msra.mxu0 0.0
      %1776 = vmatprep.subr.mxu0 0.0
      %1777 = vmatpush1.msra.mxu0 0.0
      %1778 = vmatprep.subr.mxu0 0.0
      %1779 = vmatpush1.msra.mxu0 0.0
      %1780 = vmatprep.subr.mxu0 0.0
      %1781 = vmatpush1.msra.mxu0 0.0
      %1782 = vmatprep.subr.mxu0 0.0
      %1783 = vmatpush1.msra.mxu0 0.0
      %1784 = vmatprep.subr.mxu0 0.0
      %1785 = vmatpush1.msra.mxu0 0.0
      %1786 = vmatprep.mubr.f32.mxu0 0.0
      %1787 = vmatmul.mubr.f32.gmra.mrb[0].mxu0 %v1717
      %v1788 = vpop.f32.mrb[0].mxu0
      %v1789 = vadd.f32 0.0, %v1788
      %v1790 = vpop.f32.mrb[0].mxu0
      %v1791 = vadd.f32 0.0, %v1790
      %1792 = vmatprep.mubr.f32.mxu0 0.0
      %1793 = vmatmul.mubr.f32.gmra.mrb[0].mxu0 %v1720
      %v1794 = vpop.f32.mrb[0].mxu0
      %v1795 = vadd.f32 0.0, %v1794
      %v1796 = vpop.f32.mrb[0].mxu0
      %v1797 = vadd.f32 0.0, %v1796
      %1798 = vdwg.mxu0
      %1801 = vrot.lane.b32.xlu0 %v1789, 64
      %v1802 = vpop.permute.xlu0 %1801
      %1803 = vrot.lane.b32.xlu0 %v1795, 64
      %v1804 = vpop.permute.xlu0 %1803
      %vm1805 = vcmask 261120
      %v1806 = vsel %vm1805, %v1789, 0
      %v1808 = vsel %vm1805, %v1795, 0
      %v1810 = vsel %vm1805, %v1802, 0
      %v1812 = vsel %vm1805, %v1804, 0
      %1814 = vmatprep.subr.mxu0 0.0
      %1815 = vmatpush1.xpose.msra.mxu0 %v1810
      %1816 = vmatprep.subr.mxu0 0.0
      %1817 = vmatpush1.xpose.msra.mxu0 %v1812
      %1818 = vmatprep.subr.mxu0 0.0
      %1819 = vmatpush1.xpose.msra.mxu0 0.0
      %1820 = vmatprep.subr.mxu0 0.0
      %1821 = vmatpush1.xpose.msra.mxu0 0.0
      %1822 = vmatprep.subr.mxu0 0.0
      %1823 = vmatpush1.xpose.msra.mxu0 0.0
      %1824 = vmatprep.subr.mxu0 0.0
      %1825 = vmatpush1.xpose.msra.mxu0 0.0
      %1826 = vmatprep.subr.mxu0 0.0
      %1827 = vmatpush1.xpose.msra.mxu0 0.0
      %1828 = vmatprep.subr.mxu0 0.0
      %1829 = vmatpush1.xpose.msra.mxu0 0.0
      %1830 = vmatprep.subr.mxu0 0.0
      %1831 = vmatpush1.xpose.msra.mxu0 0.0
      %1832 = vmatprep.subr.mxu0 0.0
      %1833 = vmatpush1.xpose.msra.mxu0 0.0
      %1834 = vmatprep.subr.mxu0 0.0
      %1835 = vmatpush1.xpose.msra.mxu0 0.0
      %1836 = vmatprep.subr.mxu0 0.0
      %1837 = vmatpush1.xpose.msra.mxu0 0.0
      %1838 = vmatprep.subr.mxu0 0.0
      %1839 = vmatpush1.xpose.msra.mxu0 0.0
      %1840 = vmatprep.subr.mxu0 0.0
      %1841 = vmatpush1.xpose.msra.mxu0 0.0
      %1842 = vmatprep.subr.mxu0 0.0
      %1843 = vmatpush1.xpose.msra.mxu0 0.0
      %1844 = vmatprep.subr.mxu0 0.0
      %1845 = vmatpush1.xpose.msra.mxu0 0.0
      %1846 = vmatprep.subr.mxu0 0.0
      %1847 = vmatpush1.xpose.msra.mxu0 0.0
      %1848 = vmatprep.subr.mxu0 0.0
      %1849 = vmatpush1.xpose.msra.mxu0 0.0
      %1850 = vmatprep.subr.mxu0 0.0
      %1851 = vmatpush1.xpose.msra.mxu0 0.0
      %1852 = vmatprep.subr.mxu0 0.0
      %1853 = vmatpush1.xpose.msra.mxu0 0.0
      %1854 = vmatprep.subr.mxu0 0.0
      %1855 = vmatpush1.xpose.msra.mxu0 0.0
      %1856 = vmatprep.subr.mxu0 0.0
      %1857 = vmatpush1.xpose.msra.mxu0 0.0
      %1858 = vmatprep.subr.mxu0 0.0
      %1859 = vmatpush1.xpose.msra.mxu0 0.0
      %1860 = vmatprep.subr.mxu0 0.0
      %1861 = vmatpush1.xpose.msra.mxu0 0.0
      %1862 = vmatprep.subr.mxu0 0.0
      %1863 = vmatpush1.xpose.msra.mxu0 0.0
      %1864 = vmatprep.subr.mxu0 0.0
      %1865 = vmatpush1.xpose.msra.mxu0 0.0
      %1866 = vmatprep.subr.mxu0 0.0
      %1867 = vmatpush1.xpose.msra.mxu0 0.0
      %1868 = vmatprep.subr.mxu0 0.0
      %1869 = vmatpush1.xpose.msra.mxu0 0.0
      %1870 = vmatprep.subr.mxu0 0.0
      %1871 = vmatpush1.xpose.msra.mxu0 0.0
      %1872 = vmatprep.subr.mxu0 0.0
      %1873 = vmatpush1.xpose.msra.mxu0 0.0
      %1874 = vmatprep.subr.mxu0 0.0
      %1875 = vmatpush1.xpose.msra.mxu0 0.0
      %1876 = vmatprep.subr.mxu0 0.0
      %1877 = vmatpush1.xpose.msra.mxu0 0.0
      %1878 = vmatprep.mubr.f32.mxu0 0.0
      %1879 = vmatmul.mubr.f32.gmra.mrb[0].mxu0 %v1806
      %v1880 = vpop.f32.mrb[0].mxu0
      %v1881 = vadd.f32 0.0, %v1880
      %v1882 = vpop.f32.mrb[0].mxu0
      %1883 = vmatprep.mubr.f32.mxu0 0.0
      %1884 = vmatmul.mubr.f32.gmra.mrb[0].mxu0 %v1808
      %v1885 = vpop.f32.mrb[0].mxu0
      %v1886 = vadd.f32 0.0, %v1885
      %v1887 = vpop.f32.mrb[0].mxu0
      %1888 = vdwg.mxu0
      %v1889 = vmul.f32 %v1881, 0.17677669
      %v1890 = vmul.f32 %v1886, 0.17677669
      %vm1891 = vcmask 130048
      %v1892 = vsel %vm1891, %v1889, -inf
      %1893 = vmax.xlane.f32.xlu0 %v1892
      %v1894 = vpop.xlane.xlu0 %1893
      %v1895 = vsel %vm1891, %v1890, -inf
      %1896 = vmax.xlane.f32.xlu0 %v1895
      %v1897 = vpop.xlane.xlu0 %1896
      %v1898 = vsub.f32 %v1889, %v1894
      %v1899 = vsub.f32 %v1890, %v1897
      %v1900 = vmul.f32 %v1898, 1.442695
      %v1901 = vpow.pop %v1900
      %v1902 = vmul.f32 %v1899, 1.442695
      %v1903 = vpow.pop %v1902
      %v1904 = vsel %vm1891, %v1901, 0.0
      %1905 = vadd.xlane.f32.xlu0 %v1904
      %v1906 = vpop.xlane.xlu0 %1905
      %v1907 = vsel %vm1891, %v1903, 0.0
      %1908 = vadd.xlane.f32.xlu0 %v1907
      %v1909 = vpop.xlane.xlu0 %1908
      %v1910 = vrcp.pop %v1906
      %v1911 = vrcp.pop %v1909
      %v1912 = vmul.f32 %v1901, %v1910
      %v1913 = vmul.f32 %v1903, %v1911
      %v1915 = vsel %vm1891, %v1912, 0
      %v1918 = vsel %vm1891, %v1913, 0
      %1920 = vmatprep.subr.mxu0 0.0
      %1921 = vmatpush1.msra.mxu0 %v1791
      %1922 = vmatprep.subr.mxu0 0.0
      %1923 = vmatpush1.msra.mxu0 %v1797
      %1924 = vmatprep.subr.mxu0 0.0
      %1925 = vmatpush1.msra.mxu0 0.0
      %1926 = vmatprep.subr.mxu0 0.0
      %1927 = vmatpush1.msra.mxu0 0.0
      %1928 = vmatprep.subr.mxu0 0.0
      %1929 = vmatpush1.msra.mxu0 0.0
      %1930 = vmatprep.subr.mxu0 0.0
      %1931 = vmatpush1.msra.mxu0 0.0
      %1932 = vmatprep.subr.mxu0 0.0
      %1933 = vmatpush1.msra.mxu0 0.0
      %1934 = vmatprep.subr.mxu0 0.0
      %1935 = vmatpush1.msra.mxu0 0.0
      %1936 = vmatprep.subr.mxu0 0.0
      %1937 = vmatpush1.msra.mxu0 0.0
      %1938 = vmatprep.subr.mxu0 0.0
      %1939 = vmatpush1.msra.mxu0 0.0
      %1940 = vmatprep.subr.mxu0 0.0
      %1941 = vmatpush1.msra.mxu0 0.0
      %1942 = vmatprep.subr.mxu0 0.0
      %1943 = vmatpush1.msra.mxu0 0.0
      %1944 = vmatprep.subr.mxu0 0.0
      %1945 = vmatpush1.msra.mxu0 0.0
      %1946 = vmatprep.subr.mxu0 0.0
      %1947 = vmatpush1.msra.mxu0 0.0
      %1948 = vmatprep.subr.mxu0 0.0
      %1949 = vmatpush1.msra.mxu0 0.0
      %1950 = vmatprep.subr.mxu0 0.0
      %1951 = vmatpush1.msra.mxu0 0.0
      %1952 = vmatprep.subr.mxu0 0.0
      %1953 = vmatpush1.msra.mxu0 0.0
      %1954 = vmatprep.subr.mxu0 0.0
      %1955 = vmatpush1.msra.mxu0 0.0
      %1956 = vmatprep.subr.mxu0 0.0
      %1957 = vmatpush1.msra.mxu0 0.0
      %1958 = vmatprep.subr.mxu0 0.0
      %1959 = vmatpush1.msra.mxu0 0.0
      %1960 = vmatprep.subr.mxu0 0.0
      %1961 = vmatpush1.msra.mxu0 0.0
      %1962 = vmatprep.subr.mxu0 0.0
      %1963 = vmatpush1.msra.mxu0 0.0
      %1964 = vmatprep.subr.mxu0 0.0
      %1965 = vmatpush1.msra.mxu0 0.0
      %1966 = vmatprep.subr.mxu0 0.0
      %1967 = vmatpush1.msra.mxu0 0.0
      %1968 = vmatprep.subr.mxu0 0.0
      %1969 = vmatpush1.msra.mxu0 0.0
      %1970 = vmatprep.subr.mxu0 0.0
      %1971 = vmatpush1.msra.mxu0 0.0
      %1972 = vmatprep.subr.mxu0 0.0
      %1973 = vmatpush1.msra.mxu0 0.0
      %1974 = vmatprep.subr.mxu0 0.0
      %1975 = vmatpush1.msra.mxu0 0.0
      %1976 = vmatprep.subr.mxu0 0.0
      %1977 = vmatpush1.msra.mxu0 0.0
      %1978 = vmatprep.subr.mxu0 0.0
      %1979 = vmatpush1.msra.mxu0 0.0
      %1980 = vmatprep.subr.mxu0 0.0
      %1981 = vmatpush1.msra.mxu0 0.0
      %1982 = vmatprep.subr.mxu0 0.0
      %1983 = vmatpush1.msra.mxu0 0.0
      %1984 = vmatprep.mubr.f32.mxu0 0.0
      %1985 = vmatmul.mubr.f32.gmra.mrb[0].mxu0 %v1915
      %v1986 = vpop.f32.mrb[0].mxu0
      %v1987 = vadd.f32 0.0, %v1986
      %v1988 = vpop.f32.mrb[0].mxu0
      %1989 = vmatprep.mubr.f32.mxu0 0.0
      %1990 = vmatmul.mubr.f32.gmra.mrb[0].mxu0 %v1918
      %v1991 = vpop.f32.mrb[0].mxu0
      %v1992 = vadd.f32 0.0, %v1991
      %v1993 = vpop.f32.mrb[0].mxu0
      %1994 = vdwg.mxu0
      %1995 = vst.msk [vmem:[#allocation4] sm:$0xff] %vm1805, %v1987
      %1996 = vst.msk [vmem:[#allocation4 + $0x8] sm:$0xff] %vm1805, %v1992
      %1997 = vrot.lane.b32.xlu0 %v1789, 96
      %v1998 = vpop.permute.xlu0 %1997
      %1999 = vrot.lane.b32.xlu0 %v1795, 96
      %v2000 = vpop.permute.xlu0 %1999
      %2001 = vrot.lane.b32.xlu0 %v1789, 32
      %v2002 = vpop.permute.xlu0 %2001
      %2003 = vrot.lane.b32.xlu0 %v1795, 32
      %v2004 = vpop.permute.xlu0 %2003
      %v2005 = vsel %vm1805, %v1998, 0
      %v2007 = vsel %vm1805, %v2000, 0
      %v2009 = vsel %vm1805, %v2002, 0
      %v2011 = vsel %vm1805, %v2004, 0
      %2013 = vmatprep.subr.mxu0 0.0
      %2014 = vmatpush1.xpose.msra.mxu0 %v2009
      %2015 = vmatprep.subr.mxu0 0.0
      %2016 = vmatpush1.xpose.msra.mxu0 %v2011
      %2017 = vmatprep.subr.mxu0 0.0
      %2018 = vmatpush1.xpose.msra.mxu0 0.0
      %2019 = vmatprep.subr.mxu0 0.0
      %2020 = vmatpush1.xpose.msra.mxu0 0.0
      %2021 = vmatprep.subr.mxu0 0.0
      %2022 = vmatpush1.xpose.msra.mxu0 0.0
      %2023 = vmatprep.subr.mxu0 0.0
      %2024 = vmatpush1.xpose.msra.mxu0 0.0
      %2025 = vmatprep.subr.mxu0 0.0
      %2026 = vmatpush1.xpose.msra.mxu0 0.0
      %2027 = vmatprep.subr.mxu0 0.0
      %2028 = vmatpush1.xpose.msra.mxu0 0.0
      %2029 = vmatprep.subr.mxu0 0.0
      %2030 = vmatpush1.xpose.msra.mxu0 0.0
      %2031 = vmatprep.subr.mxu0 0.0
      %2032 = vmatpush1.xpose.msra.mxu0 0.0
      %2033 = vmatprep.subr.mxu0 0.0
      %2034 = vmatpush1.xpose.msra.mxu0 0.0
      %2035 = vmatprep.subr.mxu0 0.0
      %2036 = vmatpush1.xpose.msra.mxu0 0.0
      %2037 = vmatprep.subr.mxu0 0.0
      %2038 = vmatpush1.xpose.msra.mxu0 0.0
      %2039 = vmatprep.subr.mxu0 0.0
      %2040 = vmatpush1.xpose.msra.mxu0 0.0
      %2041 = vmatprep.subr.mxu0 0.0
      %2042 = vmatpush1.xpose.msra.mxu0 0.0
      %2043 = vmatprep.subr.mxu0 0.0
      %2044 = vmatpush1.xpose.msra.mxu0 0.0
      %2045 = vmatprep.subr.mxu0 0.0
      %2046 = vmatpush1.xpose.msra.mxu0 0.0
      %2047 = vmatprep.subr.mxu0 0.0
      %2048 = vmatpush1.xpose.msra.mxu0 0.0
      %2049 = vmatprep.subr.mxu0 0.0
      %2050 = vmatpush1.xpose.msra.mxu0 0.0
      %2051 = vmatprep.subr.mxu0 0.0
      %2052 = vmatpush1.xpose.msra.mxu0 0.0
      %2053 = vmatprep.subr.mxu0 0.0
      %2054 = vmatpush1.xpose.msra.mxu0 0.0
      %2055 = vmatprep.subr.mxu0 0.0
      %2056 = vmatpush1.xpose.msra.mxu0 0.0
      %2057 = vmatprep.subr.mxu0 0.0
      %2058 = vmatpush1.xpose.msra.mxu0 0.0
      %2059 = vmatprep.subr.mxu0 0.0
      %2060 = vmatpush1.xpose.msra.mxu0 0.0
      %2061 = vmatprep.subr.mxu0 0.0
      %2062 = vmatpush1.xpose.msra.mxu0 0.0
      %2063 = vmatprep.subr.mxu0 0.0
      %2064 = vmatpush1.xpose.msra.mxu0 0.0
      %2065 = vmatprep.subr.mxu0 0.0
      %2066 = vmatpush1.xpose.msra.mxu0 0.0
      %2067 = vmatprep.subr.mxu0 0.0
      %2068 = vmatpush1.xpose.msra.mxu0 0.0
      %2069 = vmatprep.subr.mxu0 0.0
      %2070 = vmatpush1.xpose.msra.mxu0 0.0
      %2071 = vmatprep.subr.mxu0 0.0
      %2072 = vmatpush1.xpose.msra.mxu0 0.0
      %2073 = vmatprep.subr.mxu0 0.0
      %2074 = vmatpush1.xpose.msra.mxu0 0.0
      %2075 = vmatprep.subr.mxu0 0.0
      %2076 = vmatpush1.xpose.msra.mxu0 0.0
      %2077 = vmatprep.mubr.f32.mxu0 0.0
      %2078 = vmatmul.mubr.f32.gmra.mrb[0].mxu0 %v2005
      %v2079 = vpop.f32.mrb[0].mxu0
      %v2080 = vadd.f32 0.0, %v2079
      %v2081 = vpop.f32.mrb[0].mxu0
      %2082 = vmatprep.mubr.f32.mxu0 0.0
      %2083 = vmatmul.mubr.f32.gmra.mrb[0].mxu0 %v2007
      %v2084 = vpop.f32.mrb[0].mxu0
      %v2085 = vadd.f32 0.0, %v2084
      %v2086 = vpop.f32.mrb[0].mxu0
      %2087 = vdwg.mxu0
      %v2088 = vmul.f32 %v2080, 0.17677669
      %v2089 = vmul.f32 %v2085, 0.17677669
      %v2090 = vsel %vm1891, %v2088, -inf
      %2091 = vmax.xlane.f32.xlu0 %v2090
      %v2092 = vpop.xlane.xlu0 %2091
      %v2093 = vsel %vm1891, %v2089, -inf
      %2094 = vmax.xlane.f32.xlu0 %v2093
      %v2095 = vpop.xlane.xlu0 %2094
      %v2096 = vsub.f32 %v2088, %v2092
      %v2097 = vsub.f32 %v2089, %v2095
      %v2098 = vmul.f32 %v2096, 1.442695
      %v2099 = vpow.pop %v2098
      %v2100 = vmul.f32 %v2097, 1.442695
      %v2101 = vpow.pop %v2100
      %v2102 = vsel %vm1891, %v2099, 0.0
      %2103 = vadd.xlane.f32.xlu0 %v2102
      %v2104 = vpop.xlane.xlu0 %2103
      %v2105 = vsel %vm1891, %v2101, 0.0
      %2106 = vadd.xlane.f32.xlu0 %v2105
      %v2107 = vpop.xlane.xlu0 %2106
      %v2108 = vrcp.pop %v2104
      %v2109 = vrcp.pop %v2107
      %v2110 = vmul.f32 %v2099, %v2108
      %v2111 = vmul.f32 %v2101, %v2109
      %2114 = vrot.lane.b32.xlu0 %v1791, 96
      %v2115 = vpop.permute.xlu0 %2114
      %2116 = vrot.lane.b32.xlu0 %v1797, 96
      %v2117 = vpop.permute.xlu0 %2116
      %v2121 = vsel %vm1891, %v2110, 0
      %v2124 = vsel %vm1891, %v2111, 0
      %2126 = vmatprep.subr.mxu0 0.0
      %2127 = vmatpush1.msra.mxu0 %v2115
      %2128 = vmatprep.subr.mxu0 0.0
      %2129 = vmatpush1.msra.mxu0 %v2117
      %2130 = vmatprep.subr.mxu0 0.0
      %2131 = vmatpush1.msra.mxu0 0.0
      %2132 = vmatprep.subr.mxu0 0.0
      %2133 = vmatpush1.msra.mxu0 0.0
      %2134 = vmatprep.subr.mxu0 0.0
      %2135 = vmatpush1.msra.mxu0 0.0
      %2136 = vmatprep.subr.mxu0 0.0
      %2137 = vmatpush1.msra.mxu0 0.0
      %2138 = vmatprep.subr.mxu0 0.0
      %2139 = vmatpush1.msra.mxu0 0.0
      %2140 = vmatprep.subr.mxu0 0.0
      %2141 = vmatpush1.msra.mxu0 0.0
      %2142 = vmatprep.subr.mxu0 0.0
      %2143 = vmatpush1.msra.mxu0 0.0
      %2144 = vmatprep.subr.mxu0 0.0
      %2145 = vmatpush1.msra.mxu0 0.0
      %2146 = vmatprep.subr.mxu0 0.0
      %2147 = vmatpush1.msra.mxu0 0.0
      %2148 = vmatprep.subr.mxu0 0.0
      %2149 = vmatpush1.msra.mxu0 0.0
      %2150 = vmatprep.subr.mxu0 0.0
      %2151 = vmatpush1.msra.mxu0 0.0
      %2152 = vmatprep.subr.mxu0 0.0
      %2153 = vmatpush1.msra.mxu0 0.0
      %2154 = vmatprep.subr.mxu0 0.0
      %2155 = vmatpush1.msra.mxu0 0.0
      %2156 = vmatprep.subr.mxu0 0.0
      %2157 = vmatpush1.msra.mxu0 0.0
      %2158 = vmatprep.subr.mxu0 0.0
      %2159 = vmatpush1.msra.mxu0 0.0
      %2160 = vmatprep.subr.mxu0 0.0
      %2161 = vmatpush1.msra.mxu0 0.0
      %2162 = vmatprep.subr.mxu0 0.0
      %2163 = vmatpush1.msra.mxu0 0.0
      %2164 = vmatprep.subr.mxu0 0.0
      %2165 = vmatpush1.msra.mxu0 0.0
      %2166 = vmatprep.subr.mxu0 0.0
      %2167 = vmatpush1.msra.mxu0 0.0
      %2168 = vmatprep.subr.mxu0 0.0
      %2169 = vmatpush1.msra.mxu0 0.0
      %2170 = vmatprep.subr.mxu0 0.0
      %2171 = vmatpush1.msra.mxu0 0.0
      %2172 = vmatprep.subr.mxu0 0.0
      %2173 = vmatpush1.msra.mxu0 0.0
      %2174 = vmatprep.subr.mxu0 0.0
      %2175 = vmatpush1.msra.mxu0 0.0
      %2176 = vmatprep.subr.mxu0 0.0
      %2177 = vmatpush1.msra.mxu0 0.0
      %2178 = vmatprep.subr.mxu0 0.0
      %2179 = vmatpush1.msra.mxu0 0.0
      %2180 = vmatprep.subr.mxu0 0.0
      %2181 = vmatpush1.msra.mxu0 0.0
      %2182 = vmatprep.subr.mxu0 0.0
      %2183 = vmatpush1.msra.mxu0 0.0
      %2184 = vmatprep.subr.mxu0 0.0
      %2185 = vmatpush1.msra.mxu0 0.0
      %2186 = vmatprep.subr.mxu0 0.0
      %2187 = vmatpush1.msra.mxu0 0.0
      %2188 = vmatprep.subr.mxu0 0.0
      %2189 = vmatpush1.msra.mxu0 0.0
      %2190 = vmatprep.mubr.f32.mxu0 0.0
      %2191 = vmatmul.mubr.f32.gmra.mrb[0].mxu0 %v2121
      %v2192 = vpop.f32.mrb[0].mxu0
      %v2193 = vadd.f32 0.0, %v2192
      %v2194 = vpop.f32.mrb[0].mxu0
      %2195 = vmatprep.mubr.f32.mxu0 0.0
      %2196 = vmatmul.mubr.f32.gmra.mrb[0].mxu0 %v2124
      %v2197 = vpop.f32.mrb[0].mxu0
      %v2198 = vadd.f32 0.0, %v2197
      %v2199 = vpop.f32.mrb[0].mxu0
      %2200 = vdwg.mxu0
      %2203 = vrot.lane.b32.xlu0 %v2193, 32
      %v2204 = vpop.permute.xlu0 %2203
      %2205 = vrot.lane.b32.xlu0 %v2198, 32
      %v2206 = vpop.permute.xlu0 %2205
      %vm2209 = vcmask 523520
      %2210 = vst.msk [vmem:[#allocation4] sm:$0xff] %vm2209, %v2204
      %2211 = vst.msk [vmem:[#allocation4 + $0x8] sm:$0xff] %vm2209, %v2206
      %v2212 = vld [vmem:[#allocation4] sm:$0xff]
      %v2213 = vld [vmem:[#allocation4 + $0x8] sm:$0xff]
      %v2214 = vld [vmem:[%s1227] sm:$0xff]
      %v2215 = vld [vmem:[%s1227 + $0x8] sm:$0xff]
      %v2216 = vld [vmem:[%s1227 + $0x10] sm:$0xff]
      %v2217 = vld [vmem:[%s1227 + $0x18] sm:$0xff]
      %v2218 = vld [vmem:[%s1227 + $0x20] sm:$0xff]
      %v2219 = vld [vmem:[%s1227 + $0x28] sm:$0xff]
      %v2220 = vld [vmem:[%s1227 + $0x30] sm:$0xff]
      %v2221 = vld [vmem:[%s1227 + $0x38] sm:$0xff]
      %v2223 = vsel %vm1656, %v2212, 0
      %v2226 = vsel %vm1656, %v2213, 0
      %2228 = vmatprep.subr.mxu0 0.0
      %2229 = vmatpush1.msra.mxu0 %v2214
      %2230 = vmatprep.subr.mxu0 0.0
      %2231 = vmatpush1.msra.mxu0 %v2215
      %2232 = vmatprep.subr.mxu0 0.0
      %2233 = vmatpush1.msra.mxu0 %v2216
      %2234 = vmatprep.subr.mxu0 0.0
      %2235 = vmatpush1.msra.mxu0 %v2217
      %2236 = vmatprep.subr.mxu0 0.0
      %2237 = vmatpush1.msra.mxu0 %v2218
      %2238 = vmatprep.subr.mxu0 0.0
      %2239 = vmatpush1.msra.mxu0 %v2219
      %2240 = vmatprep.subr.mxu0 0.0
      %2241 = vmatpush1.msra.mxu0 %v2220
      %2242 = vmatprep.subr.mxu0 0.0
      %2243 = vmatpush1.msra.mxu0 %v2221
      %2244 = vmatprep.subr.mxu0 0.0
      %2245 = vmatpush1.msra.mxu0 0.0
      %2246 = vmatprep.subr.mxu0 0.0
      %2247 = vmatpush1.msra.mxu0 0.0
      %2248 = vmatprep.subr.mxu0 0.0
      %2249 = vmatpush1.msra.mxu0 0.0
      %2250 = vmatprep.subr.mxu0 0.0
      %2251 = vmatpush1.msra.mxu0 0.0
      %2252 = vmatprep.subr.mxu0 0.0
      %2253 = vmatpush1.msra.mxu0 0.0
      %2254 = vmatprep.subr.mxu0 0.0
      %2255 = vmatpush1.msra.mxu0 0.0
      %2256 = vmatprep.subr.mxu0 0.0
      %2257 = vmatpush1.msra.mxu0 0.0
      %2258 = vmatprep.subr.mxu0 0.0
      %2259 = vmatpush1.msra.mxu0 0.0
      %2260 = vmatprep.subr.mxu0 0.0
      %2261 = vmatpush1.msra.mxu0 0.0
      %2262 = vmatprep.subr.mxu0 0.0
      %2263 = vmatpush1.msra.mxu0 0.0
      %2264 = vmatprep.subr.mxu0 0.0
      %2265 = vmatpush1.msra.mxu0 0.0
      %2266 = vmatprep.subr.mxu0 0.0
      %2267 = vmatpush1.msra.mxu0 0.0
      %2268 = vmatprep.subr.mxu0 0.0
      %2269 = vmatpush1.msra.mxu0 0.0
      %2270 = vmatprep.subr.mxu0 0.0
      %2271 = vmatpush1.msra.mxu0 0.0
      %2272 = vmatprep.subr.mxu0 0.0
      %2273 = vmatpush1.msra.mxu0 0.0
      %2274 = vmatprep.subr.mxu0 0.0
      %2275 = vmatpush1.msra.mxu0 0.0
      %2276 = vmatprep.subr.mxu0 0.0
      %2277 = vmatpush1.msra.mxu0 0.0
      %2278 = vmatprep.subr.mxu0 0.0
      %2279 = vmatpush1.msra.mxu0 0.0
      %2280 = vmatprep.subr.mxu0 0.0
      %2281 = vmatpush1.msra.mxu0 0.0
      %2282 = vmatprep.subr.mxu0 0.0
      %2283 = vmatpush1.msra.mxu0 0.0
      %2284 = vmatprep.subr.mxu0 0.0
      %2285 = vmatpush1.msra.mxu0 0.0
      %2286 = vmatprep.subr.mxu0 0.0
      %2287 = vmatpush1.msra.mxu0 0.0
      %2288 = vmatprep.subr.mxu0 0.0
      %2289 = vmatpush1.msra.mxu0 0.0
      %2290 = vmatprep.subr.mxu0 0.0
      %2291 = vmatpush1.msra.mxu0 0.0
      %2292 = vmatprep.mubr.f32.mxu0 0.0
      %2293 = vmatmul.mubr.f32.gmra.mrb[0].mxu0 %v2223
      %v2294 = vpop.f32.mrb[0].mxu0
      %v2295 = vadd.f32 0.0, %v2294
      %v2296 = vpop.f32.mrb[0].mxu0
      %2297 = vmatprep.mubr.f32.mxu0 0.0
      %2298 = vmatmul.mubr.f32.gmra.mrb[0].mxu0 %v2226
      %v2299 = vpop.f32.mrb[0].mxu0
      %v2300 = vadd.f32 0.0, %v2299
      %v2301 = vpop.f32.mrb[0].mxu0
      %2302 = vdwg.mxu0
      %v2303 = vadd.f32 %v1651, %v2295
      %v2304 = vadd.f32 %v1652, %v2300
      %v2305 = vld [vmem:[%s1230] sm:$0x1]
      %v2306 = vld [vmem:[%s1233] sm:$0x1]
      %v2307 = vsel %vm1656, %v2303, 0.0
      %2308 = vadd.xlane.f32.xlu0 %v2307
      %v2309 = vpop.xlane.xlu0 %2308
      %v2310 = vsel %vm1656, %v2304, 0.0
      %2311 = vadd.xlane.f32.xlu0 %v2310
      %v2312 = vpop.xlane.xlu0 %2311
      %v2313 = vmul.f32 %v2309, %v1663
      %v2314 = vmul.f32 %v2312, %v1663
      %v2315 = vsub.f32 %v2303, %v2313
      %v2316 = vsub.f32 %v2304, %v2314
      %v2317 = vmul.f32 %v2315, %v2315
      %v2318 = vmul.f32 %v2316, %v2316
      %v2319 = vsel %vm1656, %v2317, 0.0
      %2320 = vadd.xlane.f32.xlu0 %v2319
      %v2321 = vpop.xlane.xlu0 %2320
      %v2322 = vsel %vm1656, %v2318, 0.0
      %2323 = vadd.xlane.f32.xlu0 %v2322
      %v2324 = vpop.xlane.xlu0 %2323
      %v2325 = vmul.f32 %v2321, %v1663
      %v2326 = vmul.f32 %v2324, %v1663
      %v2327 = vadd.f32 %v2325, 1e-05
      %v2328 = vadd.f32 %v2326, 1e-05
      %v2329 = vrsqrt.pop %v2327
      %v2330 = vrsqrt.pop %v2328
      %v2331 = vmul.f32 %v2315, %v2329
      %v2332 = vmul.f32 %v2316, %v2330
      %v2334 = vlaneseq
      %v2335 = vshrl.u32 %v2334, 7
      %v2336 = vsub.s32 0, %v2335
      %v2337 = vrot.slane %v2305, %v2336
      %v2339 = vmul.f32 %v2331, %v2337
      %v2340 = vmul.f32 %v2332, %v2337
      %v2342 = vlaneseq
      %v2343 = vshrl.u32 %v2342, 7
      %v2344 = vsub.s32 0, %v2343
      %v2345 = vrot.slane %v2306, %v2344
      %v2347 = vadd.f32 %v2339, %v2345
      %v2348 = vadd.f32 %v2340, %v2345
      %v2349 = vld [vmem:[%s1238] sm:$0xff]
      %v2350 = vld [vmem:[%s1238 + $0x8] sm:$0xff]
      %v2351 = vld [vmem:[%s1238 + $0x10] sm:$0xff]
      %v2352 = vld [vmem:[%s1238 + $0x18] sm:$0xff]
      %v2353 = vld [vmem:[%s1238 + $0x20] sm:$0xff]
      %v2354 = vld [vmem:[%s1238 + $0x28] sm:$0xff]
      %v2355 = vld [vmem:[%s1238 + $0x30] sm:$0xff]
      %v2356 = vld [vmem:[%s1238 + $0x38] sm:$0xff]
      %v2358 = vsel %vm1656, %v2347, 0
      %v2361 = vsel %vm1656, %v2348, 0
      %2363 = vmatprep.subr.mxu0 0.0
      %2364 = vmatpush1.msra.mxu0 %v2349
      %2365 = vmatprep.subr.mxu0 0.0
      %2366 = vmatpush1.msra.mxu0 %v2350
      %2367 = vmatprep.subr.mxu0 0.0
      %2368 = vmatpush1.msra.mxu0 %v2351
      %2369 = vmatprep.subr.mxu0 0.0
      %2370 = vmatpush1.msra.mxu0 %v2352
      %2371 = vmatprep.subr.mxu0 0.0
      %2372 = vmatpush1.msra.mxu0 %v2353
      %2373 = vmatprep.subr.mxu0 0.0
      %2374 = vmatpush1.msra.mxu0 %v2354
      %2375 = vmatprep.subr.mxu0 0.0
      %2376 = vmatpush1.msra.mxu0 %v2355
      %2377 = vmatprep.subr.mxu0 0.0
      %2378 = vmatpush1.msra.mxu0 %v2356
      %2379 = vmatprep.subr.mxu0 0.0
      %2380 = vmatpush1.msra.mxu0 0.0
      %2381 = vmatprep.subr.mxu0 0.0
      %2382 = vmatpush1.msra.mxu0 0.0
      %2383 = vmatprep.subr.mxu0 0.0
      %2384 = vmatpush1.msra.mxu0 0.0
      %2385 = vmatprep.subr.mxu0 0.0
      %2386 = vmatpush1.msra.mxu0 0.0
      %2387 = vmatprep.subr.mxu0 0.0
      %2388 = vmatpush1.msra.mxu0 0.0
      %2389 = vmatprep.subr.mxu0 0.0
      %2390 = vmatpush1.msra.mxu0 0.0
      %2391 = vmatprep.subr.mxu0 0.0
      %2392 = vmatpush1.msra.mxu0 0.0
      %2393 = vmatprep.subr.mxu0 0.0
      %2394 = vmatpush1.msra.mxu0 0.0
      %2395 = vmatprep.subr.mxu0 0.0
      %2396 = vmatpush1.msra.mxu0 0.0
      %2397 = vmatprep.subr.mxu0 0.0
      %2398 = vmatpush1.msra.mxu0 0.0
      %2399 = vmatprep.subr.mxu0 0.0
      %2400 = vmatpush1.msra.mxu0 0.0
      %2401 = vmatprep.subr.mxu0 0.0
      %2402 = vmatpush1.msra.mxu0 0.0
      %2403 = vmatprep.subr.mxu0 0.0
      %2404 = vmatpush1.msra.mxu0 0.0
      %2405 = vmatprep.subr.mxu0 0.0
      %2406 = vmatpush1.msra.mxu0 0.0
      %2407 = vmatprep.subr.mxu0 0.0
      %2408 = vmatpush1.msra.mxu0 0.0
      %2409 = vmatprep.subr.mxu0 0.0
      %2410 = vmatpush1.msra.mxu0 0.0
      %2411 = vmatprep.subr.mxu0 0.0
      %2412 = vmatpush1.msra.mxu0 0.0
      %2413 = vmatprep.subr.mxu0 0.0
      %2414 = vmatpush1.msra.mxu0 0.0
      %2415 = vmatprep.subr.mxu0 0.0
      %2416 = vmatpush1.msra.mxu0 0.0
      %2417 = vmatprep.subr.mxu0 0.0
      %2418 = vmatpush1.msra.mxu0 0.0
      %2419 = vmatprep.subr.mxu0 0.0
      %2420 = vmatpush1.msra.mxu0 0.0
      %2421 = vmatprep.subr.mxu0 0.0
      %2422 = vmatpush1.msra.mxu0 0.0
      %2423 = vmatprep.subr.mxu0 0.0
      %2424 = vmatpush1.msra.mxu0 0.0
      %2425 = vmatprep.subr.mxu0 0.0
      %2426 = vmatpush1.msra.mxu0 0.0
      %2427 = vmatprep.mubr.f32.mxu0 0.0
      %2428 = vmatmul.mubr.f32.gmra.mrb[0].mxu0 %v2358
      %v2429 = vpop.f32.mrb[0].mxu0
      %v2430 = vadd.f32 0.0, %v2429
      %v2431 = vpop.f32.mrb[0].mxu0
      %2432 = vmatprep.mubr.f32.mxu0 0.0
      %2433 = vmatmul.mubr.f32.gmra.mrb[0].mxu0 %v2361
      %v2434 = vpop.f32.mrb[0].mxu0
      %v2435 = vadd.f32 0.0, %v2434
      %v2436 = vpop.f32.mrb[0].mxu0
      %2437 = vdwg.mxu0
      %v2438 = vld [vmem:[%s1243] sm:$0xff]
      %v2439 = vld [vmem:[%s1243 + $0x8] sm:$0xff]
      %v2440 = vld [vmem:[%s1243 + $0x10] sm:$0xff]
      %v2441 = vld [vmem:[%s1243 + $0x18] sm:$0xff]
      %v2442 = vld [vmem:[%s1243 + $0x20] sm:$0xff]
      %v2443 = vld [vmem:[%s1243 + $0x28] sm:$0xff]
      %v2444 = vld [vmem:[%s1243 + $0x30] sm:$0xff]
      %v2445 = vld [vmem:[%s1243 + $0x38] sm:$0xff]
      %v2447 = vsel %vm1656, %v1653, 0
      %2449 = vmatprep.subr.mxu0 0.0
      %2450 = vmatpush1.msra.mxu0 %v2438
      %2451 = vmatprep.subr.mxu0 0.0
      %2452 = vmatpush1.msra.mxu0 %v2439
      %2453 = vmatprep.subr.mxu0 0.0
      %2454 = vmatpush1.msra.mxu0 %v2440
      %2455 = vmatprep.subr.mxu0 0.0
      %2456 = vmatpush1.msra.mxu0 %v2441
      %2457 = vmatprep.subr.mxu0 0.0
      %2458 = vmatpush1.msra.mxu0 %v2442
      %2459 = vmatprep.subr.mxu0 0.0
      %2460 = vmatpush1.msra.mxu0 %v2443
      %2461 = vmatprep.subr.mxu0 0.0
      %2462 = vmatpush1.msra.mxu0 %v2444
      %2463 = vmatprep.subr.mxu0 0.0
      %2464 = vmatpush1.msra.mxu0 %v2445
      %2465 = vmatprep.subr.mxu0 0.0
      %2466 = vmatpush1.msra.mxu0 0.0
      %2467 = vmatprep.subr.mxu0 0.0
      %2468 = vmatpush1.msra.mxu0 0.0
      %2469 = vmatprep.subr.mxu0 0.0
      %2470 = vmatpush1.msra.mxu0 0.0
      %2471 = vmatprep.subr.mxu0 0.0
      %2472 = vmatpush1.msra.mxu0 0.0
      %2473 = vmatprep.subr.mxu0 0.0
      %2474 = vmatpush1.msra.mxu0 0.0
      %2475 = vmatprep.subr.mxu0 0.0
      %2476 = vmatpush1.msra.mxu0 0.0
      %2477 = vmatprep.subr.mxu0 0.0
      %2478 = vmatpush1.msra.mxu0 0.0
      %2479 = vmatprep.subr.mxu0 0.0
      %2480 = vmatpush1.msra.mxu0 0.0
      %2481 = vmatprep.subr.mxu0 0.0
      %2482 = vmatpush1.msra.mxu0 0.0
      %2483 = vmatprep.subr.mxu0 0.0
      %2484 = vmatpush1.msra.mxu0 0.0
      %2485 = vmatprep.subr.mxu0 0.0
      %2486 = vmatpush1.msra.mxu0 0.0
      %2487 = vmatprep.subr.mxu0 0.0
      %2488 = vmatpush1.msra.mxu0 0.0
      %2489 = vmatprep.subr.mxu0 0.0
      %2490 = vmatpush1.msra.mxu0 0.0
      %2491 = vmatprep.subr.mxu0 0.0
      %2492 = vmatpush1.msra.mxu0 0.0
      %2493 = vmatprep.subr.mxu0 0.0
      %2494 = vmatpush1.msra.mxu0 0.0
      %2495 = vmatprep.subr.mxu0 0.0
      %2496 = vmatpush1.msra.mxu0 0.0
      %2497 = vmatprep.subr.mxu0 0.0
      %2498 = vmatpush1.msra.mxu0 0.0
      %2499 = vmatprep.subr.mxu0 0.0
      %2500 = vmatpush1.msra.mxu0 0.0
      %2501 = vmatprep.subr.mxu0 0.0
      %2502 = vmatpush1.msra.mxu0 0.0
      %2503 = vmatprep.subr.mxu0 0.0
      %2504 = vmatpush1.msra.mxu0 0.0
      %2505 = vmatprep.subr.mxu0 0.0
      %2506 = vmatpush1.msra.mxu0 0.0
      %2507 = vmatprep.subr.mxu0 0.0
      %2508 = vmatpush1.msra.mxu0 0.0
      %2509 = vmatprep.subr.mxu0 0.0
      %2510 = vmatpush1.msra.mxu0 0.0
      %2511 = vmatprep.subr.mxu0 0.0
      %2512 = vmatpush1.msra.mxu0 0.0
      %2513 = vmatprep.mubr.f32.mxu0 0.0
      %2514 = vmatmul.mubr.f32.gmra.mrb[0].mxu0 %v2447
      %v2515 = vpop.f32.mrb[0].mxu0
      %v2516 = vadd.f32 0.0, %v2515
      %v2517 = vpop.f32.mrb[0].mxu0
      %2518 = vdwg.mxu0
      %v2520 = vsel %vm1805, %v2430, 0
      %v2523 = vsel %vm1805, %v2435, 0
      %v2526 = vsel %vm1805, %v2516, 0
      %2528 = vmatprep.subr.mxu0 0.0
      %2529 = vmatpush1.xpose.msra.mxu0 %v2526
      %2530 = vmatprep.subr.mxu0 0.0
      %2531 = vmatpush1.xpose.msra.mxu0 0.0
      %2532 = vmatprep.subr.mxu0 0.0
      %2533 = vmatpush1.xpose.msra.mxu0 0.0
      %2534 = vmatprep.subr.mxu0 0.0
      %2535 = vmatpush1.xpose.msra.mxu0 0.0
      %2536 = vmatprep.subr.mxu0 0.0
      %2537 = vmatpush1.xpose.msra.mxu0 0.0
      %2538 = vmatprep.subr.mxu0 0.0
      %2539 = vmatpush1.xpose.msra.mxu0 0.0
      %2540 = vmatprep.subr.mxu0 0.0
      %2541 = vmatpush1.xpose.msra.mxu0 0.0
      %2542 = vmatprep.subr.mxu0 0.0
      %2543 = vmatpush1.xpose.msra.mxu0 0.0
      %2544 = vmatprep.subr.mxu0 0.0
      %2545 = vmatpush1.xpose.msra.mxu0 0.0
      %2546 = vmatprep.subr.mxu0 0.0
      %2547 = vmatpush1.xpose.msra.mxu0 0.0
      %2548 = vmatprep.subr.mxu0 0.0
      %2549 = vmatpush1.xpose.msra.mxu0 0.0
      %2550 = vmatprep.subr.mxu0 0.0
      %2551 = vmatpush1.xpose.msra.mxu0 0.0
      %2552 = vmatprep.subr.mxu0 0.0
      %2553 = vmatpush1.xpose.msra.mxu0 0.0
      %2554 = vmatprep.subr.mxu0 0.0
      %2555 = vmatpush1.xpose.msra.mxu0 0.0
      %2556 = vmatprep.subr.mxu0 0.0
      %2557 = vmatpush1.xpose.msra.mxu0 0.0
      %2558 = vmatprep.subr.mxu0 0.0
      %2559 = vmatpush1.xpose.msra.mxu0 0.0
      %2560 = vmatprep.subr.mxu0 0.0
      %2561 = vmatpush1.xpose.msra.mxu0 0.0
      %2562 = vmatprep.subr.mxu0 0.0
      %2563 = vmatpush1.xpose.msra.mxu0 0.0
      %2564 = vmatprep.subr.mxu0 0.0
      %2565 = vmatpush1.xpose.msra.mxu0 0.0
      %2566 = vmatprep.subr.mxu0 0.0
      %2567 = vmatpush1.xpose.msra.mxu0 0.0
      %2568 = vmatprep.subr.mxu0 0.0
      %2569 = vmatpush1.xpose.msra.mxu0 0.0
      %2570 = vmatprep.subr.mxu0 0.0
      %2571 = vmatpush1.xpose.msra.mxu0 0.0
      %2572 = vmatprep.subr.mxu0 0.0
      %2573 = vmatpush1.xpose.msra.mxu0 0.0
      %2574 = vmatprep.subr.mxu0 0.0
      %2575 = vmatpush1.xpose.msra.mxu0 0.0
      %2576 = vmatprep.subr.mxu0 0.0
      %2577 = vmatpush1.xpose.msra.mxu0 0.0
      %2578 = vmatprep.subr.mxu0 0.0
      %2579 = vmatpush1.xpose.msra.mxu0 0.0
      %2580 = vmatprep.subr.mxu0 0.0
      %2581 = vmatpush1.xpose.msra.mxu0 0.0
      %2582 = vmatprep.subr.mxu0 0.0
      %2583 = vmatpush1.xpose.msra.mxu0 0.0
      %2584 = vmatprep.subr.mxu0 0.0
      %2585 = vmatpush1.xpose.msra.mxu0 0.0
      %2586 = vmatprep.subr.mxu0 0.0
      %2587 = vmatpush1.xpose.msra.mxu0 0.0
      %2588 = vmatprep.subr.mxu0 0.0
      %2589 = vmatpush1.xpose.msra.mxu0 0.0
      %2590 = vmatprep.subr.mxu0 0.0
      %2591 = vmatpush1.xpose.msra.mxu0 0.0
      %2592 = vmatprep.mubr.f32.mxu0 0.0
      %2593 = vmatmul.mubr.f32.gmra.mrb[0].mxu0 %v2520
      %v2594 = vpop.f32.mrb[0].mxu0
      %v2595 = vadd.f32 0.0, %v2594
      %v2596 = vpop.f32.mrb[0].mxu0
      %2597 = vmatprep.mubr.f32.mxu0 0.0
      %2598 = vmatmul.mubr.f32.gmra.mrb[0].mxu0 %v2523
      %v2599 = vpop.f32.mrb[0].mxu0
      %v2600 = vadd.f32 0.0, %v2599
      %v2601 = vpop.f32.mrb[0].mxu0
      %2602 = vdwg.mxu0
      %v2603 = vmul.f32 %v2595, 0.17677669
      %v2604 = vmul.f32 %v2600, 0.17677669
      %v2606 = vlaneseq
      %v2607 = vshrl.u32 %v2606, 7
      %v2608 = vsub.s32 0, %v2607
      %v2609 = vrot.slane %v1646, %v2608
      %v2611 = vadd.f32 %v2603, %v2609
      %v2612 = vadd.f32 %v2604, %v2609
      %vm2613 = vcmask 64512
      %v2614 = vsel %vm2613, %v2611, -inf
      %2615 = vmax.xlane.f32.xlu0 %v2614
      %v2616 = vpop.xlane.xlu0 %2615
      %v2617 = vsel %vm2613, %v2612, -inf
      %2618 = vmax.xlane.f32.xlu0 %v2617
      %v2619 = vpop.xlane.xlu0 %2618
      %v2620 = vsub.f32 %v2611, %v2616
      %v2621 = vsub.f32 %v2612, %v2619
      %v2622 = vmul.f32 %v2620, 1.442695
      %v2623 = vpow.pop %v2622
      %v2624 = vmul.f32 %v2621, 1.442695
      %v2625 = vpow.pop %v2624
      %v2626 = vsel %vm2613, %v2623, 0.0
      %2627 = vadd.xlane.f32.xlu0 %v2626
      %v2628 = vpop.xlane.xlu0 %2627
      %v2629 = vsel %vm2613, %v2625, 0.0
      %2630 = vadd.xlane.f32.xlu0 %v2629
      %v2631 = vpop.xlane.xlu0 %2630
      %v2632 = vrcp.pop %v2628
      %v2633 = vrcp.pop %v2631
      %v2634 = vmul.f32 %v2623, %v2632
      %v2635 = vmul.f32 %v2625, %v2633
      %2636 = vrot.lane.b32.xlu0 %v2516, 64
      %v2637 = vpop.permute.xlu0 %2636
      %v2640 = vsel %vm2613, %v2634, 0
      %v2643 = vsel %vm2613, %v2635, 0
      %2645 = vmatprep.subr.mxu0 0.0
      %2646 = vmatpush1.msra.mxu0 %v2637
      %2647 = vmatprep.subr.mxu0 0.0
      %2648 = vmatpush1.msra.mxu0 0.0
      %2649 = vmatprep.subr.mxu0 0.0
      %2650 = vmatpush1.msra.mxu0 0.0
      %2651 = vmatprep.subr.mxu0 0.0
      %2652 = vmatpush1.msra.mxu0 0.0
      %2653 = vmatprep.subr.mxu0 0.0
      %2654 = vmatpush1.msra.mxu0 0.0
      %2655 = vmatprep.subr.mxu0 0.0
      %2656 = vmatpush1.msra.mxu0 0.0
      %2657 = vmatprep.subr.mxu0 0.0
      %2658 = vmatpush1.msra.mxu0 0.0
      %2659 = vmatprep.subr.mxu0 0.0
      %2660 = vmatpush1.msra.mxu0 0.0
      %2661 = vmatprep.subr.mxu0 0.0
      %2662 = vmatpush1.msra.mxu0 0.0
      %2663 = vmatprep.subr.mxu0 0.0
      %2664 = vmatpush1.msra.mxu0 0.0
      %2665 = vmatprep.subr.mxu0 0.0
      %2666 = vmatpush1.msra.mxu0 0.0
      %2667 = vmatprep.subr.mxu0 0.0
      %2668 = vmatpush1.msra.mxu0 0.0
      %2669 = vmatprep.subr.mxu0 0.0
      %2670 = vmatpush1.msra.mxu0 0.0
      %2671 = vmatprep.subr.mxu0 0.0
      %2672 = vmatpush1.msra.mxu0 0.0
      %2673 = vmatprep.subr.mxu0 0.0
      %2674 = vmatpush1.msra.mxu0 0.0
      %2675 = vmatprep.subr.mxu0 0.0
      %2676 = vmatpush1.msra.mxu0 0.0
      %2677 = vmatprep.subr.mxu0 0.0
      %2678 = vmatpush1.msra.mxu0 0.0
      %2679 = vmatprep.subr.mxu0 0.0
      %2680 = vmatpush1.msra.mxu0 0.0
      %2681 = vmatprep.subr.mxu0 0.0
      %2682 = vmatpush1.msra.mxu0 0.0
      %2683 = vmatprep.subr.mxu0 0.0
      %2684 = vmatpush1.msra.mxu0 0.0
      %2685 = vmatprep.subr.mxu0 0.0
      %2686 = vmatpush1.msra.mxu0 0.0
      %2687 = vmatprep.subr.mxu0 0.0
      %2688 = vmatpush1.msra.mxu0 0.0
      %2689 = vmatprep.subr.mxu0 0.0
      %2690 = vmatpush1.msra.mxu0 0.0
      %2691 = vmatprep.subr.mxu0 0.0
      %2692 = vmatpush1.msra.mxu0 0.0
      %2693 = vmatprep.subr.mxu0 0.0
      %2694 = vmatpush1.msra.mxu0 0.0
      %2695 = vmatprep.subr.mxu0 0.0
      %2696 = vmatpush1.msra.mxu0 0.0
      %2697 = vmatprep.subr.mxu0 0.0
      %2698 = vmatpush1.msra.mxu0 0.0
      %2699 = vmatprep.subr.mxu0 0.0
      %2700 = vmatpush1.msra.mxu0 0.0
      %2701 = vmatprep.subr.mxu0 0.0
      %2702 = vmatpush1.msra.mxu0 0.0
      %2703 = vmatprep.subr.mxu0 0.0
      %2704 = vmatpush1.msra.mxu0 0.0
      %2705 = vmatprep.subr.mxu0 0.0
      %2706 = vmatpush1.msra.mxu0 0.0
      %2707 = vmatprep.subr.mxu0 0.0
      %2708 = vmatpush1.msra.mxu0 0.0
      %2709 = vmatprep.mubr.f32.mxu0 0.0
      %2710 = vmatmul.mubr.f32.gmra.mrb[0].mxu0 %v2640
      %v2711 = vpop.f32.mrb[0].mxu0
      %v2712 = vadd.f32 0.0, %v2711
      %v2713 = vpop.f32.mrb[0].mxu0
      %2714 = vmatprep.mubr.f32.mxu0 0.0
      %2715 = vmatmul.mubr.f32.gmra.mrb[0].mxu0 %v2643
      %v2716 = vpop.f32.mrb[0].mxu0
      %v2717 = vadd.f32 0.0, %v2716
      %v2718 = vpop.f32.mrb[0].mxu0
      %2719 = vdwg.mxu0
      %2720 = vst.msk [vmem:[#allocation4] sm:$0xff] %vm1805, %v2712
      %2721 = vst.msk [vmem:[#allocation4 + $0x8] sm:$0xff] %vm1805, %v2717
      %2722 = vrot.lane.b32.xlu0 %v2430, 96
      %v2723 = vpop.permute.xlu0 %2722
      %2724 = vrot.lane.b32.xlu0 %v2435, 96
      %v2725 = vpop.permute.xlu0 %2724
      %2726 = vrot.lane.b32.xlu0 %v2516, 96
      %v2727 = vpop.permute.xlu0 %2726
      %v2728 = vsel %vm1805, %v2723, 0
      %v2730 = vsel %vm1805, %v2725, 0
      %v2732 = vsel %vm1805, %v2727, 0
      %2734 = vmatprep.subr.mxu0 0.0
      %2735 = vmatpush1.xpose.msra.mxu0 %v2732
      %2736 = vmatprep.subr.mxu0 0.0
      %2737 = vmatpush1.xpose.msra.mxu0 0.0
      %2738 = vmatprep.subr.mxu0 0.0
      %2739 = vmatpush1.xpose.msra.mxu0 0.0
      %2740 = vmatprep.subr.mxu0 0.0
      %2741 = vmatpush1.xpose.msra.mxu0 0.0
      %2742 = vmatprep.subr.mxu0 0.0
      %2743 = vmatpush1.xpose.msra.mxu0 0.0
      %2744 = vmatprep.subr.mxu0 0.0
      %2745 = vmatpush1.xpose.msra.mxu0 0.0
      %2746 = vmatprep.subr.mxu0 0.0
      %2747 = vmatpush1.xpose.msra.mxu0 0.0
      %2748 = vmatprep.subr.mxu0 0.0
      %2749 = vmatpush1.xpose.msra.mxu0 0.0
      %2750 = vmatprep.subr.mxu0 0.0
      %2751 = vmatpush1.xpose.msra.mxu0 0.0
      %2752 = vmatprep.subr.mxu0 0.0
      %2753 = vmatpush1.xpose.msra.mxu0 0.0
      %2754 = vmatprep.subr.mxu0 0.0
      %2755 = vmatpush1.xpose.msra.mxu0 0.0
      %2756 = vmatprep.subr.mxu0 0.0
      %2757 = vmatpush1.xpose.msra.mxu0 0.0
      %2758 = vmatprep.subr.mxu0 0.0
      %2759 = vmatpush1.xpose.msra.mxu0 0.0
      %2760 = vmatprep.subr.mxu0 0.0
      %2761 = vmatpush1.xpose.msra.mxu0 0.0
      %2762 = vmatprep.subr.mxu0 0.0
      %2763 = vmatpush1.xpose.msra.mxu0 0.0
      %2764 = vmatprep.subr.mxu0 0.0
      %2765 = vmatpush1.xpose.msra.mxu0 0.0
      %2766 = vmatprep.subr.mxu0 0.0
      %2767 = vmatpush1.xpose.msra.mxu0 0.0
      %2768 = vmatprep.subr.mxu0 0.0
      %2769 = vmatpush1.xpose.msra.mxu0 0.0
      %2770 = vmatprep.subr.mxu0 0.0
      %2771 = vmatpush1.xpose.msra.mxu0 0.0
      %2772 = vmatprep.subr.mxu0 0.0
      %2773 = vmatpush1.xpose.msra.mxu0 0.0
      %2774 = vmatprep.subr.mxu0 0.0
      %2775 = vmatpush1.xpose.msra.mxu0 0.0
      %2776 = vmatprep.subr.mxu0 0.0
      %2777 = vmatpush1.xpose.msra.mxu0 0.0
      %2778 = vmatprep.subr.mxu0 0.0
      %2779 = vmatpush1.xpose.msra.mxu0 0.0
      %2780 = vmatprep.subr.mxu0 0.0
      %2781 = vmatpush1.xpose.msra.mxu0 0.0
      %2782 = vmatprep.subr.mxu0 0.0
      %2783 = vmatpush1.xpose.msra.mxu0 0.0
      %2784 = vmatprep.subr.mxu0 0.0
      %2785 = vmatpush1.xpose.msra.mxu0 0.0
      %2786 = vmatprep.subr.mxu0 0.0
      %2787 = vmatpush1.xpose.msra.mxu0 0.0
      %2788 = vmatprep.subr.mxu0 0.0
      %2789 = vmatpush1.xpose.msra.mxu0 0.0
      %2790 = vmatprep.subr.mxu0 0.0
      %2791 = vmatpush1.xpose.msra.mxu0 0.0
      %2792 = vmatprep.subr.mxu0 0.0
      %2793 = vmatpush1.xpose.msra.mxu0 0.0
      %2794 = vmatprep.subr.mxu0 0.0
      %2795 = vmatpush1.xpose.msra.mxu0 0.0
      %2796 = vmatprep.subr.mxu0 0.0
      %2797 = vmatpush1.xpose.msra.mxu0 0.0
      %2798 = vmatprep.mubr.f32.mxu0 0.0
      %2799 = vmatmul.mubr.f32.gmra.mrb[0].mxu0 %v2728
      %v2800 = vpop.f32.mrb[0].mxu0
      %v2801 = vadd.f32 0.0, %v2800
      %v2802 = vpop.f32.mrb[0].mxu0
      %2803 = vmatprep.mubr.f32.mxu0 0.0
      %2804 = vmatmul.mubr.f32.gmra.mrb[0].mxu0 %v2730
      %v2805 = vpop.f32.mrb[0].mxu0
      %v2806 = vadd.f32 0.0, %v2805
      %v2807 = vpop.f32.mrb[0].mxu0
      %2808 = vdwg.mxu0
      %v2809 = vmul.f32 %v2801, 0.17677669
      %v2810 = vmul.f32 %v2806, 0.17677669
      %v2811 = vadd.f32 %v2809, %v2609
      %v2812 = vadd.f32 %v2810, %v2609
      %v2813 = vsel %vm2613, %v2811, -inf
      %2814 = vmax.xlane.f32.xlu0 %v2813
      %v2815 = vpop.xlane.xlu0 %2814
      %v2816 = vsel %vm2613, %v2812, -inf
      %2817 = vmax.xlane.f32.xlu0 %v2816
      %v2818 = vpop.xlane.xlu0 %2817
      %v2819 = vsub.f32 %v2811, %v2815
      %v2820 = vsub.f32 %v2812, %v2818
      %v2821 = vmul.f32 %v2819, 1.442695
      %v2822 = vpow.pop %v2821
      %v2823 = vmul.f32 %v2820, 1.442695
      %v2824 = vpow.pop %v2823
      %v2825 = vsel %vm2613, %v2822, 0.0
      %2826 = vadd.xlane.f32.xlu0 %v2825
      %v2827 = vpop.xlane.xlu0 %2826
      %v2828 = vsel %vm2613, %v2824, 0.0
      %2829 = vadd.xlane.f32.xlu0 %v2828
      %v2830 = vpop.xlane.xlu0 %2829
      %v2831 = vrcp.pop %v2827
      %v2832 = vrcp.pop %v2830
      %v2833 = vmul.f32 %v2822, %v2831
      %v2834 = vmul.f32 %v2824, %v2832
      %2835 = vrot.lane.b32.xlu0 %v2516, 32
      %v2836 = vpop.permute.xlu0 %2835
      %v2839 = vsel %vm2613, %v2833, 0
      %v2842 = vsel %vm2613, %v2834, 0
      %2844 = vmatprep.subr.mxu0 0.0
      %2845 = vmatpush1.msra.mxu0 %v2836
      %2846 = vmatprep.subr.mxu0 0.0
      %2847 = vmatpush1.msra.mxu0 0.0
      %2848 = vmatprep.subr.mxu0 0.0
      %2849 = vmatpush1.msra.mxu0 0.0
      %2850 = vmatprep.subr.mxu0 0.0
      %2851 = vmatpush1.msra.mxu0 0.0
      %2852 = vmatprep.subr.mxu0 0.0
      %2853 = vmatpush1.msra.mxu0 0.0
      %2854 = vmatprep.subr.mxu0 0.0
      %2855 = vmatpush1.msra.mxu0 0.0
      %2856 = vmatprep.subr.mxu0 0.0
      %2857 = vmatpush1.msra.mxu0 0.0
      %2858 = vmatprep.subr.mxu0 0.0
      %2859 = vmatpush1.msra.mxu0 0.0
      %2860 = vmatprep.subr.mxu0 0.0
      %2861 = vmatpush1.msra.mxu0 0.0
      %2862 = vmatprep.subr.mxu0 0.0
      %2863 = vmatpush1.msra.mxu0 0.0
      %2864 = vmatprep.subr.mxu0 0.0
      %2865 = vmatpush1.msra.mxu0 0.0
      %2866 = vmatprep.subr.mxu0 0.0
      %2867 = vmatpush1.msra.mxu0 0.0
      %2868 = vmatprep.subr.mxu0 0.0
      %2869 = vmatpush1.msra.mxu0 0.0
      %2870 = vmatprep.subr.mxu0 0.0
      %2871 = vmatpush1.msra.mxu0 0.0
      %2872 = vmatprep.subr.mxu0 0.0
      %2873 = vmatpush1.msra.mxu0 0.0
      %2874 = vmatprep.subr.mxu0 0.0
      %2875 = vmatpush1.msra.mxu0 0.0
      %2876 = vmatprep.subr.mxu0 0.0
      %2877 = vmatpush1.msra.mxu0 0.0
      %2878 = vmatprep.subr.mxu0 0.0
      %2879 = vmatpush1.msra.mxu0 0.0
      %2880 = vmatprep.subr.mxu0 0.0
      %2881 = vmatpush1.msra.mxu0 0.0
      %2882 = vmatprep.subr.mxu0 0.0
      %2883 = vmatpush1.msra.mxu0 0.0
      %2884 = vmatprep.subr.mxu0 0.0
      %2885 = vmatpush1.msra.mxu0 0.0
      %2886 = vmatprep.subr.mxu0 0.0
      %2887 = vmatpush1.msra.mxu0 0.0
      %2888 = vmatprep.subr.mxu0 0.0
      %2889 = vmatpush1.msra.mxu0 0.0
      %2890 = vmatprep.subr.mxu0 0.0
      %2891 = vmatpush1.msra.mxu0 0.0
      %2892 = vmatprep.subr.mxu0 0.0
      %2893 = vmatpush1.msra.mxu0 0.0
      %2894 = vmatprep.subr.mxu0 0.0
      %2895 = vmatpush1.msra.mxu0 0.0
      %2896 = vmatprep.subr.mxu0 0.0
      %2897 = vmatpush1.msra.mxu0 0.0
      %2898 = vmatprep.subr.mxu0 0.0
      %2899 = vmatpush1.msra.mxu0 0.0
      %2900 = vmatprep.subr.mxu0 0.0
      %2901 = vmatpush1.msra.mxu0 0.0
      %2902 = vmatprep.subr.mxu0 0.0
      %2903 = vmatpush1.msra.mxu0 0.0
      %2904 = vmatprep.subr.mxu0 0.0
      %2905 = vmatpush1.msra.mxu0 0.0
      %2906 = vmatprep.subr.mxu0 0.0
      %2907 = vmatpush1.msra.mxu0 0.0
      %2908 = vmatprep.mubr.f32.mxu0 0.0
      %2909 = vmatmul.mubr.f32.gmra.mrb[0].mxu0 %v2839
      %v2910 = vpop.f32.mrb[0].mxu0
      %v2911 = vadd.f32 0.0, %v2910
      %v2912 = vpop.f32.mrb[0].mxu0
      %2913 = vmatprep.mubr.f32.mxu0 0.0
      %2914 = vmatmul.mubr.f32.gmra.mrb[0].mxu0 %v2842
      %v2915 = vpop.f32.mrb[0].mxu0
      %v2916 = vadd.f32 0.0, %v2915
      %v2917 = vpop.f32.mrb[0].mxu0
      %2918 = vdwg.mxu0
      %2921 = vrot.lane.b32.xlu0 %v2911, 32
      %v2922 = vpop.permute.xlu0 %2921
      %2923 = vrot.lane.b32.xlu0 %v2916, 32
      %v2924 = vpop.permute.xlu0 %2923
      %2927 = vst.msk [vmem:[#allocation4] sm:$0xff] %vm2209, %v2922
      %2928 = vst.msk [vmem:[#allocation4 + $0x8] sm:$0xff] %vm2209, %v2924
      %v2929 = vld [vmem:[#allocation4] sm:$0xff]
      %v2930 = vld [vmem:[#allocation4 + $0x8] sm:$0xff]
      %v2931 = vld [vmem:[%s1248] sm:$0xff]
      %v2932 = vld [vmem:[%s1248 + $0x8] sm:$0xff]
      %v2933 = vld [vmem:[%s1248 + $0x10] sm:$0xff]
      %v2934 = vld [vmem:[%s1248 + $0x18] sm:$0xff]
      %v2935 = vld [vmem:[%s1248 + $0x20] sm:$0xff]
      %v2936 = vld [vmem:[%s1248 + $0x28] sm:$0xff]
      %v2937 = vld [vmem:[%s1248 + $0x30] sm:$0xff]
      %v2938 = vld [vmem:[%s1248 + $0x38] sm:$0xff]
      %v2940 = vsel %vm1656, %v2929, 0
      %v2943 = vsel %vm1656, %v2930, 0
      %2945 = vmatprep.subr.mxu0 0.0
      %2946 = vmatpush1.msra.mxu0 %v2931
      %2947 = vmatprep.subr.mxu0 0.0
      %2948 = vmatpush1.msra.mxu0 %v2932
      %2949 = vmatprep.subr.mxu0 0.0
      %2950 = vmatpush1.msra.mxu0 %v2933
      %2951 = vmatprep.subr.mxu0 0.0
      %2952 = vmatpush1.msra.mxu0 %v2934
      %2953 = vmatprep.subr.mxu0 0.0
      %2954 = vmatpush1.msra.mxu0 %v2935
      %2955 = vmatprep.subr.mxu0 0.0
      %2956 = vmatpush1.msra.mxu0 %v2936
      %2957 = vmatprep.subr.mxu0 0.0
      %2958 = vmatpush1.msra.mxu0 %v2937
      %2959 = vmatprep.subr.mxu0 0.0
      %2960 = vmatpush1.msra.mxu0 %v2938
      %2961 = vmatprep.subr.mxu0 0.0
      %2962 = vmatpush1.msra.mxu0 0.0
      %2963 = vmatprep.subr.mxu0 0.0
      %2964 = vmatpush1.msra.mxu0 0.0
      %2965 = vmatprep.subr.mxu0 0.0
      %2966 = vmatpush1.msra.mxu0 0.0
      %2967 = vmatprep.subr.mxu0 0.0
      %2968 = vmatpush1.msra.mxu0 0.0
      %2969 = vmatprep.subr.mxu0 0.0
      %2970 = vmatpush1.msra.mxu0 0.0
      %2971 = vmatprep.subr.mxu0 0.0
      %2972 = vmatpush1.msra.mxu0 0.0
      %2973 = vmatprep.subr.mxu0 0.0
      %2974 = vmatpush1.msra.mxu0 0.0
      %2975 = vmatprep.subr.mxu0 0.0
      %2976 = vmatpush1.msra.mxu0 0.0
      %2977 = vmatprep.subr.mxu0 0.0
      %2978 = vmatpush1.msra.mxu0 0.0
      %2979 = vmatprep.subr.mxu0 0.0
      %2980 = vmatpush1.msra.mxu0 0.0
      %2981 = vmatprep.subr.mxu0 0.0
      %2982 = vmatpush1.msra.mxu0 0.0
      %2983 = vmatprep.subr.mxu0 0.0
      %2984 = vmatpush1.msra.mxu0 0.0
      %2985 = vmatprep.subr.mxu0 0.0
      %2986 = vmatpush1.msra.mxu0 0.0
      %2987 = vmatprep.subr.mxu0 0.0
      %2988 = vmatpush1.msra.mxu0 0.0
      %2989 = vmatprep.subr.mxu0 0.0
      %2990 = vmatpush1.msra.mxu0 0.0
      %2991 = vmatprep.subr.mxu0 0.0
      %2992 = vmatpush1.msra.mxu0 0.0
      %2993 = vmatprep.subr.mxu0 0.0
      %2994 = vmatpush1.msra.mxu0 0.0
      %2995 = vmatprep.subr.mxu0 0.0
      %2996 = vmatpush1.msra.mxu0 0.0
      %2997 = vmatprep.subr.mxu0 0.0
      %2998 = vmatpush1.msra.mxu0 0.0
      %2999 = vmatprep.subr.mxu0 0.0
      %3000 = vmatpush1.msra.mxu0 0.0
      %3001 = vmatprep.subr.mxu0 0.0
      %3002 = vmatpush1.msra.mxu0 0.0
      %3003 = vmatprep.subr.mxu0 0.0
      %3004 = vmatpush1.msra.mxu0 0.0
      %3005 = vmatprep.subr.mxu0 0.0
      %3006 = vmatpush1.msra.mxu0 0.0
      %3007 = vmatprep.subr.mxu0 0.0
      %3008 = vmatpush1.msra.mxu0 0.0
      %3009 = vmatprep.mubr.f32.mxu0 0.0
      %3010 = vmatmul.mubr.f32.gmra.mrb[0].mxu0 %v2940
      %v3011 = vpop.f32.mrb[0].mxu0
      %v3012 = vadd.f32 0.0, %v3011
      %v3013 = vpop.f32.mrb[0].mxu0
      %3014 = vmatprep.mubr.f32.mxu0 0.0
      %3015 = vmatmul.mubr.f32.gmra.mrb[0].mxu0 %v2943
      %v3016 = vpop.f32.mrb[0].mxu0
      %v3017 = vadd.f32 0.0, %v3016
      %v3018 = vpop.f32.mrb[0].mxu0
      %3019 = vdwg.mxu0
      %v3020 = vadd.f32 %v2303, %v3012
      %v3021 = vadd.f32 %v2304, %v3017
      %v3022 = vld [vmem:[%s1251] sm:$0x1]
      %v3023 = vld [vmem:[%s1254] sm:$0x1]
      %v3024 = vsel %vm1656, %v3020, 0.0
      %3025 = vadd.xlane.f32.xlu0 %v3024
      %v3026 = vpop.xlane.xlu0 %3025
      %v3027 = vsel %vm1656, %v3021, 0.0
      %3028 = vadd.xlane.f32.xlu0 %v3027
      %v3029 = vpop.xlane.xlu0 %3028
      %v3030 = vmul.f32 %v3026, %v1663
      %v3031 = vmul.f32 %v3029, %v1663
      %v3032 = vsub.f32 %v3020, %v3030
      %v3033 = vsub.f32 %v3021, %v3031
      %v3034 = vmul.f32 %v3032, %v3032
      %v3035 = vmul.f32 %v3033, %v3033
      %v3036 = vsel %vm1656, %v3034, 0.0
      %3037 = vadd.xlane.f32.xlu0 %v3036
      %v3038 = vpop.xlane.xlu0 %3037
      %v3039 = vsel %vm1656, %v3035, 0.0
      %3040 = vadd.xlane.f32.xlu0 %v3039
      %v3041 = vpop.xlane.xlu0 %3040
      %v3042 = vmul.f32 %v3038, %v1663
      %v3043 = vmul.f32 %v3041, %v1663
      %v3044 = vadd.f32 %v3042, 1e-05
      %v3045 = vadd.f32 %v3043, 1e-05
      %v3046 = vrsqrt.pop %v3044
      %v3047 = vrsqrt.pop %v3045
      %v3048 = vmul.f32 %v3032, %v3046
      %v3049 = vmul.f32 %v3033, %v3047
      %v3051 = vlaneseq
      %v3052 = vshrl.u32 %v3051, 7
      %v3053 = vsub.s32 0, %v3052
      %v3054 = vrot.slane %v3022, %v3053
      %v3056 = vmul.f32 %v3048, %v3054
      %v3057 = vmul.f32 %v3049, %v3054
      %v3059 = vlaneseq
      %v3060 = vshrl.u32 %v3059, 7
      %v3061 = vsub.s32 0, %v3060
      %v3062 = vrot.slane %v3023, %v3061
      %v3064 = vadd.f32 %v3056, %v3062
      %v3065 = vadd.f32 %v3057, %v3062
      %v3066 = vld [vmem:[%s1259] sm:$0xff]
      %v3067 = vld [vmem:[%s1259 + $0x8] sm:$0xff]
      %v3068 = vld [vmem:[%s1259 + $0x10] sm:$0xff]
      %v3069 = vld [vmem:[%s1259 + $0x18] sm:$0xff]
      %v3070 = vld [vmem:[%s1259 + $0x20] sm:$0xff]
      %v3071 = vld [vmem:[%s1259 + $0x28] sm:$0xff]
      %v3072 = vld [vmem:[%s1259 + $0x30] sm:$0xff]
      %v3073 = vld [vmem:[%s1259 + $0x38] sm:$0xff]
      %v3074 = vld [vmem:[%s1259 + $0x40] sm:$0xff]
      %v3075 = vld [vmem:[%s1259 + $0x48] sm:$0xff]
      %v3076 = vld [vmem:[%s1259 + $0x50] sm:$0xff]
      %v3077 = vld [vmem:[%s1259 + $0x58] sm:$0xff]
      %v3078 = vld [vmem:[%s1259 + $0x60] sm:$0xff]
      %v3079 = vld [vmem:[%s1259 + $0x68] sm:$0xff]
      %v3080 = vld [vmem:[%s1259 + $0x70] sm:$0xff]
      %v3081 = vld [vmem:[%s1259 + $0x78] sm:$0xff]
      %v3082 = vld [vmem:[%s1263] sm:$0x3]
      %v3084 = vlaneseq
      %v3085 = vshrl.u32 %v3084, 7
      %v3086 = vsub.s32 0, %v3085
      %v3087 = vrot.slane %v3082, %v3086
      %v3088 = vlaneseq
      %v3089 = vshrl.u32 %v3088, 7
      %v3090 = vsub.s32 1, %v3089
      %v3091 = vrot.slane %v3082, %v3090
      %v3095 = vsel %vm1656, %v3064, 0
      %v3098 = vsel %vm1656, %v3065, 0
      %3100 = vmatprep.subr.mxu0 %v3067
      %3101 = vmatpush1.msra.mxu0 %v3066
      %3102 = vmatprep.subr.mxu0 %v3069
      %3103 = vmatpush1.msra.mxu0 %v3068
      %3104 = vmatprep.subr.mxu0 %v3071
      %3105 = vmatpush1.msra.mxu0 %v3070
      %3106 = vmatprep.subr.mxu0 %v3073
      %3107 = vmatpush1.msra.mxu0 %v3072
      %3108 = vmatprep.subr.mxu0 %v3075
      %3109 = vmatpush1.msra.mxu0 %v3074
      %3110 = vmatprep.subr.mxu0 %v3077
      %3111 = vmatpush1.msra.mxu0 %v3076
      %3112 = vmatprep.subr.mxu0 %v3079
      %3113 = vmatpush1.msra.mxu0 %v3078
      %3114 = vmatprep.subr.mxu0 %v3081
      %3115 = vmatpush1.msra.mxu0 %v3080
      %3116 = vmatprep.subr.mxu0 0.0
      %3117 = vmatpush1.msra.mxu0 0.0
      %3118 = vmatprep.subr.mxu0 0.0
      %3119 = vmatpush1.msra.mxu0 0.0
      %3120 = vmatprep.subr.mxu0 0.0
      %3121 = vmatpush1.msra.mxu0 0.0
      %3122 = vmatprep.subr.mxu0 0.0
      %3123 = vmatpush1.msra.mxu0 0.0
      %3124 = vmatprep.subr.mxu0 0.0
      %3125 = vmatpush1.msra.mxu0 0.0
      %3126 = vmatprep.subr.mxu0 0.0
      %3127 = vmatpush1.msra.mxu0 0.0
      %3128 = vmatprep.subr.mxu0 0.0
      %3129 = vmatpush1.msra.mxu0 0.0
      %3130 = vmatprep.subr.mxu0 0.0
      %3131 = vmatpush1.msra.mxu0 0.0
      %3132 = vmatprep.subr.mxu0 0.0
      %3133 = vmatpush1.msra.mxu0 0.0
      %3134 = vmatprep.subr.mxu0 0.0
      %3135 = vmatpush1.msra.mxu0 0.0
      %3136 = vmatprep.subr.mxu0 0.0
      %3137 = vmatpush1.msra.mxu0 0.0
      %3138 = vmatprep.subr.mxu0 0.0
      %3139 = vmatpush1.msra.mxu0 0.0
      %3140 = vmatprep.subr.mxu0 0.0
      %3141 = vmatpush1.msra.mxu0 0.0
      %3142 = vmatprep.subr.mxu0 0.0
      %3143 = vmatpush1.msra.mxu0 0.0
      %3144 = vmatprep.subr.mxu0 0.0
      %3145 = vmatpush1.msra.mxu0 0.0
      %3146 = vmatprep.subr.mxu0 0.0
      %3147 = vmatpush1.msra.mxu0 0.0
      %3148 = vmatprep.subr.mxu0 0.0
      %3149 = vmatpush1.msra.mxu0 0.0
      %3150 = vmatprep.subr.mxu0 0.0
      %3151 = vmatpush1.msra.mxu0 0.0
      %3152 = vmatprep.subr.mxu0 0.0
      %3153 = vmatpush1.msra.mxu0 0.0
      %3154 = vmatprep.subr.mxu0 0.0
      %3155 = vmatpush1.msra.mxu0 0.0
      %3156 = vmatprep.subr.mxu0 0.0
      %3157 = vmatpush1.msra.mxu0 0.0
      %3158 = vmatprep.subr.mxu0 0.0
      %3159 = vmatpush1.msra.mxu0 0.0
      %3160 = vmatprep.subr.mxu0 0.0
      %3161 = vmatpush1.msra.mxu0 0.0
      %3162 = vmatprep.subr.mxu0 0.0
      %3163 = vmatpush1.msra.mxu0 0.0
      %3164 = vmatprep.mubr.f32.mxu0 0.0
      %3165 = vmatmul.mubr.f32.gmra.mrb[0].mxu0 %v3095
      %v3166 = vpop.f32.mrb[0].mxu0
      %v3167 = vadd.f32 %v3087, %v3166
      %v3168 = vpop.f32.mrb[0].mxu0
      %v3169 = vadd.f32 %v3091, %v3168
      %3170 = vmatprep.mubr.f32.mxu0 0.0
      %3171 = vmatmul.mubr.f32.gmra.mrb[0].mxu0 %v3098
      %v3172 = vpop.f32.mrb[0].mxu0
      %v3173 = vadd.f32 %v3087, %v3172
      %v3174 = vpop.f32.mrb[0].mxu0
      %v3175 = vadd.f32 %v3091, %v3174
      %3176 = vdwg.mxu0
      %v3177 = vmul.f32 %v3167, %v3167
      %v3178 = vmul.f32 %v3169, %v3169
      %v3179 = vmul.f32 %v3173, %v3173
      %v3180 = vmul.f32 %v3175, %v3175
      %v3181 = vmul.f32 %v3167, %v3177
      %v3182 = vmul.f32 %v3169, %v3178
      %v3183 = vmul.f32 %v3173, %v3179
      %v3184 = vmul.f32 %v3175, %v3180
      %v3185 = vmul.f32 %v3181, 0.044715
      %v3186 = vmul.f32 %v3182, 0.044715
      %v3187 = vmul.f32 %v3183, 0.044715
      %v3188 = vmul.f32 %v3184, 0.044715
      %v3189 = vadd.f32 %v3167, %v3185
      %v3190 = vadd.f32 %v3169, %v3186
      %v3191 = vadd.f32 %v3173, %v3187
      %v3192 = vadd.f32 %v3175, %v3188
      %v3193 = vmul.f32 %v3189, 0.7978846
      %v3194 = vmul.f32 %v3190, 0.7978846
      %v3195 = vmul.f32 %v3191, 0.7978846
      %v3196 = vmul.f32 %v3192, 0.7978846
      %v3197 = vtanh.pop %v3193
      %v3198 = vtanh.pop %v3194
      %v3199 = vtanh.pop %v3195
      %v3200 = vtanh.pop %v3196
      %v3201 = vadd.f32 %v3197, 1.0
      %v3202 = vadd.f32 %v3198, 1.0
      %v3203 = vadd.f32 %v3199, 1.0
      %v3204 = vadd.f32 %v3200, 1.0
      %v3205 = vmul.f32 %v3201, 0.5
      %v3206 = vmul.f32 %v3202, 0.5
      %v3207 = vmul.f32 %v3203, 0.5
      %v3208 = vmul.f32 %v3204, 0.5
      %v3209 = vmul.f32 %v3167, %v3205
      %v3210 = vmul.f32 %v3169, %v3206
      %v3211 = vmul.f32 %v3173, %v3207
      %v3212 = vmul.f32 %v3175, %v3208
      %v3213 = vld [vmem:[%s1268] sm:$0xff]
      %v3214 = vld [vmem:[%s1268 + $0x8] sm:$0xff]
      %v3215 = vld [vmem:[%s1268 + $0x10] sm:$0xff]
      %v3216 = vld [vmem:[%s1268 + $0x18] sm:$0xff]
      %v3217 = vld [vmem:[%s1268 + $0x20] sm:$0xff]
      %v3218 = vld [vmem:[%s1268 + $0x28] sm:$0xff]
      %v3219 = vld [vmem:[%s1268 + $0x30] sm:$0xff]
      %v3220 = vld [vmem:[%s1268 + $0x38] sm:$0xff]
      %v3221 = vld [vmem:[%s1268 + $0x40] sm:$0xff]
      %v3222 = vld [vmem:[%s1268 + $0x48] sm:$0xff]
      %v3223 = vld [vmem:[%s1268 + $0x50] sm:$0xff]
      %v3224 = vld [vmem:[%s1268 + $0x58] sm:$0xff]
      %v3225 = vld [vmem:[%s1268 + $0x60] sm:$0xff]
      %v3226 = vld [vmem:[%s1268 + $0x68] sm:$0xff]
      %v3227 = vld [vmem:[%s1268 + $0x70] sm:$0xff]
      %v3228 = vld [vmem:[%s1268 + $0x78] sm:$0xff]
      %v3229 = vld [vmem:[%s1268 + $0x80] sm:$0xff]
      %v3230 = vld [vmem:[%s1268 + $0x88] sm:$0xff]
      %v3231 = vld [vmem:[%s1268 + $0x90] sm:$0xff]
      %v3232 = vld [vmem:[%s1268 + $0x98] sm:$0xff]
      %v3233 = vld [vmem:[%s1268 + $0xa0] sm:$0xff]
      %v3234 = vld [vmem:[%s1268 + $0xa8] sm:$0xff]
      %v3235 = vld [vmem:[%s1268 + $0xb0] sm:$0xff]
      %v3236 = vld [vmem:[%s1268 + $0xb8] sm:$0xff]
      %v3237 = vld [vmem:[%s1268 + $0xc0] sm:$0xff]
      %v3238 = vld [vmem:[%s1268 + $0xc8] sm:$0xff]
      %v3239 = vld [vmem:[%s1268 + $0xd0] sm:$0xff]
      %v3240 = vld [vmem:[%s1268 + $0xd8] sm:$0xff]
      %v3241 = vld [vmem:[%s1268 + $0xe0] sm:$0xff]
      %v3242 = vld [vmem:[%s1268 + $0xe8] sm:$0xff]
      %v3243 = vld [vmem:[%s1268 + $0xf0] sm:$0xff]
      %v3244 = vld [vmem:[%s1268 + $0xf8] sm:$0xff]
      %3245 = vmatprep.subr.mxu0 0.0
      %3246 = vmatpush1.msra.mxu0 %v3213
      %3247 = vmatprep.subr.mxu0 0.0
      %3248 = vmatpush1.msra.mxu0 %v3214
      %3249 = vmatprep.subr.mxu0 0.0
      %3250 = vmatpush1.msra.mxu0 %v3215
      %3251 = vmatprep.subr.mxu0 0.0
      %3252 = vmatpush1.msra.mxu0 %v3216
      %3253 = vmatprep.subr.mxu0 0.0
      %3254 = vmatpush1.msra.mxu0 %v3217
      %3255 = vmatprep.subr.mxu0 0.0
      %3256 = vmatpush1.msra.mxu0 %v3218
      %3257 = vmatprep.subr.mxu0 0.0
      %3258 = vmatpush1.msra.mxu0 %v3219
      %3259 = vmatprep.subr.mxu0 0.0
      %3260 = vmatpush1.msra.mxu0 %v3220
      %3261 = vmatprep.subr.mxu0 0.0
      %3262 = vmatpush1.msra.mxu0 %v3221
      %3263 = vmatprep.subr.mxu0 0.0
      %3264 = vmatpush1.msra.mxu0 %v3222
      %3265 = vmatprep.subr.mxu0 0.0
      %3266 = vmatpush1.msra.mxu0 %v3223
      %3267 = vmatprep.subr.mxu0 0.0
      %3268 = vmatpush1.msra.mxu0 %v3224
      %3269 = vmatprep.subr.mxu0 0.0
      %3270 = vmatpush1.msra.mxu0 %v3225
      %3271 = vmatprep.subr.mxu0 0.0
      %3272 = vmatpush1.msra.mxu0 %v3226
      %3273 = vmatprep.subr.mxu0 0.0
      %3274 = vmatpush1.msra.mxu0 %v3227
      %3275 = vmatprep.subr.mxu0 0.0
      %3276 = vmatpush1.msra.mxu0 %v3228
      %3277 = vmatprep.subr.mxu0 0.0
      %3278 = vmatpush1.msra.mxu0 %v3229
      %3279 = vmatprep.subr.mxu0 0.0
      %3280 = vmatpush1.msra.mxu0 %v3230
      %3281 = vmatprep.subr.mxu0 0.0
      %3282 = vmatpush1.msra.mxu0 %v3231
      %3283 = vmatprep.subr.mxu0 0.0
      %3284 = vmatpush1.msra.mxu0 %v3232
      %3285 = vmatprep.subr.mxu0 0.0
      %3286 = vmatpush1.msra.mxu0 %v3233
      %3287 = vmatprep.subr.mxu0 0.0
      %3288 = vmatpush1.msra.mxu0 %v3234
      %3289 = vmatprep.subr.mxu0 0.0
      %3290 = vmatpush1.msra.mxu0 %v3235
      %3291 = vmatprep.subr.mxu0 0.0
      %3292 = vmatpush1.msra.mxu0 %v3236
      %3293 = vmatprep.subr.mxu0 0.0
      %3294 = vmatpush1.msra.mxu0 %v3237
      %3295 = vmatprep.subr.mxu0 0.0
      %3296 = vmatpush1.msra.mxu0 %v3238
      %3297 = vmatprep.subr.mxu0 0.0
      %3298 = vmatpush1.msra.mxu0 %v3239
      %3299 = vmatprep.subr.mxu0 0.0
      %3300 = vmatpush1.msra.mxu0 %v3240
      %3301 = vmatprep.subr.mxu0 0.0
      %3302 = vmatpush1.msra.mxu0 %v3241
      %3303 = vmatprep.subr.mxu0 0.0
      %3304 = vmatpush1.msra.mxu0 %v3242
      %3305 = vmatprep.subr.mxu0 0.0
      %3306 = vmatpush1.msra.mxu0 %v3243
      %3307 = vmatprep.subr.mxu0 0.0
      %3308 = vmatpush1.msra.mxu0 %v3244
      %3309 = vmatprep.mubr.f32.mxu0 %v3210
      %3310 = vmatmul.mubr.f32.gmra.mrb[0].mxu0 %v3209
      %v3311 = vpop.f32.mrb[0].mxu0
      %v3312 = vadd.f32 0.0, %v3311
      %v3313 = vpop.f32.mrb[0].mxu0
      %3314 = vmatprep.mubr.f32.mxu0 %v3212
      %3315 = vmatmul.mubr.f32.gmra.mrb[0].mxu0 %v3211
      %v3316 = vpop.f32.mrb[0].mxu0
      %v3317 = vadd.f32 0.0, %v3316
      %v3318 = vpop.f32.mrb[0].mxu0
      %3319 = vdwg.mxu0
      %v3320 = vadd.f32 %v3020, %v3312
      %v3321 = vadd.f32 %v3021, %v3317
      %v3322 = vld [vmem:[%s1271] sm:$0x1]
      %v3324 = vlaneseq
      %v3325 = vshrl.u32 %v3324, 7
      %v3326 = vsub.s32 0, %v3325
      %v3327 = vrot.slane %v3322, %v3326
      %v3329 = vadd.f32 %v3320, %v3327
      %v3330 = vadd.f32 %v3321, %v3327
      %3331 = vst.msk [vmem:[#allocation2] sm:$0xff] %vm1656, %v3329
      %3332 = vst.msk [vmem:[#allocation2 + $0x8] sm:$0xff] %vm1656, %v3330
      %p3333 = scmp.eq.s32.totalorder %s77, 3
      // Predicated region
      $region145: #{fwd.3} parent=139 // pred_check
        %p3334 = pneg %p3333
      $region146: #{fwd.3} parent=139 // pred_check_branch
        %3336 = sbr.rel (%p3334) target = $region148
      $region147: #{fwd.3} parent=139 // pred_region
        %v3337 = vld [vmem:[%s27] sm:$0xff]
        %v3338 = vld [vmem:[%s27 + $0x8] sm:$0xff]
        %v3339 = vld [vmem:[%s27 + $0x10] sm:$0xff]
        %v3340 = vld [vmem:[%s27 + $0x18] sm:$0xff]
        %v3341 = vld [vmem:[%s27 + $0x20] sm:$0xff]
        %v3342 = vld [vmem:[%s27 + $0x28] sm:$0xff]
        %v3343 = vld [vmem:[%s27 + $0x30] sm:$0xff]
        %v3344 = vld [vmem:[%s27 + $0x38] sm:$0xff]
        %v3345 = vld [vmem:[%s29] sm:$0x1]
        %v3347 = vlaneseq
        %v3348 = vshrl.u32 %v3347, 7
        %v3349 = vsub.s32 0, %v3348
        %v3350 = vrot.slane %v3345, %v3349
        %v3353 = vsel %vm1656, %v3329, 0
        %v3356 = vsel %vm1656, %v3330, 0
        %3358 = vmatprep.subr.mxu0 0.0
        %3359 = vmatpush1.msra.mxu0 %v3337
        %3360 = vmatprep.subr.mxu0 0.0
        %3361 = vmatpush1.msra.mxu0 %v3338
        %3362 = vmatprep.subr.mxu0 0.0
        %3363 = vmatpush1.msra.mxu0 %v3339
        %3364 = vmatprep.subr.mxu0 0.0
        %3365 = vmatpush1.msra.mxu0 %v3340
        %3366 = vmatprep.subr.mxu0 0.0
        %3367 = vmatpush1.msra.mxu0 %v3341
        %3368 = vmatprep.subr.mxu0 0.0
        %3369 = vmatpush1.msra.mxu0 %v3342
        %3370 = vmatprep.subr.mxu0 0.0
        %3371 = vmatpush1.msra.mxu0 %v3343
        %3372 = vmatprep.subr.mxu0 0.0
        %3373 = vmatpush1.msra.mxu0 %v3344
        %3374 = vmatprep.subr.mxu0 0.0
        %3375 = vmatpush1.msra.mxu0 0.0
        %3376 = vmatprep.subr.mxu0 0.0
        %3377 = vmatpush1.msra.mxu0 0.0
        %3378 = vmatprep.subr.mxu0 0.0
        %3379 = vmatpush1.msra.mxu0 0.0
        %3380 = vmatprep.subr.mxu0 0.0
        %3381 = vmatpush1.msra.mxu0 0.0
        %3382 = vmatprep.subr.mxu0 0.0
        %3383 = vmatpush1.msra.mxu0 0.0
        %3384 = vmatprep.subr.mxu0 0.0
        %3385 = vmatpush1.msra.mxu0 0.0
        %3386 = vmatprep.subr.mxu0 0.0
        %3387 = vmatpush1.msra.mxu0 0.0
        %3388 = vmatprep.subr.mxu0 0.0
        %3389 = vmatpush1.msra.mxu0 0.0
        %3390 = vmatprep.subr.mxu0 0.0
        %3391 = vmatpush1.msra.mxu0 0.0
        %3392 = vmatprep.subr.mxu0 0.0
        %3393 = vmatpush1.msra.mxu0 0.0
        %3394 = vmatprep.subr.mxu0 0.0
        %3395 = vmatpush1.msra.mxu0 0.0
        %3396 = vmatprep.subr.mxu0 0.0
        %3397 = vmatpush1.msra.mxu0 0.0
        %3398 = vmatprep.subr.mxu0 0.0
        %3399 = vmatpush1.msra.mxu0 0.0
        %3400 = vmatprep.subr.mxu0 0.0
        %3401 = vmatpush1.msra.mxu0 0.0
        %3402 = vmatprep.subr.mxu0 0.0
        %3403 = vmatpush1.msra.mxu0 0.0
        %3404 = vmatprep.subr.mxu0 0.0
        %3405 = vmatpush1.msra.mxu0 0.0
        %3406 = vmatprep.subr.mxu0 0.0
        %3407 = vmatpush1.msra.mxu0 0.0
        %3408 = vmatprep.subr.mxu0 0.0
        %3409 = vmatpush1.msra.mxu0 0.0
        %3410 = vmatprep.subr.mxu0 0.0
        %3411 = vmatpush1.msra.mxu0 0.0
        %3412 = vmatprep.subr.mxu0 0.0
        %3413 = vmatpush1.msra.mxu0 0.0
        %3414 = vmatprep.subr.mxu0 0.0
        %3415 = vmatpush1.msra.mxu0 0.0
        %3416 = vmatprep.subr.mxu0 0.0
        %3417 = vmatpush1.msra.mxu0 0.0
        %3418 = vmatprep.subr.mxu0 0.0
        %3419 = vmatpush1.msra.mxu0 0.0
        %3420 = vmatprep.subr.mxu0 0.0
        %3421 = vmatpush1.msra.mxu0 0.0
        %3422 = vmatprep.mubr.f32.mxu0 0.0
        %3423 = vmatmul.mubr.f32.gmra.mrb[0].mxu0 %v3353
        %v3424 = vpop.f32.mrb[0].mxu0
        %v3425 = vadd.f32 %v3350, %v3424
        %v3426 = vpop.f32.mrb[0].mxu0
        %3427 = vmatprep.mubr.f32.mxu0 0.0
        %3428 = vmatmul.mubr.f32.gmra.mrb[0].mxu0 %v3356
        %v3429 = vpop.f32.mrb[0].mxu0
        %v3430 = vadd.f32 %v3350, %v3429
        %v3431 = vpop.f32.mrb[0].mxu0
        %3432 = vdwg.mxu0
        %vm3433 = vcmask 31744
        %3434 = vst.msk [vmem:[%s1276] sm:$0xff] %vm3433, %v3425
        %3435 = vst.msk [vmem:[%s1276 + $0x8] sm:$0xff] %vm3433, %v3430
      $region148: #{fwd.3} parent=139 // pred_fallthru
        _
      %p3436 = scmp.lt.s32.totalorder %s76, 1
      %s3437 = scalar_select %p3436, %s76, 1
      %s3438 = smul.addr %s3437, 2
      %s3439 = smul.addr %s3438, 8
      %s3440 = scalar_lea.vmem %s61, %s3439
      // Predicated region
      $region149: #{fwd.3} parent=139 // pred_check
        %p3441 = pneg %p834
      $region150: #{fwd.3} parent=139 // pred_check_branch
        %3443 = sbr.rel (%p3441) target = $region152
      $region151: #{fwd.3} parent=139 // pred_region
        _
      $region152: #{fwd.3} parent=139 // pred_fallthru
        _
    $region140: #{fwd.3} parent=5 // pred_fallthru
      _
    %p3444 = scmp.le.s32.totalorder 2, %s67
    // Predicated region
    $region153: #{fwd.3} parent=5 // pred_check
      %p3445 = pneg %p3444
    $region154: #{fwd.3} parent=5 // pred_check_branch
      %3447 = sbr.rel (%p3445) target = $region156
    $region155: #{fwd.3} parent=5 // pred_region
      %s3448 = ssub.s32 %s67, 2
      // Predicated region
      $region157: #{fwd.3} parent=155 // pred_check
        %p3449 = pneg %p840
      $region158: #{fwd.3} parent=155 // pred_check_branch
        %3451 = sbr.rel (%p3449) target = $region160
      $region159: #{fwd.3} parent=155 // pred_region
        %p3452 = scmp.lt.s32.totalorder %s78, 1
        %s3453 = scalar_select %p3452, %s78, 1
        %s3454 = smul.addr %s3453, 2
        %s3455 = smul.addr %s3454, 8
        %s3456 = scalar_lea.vmem %s61, %s3455
      $region160: #{fwd.3} parent=155 // pred_fallthru
        _
    $region156: #{fwd.3} parent=5 // pred_fallthru
      _
  $region6: #{fwd.3} parent=0 // loop_footer
    %s71 = sadd.s32 1, %s67
  $region7: #{fwd.3} parent=0 // loop_footer_branch
    %66 = sbr.rel target = $region3
  $region8: #{fwd.3} parent=0 // loop_exit
    _

// kernel: fwd.2
$region0: #{fwd.2}
  #allocation0 [shape = 'u32[]', space=smem, size = 0x4, offset = 0x4, fixed_abs, tag = 'smem constant byte address 0x4 - core index']
  #allocation1 [shape = 'u32[144,128]{1,0:T(1,128)}', space=vmem, size = 0x12000, scoped, tag = 'internal scratch']
  #allocation2 [shape = 'f32[16,64]{1,0:T(8,128)}', space=vmem, size = 0x2000, scoped, tag = 'scratch operand']
  #allocation3 [shape = 'f32[8,64]{1,0:T(8,128)}', space=vmem, size = 0x1000, scoped, tag = 'scratch operand']
  #allocation4 [shape = 'f32[16,64]{1,0:T(8,128)}', space=vmem, size = 0x2000, scoped, tag = 'scratch operand']
  %s0 = inlined_call_operand.smem [shape: u32[33], index: -1, kind: input, shape index: {}]
  %s1 = sld [smem:[%s0]]
  %s2 = scalar_lea.smem %s0, 1
  %s3 = sld [smem:[%s2]]
  %s4 = scalar_lea.smem %s0, 2
  %s5 = sld [smem:[%s4]]
  %s6 = scalar_lea.smem %s0, 3
  %s7 = sld [smem:[%s6]]
  %s8 = scalar_lea.smem %s0, 4
  %s9 = sld [smem:[%s8]]
  %s10 = scalar_lea.smem %s0, 5
  %s11 = sld [smem:[%s10]]
  %s12 = scalar_lea.smem %s0, 6
  %s13 = sld [smem:[%s12]]
  %s14 = scalar_lea.smem %s0, 7
  %s15 = sld [smem:[%s14]]
  %s16 = scalar_lea.smem %s0, 8
  %s17 = sld [smem:[%s16]]
  %s18 = scalar_lea.smem %s0, 9
  %s19 = sld [smem:[%s18]]
  %s20 = scalar_lea.smem %s0, 10
  %s21 = sld [smem:[%s20]]
  %s22 = scalar_lea.smem %s0, 11
  %s23 = sld [smem:[%s22]]
  %s24 = scalar_lea.smem %s0, 12
  %s25 = sld [smem:[%s24]]
  %s26 = scalar_lea.smem %s0, 13
  %s27 = sld [smem:[%s26]]
  %s28 = scalar_lea.smem %s0, 14
  %s29 = sld [smem:[%s28]]
  %s30 = scalar_lea.smem %s0, 15
  %s31 = sld [smem:[%s30]]
  %s32 = scalar_lea.smem %s0, 16
  %s33 = sld [smem:[%s32]]
  %s34 = scalar_lea.smem %s0, 17
  %s35 = sld [smem:[%s34]]
  %s36 = scalar_lea.smem %s0, 18
  %s37 = sld [smem:[%s36]]
  %s38 = scalar_lea.smem %s0, 19
  %s39 = sld [smem:[%s38]]
  %s40 = scalar_lea.smem %s0, 20
  %s41 = sld [smem:[%s40]]
  %s42 = scalar_lea.smem %s0, 21
  %s43 = sld [smem:[%s42]]
  %s44 = scalar_lea.smem %s0, 22
  %s45 = sld [smem:[%s44]]
  %s46 = scalar_lea.smem %s0, 23
  %s47 = sld [smem:[%s46]]
  %s48 = scalar_lea.smem %s0, 24
  %s49 = sld [smem:[%s48]]
  %s50 = scalar_lea.smem %s0, 25
  %s51 = sld [smem:[%s50]]
  %s52 = scalar_lea.smem %s0, 26
  %s53 = sld [smem:[%s52]]
  %s54 = scalar_lea.smem %s0, 27
  %s55 = sld [smem:[%s54]]
  %s56 = scalar_lea.smem %s0, 28
  %s57 = sld [smem:[%s56]]
  %s58 = scalar_lea.smem %s0, 29
  %s59 = sld [smem:[%s58]]
  %s60 = scalar_lea.smem %s0, 30
  %s61 = sld [smem:[%s60]]
  %s62 = scalar_lea.smem %s0, 31
  %s63 = sld [smem:[%s62]]
  %s64 = scalar_lea.smem %s0, 32
  %s65 = sld [smem:[%s64]]
  %s66 = sld [smem:[#allocation0]]
  $region237: #{fwd.2} parent=0
    _
  %s68 = ssub.s32 1, %s66
  %s69 = scalar_select 0, %s68, %s66
  $region1: #{fwd.2} parent=0
    #allocation5 [shape = 'u8[32768]{0}', space=vmem, size = 0x8000, scoped, tag = 'input window, operand 5, single buffered']
    #allocation6 [shape = 's32[2]{0}', space=sflag, size = 0x8, scoped, tag = 'scoped memory for fwd.2']
    #allocation7 [shape = 'u8[512]{0}', space=vmem, size = 0x400, scoped, tag = 'input window, operand 6, single buffered']
    #allocation8 [shape = 's32[1]{0}', space=sflag, size = 0x4, scoped, tag = 'scoped memory for fwd.2']
    #allocation9 [shape = 'u8[32768]{0}', space=vmem, size = 0x8000, scoped, tag = 'input window, operand 7, single buffered']
    #allocation10 [shape = 'u8[512]{0}', space=vmem, size = 0x400, scoped, tag = 'input window, operand 8, single buffered']
    #allocation11 [shape = 's32[1]{0}', space=sflag, size = 0x4, scoped, tag = 'scoped memory for fwd.2']
    #allocation12 [shape = 'u8[512]{0}', space=vmem, size = 0x400, scoped, tag = 'input window, operand 10, single buffered']
    #allocation13 [shape = 'u8[2048]{0}', space=vmem, size = 0x800, scoped, tag = 'input window, operand 11, single buffered']
    #allocation14 [shape = 's32[1]{0}', space=sflag, size = 0x4, scoped, tag = 'scoped memory for fwd.2']
    #allocation15 [shape = 'u8[512]{0}', space=vmem, size = 0x400, scoped, tag = 'input window, operand 12, single buffered']
    #allocation16 [shape = 'u8[16384]{0}', space=vmem, size = 0x4000, scoped, tag = 'input window, operand 13, single buffered']
    #allocation17 [shape = 's32[1]{0}', space=sflag, size = 0x4, scoped, tag = 'scoped memory for fwd.2']
    #allocation18 [shape = 'u8[512]{0}', space=vmem, size = 0x400, scoped, tag = 'input window, operand 14, single buffered']
    #allocation19 [shape = 'u8[1024]{0}', space=vmem, size = 0x400, scoped, tag = 'input window, operand 15']
    #allocation20 [shape = 's32[2]{0}', space=sflag, size = 0x8, scoped, tag = 'scoped memory for fwd.2']
    #allocation21 [shape = 'u8[1024]{0}', space=vmem, size = 0x400, scoped, tag = 'input window, operand 16']
    #allocation22 [shape = 'u8[1024]{0}', space=vmem, size = 0x400, scoped, tag = 'input window, operand 19']
    #allocation23 [shape = 's32[2]{0}', space=sflag, size = 0x8, scoped, tag = 'scoped memory for fwd.2']
    #allocation24 [shape = 'u8[1024]{0}', space=vmem, size = 0x400, scoped, tag = 'input window, operand 20']
    #allocation25 [shape = 'u8[1024]{0}', space=vmem, size = 0x400, scoped, tag = 'input window, operand 24']
    #allocation26 [shape = 's32[2]{0}', space=sflag, size = 0x8, scoped, tag = 'scoped memory for fwd.2']
    #allocation27 [shape = 'u8[1024]{0}', space=vmem, size = 0x400, scoped, tag = 'input window, operand 25']
    #allocation28 [shape = 'u8[2048]{0}', space=vmem, size = 0x800, scoped, tag = 'input window, operand 27']
    #allocation29 [shape = 's32[2]{0}', space=sflag, size = 0x8, scoped, tag = 'scoped memory for fwd.2']
    #allocation30 [shape = 'u8[1024]{0}', space=vmem, size = 0x400, scoped, tag = 'input window, operand 29']
    #allocation31 [shape = 'u8[65536]{0}', space=vmem, size = 0x10000, scoped, tag = 'input window, operand 30']
    #allocation32 [shape = 's32[2]{0}', space=sflag, size = 0x8, scoped, tag = 'scoped memory for fwd.2']
    %70 = vsyncpa [#allocation6], 0
    %71 = vsyncpa [#allocation8], 0
    %72 = vsyncpa [#allocation11], 0
    %73 = vsyncpa [#allocation14], 0
    %74 = vsyncpa [#allocation17], 0
    %75 = vsyncpa [#allocation20], 0
    %s76 = scalar_lea.sflag [#allocation20], 1
    %77 = vsyncpa %s76, 0
    %78 = vsyncpa [#allocation23], 0
    %s79 = scalar_lea.sflag [#allocation23], 1
    %80 = vsyncpa %s79, 0
    %81 = vsyncpa [#allocation26], 0
    %s82 = scalar_lea.sflag [#allocation26], 1
    %83 = vsyncpa %s82, 0
    %84 = vsyncpa [#allocation29], 0
    %s85 = scalar_lea.sflag [#allocation29], 1
    %86 = vsyncpa %s85, 0
    %87 = vsyncpa [#allocation32], 0
    %s88 = scalar_lea.sflag [#allocation32], 1
    %89 = vsyncpa %s88, 0
    loop: start=0, step=1, limit=6
    $region2: #{fwd.2} parent=1 // loop_pre_header
      _
    $region3: #{fwd.2} parent=1 // loop_header
      %s91 = sphi 0, %s95
      %p92 = scmp.ge.s32.totalorder %s91, 6
      %s98 = sphi 0, %s110
      %s99 = sphi 0, %s106
      %s100 = sphi 0, %s98
      %s101 = sphi 0, %s99
      %s102 = sphi 0, %s100
      %s103 = sphi 0, %s101
      %s113 = sphi 0, %s115
      %s116 = sphi 0, %s113
      %s117 = sphi 0, %s116
      %s133 = sphi 0, %s117
      %s139 = sphi 0, %s141
      %s142 = sphi 0, %s139
      %s143 = sphi 0, %s142
      %s159 = sphi 0, %s143
      %s165 = sphi 0, %s167
      %s168 = sphi 0, %s165
      %s169 = sphi 0, %s168
      %s185 = sphi 0, %s169
      %s191 = sphi 0, %s193
      %s194 = sphi 0, %s191
      %s195 = sphi 0, %s194
      %s211 = sphi 0, %s195
      %s217 = sphi 0, %s219
      %s220 = sphi 0, %s217
      %s221 = sphi 0, %s220
      %s237 = sphi 0, %s221
      %s241 = sphi 0, %s241
      %s243 = sphi 0, %s241
      %s244 = sphi 0, %s243
      %s258 = sphi 0, %s244
      %s262 = sphi 0, %s262
      %s264 = sphi 0, %s262
      %s265 = sphi 0, %s264
      %s279 = sphi 0, %s265
      %s283 = sphi 0, %s283
      %s285 = sphi 0, %s283
      %s286 = sphi 0, %s285
      %s300 = sphi 0, %s286
      %s304 = sphi 0, %s304
      %s306 = sphi 0, %s304
      %s307 = sphi 0, %s306
      %s321 = sphi 0, %s307
      %s325 = sphi 0, %s325
      %s327 = sphi 0, %s325
      %s328 = sphi 0, %s327
      %s342 = sphi 0, %s328
      %s346 = sphi 0, %s346
      %s348 = sphi 0, %s346
      %s349 = sphi 0, %s348
      %s363 = sphi 0, %s349
      %s367 = sphi 0, %s367
      %s369 = sphi 0, %s367
      %s370 = sphi 0, %s369
      %s384 = sphi 0, %s370
      %s388 = sphi 0, %s388
      %s390 = sphi 0, %s388
      %s391 = sphi 0, %s390
      %s405 = sphi 0, %s391
      %s409 = sphi 0, %s409
      %s411 = sphi 0, %s409
      %s412 = sphi 0, %s411
      %s426 = sphi 0, %s412
      %s430 = sphi 0, %s430
      %s432 = sphi 0, %s430
      %s433 = sphi 0, %s432
      %s447 = sphi 0, %s433
      %s453 = sphi 0, %s455
      %s456 = sphi 0, %s453
      %s457 = sphi 0, %s456
      %s473 = sphi 0, %s457
      %s479 = sphi 0, %s481
      %s482 = sphi 0, %s479
      %s483 = sphi 0, %s482
      %s499 = sphi 0, %s483
      %s505 = sphi 0, %s507
      %s508 = sphi 0, %s505
      %s509 = sphi 0, %s508
      %s525 = sphi 0, %s509
      %s531 = sphi 0, %s533
      %s534 = sphi 0, %s531
      %s535 = sphi 0, %s534
      %s551 = sphi 0, %s535
      %s557 = sphi 0, %s559
      %s560 = sphi 0, %s557
      %s561 = sphi 0, %s560
      %s577 = sphi 0, %s561
      %s583 = sphi 0, %s585
      %s586 = sphi 0, %s583
      %s587 = sphi 0, %s586
      %s603 = sphi 0, %s587
      %s609 = sphi 0, %s611
      %s612 = sphi 0, %s609
      %s613 = sphi 0, %s612
      %s629 = sphi 0, %s613
      %s635 = sphi 0, %s637
      %s638 = sphi 0, %s635
      %s639 = sphi 0, %s638
      %s655 = sphi 0, %s639
      %s661 = sphi 0, %s663
      %s664 = sphi 0, %s661
      %s665 = sphi 0, %s664
      %s681 = sphi 0, %s665
      %s687 = sphi 0, %s689
      %s690 = sphi 0, %s687
      %s691 = sphi 0, %s690
      %s707 = sphi 0, %s691
      %s713 = sphi 0, %s715
      %s716 = sphi 0, %s713
      %s717 = sphi 0, %s716
      %s733 = sphi 0, %s717
      %s739 = sphi 0, %s741
      %s742 = sphi 0, %s739
      %s743 = sphi 0, %s742
      %s759 = sphi 0, %s743
      %s765 = sphi 0, %s767
      %s768 = sphi 0, %s765
      %s769 = sphi 0, %s768
      %s785 = sphi 0, %s769
      %s791 = sphi 0, %s793
      %s794 = sphi 0, %s791
      %s795 = sphi 0, %s794
      %s811 = sphi 0, %s795
      %s817 = sphi 0, %s819
      %s820 = sphi 0, %s817
      %s821 = sphi 0, %s820
      %s837 = sphi 0, %s821
      %s843 = sphi 0, %s845
      %s846 = sphi 0, %s843
      %s847 = sphi 0, %s846
      %s863 = sphi 0, %s847
      %s869 = sphi 0, %s871
      %s872 = sphi 0, %s869
      %s873 = sphi 0, %s872
      %s889 = sphi 0, %s873
      %s897 = sphi 0, %s899
      %s900 = sphi 0, %s897
      %s901 = sphi 0, %s900
      %s917 = sphi 0, %s901
    $region4: #{fwd.2} parent=1 // loop_header_branch
      %94 = sbr.rel (%p92) target = $region8
    $region5: #{fwd.2} parent=1 // loop_body
      %s96 = ssub.s32 %s91, 1
      %s97 = ssub.s32 %s91, 2
      %s104 = sadd.s32 1, %s99
      %p105 = scmp.ge.s32.totalorder %s104, 2
      %s106 = scalar_select %p105, 0, %s104
      %s107 = sadd.s32 1, %s98
      %s108 = scalar_select %p105, %s107, %s98
      %p109 = scmp.ge.s32.totalorder %s108, 2
      %s110 = scalar_select %p109, 0, %s108
      %s111 = ssub.s32 %s98, %s110
      %p112 = scmp.eq.s32.totalorder %s111, 0
      %s114 = sadd.s32 %s113, 1
      %s115 = scalar_select %p112, %s113, %s114
      %p118 = pneg %p112
      %p119 = scmp.eq.s32.totalorder %s91, 3
      %p120 = por %p118, %p119
      %p121 = scmp.ne.s32.totalorder %s113, %s116
      %p122 = scmp.eq.s32.totalorder %s91, 0
      %p123 = por %p121, %p122
      %p124 = scmp.ne.s32.totalorder %s113, %s116
      %p125 = scmp.eq.s32.totalorder %s96, 3
      %p126 = por %p124, %p125
      %p127 = scmp.ne.s32.totalorder %s116, %s117
      %p128 = scmp.eq.s32.totalorder %s96, 0
      %p129 = por %p127, %p128
      %p130 = scmp.ne.s32.totalorder %s116, %s117
      %p131 = scmp.eq.s32.totalorder %s97, 3
      %p132 = por %p130, %p131
      %p134 = scmp.ne.s32.totalorder %s117, %s133
      %p135 = scmp.eq.s32.totalorder %s97, 0
      %p136 = por %p134, %p135
      %s137 = ssub.s32 %s98, %s110
      %p138 = scmp.eq.s32.totalorder %s137, 0
      %s140 = sadd.s32 %s139, 1
      %s141 = scalar_select %p138, %s139, %s140
      %p144 = pneg %p138
      %p145 = scmp.eq.s32.totalorder %s91, 3
      %p146 = por %p144, %p145
      %p147 = scmp.ne.s32.totalorder %s139, %s142
      %p148 = scmp.eq.s32.totalorder %s91, 0
      %p149 = por %p147, %p148
      %p150 = scmp.ne.s32.totalorder %s139, %s142
      %p151 = scmp.eq.s32.totalorder %s96, 3
      %p152 = por %p150, %p151
      %p153 = scmp.ne.s32.totalorder %s142, %s143
      %p154 = scmp.eq.s32.totalorder %s96, 0
      %p155 = por %p153, %p154
      %p156 = scmp.ne.s32.totalorder %s142, %s143
      %p157 = scmp.eq.s32.totalorder %s97, 3
      %p158 = por %p156, %p157
      %p160 = scmp.ne.s32.totalorder %s143, %s159
      %p161 = scmp.eq.s32.totalorder %s97, 0
      %p162 = por %p160, %p161
      %s163 = ssub.s32 %s98, %s110
      %p164 = scmp.eq.s32.totalorder %s163, 0
      %s166 = sadd.s32 %s165, 1
      %s167 = scalar_select %p164, %s165, %s166
      %p170 = pneg %p164
      %p171 = scmp.eq.s32.totalorder %s91, 3
      %p172 = por %p170, %p171
      %p173 = scmp.ne.s32.totalorder %s165, %s168
      %p174 = scmp.eq.s32.totalorder %s91, 0
      %p175 = por %p173, %p174
      %p176 = scmp.ne.s32.totalorder %s165, %s168
      %p177 = scmp.eq.s32.totalorder %s96, 3
      %p178 = por %p176, %p177
      %p179 = scmp.ne.s32.totalorder %s168, %s169
      %p180 = scmp.eq.s32.totalorder %s96, 0
      %p181 = por %p179, %p180
      %p182 = scmp.ne.s32.totalorder %s168, %s169
      %p183 = scmp.eq.s32.totalorder %s97, 3
      %p184 = por %p182, %p183
      %p186 = scmp.ne.s32.totalorder %s169, %s185
      %p187 = scmp.eq.s32.totalorder %s97, 0
      %p188 = por %p186, %p187
      %s189 = ssub.s32 %s98, %s110
      %p190 = scmp.eq.s32.totalorder %s189, 0
      %s192 = sadd.s32 %s191, 1
      %s193 = scalar_select %p190, %s191, %s192
      %p196 = pneg %p190
      %p197 = scmp.eq.s32.totalorder %s91, 3
      %p198 = por %p196, %p197
      %p199 = scmp.ne.s32.totalorder %s191, %s194
      %p200 = scmp.eq.s32.totalorder %s91, 0
      %p201 = por %p199, %p200
      %p202 = scmp.ne.s32.totalorder %s191, %s194
      %p203 = scmp.eq.s32.totalorder %s96, 3
      %p204 = por %p202, %p203
      %p205 = scmp.ne.s32.totalorder %s194, %s195
      %p206 = scmp.eq.s32.totalorder %s96, 0
      %p207 = por %p205, %p206
      %p208 = scmp.ne.s32.totalorder %s194, %s195
      %p209 = scmp.eq.s32.totalorder %s97, 3
      %p210 = por %p208, %p209
      %p212 = scmp.ne.s32.totalorder %s195, %s211
      %p213 = scmp.eq.s32.totalorder %s97, 0
      %p214 = por %p212, %p213
      %s215 = ssub.s32 %s98, %s110
      %p216 = scmp.eq.s32.totalorder %s215, 0
      %s218 = sadd.s32 %s217, 1
      %s219 = scalar_select %p216, %s217, %s218
      %p222 = pneg %p216
      %p223 = scmp.eq.s32.totalorder %s91, 3
      %p224 = por %p222, %p223
      %p225 = scmp.ne.s32.totalorder %s217, %s220
      %p226 = scmp.eq.s32.totalorder %s91, 0
      %p227 = por %p225, %p226
      %p228 = scmp.ne.s32.totalorder %s217, %s220
      %p229 = scmp.eq.s32.totalorder %s96, 3
      %p230 = por %p228, %p229
      %p231 = scmp.ne.s32.totalorder %s220, %s221
      %p232 = scmp.eq.s32.totalorder %s96, 0
      %p233 = por %p231, %p232
      %p234 = scmp.ne.s32.totalorder %s220, %s221
      %p235 = scmp.eq.s32.totalorder %s97, 3
      %p236 = por %p234, %p235
      %p238 = scmp.ne.s32.totalorder %s221, %s237
      %p239 = scmp.eq.s32.totalorder %s97, 0
      %p240 = por %p238, %p239
      %s242 = sadd.s32 %s241, 1
      %p245 = scmp.eq.s32.totalorder %s91, 3
      %p246 = scmp.ne.s32.totalorder %s241, %s243
      %p247 = scmp.eq.s32.totalorder %s91, 0
      %p248 = por %p246, %p247
      %p249 = scmp.ne.s32.totalorder %s241, %s243
      %p250 = scmp.eq.s32.totalorder %s96, 3
      %p251 = por %p249, %p250
      %p252 = scmp.ne.s32.totalorder %s243, %s244
      %p253 = scmp.eq.s32.totalorder %s96, 0
      %p254 = por %p252, %p253
      %p255 = scmp.ne.s32.totalorder %s243, %s244
      %p256 = scmp.eq.s32.totalorder %s97, 3
      %p257 = por %p255, %p256
      %p259 = scmp.ne.s32.totalorder %s244, %s258
      %p260 = scmp.eq.s32.totalorder %s97, 0
      %p261 = por %p259, %p260
      %s263 = sadd.s32 %s262, 1
      %p266 = scmp.eq.s32.totalorder %s91, 3
      %p267 = scmp.ne.s32.totalorder %s262, %s264
      %p268 = scmp.eq.s32.totalorder %s91, 0
      %p269 = por %p267, %p268
      %p270 = scmp.ne.s32.totalorder %s262, %s264
      %p271 = scmp.eq.s32.totalorder %s96, 3
      %p272 = por %p270, %p271
      %p273 = scmp.ne.s32.totalorder %s264, %s265
      %p274 = scmp.eq.s32.totalorder %s96, 0
      %p275 = por %p273, %p274
      %p276 = scmp.ne.s32.totalorder %s264, %s265
      %p277 = scmp.eq.s32.totalorder %s97, 3
      %p278 = por %p276, %p277
      %p280 = scmp.ne.s32.totalorder %s265, %s279
      %p281 = scmp.eq.s32.totalorder %s97, 0
      %p282 = por %p280, %p281
      %s284 = sadd.s32 %s283, 1
      %p287 = scmp.eq.s32.totalorder %s91, 3
      %p288 = scmp.ne.s32.totalorder %s283, %s285
      %p289 = scmp.eq.s32.totalorder %s91, 0
      %p290 = por %p288, %p289
      %p291 = scmp.ne.s32.totalorder %s283, %s285
      %p292 = scmp.eq.s32.totalorder %s96, 3
      %p293 = por %p291, %p292
      %p294 = scmp.ne.s32.totalorder %s285, %s286
      %p295 = scmp.eq.s32.totalorder %s96, 0
      %p296 = por %p294, %p295
      %p297 = scmp.ne.s32.totalorder %s285, %s286
      %p298 = scmp.eq.s32.totalorder %s97, 3
      %p299 = por %p297, %p298
      %p301 = scmp.ne.s32.totalorder %s286, %s300
      %p302 = scmp.eq.s32.totalorder %s97, 0
      %p303 = por %p301, %p302
      %s305 = sadd.s32 %s304, 1
      %p308 = scmp.eq.s32.totalorder %s91, 3
      %p309 = scmp.ne.s32.totalorder %s304, %s306
      %p310 = scmp.eq.s32.totalorder %s91, 0
      %p311 = por %p309, %p310
      %p312 = scmp.ne.s32.totalorder %s304, %s306
      %p313 = scmp.eq.s32.totalorder %s96, 3
      %p314 = por %p312, %p313
      %p315 = scmp.ne.s32.totalorder %s306, %s307
      %p316 = scmp.eq.s32.totalorder %s96, 0
      %p317 = por %p315, %p316
      %p318 = scmp.ne.s32.totalorder %s306, %s307
      %p319 = scmp.eq.s32.totalorder %s97, 3
      %p320 = por %p318, %p319
      %p322 = scmp.ne.s32.totalorder %s307, %s321
      %p323 = scmp.eq.s32.totalorder %s97, 0
      %p324 = por %p322, %p323
      %s326 = sadd.s32 %s325, 1
      %p329 = scmp.eq.s32.totalorder %s91, 3
      %p330 = scmp.ne.s32.totalorder %s325, %s327
      %p331 = scmp.eq.s32.totalorder %s91, 0
      %p332 = por %p330, %p331
      %p333 = scmp.ne.s32.totalorder %s325, %s327
      %p334 = scmp.eq.s32.totalorder %s96, 3
      %p335 = por %p333, %p334
      %p336 = scmp.ne.s32.totalorder %s327, %s328
      %p337 = scmp.eq.s32.totalorder %s96, 0
      %p338 = por %p336, %p337
      %p339 = scmp.ne.s32.totalorder %s327, %s328
      %p340 = scmp.eq.s32.totalorder %s97, 3
      %p341 = por %p339, %p340
      %p343 = scmp.ne.s32.totalorder %s328, %s342
      %p344 = scmp.eq.s32.totalorder %s97, 0
      %p345 = por %p343, %p344
      %s347 = sadd.s32 %s346, 1
      %p350 = scmp.eq.s32.totalorder %s91, 3
      %p351 = scmp.ne.s32.totalorder %s346, %s348
      %p352 = scmp.eq.s32.totalorder %s91, 0
      %p353 = por %p351, %p352
      %p354 = scmp.ne.s32.totalorder %s346, %s348
      %p355 = scmp.eq.s32.totalorder %s96, 3
      %p356 = por %p354, %p355
      %p357 = scmp.ne.s32.totalorder %s348, %s349
      %p358 = scmp.eq.s32.totalorder %s96, 0
      %p359 = por %p357, %p358
      %p360 = scmp.ne.s32.totalorder %s348, %s349
      %p361 = scmp.eq.s32.totalorder %s97, 3
      %p362 = por %p360, %p361
      %p364 = scmp.ne.s32.totalorder %s349, %s363
      %p365 = scmp.eq.s32.totalorder %s97, 0
      %p366 = por %p364, %p365
      %s368 = sadd.s32 %s367, 1
      %p371 = scmp.eq.s32.totalorder %s91, 3
      %p372 = scmp.ne.s32.totalorder %s367, %s369
      %p373 = scmp.eq.s32.totalorder %s91, 0
      %p374 = por %p372, %p373
      %p375 = scmp.ne.s32.totalorder %s367, %s369
      %p376 = scmp.eq.s32.totalorder %s96, 3
      %p377 = por %p375, %p376
      %p378 = scmp.ne.s32.totalorder %s369, %s370
      %p379 = scmp.eq.s32.totalorder %s96, 0
      %p380 = por %p378, %p379
      %p381 = scmp.ne.s32.totalorder %s369, %s370
      %p382 = scmp.eq.s32.totalorder %s97, 3
      %p383 = por %p381, %p382
      %p385 = scmp.ne.s32.totalorder %s370, %s384
      %p386 = scmp.eq.s32.totalorder %s97, 0
      %p387 = por %p385, %p386
      %s389 = sadd.s32 %s388, 1
      %p392 = scmp.eq.s32.totalorder %s91, 3
      %p393 = scmp.ne.s32.totalorder %s388, %s390
      %p394 = scmp.eq.s32.totalorder %s91, 0
      %p395 = por %p393, %p394
      %p396 = scmp.ne.s32.totalorder %s388, %s390
      %p397 = scmp.eq.s32.totalorder %s96, 3
      %p398 = por %p396, %p397
      %p399 = scmp.ne.s32.totalorder %s390, %s391
      %p400 = scmp.eq.s32.totalorder %s96, 0
      %p401 = por %p399, %p400
      %p402 = scmp.ne.s32.totalorder %s390, %s391
      %p403 = scmp.eq.s32.totalorder %s97, 3
      %p404 = por %p402, %p403
      %p406 = scmp.ne.s32.totalorder %s391, %s405
      %p407 = scmp.eq.s32.totalorder %s97, 0
      %p408 = por %p406, %p407
      %s410 = sadd.s32 %s409, 1
      %p413 = scmp.eq.s32.totalorder %s91, 3
      %p414 = scmp.ne.s32.totalorder %s409, %s411
      %p415 = scmp.eq.s32.totalorder %s91, 0
      %p416 = por %p414, %p415
      %p417 = scmp.ne.s32.totalorder %s409, %s411
      %p418 = scmp.eq.s32.totalorder %s96, 3
      %p419 = por %p417, %p418
      %p420 = scmp.ne.s32.totalorder %s411, %s412
      %p421 = scmp.eq.s32.totalorder %s96, 0
      %p422 = por %p420, %p421
      %p423 = scmp.ne.s32.totalorder %s411, %s412
      %p424 = scmp.eq.s32.totalorder %s97, 3
      %p425 = por %p423, %p424
      %p427 = scmp.ne.s32.totalorder %s412, %s426
      %p428 = scmp.eq.s32.totalorder %s97, 0
      %p429 = por %p427, %p428
      %s431 = sadd.s32 %s430, 1
      %p434 = scmp.eq.s32.totalorder %s91, 3
      %p435 = scmp.ne.s32.totalorder %s430, %s432
      %p436 = scmp.eq.s32.totalorder %s91, 0
      %p437 = por %p435, %p436
      %p438 = scmp.ne.s32.totalorder %s430, %s432
      %p439 = scmp.eq.s32.totalorder %s96, 3
      %p440 = por %p438, %p439
      %p441 = scmp.ne.s32.totalorder %s432, %s433
      %p442 = scmp.eq.s32.totalorder %s96, 0
      %p443 = por %p441, %p442
      %p444 = scmp.ne.s32.totalorder %s432, %s433
      %p445 = scmp.eq.s32.totalorder %s97, 3
      %p446 = por %p444, %p445
      %p448 = scmp.ne.s32.totalorder %s433, %s447
      %p449 = scmp.eq.s32.totalorder %s97, 0
      %p450 = por %p448, %p449
      %s451 = ssub.s32 %s99, %s106
      %p452 = scmp.eq.s32.totalorder %s451, 0
      %s454 = sadd.s32 %s453, 1
      %s455 = scalar_select %p452, %s453, %s454
      %p458 = pneg %p452
      %p459 = scmp.eq.s32.totalorder %s91, 3
      %p460 = por %p458, %p459
      %p461 = scmp.ne.s32.totalorder %s453, %s456
      %p462 = scmp.eq.s32.totalorder %s91, 0
      %p463 = por %p461, %p462
      %p464 = scmp.ne.s32.totalorder %s453, %s456
      %p465 = scmp.eq.s32.totalorder %s96, 3
      %p466 = por %p464, %p465
      %p467 = scmp.ne.s32.totalorder %s456, %s457
      %p468 = scmp.eq.s32.totalorder %s96, 0
      %p469 = por %p467, %p468
      %p470 = scmp.ne.s32.totalorder %s456, %s457
      %p471 = scmp.eq.s32.totalorder %s97, 3
      %p472 = por %p470, %p471
      %p474 = scmp.ne.s32.totalorder %s457, %s473
      %p475 = scmp.eq.s32.totalorder %s97, 0
      %p476 = por %p474, %p475
      %s477 = ssub.s32 %s99, %s106
      %p478 = scmp.eq.s32.totalorder %s477, 0
      %s480 = sadd.s32 %s479, 1
      %s481 = scalar_select %p478, %s479, %s480
      %p484 = pneg %p478
      %p485 = scmp.eq.s32.totalorder %s91, 3
      %p486 = por %p484, %p485
      %p487 = scmp.ne.s32.totalorder %s479, %s482
      %p488 = scmp.eq.s32.totalorder %s91, 0
      %p489 = por %p487, %p488
      %p490 = scmp.ne.s32.totalorder %s479, %s482
      %p491 = scmp.eq.s32.totalorder %s96, 3
      %p492 = por %p490, %p491
      %p493 = scmp.ne.s32.totalorder %s482, %s483
      %p494 = scmp.eq.s32.totalorder %s96, 0
      %p495 = por %p493, %p494
      %p496 = scmp.ne.s32.totalorder %s482, %s483
      %p497 = scmp.eq.s32.totalorder %s97, 3
      %p498 = por %p496, %p497
      %p500 = scmp.ne.s32.totalorder %s483, %s499
      %p501 = scmp.eq.s32.totalorder %s97, 0
      %p502 = por %p500, %p501
      %s503 = ssub.s32 %s99, %s106
      %p504 = scmp.eq.s32.totalorder %s503, 0
      %s506 = sadd.s32 %s505, 1
      %s507 = scalar_select %p504, %s505, %s506
      %p510 = pneg %p504
      %p511 = scmp.eq.s32.totalorder %s91, 3
      %p512 = por %p510, %p511
      %p513 = scmp.ne.s32.totalorder %s505, %s508
      %p514 = scmp.eq.s32.totalorder %s91, 0
      %p515 = por %p513, %p514
      %p516 = scmp.ne.s32.totalorder %s505, %s508
      %p517 = scmp.eq.s32.totalorder %s96, 3
      %p518 = por %p516, %p517
      %p519 = scmp.ne.s32.totalorder %s508, %s509
      %p520 = scmp.eq.s32.totalorder %s96, 0
      %p521 = por %p519, %p520
      %p522 = scmp.ne.s32.totalorder %s508, %s509
      %p523 = scmp.eq.s32.totalorder %s97, 3
      %p524 = por %p522, %p523
      %p526 = scmp.ne.s32.totalorder %s509, %s525
      %p527 = scmp.eq.s32.totalorder %s97, 0
      %p528 = por %p526, %p527
      %s529 = ssub.s32 %s99, %s106
      %p530 = scmp.eq.s32.totalorder %s529, 0
      %s532 = sadd.s32 %s531, 1
      %s533 = scalar_select %p530, %s531, %s532
      %p536 = pneg %p530
      %p537 = scmp.eq.s32.totalorder %s91, 3
      %p538 = por %p536, %p537
      %p539 = scmp.ne.s32.totalorder %s531, %s534
      %p540 = scmp.eq.s32.totalorder %s91, 0
      %p541 = por %p539, %p540
      %p542 = scmp.ne.s32.totalorder %s531, %s534
      %p543 = scmp.eq.s32.totalorder %s96, 3
      %p544 = por %p542, %p543
      %p545 = scmp.ne.s32.totalorder %s534, %s535
      %p546 = scmp.eq.s32.totalorder %s96, 0
      %p547 = por %p545, %p546
      %p548 = scmp.ne.s32.totalorder %s534, %s535
      %p549 = scmp.eq.s32.totalorder %s97, 3
      %p550 = por %p548, %p549
      %p552 = scmp.ne.s32.totalorder %s535, %s551
      %p553 = scmp.eq.s32.totalorder %s97, 0
      %p554 = por %p552, %p553
      %s555 = ssub.s32 %s99, %s106
      %p556 = scmp.eq.s32.totalorder %s555, 0
      %s558 = sadd.s32 %s557, 1
      %s559 = scalar_select %p556, %s557, %s558
      %p562 = pneg %p556
      %p563 = scmp.eq.s32.totalorder %s91, 3
      %p564 = por %p562, %p563
      %p565 = scmp.ne.s32.totalorder %s557, %s560
      %p566 = scmp.eq.s32.totalorder %s91, 0
      %p567 = por %p565, %p566
      %p568 = scmp.ne.s32.totalorder %s557, %s560
      %p569 = scmp.eq.s32.totalorder %s96, 3
      %p570 = por %p568, %p569
      %p571 = scmp.ne.s32.totalorder %s560, %s561
      %p572 = scmp.eq.s32.totalorder %s96, 0
      %p573 = por %p571, %p572
      %p574 = scmp.ne.s32.totalorder %s560, %s561
      %p575 = scmp.eq.s32.totalorder %s97, 3
      %p576 = por %p574, %p575
      %p578 = scmp.ne.s32.totalorder %s561, %s577
      %p579 = scmp.eq.s32.totalorder %s97, 0
      %p580 = por %p578, %p579
      %s581 = ssub.s32 %s99, %s106
      %p582 = scmp.eq.s32.totalorder %s581, 0
      %s584 = sadd.s32 %s583, 1
      %s585 = scalar_select %p582, %s583, %s584
      %p588 = pneg %p582
      %p589 = scmp.eq.s32.totalorder %s91, 3
      %p590 = por %p588, %p589
      %p591 = scmp.ne.s32.totalorder %s583, %s586
      %p592 = scmp.eq.s32.totalorder %s91, 0
      %p593 = por %p591, %p592
      %p594 = scmp.ne.s32.totalorder %s583, %s586
      %p595 = scmp.eq.s32.totalorder %s96, 3
      %p596 = por %p594, %p595
      %p597 = scmp.ne.s32.totalorder %s586, %s587
      %p598 = scmp.eq.s32.totalorder %s96, 0
      %p599 = por %p597, %p598
      %p600 = scmp.ne.s32.totalorder %s586, %s587
      %p601 = scmp.eq.s32.totalorder %s97, 3
      %p602 = por %p600, %p601
      %p604 = scmp.ne.s32.totalorder %s587, %s603
      %p605 = scmp.eq.s32.totalorder %s97, 0
      %p606 = por %p604, %p605
      %s607 = ssub.s32 %s99, %s106
      %p608 = scmp.eq.s32.totalorder %s607, 0
      %s610 = sadd.s32 %s609, 1
      %s611 = scalar_select %p608, %s609, %s610
      %p614 = pneg %p608
      %p615 = scmp.eq.s32.totalorder %s91, 3
      %p616 = por %p614, %p615
      %p617 = scmp.ne.s32.totalorder %s609, %s612
      %p618 = scmp.eq.s32.totalorder %s91, 0
      %p619 = por %p617, %p618
      %p620 = scmp.ne.s32.totalorder %s609, %s612
      %p621 = scmp.eq.s32.totalorder %s96, 3
      %p622 = por %p620, %p621
      %p623 = scmp.ne.s32.totalorder %s612, %s613
      %p624 = scmp.eq.s32.totalorder %s96, 0
      %p625 = por %p623, %p624
      %p626 = scmp.ne.s32.totalorder %s612, %s613
      %p627 = scmp.eq.s32.totalorder %s97, 3
      %p628 = por %p626, %p627
      %p630 = scmp.ne.s32.totalorder %s613, %s629
      %p631 = scmp.eq.s32.totalorder %s97, 0
      %p632 = por %p630, %p631
      %s633 = ssub.s32 %s99, %s106
      %p634 = scmp.eq.s32.totalorder %s633, 0
      %s636 = sadd.s32 %s635, 1
      %s637 = scalar_select %p634, %s635, %s636
      %p640 = pneg %p634
      %p641 = scmp.eq.s32.totalorder %s91, 3
      %p642 = por %p640, %p641
      %p643 = scmp.ne.s32.totalorder %s635, %s638
      %p644 = scmp.eq.s32.totalorder %s91, 0
      %p645 = por %p643, %p644
      %p646 = scmp.ne.s32.totalorder %s635, %s638
      %p647 = scmp.eq.s32.totalorder %s96, 3
      %p648 = por %p646, %p647
      %p649 = scmp.ne.s32.totalorder %s638, %s639
      %p650 = scmp.eq.s32.totalorder %s96, 0
      %p651 = por %p649, %p650
      %p652 = scmp.ne.s32.totalorder %s638, %s639
      %p653 = scmp.eq.s32.totalorder %s97, 3
      %p654 = por %p652, %p653
      %p656 = scmp.ne.s32.totalorder %s639, %s655
      %p657 = scmp.eq.s32.totalorder %s97, 0
      %p658 = por %p656, %p657
      %s659 = ssub.s32 %s99, %s106
      %p660 = scmp.eq.s32.totalorder %s659, 0
      %s662 = sadd.s32 %s661, 1
      %s663 = scalar_select %p660, %s661, %s662
      %p666 = pneg %p660
      %p667 = scmp.eq.s32.totalorder %s91, 3
      %p668 = por %p666, %p667
      %p669 = scmp.ne.s32.totalorder %s661, %s664
      %p670 = scmp.eq.s32.totalorder %s91, 0
      %p671 = por %p669, %p670
      %p672 = scmp.ne.s32.totalorder %s661, %s664
      %p673 = scmp.eq.s32.totalorder %s96, 3
      %p674 = por %p672, %p673
      %p675 = scmp.ne.s32.totalorder %s664, %s665
      %p676 = scmp.eq.s32.totalorder %s96, 0
      %p677 = por %p675, %p676
      %p678 = scmp.ne.s32.totalorder %s664, %s665
      %p679 = scmp.eq.s32.totalorder %s97, 3
      %p680 = por %p678, %p679
      %p682 = scmp.ne.s32.totalorder %s665, %s681
      %p683 = scmp.eq.s32.totalorder %s97, 0
      %p684 = por %p682, %p683
      %s685 = ssub.s32 %s99, %s106
      %p686 = scmp.eq.s32.totalorder %s685, 0
      %s688 = sadd.s32 %s687, 1
      %s689 = scalar_select %p686, %s687, %s688
      %p692 = pneg %p686
      %p693 = scmp.eq.s32.totalorder %s91, 3
      %p694 = por %p692, %p693
      %p695 = scmp.ne.s32.totalorder %s687, %s690
      %p696 = scmp.eq.s32.totalorder %s91, 0
      %p697 = por %p695, %p696
      %p698 = scmp.ne.s32.totalorder %s687, %s690
      %p699 = scmp.eq.s32.totalorder %s96, 3
      %p700 = por %p698, %p699
      %p701 = scmp.ne.s32.totalorder %s690, %s691
      %p702 = scmp.eq.s32.totalorder %s96, 0
      %p703 = por %p701, %p702
      %p704 = scmp.ne.s32.totalorder %s690, %s691
      %p705 = scmp.eq.s32.totalorder %s97, 3
      %p706 = por %p704, %p705
      %p708 = scmp.ne.s32.totalorder %s691, %s707
      %p709 = scmp.eq.s32.totalorder %s97, 0
      %p710 = por %p708, %p709
      %s711 = ssub.s32 %s99, %s106
      %p712 = scmp.eq.s32.totalorder %s711, 0
      %s714 = sadd.s32 %s713, 1
      %s715 = scalar_select %p712, %s713, %s714
      %p718 = pneg %p712
      %p719 = scmp.eq.s32.totalorder %s91, 3
      %p720 = por %p718, %p719
      %p721 = scmp.ne.s32.totalorder %s713, %s716
      %p722 = scmp.eq.s32.totalorder %s91, 0
      %p723 = por %p721, %p722
      %p724 = scmp.ne.s32.totalorder %s713, %s716
      %p725 = scmp.eq.s32.totalorder %s96, 3
      %p726 = por %p724, %p725
      %p727 = scmp.ne.s32.totalorder %s716, %s717
      %p728 = scmp.eq.s32.totalorder %s96, 0
      %p729 = por %p727, %p728
      %p730 = scmp.ne.s32.totalorder %s716, %s717
      %p731 = scmp.eq.s32.totalorder %s97, 3
      %p732 = por %p730, %p731
      %p734 = scmp.ne.s32.totalorder %s717, %s733
      %p735 = scmp.eq.s32.totalorder %s97, 0
      %p736 = por %p734, %p735
      %s737 = ssub.s32 %s99, %s106
      %p738 = scmp.eq.s32.totalorder %s737, 0
      %s740 = sadd.s32 %s739, 1
      %s741 = scalar_select %p738, %s739, %s740
      %p744 = pneg %p738
      %p745 = scmp.eq.s32.totalorder %s91, 3
      %p746 = por %p744, %p745
      %p747 = scmp.ne.s32.totalorder %s739, %s742
      %p748 = scmp.eq.s32.totalorder %s91, 0
      %p749 = por %p747, %p748
      %p750 = scmp.ne.s32.totalorder %s739, %s742
      %p751 = scmp.eq.s32.totalorder %s96, 3
      %p752 = por %p750, %p751
      %p753 = scmp.ne.s32.totalorder %s742, %s743
      %p754 = scmp.eq.s32.totalorder %s96, 0
      %p755 = por %p753, %p754
      %p756 = scmp.ne.s32.totalorder %s742, %s743
      %p757 = scmp.eq.s32.totalorder %s97, 3
      %p758 = por %p756, %p757
      %p760 = scmp.ne.s32.totalorder %s743, %s759
      %p761 = scmp.eq.s32.totalorder %s97, 0
      %p762 = por %p760, %p761
      %s763 = ssub.s32 %s99, %s106
      %p764 = scmp.eq.s32.totalorder %s763, 0
      %s766 = sadd.s32 %s765, 1
      %s767 = scalar_select %p764, %s765, %s766
      %p770 = pneg %p764
      %p771 = scmp.eq.s32.totalorder %s91, 3
      %p772 = por %p770, %p771
      %p773 = scmp.ne.s32.totalorder %s765, %s768
      %p774 = scmp.eq.s32.totalorder %s91, 0
      %p775 = por %p773, %p774
      %p776 = scmp.ne.s32.totalorder %s765, %s768
      %p777 = scmp.eq.s32.totalorder %s96, 3
      %p778 = por %p776, %p777
      %p779 = scmp.ne.s32.totalorder %s768, %s769
      %p780 = scmp.eq.s32.totalorder %s96, 0
      %p781 = por %p779, %p780
      %p782 = scmp.ne.s32.totalorder %s768, %s769
      %p783 = scmp.eq.s32.totalorder %s97, 3
      %p784 = por %p782, %p783
      %p786 = scmp.ne.s32.totalorder %s769, %s785
      %p787 = scmp.eq.s32.totalorder %s97, 0
      %p788 = por %p786, %p787
      %s789 = ssub.s32 %s99, %s106
      %p790 = scmp.eq.s32.totalorder %s789, 0
      %s792 = sadd.s32 %s791, 1
      %s793 = scalar_select %p790, %s791, %s792
      %p796 = pneg %p790
      %p797 = scmp.eq.s32.totalorder %s91, 3
      %p798 = por %p796, %p797
      %p799 = scmp.ne.s32.totalorder %s791, %s794
      %p800 = scmp.eq.s32.totalorder %s91, 0
      %p801 = por %p799, %p800
      %p802 = scmp.ne.s32.totalorder %s791, %s794
      %p803 = scmp.eq.s32.totalorder %s96, 3
      %p804 = por %p802, %p803
      %p805 = scmp.ne.s32.totalorder %s794, %s795
      %p806 = scmp.eq.s32.totalorder %s96, 0
      %p807 = por %p805, %p806
      %p808 = scmp.ne.s32.totalorder %s794, %s795
      %p809 = scmp.eq.s32.totalorder %s97, 3
      %p810 = por %p808, %p809
      %p812 = scmp.ne.s32.totalorder %s795, %s811
      %p813 = scmp.eq.s32.totalorder %s97, 0
      %p814 = por %p812, %p813
      %s815 = ssub.s32 %s99, %s106
      %p816 = scmp.eq.s32.totalorder %s815, 0
      %s818 = sadd.s32 %s817, 1
      %s819 = scalar_select %p816, %s817, %s818
      %p822 = pneg %p816
      %p823 = scmp.eq.s32.totalorder %s91, 3
      %p824 = por %p822, %p823
      %p825 = scmp.ne.s32.totalorder %s817, %s820
      %p826 = scmp.eq.s32.totalorder %s91, 0
      %p827 = por %p825, %p826
      %p828 = scmp.ne.s32.totalorder %s817, %s820
      %p829 = scmp.eq.s32.totalorder %s96, 3
      %p830 = por %p828, %p829
      %p831 = scmp.ne.s32.totalorder %s820, %s821
      %p832 = scmp.eq.s32.totalorder %s96, 0
      %p833 = por %p831, %p832
      %p834 = scmp.ne.s32.totalorder %s820, %s821
      %p835 = scmp.eq.s32.totalorder %s97, 3
      %p836 = por %p834, %p835
      %p838 = scmp.ne.s32.totalorder %s821, %s837
      %p839 = scmp.eq.s32.totalorder %s97, 0
      %p840 = por %p838, %p839
      %s841 = ssub.s32 %s99, %s106
      %p842 = scmp.eq.s32.totalorder %s841, 0
      %s844 = sadd.s32 %s843, 1
      %s845 = scalar_select %p842, %s843, %s844
      %p848 = pneg %p842
      %p849 = scmp.eq.s32.totalorder %s91, 3
      %p850 = por %p848, %p849
      %p851 = scmp.ne.s32.totalorder %s843, %s846
      %p852 = scmp.eq.s32.totalorder %s91, 0
      %p853 = por %p851, %p852
      %p854 = scmp.ne.s32.totalorder %s843, %s846
      %p855 = scmp.eq.s32.totalorder %s96, 3
      %p856 = por %p854, %p855
      %p857 = scmp.ne.s32.totalorder %s846, %s847
      %p858 = scmp.eq.s32.totalorder %s96, 0
      %p859 = por %p857, %p858
      %p860 = scmp.ne.s32.totalorder %s846, %s847
      %p861 = scmp.eq.s32.totalorder %s97, 3
      %p862 = por %p860, %p861
      %p864 = scmp.ne.s32.totalorder %s847, %s863
      %p865 = scmp.eq.s32.totalorder %s97, 0
      %p866 = por %p864, %p865
      %s867 = ssub.s32 %s99, %s106
      %p868 = scmp.eq.s32.totalorder %s867, 0
      %s870 = sadd.s32 %s869, 1
      %s871 = scalar_select %p868, %s869, %s870
      %p874 = pneg %p868
      %p875 = scmp.eq.s32.totalorder %s91, 3
      %p876 = por %p874, %p875
      %p877 = scmp.ne.s32.totalorder %s869, %s872
      %p878 = scmp.eq.s32.totalorder %s91, 0
      %p879 = por %p877, %p878
      %p880 = scmp.ne.s32.totalorder %s869, %s872
      %p881 = scmp.eq.s32.totalorder %s96, 3
      %p882 = por %p880, %p881
      %p883 = scmp.ne.s32.totalorder %s872, %s873
      %p884 = scmp.eq.s32.totalorder %s96, 0
      %p885 = por %p883, %p884
      %p886 = scmp.ne.s32.totalorder %s872, %s873
      %p887 = scmp.eq.s32.totalorder %s97, 3
      %p888 = por %p886, %p887
      %p890 = scmp.ne.s32.totalorder %s873, %s889
      %p891 = scmp.eq.s32.totalorder %s97, 0
      %p892 = por %p890, %p891
      %s893 = ssub.s32 %s99, %s106
      %s894 = ssub.s32 %s98, %s110
      %s895 = sor.u32 %s893, %s894
      %p896 = scmp.eq.s32.totalorder %s895, 0
      %s898 = sadd.s32 %s897, 1
      %s899 = scalar_select %p896, %s897, %s898
      %p902 = pneg %p896
      %p903 = scmp.eq.s32.totalorder %s91, 3
      %p904 = por %p902, %p903
      %p905 = scmp.ne.s32.totalorder %s897, %s900
      %p906 = scmp.eq.s32.totalorder %s91, 0
      %p907 = por %p905, %p906
      %p908 = scmp.ne.s32.totalorder %s897, %s900
      %p909 = scmp.eq.s32.totalorder %s96, 3
      %p910 = por %p908, %p909
      %p911 = scmp.ne.s32.totalorder %s900, %s901
      %p912 = scmp.eq.s32.totalorder %s96, 0
      %p913 = por %p911, %p912
      %p914 = scmp.ne.s32.totalorder %s900, %s901
      %p915 = scmp.eq.s32.totalorder %s97, 3
      %p916 = por %p914, %p915
      %p918 = scmp.ne.s32.totalorder %s901, %s917
      %p919 = scmp.eq.s32.totalorder %s97, 0
      %p920 = por %p918, %p919
      %p921 = scmp.le.s32.totalorder 1, %s91
      %p922 = scmp.lt.s32.totalorder %s91, 5
      %p923 = pnand %p921, %p922
      %p924 = pneg %p923
      // Predicated region
      $region9: #{fwd.2} parent=5 // pred_check
        _
      $region10: #{fwd.2} parent=5 // pred_check_branch
        %926 = sbr.rel (%p923) target = $region12
      $region11: #{fwd.2} parent=5 // pred_region
        %s927 = ssub.s32 %s91, 1
        // Predicated region
        $region13: #{fwd.2} parent=11 // pred_check
          %p928 = pneg %p254
        $region14: #{fwd.2} parent=11 // pred_check_branch
          %930 = sbr.rel (%p928) target = $region16
        $region15: #{fwd.2} parent=11 // pred_region
          %s932 = ssub.s32 1024, 1024
          %933 = vsyncadd [#allocation6], %s932
          %s934 = sshll.u32 [#allocation5], 4
          %s935 = int_to_ptr.vmem [resolvable:$true] %s934
          %940 = dma.hbm_to_vmem [thread:$0]  %s11, 1024, %s935, [#allocation6], 128, 128, 8
        $region16: #{fwd.2} parent=11 // pred_fallthru
          _
        // Predicated region
        $region17: #{fwd.2} parent=11 // pred_check
          %p941 = pneg %p275
        $region18: #{fwd.2} parent=11 // pred_check_branch
          %943 = sbr.rel (%p941) target = $region20
        $region19: #{fwd.2} parent=11 // pred_region
          %s945 = ssub.s32 16, 16
          %946 = vsyncadd [#allocation8], %s945
          %s948 = sshll.u32 [#allocation7], 4
          %s949 = int_to_ptr.vmem [resolvable:$true] %s948
          %951 = dma.hbm_to_vmem [thread:$0]  %s13, 16, %s949, [#allocation8]
        $region20: #{fwd.2} parent=11 // pred_fallthru
          _
        // Predicated region
        $region21: #{fwd.2} parent=11 // pred_check
          %p952 = pneg %p296
        $region22: #{fwd.2} parent=11 // pred_check_branch
          %954 = sbr.rel (%p952) target = $region24
        $region23: #{fwd.2} parent=11 // pred_region
          %s956 = ssub.s32 1024, 1024
          %957 = vsyncadd [#allocation8], %s956
          %s958 = sshll.u32 [#allocation9], 4
          %s959 = int_to_ptr.vmem [resolvable:$true] %s958
          %964 = dma.hbm_to_vmem [thread:$0]  %s15, 1024, %s959, [#allocation8], 128, 128, 8
        $region24: #{fwd.2} parent=11 // pred_fallthru
          _
        // Predicated region
        $region25: #{fwd.2} parent=11 // pred_check
          %p965 = pneg %p317
        $region26: #{fwd.2} parent=11 // pred_check_branch
          %967 = sbr.rel (%p965) target = $region28
        $region27: #{fwd.2} parent=11 // pred_region
          %s969 = ssub.s32 16, 16
          %970 = vsyncadd [#allocation11], %s969
          %s972 = sshll.u32 [#allocation10], 4
          %s973 = int_to_ptr.vmem [resolvable:$true] %s972
          %975 = dma.hbm_to_vmem [thread:$0]  %s17, 16, %s973, [#allocation11]
        $region28: #{fwd.2} parent=11 // pred_fallthru
          _
        // Predicated region
        $region29: #{fwd.2} parent=11 // pred_check
          %p976 = pneg %p338
        $region30: #{fwd.2} parent=11 // pred_check_branch
          %978 = sbr.rel (%p976) target = $region32
        $region31: #{fwd.2} parent=11 // pred_region
          _
        $region32: #{fwd.2} parent=11 // pred_fallthru
          _
        // Predicated region
        $region33: #{fwd.2} parent=11 // pred_check
          %p979 = pneg %p359
        $region34: #{fwd.2} parent=11 // pred_check_branch
          %981 = sbr.rel (%p979) target = $region36
        $region35: #{fwd.2} parent=11 // pred_region
          %s983 = ssub.s32 16, 16
          %984 = vsyncadd [#allocation11], %s983
          %s986 = sshll.u32 [#allocation12], 4
          %s987 = int_to_ptr.vmem [resolvable:$true] %s986
          %989 = dma.hbm_to_vmem [thread:$0]  %s21, 16, %s987, [#allocation11]
        $region36: #{fwd.2} parent=11 // pred_fallthru
          _
        // Predicated region
        $region37: #{fwd.2} parent=11 // pred_check
          %p990 = pneg %p380
        $region38: #{fwd.2} parent=11 // pred_check_branch
          %992 = sbr.rel (%p990) target = $region40
        $region39: #{fwd.2} parent=11 // pred_region
          %s994 = ssub.s32 64, 64
          %995 = vsyncadd [#allocation14], %s994
          %s997 = sshll.u32 [#allocation13], 4
          %s998 = int_to_ptr.vmem [resolvable:$true] %s997
          %1000 = dma.hbm_to_vmem [thread:$0]  %s23, 64, %s998, [#allocation14]
        $region40: #{fwd.2} parent=11 // pred_fallthru
          _
        // Predicated region
        $region41: #{fwd.2} parent=11 // pred_check
          %p1001 = pneg %p401
        $region42: #{fwd.2} parent=11 // pred_check_branch
          %1003 = sbr.rel (%p1001) target = $region44
        $region43: #{fwd.2} parent=11 // pred_region
          %s1005 = ssub.s32 16, 16
          %1006 = vsyncadd [#allocation14], %s1005
          %s1008 = sshll.u32 [#allocation15], 4
          %s1009 = int_to_ptr.vmem [resolvable:$true] %s1008
          %1011 = dma.hbm_to_vmem [thread:$0]  %s25, 16, %s1009, [#allocation14]
        $region44: #{fwd.2} parent=11 // pred_fallthru
          _
        // Predicated region
        $region45: #{fwd.2} parent=11 // pred_check
          %p1012 = pneg %p422
        $region46: #{fwd.2} parent=11 // pred_check_branch
          %1014 = sbr.rel (%p1012) target = $region48
        $region47: #{fwd.2} parent=11 // pred_region
          %s1016 = ssub.s32 512, 512
          %1017 = vsyncadd [#allocation17], %s1016
          %s1018 = sshll.u32 [#allocation16], 4
          %s1019 = int_to_ptr.vmem [resolvable:$true] %s1018
          %1024 = dma.hbm_to_vmem [thread:$0]  %s27, 512, %s1019, [#allocation17], 128, 128, 8
        $region48: #{fwd.2} parent=11 // pred_fallthru
          _
        // Predicated region
        $region49: #{fwd.2} parent=11 // pred_check
          %p1025 = pneg %p443
        $region50: #{fwd.2} parent=11 // pred_check_branch
          %1027 = sbr.rel (%p1025) target = $region52
        $region51: #{fwd.2} parent=11 // pred_region
          %s1029 = ssub.s32 16, 16
          %1030 = vsyncadd [#allocation17], %s1029
          %s1032 = sshll.u32 [#allocation18], 4
          %s1033 = int_to_ptr.vmem [resolvable:$true] %s1032
          %1035 = dma.hbm_to_vmem [thread:$0]  %s29, 16, %s1033, [#allocation17]
        $region52: #{fwd.2} parent=11 // pred_fallthru
          _
      $region12: #{fwd.2} parent=5 // pred_fallthru
        _
      %p1036 = scmp.lt.s32.totalorder %s91, 4
      // Predicated region
      $region53: #{fwd.2} parent=5 // pred_check
        %p1037 = pneg %p1036
      $region54: #{fwd.2} parent=5 // pred_check_branch
        %1039 = sbr.rel (%p1037) target = $region56
      $region55: #{fwd.2} parent=5 // pred_region
        // Predicated region
        $region57: #{fwd.2} parent=55 // pred_check
          %p1040 = pneg %p123
        $region58: #{fwd.2} parent=55 // pred_check_branch
          %1042 = sbr.rel (%p1040) target = $region60
        $region59: #{fwd.2} parent=55 // pred_region
          %p1043 = scmp.lt.s32.totalorder %s98, 1
          %s1044 = scalar_select %p1043, %s98, 1
          %s1045 = smul.addr %s1044, 2
          %s1046 = smul.addr %s1045, 8
          %s1047 = scalar_lea.vmem %s1, %s1046
        $region60: #{fwd.2} parent=55 // pred_fallthru
          _
        // Predicated region
        $region61: #{fwd.2} parent=55 // pred_check
          %p1048 = pneg %p149
        $region62: #{fwd.2} parent=55 // pred_check_branch
          %1050 = sbr.rel (%p1048) target = $region64
        $region63: #{fwd.2} parent=55 // pred_region
          %p1051 = scmp.lt.s32.totalorder %s98, 1
          %s1052 = scalar_select %p1051, %s98, 1
          %s1053 = smul.addr %s1052, 2
          %s1054 = smul.addr %s1053, 8
          %s1055 = scalar_lea.vmem %s3, %s1054
        $region64: #{fwd.2} parent=55 // pred_fallthru
          _
        // Predicated region
        $region65: #{fwd.2} parent=55 // pred_check
          %p1056 = pneg %p175
        $region66: #{fwd.2} parent=55 // pred_check_branch
          %1058 = sbr.rel (%p1056) target = $region68
        $region67: #{fwd.2} parent=55 // pred_region
          %p1059 = scmp.lt.s32.totalorder %s98, 1
          %s1060 = scalar_select %p1059, %s98, 1
          %s1061 = scalar_lea.vmem %s5, %s1060
        $region68: #{fwd.2} parent=55 // pred_fallthru
          _
        // Predicated region
        $region69: #{fwd.2} parent=55 // pred_check
          %p1062 = pneg %p201
        $region70: #{fwd.2} parent=55 // pred_check_branch
          %1064 = sbr.rel (%p1062) target = $region72
        $region71: #{fwd.2} parent=55 // pred_region
          %p1065 = scmp.lt.s32.totalorder %s98, 1
          %s1066 = scalar_select %p1065, %s98, 1
          %s1067 = smul.addr %s1066, 8
          %s1068 = scalar_lea.vmem %s7, %s1067
        $region72: #{fwd.2} parent=55 // pred_fallthru
          _
        // Predicated region
        $region73: #{fwd.2} parent=55 // pred_check
          %p1069 = pneg %p227
        $region74: #{fwd.2} parent=55 // pred_check_branch
          %1071 = sbr.rel (%p1069) target = $region76
        $region75: #{fwd.2} parent=55 // pred_region
          %p1072 = scmp.lt.s32.totalorder %s98, 1
          %s1073 = scalar_select %p1072, %s98, 1
          %s1074 = scalar_lea.vmem %s9, %s1073
        $region76: #{fwd.2} parent=55 // pred_fallthru
          _
        // Predicated region
        $region77: #{fwd.2} parent=55 // pred_check
          %p1075 = pneg %p463
        $region78: #{fwd.2} parent=55 // pred_check_branch
          %1077 = sbr.rel (%p1075) target = $region80
        $region79: #{fwd.2} parent=55 // pred_region
          %s1078 = sand.u32 %s91, 1
          %s1079 = scalar_lea.sflag [#allocation20], %s1078
          %s1080 = sand.u32 %s453, 1
          %s1081 = scalar_lea.vmem [#allocation19], %s1080
          %s1083 = ssub.s32 16, 16
          %1084 = vsyncadd %s1079, %s1083
          %s1085 = smul.addr %s99, 16
          %s1086 = scalar_lea.hbm %s31, %s1085
          %s1088 = sshll.u32 %s1081, 4
          %s1089 = int_to_ptr.vmem [resolvable:$true] %s1088
          %1091 = dma.hbm_to_vmem [thread:$0]  %s1086, 16, %s1089, %s1079
        $region80: #{fwd.2} parent=55 // pred_fallthru
          _
        // Predicated region
        $region81: #{fwd.2} parent=55 // pred_check
          %p1092 = pneg %p489
        $region82: #{fwd.2} parent=55 // pred_check_branch
          %1094 = sbr.rel (%p1092) target = $region84
        $region83: #{fwd.2} parent=55 // pred_region
          %s1095 = sand.u32 %s91, 1
          %s1096 = scalar_lea.sflag [#allocation20], %s1095
          %s1097 = sand.u32 %s479, 1
          %s1098 = scalar_lea.vmem [#allocation21], %s1097
          %s1100 = ssub.s32 16, 16
          %1101 = vsyncadd %s1096, %s1100
          %s1102 = smul.addr %s99, 16
          %s1103 = scalar_lea.hbm %s33, %s1102
          %s1105 = sshll.u32 %s1098, 4
          %s1106 = int_to_ptr.vmem [resolvable:$true] %s1105
          %1108 = dma.hbm_to_vmem [thread:$0]  %s1103, 16, %s1106, %s1096
        $region84: #{fwd.2} parent=55 // pred_fallthru
          _
        // Predicated region
        $region85: #{fwd.2} parent=55 // pred_check
          %p1109 = pneg %p515
        $region86: #{fwd.2} parent=55 // pred_check_branch
          %1111 = sbr.rel (%p1109) target = $region88
        $region87: #{fwd.2} parent=55 // pred_region
          %p1112 = scmp.lt.s32.totalorder %s99, 1
          %s1113 = scalar_select %p1112, %s99, 1
          %s1114 = smul.addr %s1113, 16
          %s1115 = smul.addr %s1114, 8
          %s1116 = scalar_lea.vmem %s35, %s1115
        $region88: #{fwd.2} parent=55 // pred_fallthru
          _
        // Predicated region
        $region89: #{fwd.2} parent=55 // pred_check
          %p1117 = pneg %p541
        $region90: #{fwd.2} parent=55 // pred_check_branch
          %1119 = sbr.rel (%p1117) target = $region92
        $region91: #{fwd.2} parent=55 // pred_region
          %p1120 = scmp.lt.s32.totalorder %s99, 1
          %s1121 = scalar_select %p1120, %s99, 1
          %s1122 = smul.addr %s1121, 8
          %s1123 = smul.addr %s1122, 8
          %s1124 = scalar_lea.vmem %s37, %s1123
        $region92: #{fwd.2} parent=55 // pred_fallthru
          _
        // Predicated region
        $region93: #{fwd.2} parent=55 // pred_check
          %p1125 = pneg %p567
        $region94: #{fwd.2} parent=55 // pred_check_branch
          %1127 = sbr.rel (%p1125) target = $region96
        $region95: #{fwd.2} parent=55 // pred_region
          %s1128 = sand.u32 %s91, 1
          %s1129 = scalar_lea.sflag [#allocation23], %s1128
          %s1130 = sand.u32 %s557, 1
          %s1131 = scalar_lea.vmem [#allocation22], %s1130
          %s1133 = ssub.s32 16, 16
          %1134 = vsyncadd %s1129, %s1133
          %s1135 = smul.addr %s99, 16
          %s1136 = scalar_lea.hbm %s39, %s1135
          %s1138 = sshll.u32 %s1131, 4
          %s1139 = int_to_ptr.vmem [resolvable:$true] %s1138
          %1141 = dma.hbm_to_vmem [thread:$0]  %s1136, 16, %s1139, %s1129
        $region96: #{fwd.2} parent=55 // pred_fallthru
          _
        // Predicated region
        $region97: #{fwd.2} parent=55 // pred_check
          %p1142 = pneg %p593
        $region98: #{fwd.2} parent=55 // pred_check_branch
          %1144 = sbr.rel (%p1142) target = $region100
        $region99: #{fwd.2} parent=55 // pred_region
          %s1145 = sand.u32 %s91, 1
          %s1146 = scalar_lea.sflag [#allocation23], %s1145
          %s1147 = sand.u32 %s583, 1
          %s1148 = scalar_lea.vmem [#allocation24], %s1147
          %s1150 = ssub.s32 16, 16
          %1151 = vsyncadd %s1146, %s1150
          %s1152 = smul.addr %s99, 16
          %s1153 = scalar_lea.hbm %s41, %s1152
          %s1155 = sshll.u32 %s1148, 4
          %s1156 = int_to_ptr.vmem [resolvable:$true] %s1155
          %1158 = dma.hbm_to_vmem [thread:$0]  %s1153, 16, %s1156, %s1146
        $region100: #{fwd.2} parent=55 // pred_fallthru
          _
        // Predicated region
        $region101: #{fwd.2} parent=55 // pred_check
          %p1159 = pneg %p619
        $region102: #{fwd.2} parent=55 // pred_check_branch
          %1161 = sbr.rel (%p1159) target = $region104
        $region103: #{fwd.2} parent=55 // pred_region
          %p1162 = scmp.lt.s32.totalorder %s99, 1
          %s1163 = scalar_select %p1162, %s99, 1
          %s1164 = smul.addr %s1163, 8
          %s1165 = smul.addr %s1164, 8
          %s1166 = scalar_lea.vmem %s43, %s1165
        $region104: #{fwd.2} parent=55 // pred_fallthru
          _
        // Predicated region
        $region105: #{fwd.2} parent=55 // pred_check
          %p1167 = pneg %p645
        $region106: #{fwd.2} parent=55 // pred_check_branch
          %1169 = sbr.rel (%p1167) target = $region108
        $region107: #{fwd.2} parent=55 // pred_region
          %p1170 = scmp.lt.s32.totalorder %s99, 1
          %s1171 = scalar_select %p1170, %s99, 1
          %s1172 = smul.addr %s1171, 8
          %s1173 = smul.addr %s1172, 8
          %s1174 = scalar_lea.vmem %s45, %s1173
        $region108: #{fwd.2} parent=55 // pred_fallthru
          _
        // Predicated region
        $region109: #{fwd.2} parent=55 // pred_check
          %p1175 = pneg %p671
        $region110: #{fwd.2} parent=55 // pred_check_branch
          %1177 = sbr.rel (%p1175) target = $region112
        $region111: #{fwd.2} parent=55 // pred_region
          %p1178 = scmp.lt.s32.totalorder %s99, 1
          %s1179 = scalar_select %p1178, %s99, 1
          %s1180 = smul.addr %s1179, 8
          %s1181 = smul.addr %s1180, 8
          %s1182 = scalar_lea.vmem %s47, %s1181
        $region112: #{fwd.2} parent=55 // pred_fallthru
          _
        // Predicated region
        $region113: #{fwd.2} parent=55 // pred_check
          %p1183 = pneg %p697
        $region114: #{fwd.2} parent=55 // pred_check_branch
          %1185 = sbr.rel (%p1183) target = $region116
        $region115: #{fwd.2} parent=55 // pred_region
          %s1186 = sand.u32 %s91, 1
          %s1187 = scalar_lea.sflag [#allocation26], %s1186
          %s1188 = sand.u32 %s687, 1
          %s1189 = scalar_lea.vmem [#allocation25], %s1188
          %s1191 = ssub.s32 16, 16
          %1192 = vsyncadd %s1187, %s1191
          %s1193 = smul.addr %s99, 16
          %s1194 = scalar_lea.hbm %s49, %s1193
          %s1196 = sshll.u32 %s1189, 4
          %s1197 = int_to_ptr.vmem [resolvable:$true] %s1196
          %1199 = dma.hbm_to_vmem [thread:$0]  %s1194, 16, %s1197, %s1187
        $region116: #{fwd.2} parent=55 // pred_fallthru
          _
        // Predicated region
        $region117: #{fwd.2} parent=55 // pred_check
          %p1200 = pneg %p723
        $region118: #{fwd.2} parent=55 // pred_check_branch
          %1202 = sbr.rel (%p1200) target = $region120
        $region119: #{fwd.2} parent=55 // pred_region
          %s1203 = sand.u32 %s91, 1
          %s1204 = scalar_lea.sflag [#allocation26], %s1203
          %s1205 = sand.u32 %s713, 1
          %s1206 = scalar_lea.vmem [#allocation27], %s1205
          %s1208 = ssub.s32 16, 16
          %1209 = vsyncadd %s1204, %s1208
          %s1210 = smul.addr %s99, 16
          %s1211 = scalar_lea.hbm %s51, %s1210
          %s1213 = sshll.u32 %s1206, 4
          %s1214 = int_to_ptr.vmem [resolvable:$true] %s1213
          %1216 = dma.hbm_to_vmem [thread:$0]  %s1211, 16, %s1214, %s1204
        $region120: #{fwd.2} parent=55 // pred_fallthru
          _
        // Predicated region
        $region121: #{fwd.2} parent=55 // pred_check
          %p1217 = pneg %p749
        $region122: #{fwd.2} parent=55 // pred_check_branch
          %1219 = sbr.rel (%p1217) target = $region124
        $region123: #{fwd.2} parent=55 // pred_region
          %p1220 = scmp.lt.s32.totalorder %s99, 1
          %s1221 = scalar_select %p1220, %s99, 1
          %s1222 = smul.addr %s1221, 16
          %s1223 = smul.addr %s1222, 8
          %s1224 = scalar_lea.vmem %s53, %s1223
        $region124: #{fwd.2} parent=55 // pred_fallthru
          _
        // Predicated region
        $region125: #{fwd.2} parent=55 // pred_check
          %p1225 = pneg %p775
        $region126: #{fwd.2} parent=55 // pred_check_branch
          %1227 = sbr.rel (%p1225) target = $region128
        $region127: #{fwd.2} parent=55 // pred_region
          %s1228 = sand.u32 %s91, 1
          %s1229 = scalar_lea.sflag [#allocation29], %s1228
          %s1230 = sand.u32 %s765, 1
          %s1231 = smul.addr %s1230, 2
          %s1232 = scalar_lea.vmem [#allocation28], %s1231
          %s1234 = ssub.s32 32, 32
          %1235 = vsyncadd %s1229, %s1234
          %s1236 = smul.addr %s99, 2
          %s1237 = smul.addr %s1236, 16
          %s1238 = scalar_lea.hbm %s55, %s1237
          %s1240 = sshll.u32 %s1232, 4
          %s1241 = int_to_ptr.vmem [resolvable:$true] %s1240
          %1243 = dma.hbm_to_vmem [thread:$0]  %s1238, 32, %s1241, %s1229
        $region128: #{fwd.2} parent=55 // pred_fallthru
          _
        // Predicated region
        $region129: #{fwd.2} parent=55 // pred_check
          %p1244 = pneg %p801
        $region130: #{fwd.2} parent=55 // pred_check_branch
          %1246 = sbr.rel (%p1244) target = $region132
        $region131: #{fwd.2} parent=55 // pred_region
          %p1247 = scmp.lt.s32.totalorder %s99, 1
          %s1248 = scalar_select %p1247, %s99, 1
          %s1249 = smul.addr %s1248, 32
          %s1250 = smul.addr %s1249, 8
          %s1251 = scalar_lea.vmem %s57, %s1250
        $region132: #{fwd.2} parent=55 // pred_fallthru
          _
        // Predicated region
        $region133: #{fwd.2} parent=55 // pred_check
          %p1252 = pneg %p827
        $region134: #{fwd.2} parent=55 // pred_check_branch
          %1254 = sbr.rel (%p1252) target = $region136
        $region135: #{fwd.2} parent=55 // pred_region
          %s1255 = sand.u32 %s91, 1
          %s1256 = scalar_lea.sflag [#allocation29], %s1255
          %s1257 = sand.u32 %s817, 1
          %s1258 = scalar_lea.vmem [#allocation30], %s1257
          %s1260 = ssub.s32 16, 16
          %1261 = vsyncadd %s1256, %s1260
          %s1262 = smul.addr %s99, 16
          %s1263 = scalar_lea.hbm %s59, %s1262
          %s1265 = sshll.u32 %s1258, 4
          %s1266 = int_to_ptr.vmem [resolvable:$true] %s1265
          %1268 = dma.hbm_to_vmem [thread:$0]  %s1263, 16, %s1266, %s1256
        $region136: #{fwd.2} parent=55 // pred_fallthru
          _
        // Predicated region
        $region137: #{fwd.2} parent=55 // pred_check
          %p1269 = pneg %p853
        $region138: #{fwd.2} parent=55 // pred_check_branch
          %1271 = sbr.rel (%p1269) target = $region140
        $region139: #{fwd.2} parent=55 // pred_region
          %s1272 = sand.u32 %s843, 1
          %s1273 = scalar_lea.sflag [#allocation32], %s1272
          %s1274 = sand.u32 %s843, 1
          %s1275 = smul.addr %s1274, 64
          %s1276 = scalar_lea.vmem [#allocation31], %s1275
          %s1278 = ssub.s32 1024, 1024
          %1279 = vsyncadd %s1273, %s1278
          %s1280 = smul.addr %s99, 8
          %s1281 = smul.addr %s1280, 128
          %s1282 = scalar_lea.hbm %s61, %s1281
          %s1283 = sshll.u32 %s1276, 4
          %s1284 = int_to_ptr.vmem [resolvable:$true] %s1283
          %1289 = dma.hbm_to_vmem [thread:$0]  %s1282, 1024, %s1284, %s1273, 128, 128, 8
        $region140: #{fwd.2} parent=55 // pred_fallthru
          _
        // Predicated region
        $region141: #{fwd.2} parent=55 // pred_check
          %p1290 = pneg %p879
        $region142: #{fwd.2} parent=55 // pred_check_branch
          %1292 = sbr.rel (%p1290) target = $region144
        $region143: #{fwd.2} parent=55 // pred_region
          %p1293 = scmp.lt.s32.totalorder %s99, 1
          %s1294 = scalar_select %p1293, %s99, 1
          %s1295 = scalar_lea.vmem %s63, %s1294
        $region144: #{fwd.2} parent=55 // pred_fallthru
          _
      $region56: #{fwd.2} parent=5 // pred_fallthru
        _
      %p1296 = scmp.le.s32.totalorder 1, %s91
      %p1297 = scmp.lt.s32.totalorder %s91, 5
      %p1298 = pnand %p1296, %p1297
      %p1299 = pneg %p1298
      // Predicated region
      $region145: #{fwd.2} parent=5 // pred_check
        _
      $region146: #{fwd.2} parent=5 // pred_check_branch
        %1301 = sbr.rel (%p1298) target = $region148
      $region147: #{fwd.2} parent=5 // pred_region
        %s1302 = ssub.s32 %s91, 1
        // Predicated region
        $region149: #{fwd.2} parent=147 // pred_check
          %p1303 = pneg %p254
        $region150: #{fwd.2} parent=147 // pred_check_branch
          %1305 = sbr.rel (%p1303) target = $region152
        $region151: #{fwd.2} parent=147 // pred_region
          %1306 = dma.done [#allocation6], 1024
        $region152: #{fwd.2} parent=147 // pred_fallthru
          _
        // Predicated region
        $region153: #{fwd.2} parent=147 // pred_check
          %p1307 = pneg %p275
        $region154: #{fwd.2} parent=147 // pred_check_branch
          %1309 = sbr.rel (%p1307) target = $region156
        $region155: #{fwd.2} parent=147 // pred_region
          %1310 = dma.done [#allocation8], 16
        $region156: #{fwd.2} parent=147 // pred_fallthru
          _
        // Predicated region
        $region157: #{fwd.2} parent=147 // pred_check
          %p1311 = pneg %p296
        $region158: #{fwd.2} parent=147 // pred_check_branch
          %1313 = sbr.rel (%p1311) target = $region160
        $region159: #{fwd.2} parent=147 // pred_region
          %1314 = dma.done [#allocation8], 1024
        $region160: #{fwd.2} parent=147 // pred_fallthru
          _
        // Predicated region
        $region161: #{fwd.2} parent=147 // pred_check
          %p1315 = pneg %p317
        $region162: #{fwd.2} parent=147 // pred_check_branch
          %1317 = sbr.rel (%p1315) target = $region164
        $region163: #{fwd.2} parent=147 // pred_region
          %1318 = dma.done [#allocation11], 16
        $region164: #{fwd.2} parent=147 // pred_fallthru
          _
        // Predicated region
        $region165: #{fwd.2} parent=147 // pred_check
          %p1319 = pneg %p359
        $region166: #{fwd.2} parent=147 // pred_check_branch
          %1321 = sbr.rel (%p1319) target = $region168
        $region167: #{fwd.2} parent=147 // pred_region
          %1322 = dma.done [#allocation11], 16
        $region168: #{fwd.2} parent=147 // pred_fallthru
          _
        // Predicated region
        $region169: #{fwd.2} parent=147 // pred_check
          %p1323 = pneg %p380
        $region170: #{fwd.2} parent=147 // pred_check_branch
          %1325 = sbr.rel (%p1323) target = $region172
        $region171: #{fwd.2} parent=147 // pred_region
          %1326 = dma.done [#allocation14], 64
        $region172: #{fwd.2} parent=147 // pred_fallthru
          _
        // Predicated region
        $region173: #{fwd.2} parent=147 // pred_check
          %p1327 = pneg %p401
        $region174: #{fwd.2} parent=147 // pred_check_branch
          %1329 = sbr.rel (%p1327) target = $region176
        $region175: #{fwd.2} parent=147 // pred_region
          %1330 = dma.done [#allocation14], 16
        $region176: #{fwd.2} parent=147 // pred_fallthru
          _
        // Predicated region
        $region177: #{fwd.2} parent=147 // pred_check
          %p1331 = pneg %p422
        $region178: #{fwd.2} parent=147 // pred_check_branch
          %1333 = sbr.rel (%p1331) target = $region180
        $region179: #{fwd.2} parent=147 // pred_region
          %1334 = dma.done [#allocation17], 512
        $region180: #{fwd.2} parent=147 // pred_fallthru
          _
        // Predicated region
        $region181: #{fwd.2} parent=147 // pred_check
          %p1335 = pneg %p443
        $region182: #{fwd.2} parent=147 // pred_check_branch
          %1337 = sbr.rel (%p1335) target = $region184
        $region183: #{fwd.2} parent=147 // pred_region
          %1338 = dma.done [#allocation17], 16
        $region184: #{fwd.2} parent=147 // pred_fallthru
          _
        %s1339 = sand.u32 %s96, 1
        %s1340 = scalar_lea.sflag [#allocation20], %s1339
        %s1341 = sand.u32 %s456, 1
        %s1342 = scalar_lea.vmem [#allocation19], %s1341
        // Predicated region
        $region185: #{fwd.2} parent=147 // pred_check
          %p1343 = pneg %p469
        $region186: #{fwd.2} parent=147 // pred_check_branch
          %1345 = sbr.rel (%p1343) target = $region188
        $region187: #{fwd.2} parent=147 // pred_region
          %1346 = dma.done %s1340, 16
        $region188: #{fwd.2} parent=147 // pred_fallthru
          _
        %s1347 = sand.u32 %s96, 1
        %s1348 = scalar_lea.sflag [#allocation20], %s1347
        %s1349 = sand.u32 %s482, 1
        %s1350 = scalar_lea.vmem [#allocation21], %s1349
        // Predicated region
        $region189: #{fwd.2} parent=147 // pred_check
          %p1351 = pneg %p495
        $region190: #{fwd.2} parent=147 // pred_check_branch
          %1353 = sbr.rel (%p1351) target = $region192
        $region191: #{fwd.2} parent=147 // pred_region
          %1354 = dma.done %s1348, 16
        $region192: #{fwd.2} parent=147 // pred_fallthru
          _
        %s1355 = sand.u32 %s96, 1
        %s1356 = scalar_lea.sflag [#allocation23], %s1355
        %s1357 = sand.u32 %s560, 1
        %s1358 = scalar_lea.vmem [#allocation22], %s1357
        // Predicated region
        $region193: #{fwd.2} parent=147 // pred_check
          %p1359 = pneg %p573
        $region194: #{fwd.2} parent=147 // pred_check_branch
          %1361 = sbr.rel (%p1359) target = $region196
        $region195: #{fwd.2} parent=147 // pred_region
          %1362 = dma.done %s1356, 16
        $region196: #{fwd.2} parent=147 // pred_fallthru
          _
        %s1363 = sand.u32 %s96, 1
        %s1364 = scalar_lea.sflag [#allocation23], %s1363
        %s1365 = sand.u32 %s586, 1
        %s1366 = scalar_lea.vmem [#allocation24], %s1365
        // Predicated region
        $region197: #{fwd.2} parent=147 // pred_check
          %p1367 = pneg %p599
        $region198: #{fwd.2} parent=147 // pred_check_branch
          %1369 = sbr.rel (%p1367) target = $region200
        $region199: #{fwd.2} parent=147 // pred_region
          %1370 = dma.done %s1364, 16
        $region200: #{fwd.2} parent=147 // pred_fallthru
          _
        %s1371 = sand.u32 %s96, 1
        %s1372 = scalar_lea.sflag [#allocation26], %s1371
        %s1373 = sand.u32 %s690, 1
        %s1374 = scalar_lea.vmem [#allocation25], %s1373
        // Predicated region
        $region201: #{fwd.2} parent=147 // pred_check
          %p1375 = pneg %p703
        $region202: #{fwd.2} parent=147 // pred_check_branch
          %1377 = sbr.rel (%p1375) target = $region204
        $region203: #{fwd.2} parent=147 // pred_region
          %1378 = dma.done %s1372, 16
        $region204: #{fwd.2} parent=147 // pred_fallthru
          _
        %s1379 = sand.u32 %s96, 1
        %s1380 = scalar_lea.sflag [#allocation26], %s1379
        %s1381 = sand.u32 %s716, 1
        %s1382 = scalar_lea.vmem [#allocation27], %s1381
        // Predicated region
        $region205: #{fwd.2} parent=147 // pred_check
          %p1383 = pneg %p729
        $region206: #{fwd.2} parent=147 // pred_check_branch
          %1385 = sbr.rel (%p1383) target = $region208
        $region207: #{fwd.2} parent=147 // pred_region
          %1386 = dma.done %s1380, 16
        $region208: #{fwd.2} parent=147 // pred_fallthru
          _
        %s1387 = sand.u32 %s96, 1
        %s1388 = scalar_lea.sflag [#allocation29], %s1387
        %s1389 = sand.u32 %s768, 1
        %s1390 = smul.addr %s1389, 2
        %s1391 = scalar_lea.vmem [#allocation28], %s1390
        // Predicated region
        $region209: #{fwd.2} parent=147 // pred_check
          %p1392 = pneg %p781
        $region210: #{fwd.2} parent=147 // pred_check_branch
          %1394 = sbr.rel (%p1392) target = $region212
        $region211: #{fwd.2} parent=147 // pred_region
          %1395 = dma.done %s1388, 32
        $region212: #{fwd.2} parent=147 // pred_fallthru
          _
        %s1396 = sand.u32 %s96, 1
        %s1397 = scalar_lea.sflag [#allocation29], %s1396
        %s1398 = sand.u32 %s820, 1
        %s1399 = scalar_lea.vmem [#allocation30], %s1398
        // Predicated region
        $region213: #{fwd.2} parent=147 // pred_check
          %p1400 = pneg %p833
        $region214: #{fwd.2} parent=147 // pred_check_branch
          %1402 = sbr.rel (%p1400) target = $region216
        $region215: #{fwd.2} parent=147 // pred_region
          %1403 = dma.done %s1397, 16
        $region216: #{fwd.2} parent=147 // pred_fallthru
          _
        %s1404 = sand.u32 %s846, 1
        %s1405 = scalar_lea.sflag [#allocation32], %s1404
        %s1406 = sand.u32 %s846, 1
        %s1407 = smul.addr %s1406, 64
        %s1408 = scalar_lea.vmem [#allocation31], %s1407
        // Predicated region
        $region217: #{fwd.2} parent=147 // pred_check
          %p1409 = pneg %p859
        $region218: #{fwd.2} parent=147 // pred_check_branch
          %1411 = sbr.rel (%p1409) target = $region220
        $region219: #{fwd.2} parent=147 // pred_region
          %1412 = dma.done %s1405, 1024
        $region220: #{fwd.2} parent=147 // pred_fallthru
          _
        %p1413 = scmp.lt.s32.totalorder %s100, 1
        %s1414 = scalar_select %p1413, %s100, 1
        %s1415 = smul.addr %s1414, 2
        %s1416 = smul.addr %s1415, 8
        %s1417 = scalar_lea.vmem %s1, %s1416
        %p1418 = pneg %p129
        %p1419 = pneg %p126
        %p1420 = scmp.lt.s32.totalorder %s100, 1
        %s1421 = scalar_select %p1420, %s100, 1
        %s1422 = smul.addr %s1421, 2
        %s1423 = smul.addr %s1422, 8
        %s1424 = scalar_lea.vmem %s3, %s1423
        %p1425 = pneg %p155
        %p1426 = pneg %p152
        %p1427 = scmp.lt.s32.totalorder %s100, 1
        %s1428 = scalar_select %p1427, %s100, 1
        %s1429 = scalar_lea.vmem %s5, %s1428
        %p1430 = pneg %p181
        %p1431 = pneg %p178
        %p1432 = scmp.lt.s32.totalorder %s100, 1
        %s1433 = scalar_select %p1432, %s100, 1
        %s1434 = smul.addr %s1433, 8
        %s1435 = scalar_lea.vmem %s7, %s1434
        %p1436 = pneg %p207
        %p1437 = pneg %p204
        %p1438 = scmp.lt.s32.totalorder %s100, 1
        %s1439 = scalar_select %p1438, %s100, 1
        %s1440 = scalar_lea.vmem %s9, %s1439
        %p1441 = pneg %p233
        %p1442 = pneg %p230
        %p1443 = pneg %p254
        %p1444 = pneg %p251
        %p1445 = pneg %p275
        %p1446 = pneg %p272
        %p1447 = pneg %p296
        %p1448 = pneg %p293
        %p1449 = pneg %p317
        %p1450 = pneg %p314
        %p1451 = pneg %p338
        %p1452 = pneg %p335
        %p1453 = pneg %p359
        %p1454 = pneg %p356
        %p1455 = pneg %p380
        %p1456 = pneg %p377
        %p1457 = pneg %p401
        %p1458 = pneg %p398
        %p1459 = pneg %p422
        %p1460 = pneg %p419
        %p1461 = pneg %p443
        %p1462 = pneg %p440
        %s1463 = sand.u32 %s96, 1
        %s1464 = scalar_lea.sflag [#allocation20], %s1463
        %s1465 = sand.u32 %s456, 1
        %s1466 = scalar_lea.vmem [#allocation19], %s1465
        %p1467 = pneg %p469
        %p1468 = pneg %p466
        %s1469 = sand.u32 %s96, 1
        %s1470 = scalar_lea.sflag [#allocation20], %s1469
        %s1471 = sand.u32 %s482, 1
        %s1472 = scalar_lea.vmem [#allocation21], %s1471
        %p1473 = pneg %p495
        %p1474 = pneg %p492
        %p1475 = scmp.lt.s32.totalorder %s101, 1
        %s1476 = scalar_select %p1475, %s101, 1
        %s1477 = smul.addr %s1476, 16
        %s1478 = smul.addr %s1477, 8
        %s1479 = scalar_lea.vmem %s35, %s1478
        %p1480 = pneg %p521
        %p1481 = pneg %p518
        %p1482 = scmp.lt.s32.totalorder %s101, 1
        %s1483 = scalar_select %p1482, %s101, 1
        %s1484 = smul.addr %s1483, 8
        %s1485 = smul.addr %s1484, 8
        %s1486 = scalar_lea.vmem %s37, %s1485
        %p1487 = pneg %p547
        %p1488 = pneg %p544
        %s1489 = sand.u32 %s96, 1
        %s1490 = scalar_lea.sflag [#allocation23], %s1489
        %s1491 = sand.u32 %s560, 1
        %s1492 = scalar_lea.vmem [#allocation22], %s1491
        %p1493 = pneg %p573
        %p1494 = pneg %p570
        %s1495 = sand.u32 %s96, 1
        %s1496 = scalar_lea.sflag [#allocation23], %s1495
        %s1497 = sand.u32 %s586, 1
        %s1498 = scalar_lea.vmem [#allocation24], %s1497
        %p1499 = pneg %p599
        %p1500 = pneg %p596
        %p1501 = scmp.lt.s32.totalorder %s101, 1
        %s1502 = scalar_select %p1501, %s101, 1
        %s1503 = smul.addr %s1502, 8
        %s1504 = smul.addr %s1503, 8
        %s1505 = scalar_lea.vmem %s43, %s1504
        %p1506 = pneg %p625
        %p1507 = pneg %p622
        %p1508 = scmp.lt.s32.totalorder %s101, 1
        %s1509 = scalar_select %p1508, %s101, 1
        %s1510 = smul.addr %s1509, 8
        %s1511 = smul.addr %s1510, 8
        %s1512 = scalar_lea.vmem %s45, %s1511
        %p1513 = pneg %p651
        %p1514 = pneg %p648
        %p1515 = scmp.lt.s32.totalorder %s101, 1
        %s1516 = scalar_select %p1515, %s101, 1
        %s1517 = smul.addr %s1516, 8
        %s1518 = smul.addr %s1517, 8
        %s1519 = scalar_lea.vmem %s47, %s1518
        %p1520 = pneg %p677
        %p1521 = pneg %p674
        %s1522 = sand.u32 %s96, 1
        %s1523 = scalar_lea.sflag [#allocation26], %s1522
        %s1524 = sand.u32 %s690, 1
        %s1525 = scalar_lea.vmem [#allocation25], %s1524
        %p1526 = pneg %p703
        %p1527 = pneg %p700
        %s1528 = sand.u32 %s96, 1
        %s1529 = scalar_lea.sflag [#allocation26], %s1528
        %s1530 = sand.u32 %s716, 1
        %s1531 = scalar_lea.vmem [#allocation27], %s1530
        %p1532 = pneg %p729
        %p1533 = pneg %p726
        %p1534 = scmp.lt.s32.totalorder %s101, 1
        %s1535 = scalar_select %p1534, %s101, 1
        %s1536 = smul.addr %s1535, 16
        %s1537 = smul.addr %s1536, 8
        %s1538 = scalar_lea.vmem %s53, %s1537
        %p1539 = pneg %p755
        %p1540 = pneg %p752
        %s1541 = sand.u32 %s96, 1
        %s1542 = scalar_lea.sflag [#allocation29], %s1541
        %s1543 = sand.u32 %s768, 1
        %s1544 = smul.addr %s1543, 2
        %s1545 = scalar_lea.vmem [#allocation28], %s1544
        %p1546 = pneg %p781
        %p1547 = pneg %p778
        %p1548 = scmp.lt.s32.totalorder %s101, 1
        %s1549 = scalar_select %p1548, %s101, 1
        %s1550 = smul.addr %s1549, 32
        %s1551 = smul.addr %s1550, 8
        %s1552 = scalar_lea.vmem %s57, %s1551
        %p1553 = pneg %p807
        %p1554 = pneg %p804
        %s1555 = sand.u32 %s96, 1
        %s1556 = scalar_lea.sflag [#allocation29], %s1555
        %s1557 = sand.u32 %s820, 1
        %s1558 = scalar_lea.vmem [#allocation30], %s1557
        %p1559 = pneg %p833
        %p1560 = pneg %p830
        %s1561 = sand.u32 %s846, 1
        %s1562 = scalar_lea.sflag [#allocation32], %s1561
        %s1563 = sand.u32 %s846, 1
        %s1564 = smul.addr %s1563, 64
        %s1565 = scalar_lea.vmem [#allocation31], %s1564
        %p1566 = pneg %p859
        %p1567 = pneg %p856
        %p1568 = scmp.lt.s32.totalorder %s101, 1
        %s1569 = scalar_select %p1568, %s101, 1
        %s1570 = scalar_lea.vmem %s63, %s1569
        %p1571 = pneg %p885
        %p1572 = pneg %p882
        %p1573 = pneg %p913
        %p1574 = pneg %p910
        %p1575 = scmp.lt.s32.totalorder %s101, 1
        %s1576 = scalar_select %p1575, %s101, 1
        %p1577 = scmp.lt.s32.totalorder %s100, 1
        %s1578 = scalar_select %p1577, %s100, 1
        %s1579 = smul.addr %s1578, 2
        %s1580 = smul.addr %s1576, 4
        %s1581 = sadd.s32 %s1579, %s1580
        %s1582 = smul.addr %s1581, 8
        %s1583 = scalar_lea.vmem %s65, %s1582
        %p1584 = scmp.lt.s32.totalorder %s100, 1
        %s1585 = scalar_select %p1584, %s100, 1
        %s1586 = smul.addr %s1585, 2
        %s1587 = smul.addr %s1586, 8
        %s1588 = scalar_lea.vmem %s1, %s1587
        %p1589 = scmp.lt.s32.totalorder %s100, 1
        %s1590 = scalar_select %p1589, %s100, 1
        %s1591 = smul.addr %s1590, 2
        %s1592 = smul.addr %s1591, 8
        %s1593 = scalar_lea.vmem %s3, %s1592
        %p1594 = scmp.lt.s32.totalorder %s100, 1
        %s1595 = scalar_select %p1594, %s100, 1
        %s1596 = scalar_lea.vmem %s5, %s1595
        %p1597 = scmp.lt.s32.totalorder %s100, 1
        %s1598 = scalar_select %p1597, %s100, 1
        %s1599 = smul.addr %s1598, 8
        %s1600 = scalar_lea.vmem %s7, %s1599
        %p1601 = scmp.lt.s32.totalorder %s100, 1
        %s1602 = scalar_select %p1601, %s100, 1
        %s1603 = scalar_lea.vmem %s9, %s1602
        %p1604 = scmp.lt.s32.totalorder %s101, 1
        %s1605 = scalar_select %p1604, %s101, 1
        %s1606 = smul.addr %s1605, 16
        %s1607 = smul.addr %s1606, 8
        %s1608 = scalar_lea.vmem %s35, %s1607
        %p1609 = scmp.lt.s32.totalorder %s101, 1
        %s1610 = scalar_select %p1609, %s101, 1
        %s1611 = smul.addr %s1610, 8
        %s1612 = smul.addr %s1611, 8
        %s1613 = scalar_lea.vmem %s37, %s1612
        %p1614 = scmp.lt.s32.totalorder %s101, 1
        %s1615 = scalar_select %p1614, %s101, 1
        %s1616 = smul.addr %s1615, 8
        %s1617 = smul.addr %s1616, 8
        %s1618 = scalar_lea.vmem %s43, %s1617
        %p1619 = scmp.lt.s32.totalorder %s101, 1
        %s1620 = scalar_select %p1619, %s101, 1
        %s1621 = smul.addr %s1620, 8
        %s1622 = smul.addr %s1621, 8
        %s1623 = scalar_lea.vmem %s45, %s1622
        %p1624 = scmp.lt.s32.totalorder %s101, 1
        %s1625 = scalar_select %p1624, %s101, 1
        %s1626 = smul.addr %s1625, 8
        %s1627 = smul.addr %s1626, 8
        %s1628 = scalar_lea.vmem %s47, %s1627
        %p1629 = scmp.lt.s32.totalorder %s101, 1
        %s1630 = scalar_select %p1629, %s101, 1
        %s1631 = smul.addr %s1630, 16
        %s1632 = smul.addr %s1631, 8
        %s1633 = scalar_lea.vmem %s53, %s1632
        %p1634 = scmp.lt.s32.totalorder %s101, 1
        %s1635 = scalar_select %p1634, %s101, 1
        %s1636 = smul.addr %s1635, 32
        %s1637 = smul.addr %s1636, 8
        %s1638 = scalar_lea.vmem %s57, %s1637
        %p1639 = scmp.lt.s32.totalorder %s101, 1
        %s1640 = scalar_select %p1639, %s101, 1
        %s1641 = scalar_lea.vmem %s63, %s1640
        %p1642 = scmp.lt.s32.totalorder %s101, 1
        %s1643 = scalar_select %p1642, %s101, 1
        %p1644 = scmp.lt.s32.totalorder %s100, 1
        %s1645 = scalar_select %p1644, %s100, 1
        %s1646 = smul.addr %s1645, 2
        %s1647 = smul.addr %s1643, 4
        %s1648 = sadd.s32 %s1646, %s1647
        %s1649 = smul.addr %s1648, 8
        %s1650 = scalar_lea.vmem %s65, %s1649
        %p1651 = scmp.eq.s32.totalorder %s101, 0
        // Predicated region
        $region221: #{fwd.2} parent=147 // pred_check
          %p1652 = pneg %p1651
        $region222: #{fwd.2} parent=147 // pred_check_branch
          %1654 = sbr.rel (%p1652) target = $region224
        $region223: #{fwd.2} parent=147 // pred_region
          %v1655 = vld [vmem:[%s1596] sm:$0x1]
          %v1656 = vld [vmem:[#allocation5] sm:$0xff]
          %v1657 = vld [vmem:[#allocation5 + $0x8] sm:$0xff]
          %v1658 = vld [vmem:[#allocation5 + $0x10] sm:$0xff]
          %v1659 = vld [vmem:[#allocation5 + $0x18] sm:$0xff]
          %v1660 = vld [vmem:[#allocation5 + $0x20] sm:$0xff]
          %v1661 = vld [vmem:[#allocation5 + $0x28] sm:$0xff]
          %v1662 = vld [vmem:[#allocation5 + $0x30] sm:$0xff]
          %v1663 = vld [vmem:[#allocation5 + $0x38] sm:$0xff]
          %v1664 = vld [vmem:[#allocation7] sm:$0x1]
          %vm1665 = vcmask 523264
          %v1667 = vsel %vm1665, %v1655, 0
          %1669 = vmatprep.subr.mxu0 0.0
          %1670 = vmatpush1.msra.mxu0 %v1656
          %1671 = vmatprep.subr.mxu0 0.0
          %1672 = vmatpush1.msra.mxu0 %v1657
          %1673 = vmatprep.subr.mxu0 0.0
          %1674 = vmatpush1.msra.mxu0 %v1658
          %1675 = vmatprep.subr.mxu0 0.0
          %1676 = vmatpush1.msra.mxu0 %v1659
          %1677 = vmatprep.subr.mxu0 0.0
          %1678 = vmatpush1.msra.mxu0 %v1660
          %1679 = vmatprep.subr.mxu0 0.0
          %1680 = vmatpush1.msra.mxu0 %v1661
          %1681 = vmatprep.subr.mxu0 0.0
          %1682 = vmatpush1.msra.mxu0 %v1662
          %1683 = vmatprep.subr.mxu0 0.0
          %1684 = vmatpush1.msra.mxu0 %v1663
          %1685 = vmatprep.subr.mxu0 0.0
          %1686 = vmatpush1.msra.mxu0 0.0
          %1687 = vmatprep.subr.mxu0 0.0
          %1688 = vmatpush1.msra.mxu0 0.0
          %1689 = vmatprep.subr.mxu0 0.0
          %1690 = vmatpush1.msra.mxu0 0.0
          %1691 = vmatprep.subr.mxu0 0.0
          %1692 = vmatpush1.msra.mxu0 0.0
          %1693 = vmatprep.subr.mxu0 0.0
          %1694 = vmatpush1.msra.mxu0 0.0
          %1695 = vmatprep.subr.mxu0 0.0
          %1696 = vmatpush1.msra.mxu0 0.0
          %1697 = vmatprep.subr.mxu0 0.0
          %1698 = vmatpush1.msra.mxu0 0.0
          %1699 = vmatprep.subr.mxu0 0.0
          %1700 = vmatpush1.msra.mxu0 0.0
          %1701 = vmatprep.subr.mxu0 0.0
          %1702 = vmatpush1.msra.mxu0 0.0
          %1703 = vmatprep.subr.mxu0 0.0
          %1704 = vmatpush1.msra.mxu0 0.0
          %1705 = vmatprep.subr.mxu0 0.0
          %1706 = vmatpush1.msra.mxu0 0.0
          %1707 = vmatprep.subr.mxu0 0.0
          %1708 = vmatpush1.msra.mxu0 0.0
          %1709 = vmatprep.subr.mxu0 0.0
          %1710 = vmatpush1.msra.mxu0 0.0
          %1711 = vmatprep.subr.mxu0 0.0
          %1712 = vmatpush1.msra.mxu0 0.0
          %1713 = vmatprep.subr.mxu0 0.0
          %1714 = vmatpush1.msra.mxu0 0.0
          %1715 = vmatprep.subr.mxu0 0.0
          %1716 = vmatpush1.msra.mxu0 0.0
          %1717 = vmatprep.subr.mxu0 0.0
          %1718 = vmatpush1.msra.mxu0 0.0
          %1719 = vmatprep.subr.mxu0 0.0
          %1720 = vmatpush1.msra.mxu0 0.0
          %1721 = vmatprep.subr.mxu0 0.0
          %1722 = vmatpush1.msra.mxu0 0.0
          %1723 = vmatprep.subr.mxu0 0.0
          %1724 = vmatpush1.msra.mxu0 0.0
          %1725 = vmatprep.subr.mxu0 0.0
          %1726 = vmatpush1.msra.mxu0 0.0
          %1727 = vmatprep.subr.mxu0 0.0
          %1728 = vmatpush1.msra.mxu0 0.0
          %1729 = vmatprep.subr.mxu0 0.0
          %1730 = vmatpush1.msra.mxu0 0.0
          %1731 = vmatprep.subr.mxu0 0.0
          %1732 = vmatpush1.msra.mxu0 0.0
          %1733 = vmatprep.mubr.f32.mxu0 0.0
          %1734 = vmatmul.mubr.f32.gmra.mrb[0].mxu0 %v1667
          %v1735 = vpop.f32.mrb[0].mxu0
          %v1736 = vadd.f32 %v1664, %v1735
          %v1737 = vpop.f32.mrb[0].mxu0
          %1738 = vdwg.mxu0
          %v1739 = vsub.f32 0.0, %v1736
          %v1740 = vmul.f32 %v1739, 1.442695
          %v1741 = vpow.pop %v1740
          %v1742 = vadd.f32 %v1741, 1.0
          %v1743 = vrcp.pop %v1742
          %v1744 = vmul.f32 %v1736, %v1743
          %v1745 = vld [vmem:[#allocation9] sm:$0xff]
          %v1746 = vld [vmem:[#allocation9 + $0x8] sm:$0xff]
          %v1747 = vld [vmem:[#allocation9 + $0x10] sm:$0xff]
          %v1748 = vld [vmem:[#allocation9 + $0x18] sm:$0xff]
          %v1749 = vld [vmem:[#allocation9 + $0x20] sm:$0xff]
          %v1750 = vld [vmem:[#allocation9 + $0x28] sm:$0xff]
          %v1751 = vld [vmem:[#allocation9 + $0x30] sm:$0xff]
          %v1752 = vld [vmem:[#allocation9 + $0x38] sm:$0xff]
          %v1753 = vld [vmem:[#allocation10] sm:$0x1]
          %v1755 = vsel %vm1665, %v1744, 0
          %1757 = vmatprep.subr.mxu0 0.0
          %1758 = vmatpush1.msra.mxu0 %v1745
          %1759 = vmatprep.subr.mxu0 0.0
          %1760 = vmatpush1.msra.mxu0 %v1746
          %1761 = vmatprep.subr.mxu0 0.0
          %1762 = vmatpush1.msra.mxu0 %v1747
          %1763 = vmatprep.subr.mxu0 0.0
          %1764 = vmatpush1.msra.mxu0 %v1748
          %1765 = vmatprep.subr.mxu0 0.0
          %1766 = vmatpush1.msra.mxu0 %v1749
          %1767 = vmatprep.subr.mxu0 0.0
          %1768 = vmatpush1.msra.mxu0 %v1750
          %1769 = vmatprep.subr.mxu0 0.0
          %1770 = vmatpush1.msra.mxu0 %v1751
          %1771 = vmatprep.subr.mxu0 0.0
          %1772 = vmatpush1.msra.mxu0 %v1752
          %1773 = vmatprep.subr.mxu0 0.0
          %1774 = vmatpush1.msra.mxu0 0.0
          %1775 = vmatprep.subr.mxu0 0.0
          %1776 = vmatpush1.msra.mxu0 0.0
          %1777 = vmatprep.subr.mxu0 0.0
          %1778 = vmatpush1.msra.mxu0 0.0
          %1779 = vmatprep.subr.mxu0 0.0
          %1780 = vmatpush1.msra.mxu0 0.0
          %1781 = vmatprep.subr.mxu0 0.0
          %1782 = vmatpush1.msra.mxu0 0.0
          %1783 = vmatprep.subr.mxu0 0.0
          %1784 = vmatpush1.msra.mxu0 0.0
          %1785 = vmatprep.subr.mxu0 0.0
          %1786 = vmatpush1.msra.mxu0 0.0
          %1787 = vmatprep.subr.mxu0 0.0
          %1788 = vmatpush1.msra.mxu0 0.0
          %1789 = vmatprep.subr.mxu0 0.0
          %1790 = vmatpush1.msra.mxu0 0.0
          %1791 = vmatprep.subr.mxu0 0.0
          %1792 = vmatpush1.msra.mxu0 0.0
          %1793 = vmatprep.subr.mxu0 0.0
          %1794 = vmatpush1.msra.mxu0 0.0
          %1795 = vmatprep.subr.mxu0 0.0
          %1796 = vmatpush1.msra.mxu0 0.0
          %1797 = vmatprep.subr.mxu0 0.0
          %1798 = vmatpush1.msra.mxu0 0.0
          %1799 = vmatprep.subr.mxu0 0.0
          %1800 = vmatpush1.msra.mxu0 0.0
          %1801 = vmatprep.subr.mxu0 0.0
          %1802 = vmatpush1.msra.mxu0 0.0
          %1803 = vmatprep.subr.mxu0 0.0
          %1804 = vmatpush1.msra.mxu0 0.0
          %1805 = vmatprep.subr.mxu0 0.0
          %1806 = vmatpush1.msra.mxu0 0.0
          %1807 = vmatprep.subr.mxu0 0.0
          %1808 = vmatpush1.msra.mxu0 0.0
          %1809 = vmatprep.subr.mxu0 0.0
          %1810 = vmatpush1.msra.mxu0 0.0
          %1811 = vmatprep.subr.mxu0 0.0
          %1812 = vmatpush1.msra.mxu0 0.0
          %1813 = vmatprep.subr.mxu0 0.0
          %1814 = vmatpush1.msra.mxu0 0.0
          %1815 = vmatprep.subr.mxu0 0.0
          %1816 = vmatpush1.msra.mxu0 0.0
          %1817 = vmatprep.subr.mxu0 0.0
          %1818 = vmatpush1.msra.mxu0 0.0
          %1819 = vmatprep.subr.mxu0 0.0
          %1820 = vmatpush1.msra.mxu0 0.0
          %1821 = vmatprep.mubr.f32.mxu0 0.0
          %1822 = vmatmul.mubr.f32.gmra.mrb[0].mxu0 %v1755
          %v1823 = vpop.f32.mrb[0].mxu0
          %v1824 = vadd.f32 %v1753, %v1823
          %v1825 = vpop.f32.mrb[0].mxu0
          %1826 = vdwg.mxu0
          %v1827 = vld [vmem:[%s1588] sm:$0xff]
          %v1828 = vld [vmem:[%s1588 + $0x8] sm:$0xff]
          %v1829 = vld [vmem:[%s19] sm:$0xf]
          %v1830 = vld [vmem:[#allocation12] sm:$0x1]
          %v1832 = vlaneseq
          %v1833 = vshrl.u32 %v1832, 7
          %v1834 = vsub.s32 0, %v1833
          %v1835 = vrot.slane %v1830, %v1834
          %vm1837 = vcmask 31744
          %v1839 = vsel %vm1837, %v1827, 0
          %v1842 = vsel %vm1837, %v1828, 0
          %vm1844 = vcmask 1043456
          %v1846 = vsel %vm1844, %v1829, 0
          %1848 = vmatprep.subr.mxu0 0.0
          %1849 = vmatpush1.msra.mxu0 %v1846
          %1850 = vmatprep.subr.mxu0 0.0
          %1851 = vmatpush1.msra.mxu0 0.0
          %1852 = vmatprep.subr.mxu0 0.0
          %1853 = vmatpush1.msra.mxu0 0.0
          %1854 = vmatprep.subr.mxu0 0.0
          %1855 = vmatpush1.msra.mxu0 0.0
          %1856 = vmatprep.subr.mxu0 0.0
          %1857 = vmatpush1.msra.mxu0 0.0
          %1858 = vmatprep.subr.mxu0 0.0
          %1859 = vmatpush1.msra.mxu0 0.0
          %1860 = vmatprep.subr.mxu0 0.0
          %1861 = vmatpush1.msra.mxu0 0.0
          %1862 = vmatprep.subr.mxu0 0.0
          %1863 = vmatpush1.msra.mxu0 0.0
          %1864 = vmatprep.subr.mxu0 0.0
          %1865 = vmatpush1.msra.mxu0 0.0
          %1866 = vmatprep.subr.mxu0 0.0
          %1867 = vmatpush1.msra.mxu0 0.0
          %1868 = vmatprep.subr.mxu0 0.0
          %1869 = vmatpush1.msra.mxu0 0.0
          %1870 = vmatprep.subr.mxu0 0.0
          %1871 = vmatpush1.msra.mxu0 0.0
          %1872 = vmatprep.subr.mxu0 0.0
          %1873 = vmatpush1.msra.mxu0 0.0
          %1874 = vmatprep.subr.mxu0 0.0
          %1875 = vmatpush1.msra.mxu0 0.0
          %1876 = vmatprep.subr.mxu0 0.0
          %1877 = vmatpush1.msra.mxu0 0.0
          %1878 = vmatprep.subr.mxu0 0.0
          %1879 = vmatpush1.msra.mxu0 0.0
          %1880 = vmatprep.subr.mxu0 0.0
          %1881 = vmatpush1.msra.mxu0 0.0
          %1882 = vmatprep.subr.mxu0 0.0
          %1883 = vmatpush1.msra.mxu0 0.0
          %1884 = vmatprep.subr.mxu0 0.0
          %1885 = vmatpush1.msra.mxu0 0.0
          %1886 = vmatprep.subr.mxu0 0.0
          %1887 = vmatpush1.msra.mxu0 0.0
          %1888 = vmatprep.subr.mxu0 0.0
          %1889 = vmatpush1.msra.mxu0 0.0
          %1890 = vmatprep.subr.mxu0 0.0
          %1891 = vmatpush1.msra.mxu0 0.0
          %1892 = vmatprep.subr.mxu0 0.0
          %1893 = vmatpush1.msra.mxu0 0.0
          %1894 = vmatprep.subr.mxu0 0.0
          %1895 = vmatpush1.msra.mxu0 0.0
          %1896 = vmatprep.subr.mxu0 0.0
          %1897 = vmatpush1.msra.mxu0 0.0
          %1898 = vmatprep.subr.mxu0 0.0
          %1899 = vmatpush1.msra.mxu0 0.0
          %1900 = vmatprep.subr.mxu0 0.0
          %1901 = vmatpush1.msra.mxu0 0.0
          %1902 = vmatprep.subr.mxu0 0.0
          %1903 = vmatpush1.msra.mxu0 0.0
          %1904 = vmatprep.subr.mxu0 0.0
          %1905 = vmatpush1.msra.mxu0 0.0
          %1906 = vmatprep.subr.mxu0 0.0
          %1907 = vmatpush1.msra.mxu0 0.0
          %1908 = vmatprep.subr.mxu0 0.0
          %1909 = vmatpush1.msra.mxu0 0.0
          %1910 = vmatprep.subr.mxu0 0.0
          %1911 = vmatpush1.msra.mxu0 0.0
          %1912 = vmatprep.mubr.f32.mxu0 0.0
          %1913 = vmatmul.mubr.f32.gmra.mrb[0].mxu0 %v1839
          %v1914 = vpop.f32.mrb[0].mxu0
          %v1915 = vadd.f32 %v1835, %v1914
          %v1916 = vpop.f32.mrb[0].mxu0
          %1917 = vmatprep.mubr.f32.mxu0 0.0
          %1918 = vmatmul.mubr.f32.gmra.mrb[0].mxu0 %v1842
          %v1919 = vpop.f32.mrb[0].mxu0
          %v1920 = vadd.f32 %v1835, %v1919
          %v1921 = vpop.f32.mrb[0].mxu0
          %1922 = vdwg.mxu0
          %v1923 = vlaneseq
          %v1924 = vshrl.u32 %v1923, 7
          %v1925 = vsub.s32 0, %v1924
          %v1926 = vrot.slane %v1824, %v1925
          %v1927 = vadd.f32 %v1915, %v1926
          %v1928 = vadd.f32 %v1920, %v1926
          %v1929 = vld [vmem:[%s1593] sm:$0xff]
          %v1930 = vld [vmem:[%s1593 + $0x8] sm:$0xff]
          %v1931 = vld [vmem:[#allocation13] sm:$0xf]
          %v1933 = vsel %vm1837, %v1929, 0
          %v1936 = vsel %vm1837, %v1930, 0
          %v1939 = vsel %vm1844, %v1931, 0
          %1941 = vmatprep.subr.mxu0 0.0
          %1942 = vmatpush1.msra.mxu0 %v1939
          %1943 = vmatprep.subr.mxu0 0.0
          %1944 = vmatpush1.msra.mxu0 0.0
          %1945 = vmatprep.subr.mxu0 0.0
          %1946 = vmatpush1.msra.mxu0 0.0
          %1947 = vmatprep.subr.mxu0 0.0
          %1948 = vmatpush1.msra.mxu0 0.0
          %1949 = vmatprep.subr.mxu0 0.0
          %1950 = vmatpush1.msra.mxu0 0.0
          %1951 = vmatprep.subr.mxu0 0.0
          %1952 = vmatpush1.msra.mxu0 0.0
          %1953 = vmatprep.subr.mxu0 0.0
          %1954 = vmatpush1.msra.mxu0 0.0
          %1955 = vmatprep.subr.mxu0 0.0
          %1956 = vmatpush1.msra.mxu0 0.0
          %1957 = vmatprep.subr.mxu0 0.0
          %1958 = vmatpush1.msra.mxu0 0.0
          %1959 = vmatprep.subr.mxu0 0.0
          %1960 = vmatpush1.msra.mxu0 0.0
          %1961 = vmatprep.subr.mxu0 0.0
          %1962 = vmatpush1.msra.mxu0 0.0
          %1963 = vmatprep.subr.mxu0 0.0
          %1964 = vmatpush1.msra.mxu0 0.0
          %1965 = vmatprep.subr.mxu0 0.0
          %1966 = vmatpush1.msra.mxu0 0.0
          %1967 = vmatprep.subr.mxu0 0.0
          %1968 = vmatpush1.msra.mxu0 0.0
          %1969 = vmatprep.subr.mxu0 0.0
          %1970 = vmatpush1.msra.mxu0 0.0
          %1971 = vmatprep.subr.mxu0 0.0
          %1972 = vmatpush1.msra.mxu0 0.0
          %1973 = vmatprep.subr.mxu0 0.0
          %1974 = vmatpush1.msra.mxu0 0.0
          %1975 = vmatprep.subr.mxu0 0.0
          %1976 = vmatpush1.msra.mxu0 0.0
          %1977 = vmatprep.subr.mxu0 0.0
          %1978 = vmatpush1.msra.mxu0 0.0
          %1979 = vmatprep.subr.mxu0 0.0
          %1980 = vmatpush1.msra.mxu0 0.0
          %1981 = vmatprep.subr.mxu0 0.0
          %1982 = vmatpush1.msra.mxu0 0.0
          %1983 = vmatprep.subr.mxu0 0.0
          %1984 = vmatpush1.msra.mxu0 0.0
          %1985 = vmatprep.subr.mxu0 0.0
          %1986 = vmatpush1.msra.mxu0 0.0
          %1987 = vmatprep.subr.mxu0 0.0
          %1988 = vmatpush1.msra.mxu0 0.0
          %1989 = vmatprep.subr.mxu0 0.0
          %1990 = vmatpush1.msra.mxu0 0.0
          %1991 = vmatprep.subr.mxu0 0.0
          %1992 = vmatpush1.msra.mxu0 0.0
          %1993 = vmatprep.subr.mxu0 0.0
          %1994 = vmatpush1.msra.mxu0 0.0
          %1995 = vmatprep.subr.mxu0 0.0
          %1996 = vmatpush1.msra.mxu0 0.0
          %1997 = vmatprep.subr.mxu0 0.0
          %1998 = vmatpush1.msra.mxu0 0.0
          %1999 = vmatprep.subr.mxu0 0.0
          %2000 = vmatpush1.msra.mxu0 0.0
          %2001 = vmatprep.subr.mxu0 0.0
          %2002 = vmatpush1.msra.mxu0 0.0
          %2003 = vmatprep.subr.mxu0 0.0
          %2004 = vmatpush1.msra.mxu0 0.0
          %2005 = vmatprep.mubr.f32.mxu0 0.0
          %2006 = vmatmul.mubr.f32.gmra.mrb[0].mxu0 %v1933
          %v2007 = vpop.f32.mrb[0].mxu0
          %v2008 = vadd.f32 0.0, %v2007
          %v2009 = vpop.f32.mrb[0].mxu0
          %2010 = vmatprep.mubr.f32.mxu0 0.0
          %2011 = vmatmul.mubr.f32.gmra.mrb[0].mxu0 %v1936
          %v2012 = vpop.f32.mrb[0].mxu0
          %v2013 = vadd.f32 0.0, %v2012
          %v2014 = vpop.f32.mrb[0].mxu0
          %2015 = vdwg.mxu0
          %v2016 = vadd.f32 %v1927, %v2008
          %v2017 = vadd.f32 %v1928, %v2013
          %v2018 = vld [vmem:[#allocation15] sm:$0x1]
          %v2020 = vlaneseq
          %v2021 = vshrl.u32 %v2020, 7
          %v2022 = vsub.s32 0, %v2021
          %v2023 = vrot.slane %v2018, %v2022
          %v2025 = vadd.f32 %v2016, %v2023
          %v2026 = vadd.f32 %v2017, %v2023
          %2027 = vst.msk [vmem:[#allocation2] sm:$0xff] %vm1665, %v2025
          %2028 = vst.msk [vmem:[#allocation2 + $0x8] sm:$0xff] %vm1665, %v2026
          %v2029 = vld [vmem:[%s1600] sm:$0xff]
          %v2030 = vld [vmem:[#allocation16] sm:$0xff]
          %v2031 = vld [vmem:[#allocation16 + $0x8] sm:$0xff]
          %v2032 = vld [vmem:[#allocation16 + $0x10] sm:$0xff]
          %v2033 = vld [vmem:[#allocation16 + $0x18] sm:$0xff]
          %v2034 = vld [vmem:[#allocation18] sm:$0x1]
          %v2036 = vlaneseq
          %v2037 = vshrl.u32 %v2036, 7
          %v2038 = vsub.s32 0, %v2037
          %v2039 = vrot.slane %v2034, %v2038
          %vm2041 = vcmask 261120
          %v2043 = vsel %vm2041, %v2029, 0
          %2045 = vmatprep.subr.mxu0 0.0
          %2046 = vmatpush1.msra.mxu0 %v2030
          %2047 = vmatprep.subr.mxu0 0.0
          %2048 = vmatpush1.msra.mxu0 %v2031
          %2049 = vmatprep.subr.mxu0 0.0
          %2050 = vmatpush1.msra.mxu0 %v2032
          %2051 = vmatprep.subr.mxu0 0.0
          %2052 = vmatpush1.msra.mxu0 %v2033
          %2053 = vmatprep.subr.mxu0 0.0
          %2054 = vmatpush1.msra.mxu0 0.0
          %2055 = vmatprep.subr.mxu0 0.0
          %2056 = vmatpush1.msra.mxu0 0.0
          %2057 = vmatprep.subr.mxu0 0.0
          %2058 = vmatpush1.msra.mxu0 0.0
          %2059 = vmatprep.subr.mxu0 0.0
          %2060 = vmatpush1.msra.mxu0 0.0
          %2061 = vmatprep.subr.mxu0 0.0
          %2062 = vmatpush1.msra.mxu0 0.0
          %2063 = vmatprep.subr.mxu0 0.0
          %2064 = vmatpush1.msra.mxu0 0.0
          %2065 = vmatprep.subr.mxu0 0.0
          %2066 = vmatpush1.msra.mxu0 0.0
          %2067 = vmatprep.subr.mxu0 0.0
          %2068 = vmatpush1.msra.mxu0 0.0
          %2069 = vmatprep.subr.mxu0 0.0
          %2070 = vmatpush1.msra.mxu0 0.0
          %2071 = vmatprep.subr.mxu0 0.0
          %2072 = vmatpush1.msra.mxu0 0.0
          %2073 = vmatprep.subr.mxu0 0.0
          %2074 = vmatpush1.msra.mxu0 0.0
          %2075 = vmatprep.subr.mxu0 0.0
          %2076 = vmatpush1.msra.mxu0 0.0
          %2077 = vmatprep.subr.mxu0 0.0
          %2078 = vmatpush1.msra.mxu0 0.0
          %2079 = vmatprep.subr.mxu0 0.0
          %2080 = vmatpush1.msra.mxu0 0.0
          %2081 = vmatprep.subr.mxu0 0.0
          %2082 = vmatpush1.msra.mxu0 0.0
          %2083 = vmatprep.subr.mxu0 0.0
          %2084 = vmatpush1.msra.mxu0 0.0
          %2085 = vmatprep.subr.mxu0 0.0
          %2086 = vmatpush1.msra.mxu0 0.0
          %2087 = vmatprep.subr.mxu0 0.0
          %2088 = vmatpush1.msra.mxu0 0.0
          %2089 = vmatprep.subr.mxu0 0.0
          %2090 = vmatpush1.msra.mxu0 0.0
          %2091 = vmatprep.subr.mxu0 0.0
          %2092 = vmatpush1.msra.mxu0 0.0
          %2093 = vmatprep.subr.mxu0 0.0
          %2094 = vmatpush1.msra.mxu0 0.0
          %2095 = vmatprep.subr.mxu0 0.0
          %2096 = vmatpush1.msra.mxu0 0.0
          %2097 = vmatprep.subr.mxu0 0.0
          %2098 = vmatpush1.msra.mxu0 0.0
          %2099 = vmatprep.subr.mxu0 0.0
          %2100 = vmatpush1.msra.mxu0 0.0
          %2101 = vmatprep.subr.mxu0 0.0
          %2102 = vmatpush1.msra.mxu0 0.0
          %2103 = vmatprep.subr.mxu0 0.0
          %2104 = vmatpush1.msra.mxu0 0.0
          %2105 = vmatprep.subr.mxu0 0.0
          %2106 = vmatpush1.msra.mxu0 0.0
          %2107 = vmatprep.subr.mxu0 0.0
          %2108 = vmatpush1.msra.mxu0 0.0
          %2109 = vmatprep.mubr.f32.mxu0 0.0
          %2110 = vmatmul.mubr.f32.gmra.mrb[0].mxu0 %v2043
          %v2111 = vpop.f32.mrb[0].mxu0
          %v2112 = vadd.f32 %v2039, %v2111
          %v2113 = vpop.f32.mrb[0].mxu0
          %2114 = vdwg.mxu0
          %2115 = vst.msk [vmem:[#allocation3] sm:$0xff] %vm1665, %v2112
        $region224: #{fwd.2} parent=147 // pred_fallthru
          _
        %v2116 = vld [vmem:[%s1603] sm:$0x1]
        %v2117 = vsub.f32 %v2116, 1.0
        %v2118 = vmul.f32 %v2117, 1e+09
        %v2119 = vld [vmem:[#allocation2] sm:$0xff]
        %v2120 = vld [vmem:[#allocation2 + $0x8] sm:$0xff]
        %v2121 = vld [vmem:[#allocation3] sm:$0xff]
        %v2122 = vld [vmem:[%s1342] sm:$0x1]
        %v2123 = vld [vmem:[%s1350] sm:$0x1]
        %vm2124 = vcmask 523264
        %v2125 = vsel %vm2124, %v2119, 0.0
        %2126 = vadd.xlane.f32.xlu0 %v2125
        %v2127 = vpop.xlane.xlu0 %2126
        %v2128 = vsel %vm2124, %v2120, 0.0
        %2129 = vadd.xlane.f32.xlu0 %v2128
        %v2130 = vpop.xlane.xlu0 %2129
        %v2131 = vrcp.pop 64.0
        %v2132 = vmul.f32 %v2127, %v2131
        %v2133 = vmul.f32 %v2130, %v2131
        %v2134 = vsub.f32 %v2119, %v2132
        %v2135 = vsub.f32 %v2120, %v2133
        %v2136 = vmul.f32 %v2134, %v2134
        %v2137 = vmul.f32 %v2135, %v2135
        %v2138 = vsel %vm2124, %v2136, 0.0
        %2139 = vadd.xlane.f32.xlu0 %v2138
        %v2140 = vpop.xlane.xlu0 %2139
        %v2141 = vsel %vm2124, %v2137, 0.0
        %2142 = vadd.xlane.f32.xlu0 %v2141
        %v2143 = vpop.xlane.xlu0 %2142
        %v2144 = vmul.f32 %v2140, %v2131
        %v2145 = vmul.f32 %v2143, %v2131
        %v2146 = vadd.f32 %v2144, 1e-05
        %v2147 = vadd.f32 %v2145, 1e-05
        %v2148 = vrsqrt.pop %v2146
        %v2149 = vrsqrt.pop %v2147
        %v2150 = vmul.f32 %v2134, %v2148
        %v2151 = vmul.f32 %v2135, %v2149
        %v2153 = vlaneseq
        %v2154 = vshrl.u32 %v2153, 7
        %v2155 = vsub.s32 0, %v2154
        %v2156 = vrot.slane %v2122, %v2155
        %v2158 = vmul.f32 %v2150, %v2156
        %v2159 = vmul.f32 %v2151, %v2156
        %v2161 = vlaneseq
        %v2162 = vshrl.u32 %v2161, 7
        %v2163 = vsub.s32 0, %v2162
        %v2164 = vrot.slane %v2123, %v2163
        %v2166 = vadd.f32 %v2158, %v2164
        %v2167 = vadd.f32 %v2159, %v2164
        %v2168 = vld [vmem:[%s1608] sm:$0xff]
        %v2169 = vld [vmem:[%s1608 + $0x8] sm:$0xff]
        %v2170 = vld [vmem:[%s1608 + $0x10] sm:$0xff]
        %v2171 = vld [vmem:[%s1608 + $0x18] sm:$0xff]
        %v2172 = vld [vmem:[%s1608 + $0x20] sm:$0xff]
        %v2173 = vld [vmem:[%s1608 + $0x28] sm:$0xff]
        %v2174 = vld [vmem:[%s1608 + $0x30] sm:$0xff]
        %v2175 = vld [vmem:[%s1608 + $0x38] sm:$0xff]
        %v2176 = vld [vmem:[%s1608 + $0x40] sm:$0xff]
        %v2177 = vld [vmem:[%s1608 + $0x48] sm:$0xff]
        %v2178 = vld [vmem:[%s1608 + $0x50] sm:$0xff]
        %v2179 = vld [vmem:[%s1608 + $0x58] sm:$0xff]
        %v2180 = vld [vmem:[%s1608 + $0x60] sm:$0xff]
        %v2181 = vld [vmem:[%s1608 + $0x68] sm:$0xff]
        %v2182 = vld [vmem:[%s1608 + $0x70] sm:$0xff]
        %v2183 = vld [vmem:[%s1608 + $0x78] sm:$0xff]
        %v2185 = vsel %vm2124, %v2166, 0
        %v2188 = vsel %vm2124, %v2167, 0
        %2190 = vmatprep.subr.mxu0 %v2169
        %2191 = vmatpush1.msra.mxu0 %v2168
        %2192 = vmatprep.subr.mxu0 %v2171
        %2193 = vmatpush1.msra.mxu0 %v2170
        %2194 = vmatprep.subr.mxu0 %v2173
        %2195 = vmatpush1.msra.mxu0 %v2172
        %2196 = vmatprep.subr.mxu0 %v2175
        %2197 = vmatpush1.msra.mxu0 %v2174
        %2198 = vmatprep.subr.mxu0 %v2177
        %2199 = vmatpush1.msra.mxu0 %v2176
        %2200 = vmatprep.subr.mxu0 %v2179
        %2201 = vmatpush1.msra.mxu0 %v2178
        %2202 = vmatprep.subr.mxu0 %v2181
        %2203 = vmatpush1.msra.mxu0 %v2180
        %2204 = vmatprep.subr.mxu0 %v2183
        %2205 = vmatpush1.msra.mxu0 %v2182
        %2206 = vmatprep.subr.mxu0 0.0
        %2207 = vmatpush1.msra.mxu0 0.0
        %2208 = vmatprep.subr.mxu0 0.0
        %2209 = vmatpush1.msra.mxu0 0.0
        %2210 = vmatprep.subr.mxu0 0.0
        %2211 = vmatpush1.msra.mxu0 0.0
        %2212 = vmatprep.subr.mxu0 0.0
        %2213 = vmatpush1.msra.mxu0 0.0
        %2214 = vmatprep.subr.mxu0 0.0
        %2215 = vmatpush1.msra.mxu0 0.0
        %2216 = vmatprep.subr.mxu0 0.0
        %2217 = vmatpush1.msra.mxu0 0.0
        %2218 = vmatprep.subr.mxu0 0.0
        %2219 = vmatpush1.msra.mxu0 0.0
        %2220 = vmatprep.subr.mxu0 0.0
        %2221 = vmatpush1.msra.mxu0 0.0
        %2222 = vmatprep.subr.mxu0 0.0
        %2223 = vmatpush1.msra.mxu0 0.0
        %2224 = vmatprep.subr.mxu0 0.0
        %2225 = vmatpush1.msra.mxu0 0.0
        %2226 = vmatprep.subr.mxu0 0.0
        %2227 = vmatpush1.msra.mxu0 0.0
        %2228 = vmatprep.subr.mxu0 0.0
        %2229 = vmatpush1.msra.mxu0 0.0
        %2230 = vmatprep.subr.mxu0 0.0
        %2231 = vmatpush1.msra.mxu0 0.0
        %2232 = vmatprep.subr.mxu0 0.0
        %2233 = vmatpush1.msra.mxu0 0.0
        %2234 = vmatprep.subr.mxu0 0.0
        %2235 = vmatpush1.msra.mxu0 0.0
        %2236 = vmatprep.subr.mxu0 0.0
        %2237 = vmatpush1.msra.mxu0 0.0
        %2238 = vmatprep.subr.mxu0 0.0
        %2239 = vmatpush1.msra.mxu0 0.0
        %2240 = vmatprep.subr.mxu0 0.0
        %2241 = vmatpush1.msra.mxu0 0.0
        %2242 = vmatprep.subr.mxu0 0.0
        %2243 = vmatpush1.msra.mxu0 0.0
        %2244 = vmatprep.subr.mxu0 0.0
        %2245 = vmatpush1.msra.mxu0 0.0
        %2246 = vmatprep.subr.mxu0 0.0
        %2247 = vmatpush1.msra.mxu0 0.0
        %2248 = vmatprep.subr.mxu0 0.0
        %2249 = vmatpush1.msra.mxu0 0.0
        %2250 = vmatprep.subr.mxu0 0.0
        %2251 = vmatpush1.msra.mxu0 0.0
        %2252 = vmatprep.subr.mxu0 0.0
        %2253 = vmatpush1.msra.mxu0 0.0
        %2254 = vmatprep.mubr.f32.mxu0 0.0
        %2255 = vmatmul.mubr.f32.gmra.mrb[0].mxu0 %v2185
        %v2256 = vpop.f32.mrb[0].mxu0
        %v2257 = vadd.f32 0.0, %v2256
        %v2258 = vpop.f32.mrb[0].mxu0
        %v2259 = vadd.f32 0.0, %v2258
        %2260 = vmatprep.mubr.f32.mxu0 0.0
        %2261 = vmatmul.mubr.f32.gmra.mrb[0].mxu0 %v2188
        %v2262 = vpop.f32.mrb[0].mxu0
        %v2263 = vadd.f32 0.0, %v2262
        %v2264 = vpop.f32.mrb[0].mxu0
        %v2265 = vadd.f32 0.0, %v2264
        %2266 = vdwg.mxu0
        %2269 = vrot.lane.b32.xlu0 %v2257, 64
        %v2270 = vpop.permute.xlu0 %2269
        %2271 = vrot.lane.b32.xlu0 %v2263, 64
        %v2272 = vpop.permute.xlu0 %2271
        %vm2273 = vcmask 261120
        %v2274 = vsel %vm2273, %v2257, 0
        %v2276 = vsel %vm2273, %v2263, 0
        %v2278 = vsel %vm2273, %v2270, 0
        %v2280 = vsel %vm2273, %v2272, 0
        %2282 = vmatprep.subr.mxu0 0.0
        %2283 = vmatpush1.xpose.msra.mxu0 %v2278
        %2284 = vmatprep.subr.mxu0 0.0
        %2285 = vmatpush1.xpose.msra.mxu0 %v2280
        %2286 = vmatprep.subr.mxu0 0.0
        %2287 = vmatpush1.xpose.msra.mxu0 0.0
        %2288 = vmatprep.subr.mxu0 0.0
        %2289 = vmatpush1.xpose.msra.mxu0 0.0
        %2290 = vmatprep.subr.mxu0 0.0
        %2291 = vmatpush1.xpose.msra.mxu0 0.0
        %2292 = vmatprep.subr.mxu0 0.0
        %2293 = vmatpush1.xpose.msra.mxu0 0.0
        %2294 = vmatprep.subr.mxu0 0.0
        %2295 = vmatpush1.xpose.msra.mxu0 0.0
        %2296 = vmatprep.subr.mxu0 0.0
        %2297 = vmatpush1.xpose.msra.mxu0 0.0
        %2298 = vmatprep.subr.mxu0 0.0
        %2299 = vmatpush1.xpose.msra.mxu0 0.0
        %2300 = vmatprep.subr.mxu0 0.0
        %2301 = vmatpush1.xpose.msra.mxu0 0.0
        %2302 = vmatprep.subr.mxu0 0.0
        %2303 = vmatpush1.xpose.msra.mxu0 0.0
        %2304 = vmatprep.subr.mxu0 0.0
        %2305 = vmatpush1.xpose.msra.mxu0 0.0
        %2306 = vmatprep.subr.mxu0 0.0
        %2307 = vmatpush1.xpose.msra.mxu0 0.0
        %2308 = vmatprep.subr.mxu0 0.0
        %2309 = vmatpush1.xpose.msra.mxu0 0.0
        %2310 = vmatprep.subr.mxu0 0.0
        %2311 = vmatpush1.xpose.msra.mxu0 0.0
        %2312 = vmatprep.subr.mxu0 0.0
        %2313 = vmatpush1.xpose.msra.mxu0 0.0
        %2314 = vmatprep.subr.mxu0 0.0
        %2315 = vmatpush1.xpose.msra.mxu0 0.0
        %2316 = vmatprep.subr.mxu0 0.0
        %2317 = vmatpush1.xpose.msra.mxu0 0.0
        %2318 = vmatprep.subr.mxu0 0.0
        %2319 = vmatpush1.xpose.msra.mxu0 0.0
        %2320 = vmatprep.subr.mxu0 0.0
        %2321 = vmatpush1.xpose.msra.mxu0 0.0
        %2322 = vmatprep.subr.mxu0 0.0
        %2323 = vmatpush1.xpose.msra.mxu0 0.0
        %2324 = vmatprep.subr.mxu0 0.0
        %2325 = vmatpush1.xpose.msra.mxu0 0.0
        %2326 = vmatprep.subr.mxu0 0.0
        %2327 = vmatpush1.xpose.msra.mxu0 0.0
        %2328 = vmatprep.subr.mxu0 0.0
        %2329 = vmatpush1.xpose.msra.mxu0 0.0
        %2330 = vmatprep.subr.mxu0 0.0
        %2331 = vmatpush1.xpose.msra.mxu0 0.0
        %2332 = vmatprep.subr.mxu0 0.0
        %2333 = vmatpush1.xpose.msra.mxu0 0.0
        %2334 = vmatprep.subr.mxu0 0.0
        %2335 = vmatpush1.xpose.msra.mxu0 0.0
        %2336 = vmatprep.subr.mxu0 0.0
        %2337 = vmatpush1.xpose.msra.mxu0 0.0
        %2338 = vmatprep.subr.mxu0 0.0
        %2339 = vmatpush1.xpose.msra.mxu0 0.0
        %2340 = vmatprep.subr.mxu0 0.0
        %2341 = vmatpush1.xpose.msra.mxu0 0.0
        %2342 = vmatprep.subr.mxu0 0.0
        %2343 = vmatpush1.xpose.msra.mxu0 0.0
        %2344 = vmatprep.subr.mxu0 0.0
        %2345 = vmatpush1.xpose.msra.mxu0 0.0
        %2346 = vmatprep.mubr.f32.mxu0 0.0
        %2347 = vmatmul.mubr.f32.gmra.mrb[0].mxu0 %v2274
        %v2348 = vpop.f32.mrb[0].mxu0
        %v2349 = vadd.f32 0.0, %v2348
        %v2350 = vpop.f32.mrb[0].mxu0
        %2351 = vmatprep.mubr.f32.mxu0 0.0
        %2352 = vmatmul.mubr.f32.gmra.mrb[0].mxu0 %v2276
        %v2353 = vpop.f32.mrb[0].mxu0
        %v2354 = vadd.f32 0.0, %v2353
        %v2355 = vpop.f32.mrb[0].mxu0
        %2356 = vdwg.mxu0
        %v2357 = vmul.f32 %v2349, 0.17677669
        %v2358 = vmul.f32 %v2354, 0.17677669
        %vm2359 = vcmask 130048
        %v2360 = vsel %vm2359, %v2357, -inf
        %2361 = vmax.xlane.f32.xlu0 %v2360
        %v2362 = vpop.xlane.xlu0 %2361
        %v2363 = vsel %vm2359, %v2358, -inf
        %2364 = vmax.xlane.f32.xlu0 %v2363
        %v2365 = vpop.xlane.xlu0 %2364
        %v2366 = vsub.f32 %v2357, %v2362
        %v2367 = vsub.f32 %v2358, %v2365
        %v2368 = vmul.f32 %v2366, 1.442695
        %v2369 = vpow.pop %v2368
        %v2370 = vmul.f32 %v2367, 1.442695
        %v2371 = vpow.pop %v2370
        %v2372 = vsel %vm2359, %v2369, 0.0
        %2373 = vadd.xlane.f32.xlu0 %v2372
        %v2374 = vpop.xlane.xlu0 %2373
        %v2375 = vsel %vm2359, %v2371, 0.0
        %2376 = vadd.xlane.f32.xlu0 %v2375
        %v2377 = vpop.xlane.xlu0 %2376
        %v2378 = vrcp.pop %v2374
        %v2379 = vrcp.pop %v2377
        %v2380 = vmul.f32 %v2369, %v2378
        %v2381 = vmul.f32 %v2371, %v2379
        %v2383 = vsel %vm2359, %v2380, 0
        %v2386 = vsel %vm2359, %v2381, 0
        %2388 = vmatprep.subr.mxu0 0.0
        %2389 = vmatpush1.msra.mxu0 %v2259
        %2390 = vmatprep.subr.mxu0 0.0
        %2391 = vmatpush1.msra.mxu0 %v2265
        %2392 = vmatprep.subr.mxu0 0.0
        %2393 = vmatpush1.msra.mxu0 0.0
        %2394 = vmatprep.subr.mxu0 0.0
        %2395 = vmatpush1.msra.mxu0 0.0
        %2396 = vmatprep.subr.mxu0 0.0
        %2397 = vmatpush1.msra.mxu0 0.0
        %2398 = vmatprep.subr.mxu0 0.0
        %2399 = vmatpush1.msra.mxu0 0.0
        %2400 = vmatprep.subr.mxu0 0.0
        %2401 = vmatpush1.msra.mxu0 0.0
        %2402 = vmatprep.subr.mxu0 0.0
        %2403 = vmatpush1.msra.mxu0 0.0
        %2404 = vmatprep.subr.mxu0 0.0
        %2405 = vmatpush1.msra.mxu0 0.0
        %2406 = vmatprep.subr.mxu0 0.0
        %2407 = vmatpush1.msra.mxu0 0.0
        %2408 = vmatprep.subr.mxu0 0.0
        %2409 = vmatpush1.msra.mxu0 0.0
        %2410 = vmatprep.subr.mxu0 0.0
        %2411 = vmatpush1.msra.mxu0 0.0
        %2412 = vmatprep.subr.mxu0 0.0
        %2413 = vmatpush1.msra.mxu0 0.0
        %2414 = vmatprep.subr.mxu0 0.0
        %2415 = vmatpush1.msra.mxu0 0.0
        %2416 = vmatprep.subr.mxu0 0.0
        %2417 = vmatpush1.msra.mxu0 0.0
        %2418 = vmatprep.subr.mxu0 0.0
        %2419 = vmatpush1.msra.mxu0 0.0
        %2420 = vmatprep.subr.mxu0 0.0
        %2421 = vmatpush1.msra.mxu0 0.0
        %2422 = vmatprep.subr.mxu0 0.0
        %2423 = vmatpush1.msra.mxu0 0.0
        %2424 = vmatprep.subr.mxu0 0.0
        %2425 = vmatpush1.msra.mxu0 0.0
        %2426 = vmatprep.subr.mxu0 0.0
        %2427 = vmatpush1.msra.mxu0 0.0
        %2428 = vmatprep.subr.mxu0 0.0
        %2429 = vmatpush1.msra.mxu0 0.0
        %2430 = vmatprep.subr.mxu0 0.0
        %2431 = vmatpush1.msra.mxu0 0.0
        %2432 = vmatprep.subr.mxu0 0.0
        %2433 = vmatpush1.msra.mxu0 0.0
        %2434 = vmatprep.subr.mxu0 0.0
        %2435 = vmatpush1.msra.mxu0 0.0
        %2436 = vmatprep.subr.mxu0 0.0
        %2437 = vmatpush1.msra.mxu0 0.0
        %2438 = vmatprep.subr.mxu0 0.0
        %2439 = vmatpush1.msra.mxu0 0.0
        %2440 = vmatprep.subr.mxu0 0.0
        %2441 = vmatpush1.msra.mxu0 0.0
        %2442 = vmatprep.subr.mxu0 0.0
        %2443 = vmatpush1.msra.mxu0 0.0
        %2444 = vmatprep.subr.mxu0 0.0
        %2445 = vmatpush1.msra.mxu0 0.0
        %2446 = vmatprep.subr.mxu0 0.0
        %2447 = vmatpush1.msra.mxu0 0.0
        %2448 = vmatprep.subr.mxu0 0.0
        %2449 = vmatpush1.msra.mxu0 0.0
        %2450 = vmatprep.subr.mxu0 0.0
        %2451 = vmatpush1.msra.mxu0 0.0
        %2452 = vmatprep.mubr.f32.mxu0 0.0
        %2453 = vmatmul.mubr.f32.gmra.mrb[0].mxu0 %v2383
        %v2454 = vpop.f32.mrb[0].mxu0
        %v2455 = vadd.f32 0.0, %v2454
        %v2456 = vpop.f32.mrb[0].mxu0
        %2457 = vmatprep.mubr.f32.mxu0 0.0
        %2458 = vmatmul.mubr.f32.gmra.mrb[0].mxu0 %v2386
        %v2459 = vpop.f32.mrb[0].mxu0
        %v2460 = vadd.f32 0.0, %v2459
        %v2461 = vpop.f32.mrb[0].mxu0
        %2462 = vdwg.mxu0
        %2463 = vst.msk [vmem:[#allocation4] sm:$0xff] %vm2273, %v2455
        %2464 = vst.msk [vmem:[#allocation4 + $0x8] sm:$0xff] %vm2273, %v2460
        %2465 = vrot.lane.b32.xlu0 %v2257, 96
        %v2466 = vpop.permute.xlu0 %2465
        %2467 = vrot.lane.b32.xlu0 %v2263, 96
        %v2468 = vpop.permute.xlu0 %2467
        %2469 = vrot.lane.b32.xlu0 %v2257, 32
        %v2470 = vpop.permute.xlu0 %2469
        %2471 = vrot.lane.b32.xlu0 %v2263, 32
        %v2472 = vpop.permute.xlu0 %2471
        %v2473 = vsel %vm2273, %v2466, 0
        %v2475 = vsel %vm2273, %v2468, 0
        %v2477 = vsel %vm2273, %v2470, 0
        %v2479 = vsel %vm2273, %v2472, 0
        %2481 = vmatprep.subr.mxu0 0.0
        %2482 = vmatpush1.xpose.msra.mxu0 %v2477
        %2483 = vmatprep.subr.mxu0 0.0
        %2484 = vmatpush1.xpose.msra.mxu0 %v2479
        %2485 = vmatprep.subr.mxu0 0.0
        %2486 = vmatpush1.xpose.msra.mxu0 0.0
        %2487 = vmatprep.subr.mxu0 0.0
        %2488 = vmatpush1.xpose.msra.mxu0 0.0
        %2489 = vmatprep.subr.mxu0 0.0
        %2490 = vmatpush1.xpose.msra.mxu0 0.0
        %2491 = vmatprep.subr.mxu0 0.0
        %2492 = vmatpush1.xpose.msra.mxu0 0.0
        %2493 = vmatprep.subr.mxu0 0.0
        %2494 = vmatpush1.xpose.msra.mxu0 0.0
        %2495 = vmatprep.subr.mxu0 0.0
        %2496 = vmatpush1.xpose.msra.mxu0 0.0
        %2497 = vmatprep.subr.mxu0 0.0
        %2498 = vmatpush1.xpose.msra.mxu0 0.0
        %2499 = vmatprep.subr.mxu0 0.0
        %2500 = vmatpush1.xpose.msra.mxu0 0.0
        %2501 = vmatprep.subr.mxu0 0.0
        %2502 = vmatpush1.xpose.msra.mxu0 0.0
        %2503 = vmatprep.subr.mxu0 0.0
        %2504 = vmatpush1.xpose.msra.mxu0 0.0
        %2505 = vmatprep.subr.mxu0 0.0
        %2506 = vmatpush1.xpose.msra.mxu0 0.0
        %2507 = vmatprep.subr.mxu0 0.0
        %2508 = vmatpush1.xpose.msra.mxu0 0.0
        %2509 = vmatprep.subr.mxu0 0.0
        %2510 = vmatpush1.xpose.msra.mxu0 0.0
        %2511 = vmatprep.subr.mxu0 0.0
        %2512 = vmatpush1.xpose.msra.mxu0 0.0
        %2513 = vmatprep.subr.mxu0 0.0
        %2514 = vmatpush1.xpose.msra.mxu0 0.0
        %2515 = vmatprep.subr.mxu0 0.0
        %2516 = vmatpush1.xpose.msra.mxu0 0.0
        %2517 = vmatprep.subr.mxu0 0.0
        %2518 = vmatpush1.xpose.msra.mxu0 0.0
        %2519 = vmatprep.subr.mxu0 0.0
        %2520 = vmatpush1.xpose.msra.mxu0 0.0
        %2521 = vmatprep.subr.mxu0 0.0
        %2522 = vmatpush1.xpose.msra.mxu0 0.0
        %2523 = vmatprep.subr.mxu0 0.0
        %2524 = vmatpush1.xpose.msra.mxu0 0.0
        %2525 = vmatprep.subr.mxu0 0.0
        %2526 = vmatpush1.xpose.msra.mxu0 0.0
        %2527 = vmatprep.subr.mxu0 0.0
        %2528 = vmatpush1.xpose.msra.mxu0 0.0
        %2529 = vmatprep.subr.mxu0 0.0
        %2530 = vmatpush1.xpose.msra.mxu0 0.0
        %2531 = vmatprep.subr.mxu0 0.0
        %2532 = vmatpush1.xpose.msra.mxu0 0.0
        %2533 = vmatprep.subr.mxu0 0.0
        %2534 = vmatpush1.xpose.msra.mxu0 0.0
        %2535 = vmatprep.subr.mxu0 0.0
        %2536 = vmatpush1.xpose.msra.mxu0 0.0
        %2537 = vmatprep.subr.mxu0 0.0
        %2538 = vmatpush1.xpose.msra.mxu0 0.0
        %2539 = vmatprep.subr.mxu0 0.0
        %2540 = vmatpush1.xpose.msra.mxu0 0.0
        %2541 = vmatprep.subr.mxu0 0.0
        %2542 = vmatpush1.xpose.msra.mxu0 0.0
        %2543 = vmatprep.subr.mxu0 0.0
        %2544 = vmatpush1.xpose.msra.mxu0 0.0
        %2545 = vmatprep.mubr.f32.mxu0 0.0
        %2546 = vmatmul.mubr.f32.gmra.mrb[0].mxu0 %v2473
        %v2547 = vpop.f32.mrb[0].mxu0
        %v2548 = vadd.f32 0.0, %v2547
        %v2549 = vpop.f32.mrb[0].mxu0
        %2550 = vmatprep.mubr.f32.mxu0 0.0
        %2551 = vmatmul.mubr.f32.gmra.mrb[0].mxu0 %v2475
        %v2552 = vpop.f32.mrb[0].mxu0
        %v2553 = vadd.f32 0.0, %v2552
        %v2554 = vpop.f32.mrb[0].mxu0
        %2555 = vdwg.mxu0
        %v2556 = vmul.f32 %v2548, 0.17677669
        %v2557 = vmul.f32 %v2553, 0.17677669
        %v2558 = vsel %vm2359, %v2556, -inf
        %2559 = vmax.xlane.f32.xlu0 %v2558
        %v2560 = vpop.xlane.xlu0 %2559
        %v2561 = vsel %vm2359, %v2557, -inf
        %2562 = vmax.xlane.f32.xlu0 %v2561
        %v2563 = vpop.xlane.xlu0 %2562
        %v2564 = vsub.f32 %v2556, %v2560
        %v2565 = vsub.f32 %v2557, %v2563
        %v2566 = vmul.f32 %v2564, 1.442695
        %v2567 = vpow.pop %v2566
        %v2568 = vmul.f32 %v2565, 1.442695
        %v2569 = vpow.pop %v2568
        %v2570 = vsel %vm2359, %v2567, 0.0
        %2571 = vadd.xlane.f32.xlu0 %v2570
        %v2572 = vpop.xlane.xlu0 %2571
        %v2573 = vsel %vm2359, %v2569, 0.0
        %2574 = vadd.xlane.f32.xlu0 %v2573
        %v2575 = vpop.xlane.xlu0 %2574
        %v2576 = vrcp.pop %v2572
        %v2577 = vrcp.pop %v2575
        %v2578 = vmul.f32 %v2567, %v2576
        %v2579 = vmul.f32 %v2569, %v2577
        %2582 = vrot.lane.b32.xlu0 %v2259, 96
        %v2583 = vpop.permute.xlu0 %2582
        %2584 = vrot.lane.b32.xlu0 %v2265, 96
        %v2585 = vpop.permute.xlu0 %2584
        %v2589 = vsel %vm2359, %v2578, 0
        %v2592 = vsel %vm2359, %v2579, 0
        %2594 = vmatprep.subr.mxu0 0.0
        %2595 = vmatpush1.msra.mxu0 %v2583
        %2596 = vmatprep.subr.mxu0 0.0
        %2597 = vmatpush1.msra.mxu0 %v2585
        %2598 = vmatprep.subr.mxu0 0.0
        %2599 = vmatpush1.msra.mxu0 0.0
        %2600 = vmatprep.subr.mxu0 0.0
        %2601 = vmatpush1.msra.mxu0 0.0
        %2602 = vmatprep.subr.mxu0 0.0
        %2603 = vmatpush1.msra.mxu0 0.0
        %2604 = vmatprep.subr.mxu0 0.0
        %2605 = vmatpush1.msra.mxu0 0.0
        %2606 = vmatprep.subr.mxu0 0.0
        %2607 = vmatpush1.msra.mxu0 0.0
        %2608 = vmatprep.subr.mxu0 0.0
        %2609 = vmatpush1.msra.mxu0 0.0
        %2610 = vmatprep.subr.mxu0 0.0
        %2611 = vmatpush1.msra.mxu0 0.0
        %2612 = vmatprep.subr.mxu0 0.0
        %2613 = vmatpush1.msra.mxu0 0.0
        %2614 = vmatprep.subr.mxu0 0.0
        %2615 = vmatpush1.msra.mxu0 0.0
        %2616 = vmatprep.subr.mxu0 0.0
        %2617 = vmatpush1.msra.mxu0 0.0
        %2618 = vmatprep.subr.mxu0 0.0
        %2619 = vmatpush1.msra.mxu0 0.0
        %2620 = vmatprep.subr.mxu0 0.0
        %2621 = vmatpush1.msra.mxu0 0.0
        %2622 = vmatprep.subr.mxu0 0.0
        %2623 = vmatpush1.msra.mxu0 0.0
        %2624 = vmatprep.subr.mxu0 0.0
        %2625 = vmatpush1.msra.mxu0 0.0
        %2626 = vmatprep.subr.mxu0 0.0
        %2627 = vmatpush1.msra.mxu0 0.0
        %2628 = vmatprep.subr.mxu0 0.0
        %2629 = vmatpush1.msra.mxu0 0.0
        %2630 = vmatprep.subr.mxu0 0.0
        %2631 = vmatpush1.msra.mxu0 0.0
        %2632 = vmatprep.subr.mxu0 0.0
        %2633 = vmatpush1.msra.mxu0 0.0
        %2634 = vmatprep.subr.mxu0 0.0
        %2635 = vmatpush1.msra.mxu0 0.0
        %2636 = vmatprep.subr.mxu0 0.0
        %2637 = vmatpush1.msra.mxu0 0.0
        %2638 = vmatprep.subr.mxu0 0.0
        %2639 = vmatpush1.msra.mxu0 0.0
        %2640 = vmatprep.subr.mxu0 0.0
        %2641 = vmatpush1.msra.mxu0 0.0
        %2642 = vmatprep.subr.mxu0 0.0
        %2643 = vmatpush1.msra.mxu0 0.0
        %2644 = vmatprep.subr.mxu0 0.0
        %2645 = vmatpush1.msra.mxu0 0.0
        %2646 = vmatprep.subr.mxu0 0.0
        %2647 = vmatpush1.msra.mxu0 0.0
        %2648 = vmatprep.subr.mxu0 0.0
        %2649 = vmatpush1.msra.mxu0 0.0
        %2650 = vmatprep.subr.mxu0 0.0
        %2651 = vmatpush1.msra.mxu0 0.0
        %2652 = vmatprep.subr.mxu0 0.0
        %2653 = vmatpush1.msra.mxu0 0.0
        %2654 = vmatprep.subr.mxu0 0.0
        %2655 = vmatpush1.msra.mxu0 0.0
        %2656 = vmatprep.subr.mxu0 0.0
        %2657 = vmatpush1.msra.mxu0 0.0
        %2658 = vmatprep.mubr.f32.mxu0 0.0
        %2659 = vmatmul.mubr.f32.gmra.mrb[0].mxu0 %v2589
        %v2660 = vpop.f32.mrb[0].mxu0
        %v2661 = vadd.f32 0.0, %v2660
        %v2662 = vpop.f32.mrb[0].mxu0
        %2663 = vmatprep.mubr.f32.mxu0 0.0
        %2664 = vmatmul.mubr.f32.gmra.mrb[0].mxu0 %v2592
        %v2665 = vpop.f32.mrb[0].mxu0
        %v2666 = vadd.f32 0.0, %v2665
        %v2667 = vpop.f32.mrb[0].mxu0
        %2668 = vdwg.mxu0
        %2671 = vrot.lane.b32.xlu0 %v2661, 32
        %v2672 = vpop.permute.xlu0 %2671
        %2673 = vrot.lane.b32.xlu0 %v2666, 32
        %v2674 = vpop.permute.xlu0 %2673
        %vm2677 = vcmask 523520
        %2678 = vst.msk [vmem:[#allocation4] sm:$0xff] %vm2677, %v2672
        %2679 = vst.msk [vmem:[#allocation4 + $0x8] sm:$0xff] %vm2677, %v2674
        %v2680 = vld [vmem:[#allocation4] sm:$0xff]
        %v2681 = vld [vmem:[#allocation4 + $0x8] sm:$0xff]
        %v2682 = vld [vmem:[%s1613] sm:$0xff]
        %v2683 = vld [vmem:[%s1613 + $0x8] sm:$0xff]
        %v2684 = vld [vmem:[%s1613 + $0x10] sm:$0xff]
        %v2685 = vld [vmem:[%s1613 + $0x18] sm:$0xff]
        %v2686 = vld [vmem:[%s1613 + $0x20] sm:$0xff]
        %v2687 = vld [vmem:[%s1613 + $0x28] sm:$0xff]
        %v2688 = vld [vmem:[%s1613 + $0x30] sm:$0xff]
        %v2689 = vld [vmem:[%s1613 + $0x38] sm:$0xff]
        %v2691 = vsel %vm2124, %v2680, 0
        %v2694 = vsel %vm2124, %v2681, 0
        %2696 = vmatprep.subr.mxu0 0.0
        %2697 = vmatpush1.msra.mxu0 %v2682
        %2698 = vmatprep.subr.mxu0 0.0
        %2699 = vmatpush1.msra.mxu0 %v2683
        %2700 = vmatprep.subr.mxu0 0.0
        %2701 = vmatpush1.msra.mxu0 %v2684
        %2702 = vmatprep.subr.mxu0 0.0
        %2703 = vmatpush1.msra.mxu0 %v2685
        %2704 = vmatprep.subr.mxu0 0.0
        %2705 = vmatpush1.msra.mxu0 %v2686
        %2706 = vmatprep.subr.mxu0 0.0
        %2707 = vmatpush1.msra.mxu0 %v2687
        %2708 = vmatprep.subr.mxu0 0.0
        %2709 = vmatpush1.msra.mxu0 %v2688
        %2710 = vmatprep.subr.mxu0 0.0
        %2711 = vmatpush1.msra.mxu0 %v2689
        %2712 = vmatprep.subr.mxu0 0.0
        %2713 = vmatpush1.msra.mxu0 0.0
        %2714 = vmatprep.subr.mxu0 0.0
        %2715 = vmatpush1.msra.mxu0 0.0
        %2716 = vmatprep.subr.mxu0 0.0
        %2717 = vmatpush1.msra.mxu0 0.0
        %2718 = vmatprep.subr.mxu0 0.0
        %2719 = vmatpush1.msra.mxu0 0.0
        %2720 = vmatprep.subr.mxu0 0.0
        %2721 = vmatpush1.msra.mxu0 0.0
        %2722 = vmatprep.subr.mxu0 0.0
        %2723 = vmatpush1.msra.mxu0 0.0
        %2724 = vmatprep.subr.mxu0 0.0
        %2725 = vmatpush1.msra.mxu0 0.0
        %2726 = vmatprep.subr.mxu0 0.0
        %2727 = vmatpush1.msra.mxu0 0.0
        %2728 = vmatprep.subr.mxu0 0.0
        %2729 = vmatpush1.msra.mxu0 0.0
        %2730 = vmatprep.subr.mxu0 0.0
        %2731 = vmatpush1.msra.mxu0 0.0
        %2732 = vmatprep.subr.mxu0 0.0
        %2733 = vmatpush1.msra.mxu0 0.0
        %2734 = vmatprep.subr.mxu0 0.0
        %2735 = vmatpush1.msra.mxu0 0.0
        %2736 = vmatprep.subr.mxu0 0.0
        %2737 = vmatpush1.msra.mxu0 0.0
        %2738 = vmatprep.subr.mxu0 0.0
        %2739 = vmatpush1.msra.mxu0 0.0
        %2740 = vmatprep.subr.mxu0 0.0
        %2741 = vmatpush1.msra.mxu0 0.0
        %2742 = vmatprep.subr.mxu0 0.0
        %2743 = vmatpush1.msra.mxu0 0.0
        %2744 = vmatprep.subr.mxu0 0.0
        %2745 = vmatpush1.msra.mxu0 0.0
        %2746 = vmatprep.subr.mxu0 0.0
        %2747 = vmatpush1.msra.mxu0 0.0
        %2748 = vmatprep.subr.mxu0 0.0
        %2749 = vmatpush1.msra.mxu0 0.0
        %2750 = vmatprep.subr.mxu0 0.0
        %2751 = vmatpush1.msra.mxu0 0.0
        %2752 = vmatprep.subr.mxu0 0.0
        %2753 = vmatpush1.msra.mxu0 0.0
        %2754 = vmatprep.subr.mxu0 0.0
        %2755 = vmatpush1.msra.mxu0 0.0
        %2756 = vmatprep.subr.mxu0 0.0
        %2757 = vmatpush1.msra.mxu0 0.0
        %2758 = vmatprep.subr.mxu0 0.0
        %2759 = vmatpush1.msra.mxu0 0.0
        %2760 = vmatprep.mubr.f32.mxu0 0.0
        %2761 = vmatmul.mubr.f32.gmra.mrb[0].mxu0 %v2691
        %v2762 = vpop.f32.mrb[0].mxu0
        %v2763 = vadd.f32 0.0, %v2762
        %v2764 = vpop.f32.mrb[0].mxu0
        %2765 = vmatprep.mubr.f32.mxu0 0.0
        %2766 = vmatmul.mubr.f32.gmra.mrb[0].mxu0 %v2694
        %v2767 = vpop.f32.mrb[0].mxu0
        %v2768 = vadd.f32 0.0, %v2767
        %v2769 = vpop.f32.mrb[0].mxu0
        %2770 = vdwg.mxu0
        %v2771 = vadd.f32 %v2119, %v2763
        %v2772 = vadd.f32 %v2120, %v2768
        %v2773 = vld [vmem:[%s1358] sm:$0x1]
        %v2774 = vld [vmem:[%s1366] sm:$0x1]
        %v2775 = vsel %vm2124, %v2771, 0.0
        %2776 = vadd.xlane.f32.xlu0 %v2775
        %v2777 = vpop.xlane.xlu0 %2776
        %v2778 = vsel %vm2124, %v2772, 0.0
        %2779 = vadd.xlane.f32.xlu0 %v2778
        %v2780 = vpop.xlane.xlu0 %2779
        %v2781 = vmul.f32 %v2777, %v2131
        %v2782 = vmul.f32 %v2780, %v2131
        %v2783 = vsub.f32 %v2771, %v2781
        %v2784 = vsub.f32 %v2772, %v2782
        %v2785 = vmul.f32 %v2783, %v2783
        %v2786 = vmul.f32 %v2784, %v2784
        %v2787 = vsel %vm2124, %v2785, 0.0
        %2788 = vadd.xlane.f32.xlu0 %v2787
        %v2789 = vpop.xlane.xlu0 %2788
        %v2790 = vsel %vm2124, %v2786, 0.0
        %2791 = vadd.xlane.f32.xlu0 %v2790
        %v2792 = vpop.xlane.xlu0 %2791
        %v2793 = vmul.f32 %v2789, %v2131
        %v2794 = vmul.f32 %v2792, %v2131
        %v2795 = vadd.f32 %v2793, 1e-05
        %v2796 = vadd.f32 %v2794, 1e-05
        %v2797 = vrsqrt.pop %v2795
        %v2798 = vrsqrt.pop %v2796
        %v2799 = vmul.f32 %v2783, %v2797
        %v2800 = vmul.f32 %v2784, %v2798
        %v2802 = vlaneseq
        %v2803 = vshrl.u32 %v2802, 7
        %v2804 = vsub.s32 0, %v2803
        %v2805 = vrot.slane %v2773, %v2804
        %v2807 = vmul.f32 %v2799, %v2805
        %v2808 = vmul.f32 %v2800, %v2805
        %v2810 = vlaneseq
        %v2811 = vshrl.u32 %v2810, 7
        %v2812 = vsub.s32 0, %v2811
        %v2813 = vrot.slane %v2774, %v2812
        %v2815 = vadd.f32 %v2807, %v2813
        %v2816 = vadd.f32 %v2808, %v2813
        %v2817 = vld [vmem:[%s1618] sm:$0xff]
        %v2818 = vld [vmem:[%s1618 + $0x8] sm:$0xff]
        %v2819 = vld [vmem:[%s1618 + $0x10] sm:$0xff]
        %v2820 = vld [vmem:[%s1618 + $0x18] sm:$0xff]
        %v2821 = vld [vmem:[%s1618 + $0x20] sm:$0xff]
        %v2822 = vld [vmem:[%s1618 + $0x28] sm:$0xff]
        %v2823 = vld [vmem:[%s1618 + $0x30] sm:$0xff]
        %v2824 = vld [vmem:[%s1618 + $0x38] sm:$0xff]
        %v2826 = vsel %vm2124, %v2815, 0
        %v2829 = vsel %vm2124, %v2816, 0
        %2831 = vmatprep.subr.mxu0 0.0
        %2832 = vmatpush1.msra.mxu0 %v2817
        %2833 = vmatprep.subr.mxu0 0.0
        %2834 = vmatpush1.msra.mxu0 %v2818
        %2835 = vmatprep.subr.mxu0 0.0
        %2836 = vmatpush1.msra.mxu0 %v2819
        %2837 = vmatprep.subr.mxu0 0.0
        %2838 = vmatpush1.msra.mxu0 %v2820
        %2839 = vmatprep.subr.mxu0 0.0
        %2840 = vmatpush1.msra.mxu0 %v2821
        %2841 = vmatprep.subr.mxu0 0.0
        %2842 = vmatpush1.msra.mxu0 %v2822
        %2843 = vmatprep.subr.mxu0 0.0
        %2844 = vmatpush1.msra.mxu0 %v2823
        %2845 = vmatprep.subr.mxu0 0.0
        %2846 = vmatpush1.msra.mxu0 %v2824
        %2847 = vmatprep.subr.mxu0 0.0
        %2848 = vmatpush1.msra.mxu0 0.0
        %2849 = vmatprep.subr.mxu0 0.0
        %2850 = vmatpush1.msra.mxu0 0.0
        %2851 = vmatprep.subr.mxu0 0.0
        %2852 = vmatpush1.msra.mxu0 0.0
        %2853 = vmatprep.subr.mxu0 0.0
        %2854 = vmatpush1.msra.mxu0 0.0
        %2855 = vmatprep.subr.mxu0 0.0
        %2856 = vmatpush1.msra.mxu0 0.0
        %2857 = vmatprep.subr.mxu0 0.0
        %2858 = vmatpush1.msra.mxu0 0.0
        %2859 = vmatprep.subr.mxu0 0.0
        %2860 = vmatpush1.msra.mxu0 0.0
        %2861 = vmatprep.subr.mxu0 0.0
        %2862 = vmatpush1.msra.mxu0 0.0
        %2863 = vmatprep.subr.mxu0 0.0
        %2864 = vmatpush1.msra.mxu0 0.0
        %2865 = vmatprep.subr.mxu0 0.0
        %2866 = vmatpush1.msra.mxu0 0.0
        %2867 = vmatprep.subr.mxu0 0.0
        %2868 = vmatpush1.msra.mxu0 0.0
        %2869 = vmatprep.subr.mxu0 0.0
        %2870 = vmatpush1.msra.mxu0 0.0
        %2871 = vmatprep.subr.mxu0 0.0
        %2872 = vmatpush1.msra.mxu0 0.0
        %2873 = vmatprep.subr.mxu0 0.0
        %2874 = vmatpush1.msra.mxu0 0.0
        %2875 = vmatprep.subr.mxu0 0.0
        %2876 = vmatpush1.msra.mxu0 0.0
        %2877 = vmatprep.subr.mxu0 0.0
        %2878 = vmatpush1.msra.mxu0 0.0
        %2879 = vmatprep.subr.mxu0 0.0
        %2880 = vmatpush1.msra.mxu0 0.0
        %2881 = vmatprep.subr.mxu0 0.0
        %2882 = vmatpush1.msra.mxu0 0.0
        %2883 = vmatprep.subr.mxu0 0.0
        %2884 = vmatpush1.msra.mxu0 0.0
        %2885 = vmatprep.subr.mxu0 0.0
        %2886 = vmatpush1.msra.mxu0 0.0
        %2887 = vmatprep.subr.mxu0 0.0
        %2888 = vmatpush1.msra.mxu0 0.0
        %2889 = vmatprep.subr.mxu0 0.0
        %2890 = vmatpush1.msra.mxu0 0.0
        %2891 = vmatprep.subr.mxu0 0.0
        %2892 = vmatpush1.msra.mxu0 0.0
        %2893 = vmatprep.subr.mxu0 0.0
        %2894 = vmatpush1.msra.mxu0 0.0
        %2895 = vmatprep.mubr.f32.mxu0 0.0
        %2896 = vmatmul.mubr.f32.gmra.mrb[0].mxu0 %v2826
        %v2897 = vpop.f32.mrb[0].mxu0
        %v2898 = vadd.f32 0.0, %v2897
        %v2899 = vpop.f32.mrb[0].mxu0
        %2900 = vmatprep.mubr.f32.mxu0 0.0
        %2901 = vmatmul.mubr.f32.gmra.mrb[0].mxu0 %v2829
        %v2902 = vpop.f32.mrb[0].mxu0
        %v2903 = vadd.f32 0.0, %v2902
        %v2904 = vpop.f32.mrb[0].mxu0
        %2905 = vdwg.mxu0
        %v2906 = vld [vmem:[%s1623] sm:$0xff]
        %v2907 = vld [vmem:[%s1623 + $0x8] sm:$0xff]
        %v2908 = vld [vmem:[%s1623 + $0x10] sm:$0xff]
        %v2909 = vld [vmem:[%s1623 + $0x18] sm:$0xff]
        %v2910 = vld [vmem:[%s1623 + $0x20] sm:$0xff]
        %v2911 = vld [vmem:[%s1623 + $0x28] sm:$0xff]
        %v2912 = vld [vmem:[%s1623 + $0x30] sm:$0xff]
        %v2913 = vld [vmem:[%s1623 + $0x38] sm:$0xff]
        %v2915 = vsel %vm2124, %v2121, 0
        %2917 = vmatprep.subr.mxu0 0.0
        %2918 = vmatpush1.msra.mxu0 %v2906
        %2919 = vmatprep.subr.mxu0 0.0
        %2920 = vmatpush1.msra.mxu0 %v2907
        %2921 = vmatprep.subr.mxu0 0.0
        %2922 = vmatpush1.msra.mxu0 %v2908
        %2923 = vmatprep.subr.mxu0 0.0
        %2924 = vmatpush1.msra.mxu0 %v2909
        %2925 = vmatprep.subr.mxu0 0.0
        %2926 = vmatpush1.msra.mxu0 %v2910
        %2927 = vmatprep.subr.mxu0 0.0
        %2928 = vmatpush1.msra.mxu0 %v2911
        %2929 = vmatprep.subr.mxu0 0.0
        %2930 = vmatpush1.msra.mxu0 %v2912
        %2931 = vmatprep.subr.mxu0 0.0
        %2932 = vmatpush1.msra.mxu0 %v2913
        %2933 = vmatprep.subr.mxu0 0.0
        %2934 = vmatpush1.msra.mxu0 0.0
        %2935 = vmatprep.subr.mxu0 0.0
        %2936 = vmatpush1.msra.mxu0 0.0
        %2937 = vmatprep.subr.mxu0 0.0
        %2938 = vmatpush1.msra.mxu0 0.0
        %2939 = vmatprep.subr.mxu0 0.0
        %2940 = vmatpush1.msra.mxu0 0.0
        %2941 = vmatprep.subr.mxu0 0.0
        %2942 = vmatpush1.msra.mxu0 0.0
        %2943 = vmatprep.subr.mxu0 0.0
        %2944 = vmatpush1.msra.mxu0 0.0
        %2945 = vmatprep.subr.mxu0 0.0
        %2946 = vmatpush1.msra.mxu0 0.0
        %2947 = vmatprep.subr.mxu0 0.0
        %2948 = vmatpush1.msra.mxu0 0.0
        %2949 = vmatprep.subr.mxu0 0.0
        %2950 = vmatpush1.msra.mxu0 0.0
        %2951 = vmatprep.subr.mxu0 0.0
        %2952 = vmatpush1.msra.mxu0 0.0
        %2953 = vmatprep.subr.mxu0 0.0
        %2954 = vmatpush1.msra.mxu0 0.0
        %2955 = vmatprep.subr.mxu0 0.0
        %2956 = vmatpush1.msra.mxu0 0.0
        %2957 = vmatprep.subr.mxu0 0.0
        %2958 = vmatpush1.msra.mxu0 0.0
        %2959 = vmatprep.subr.mxu0 0.0
        %2960 = vmatpush1.msra.mxu0 0.0
        %2961 = vmatprep.subr.mxu0 0.0
        %2962 = vmatpush1.msra.mxu0 0.0
        %2963 = vmatprep.subr.mxu0 0.0
        %2964 = vmatpush1.msra.mxu0 0.0
        %2965 = vmatprep.subr.mxu0 0.0
        %2966 = vmatpush1.msra.mxu0 0.0
        %2967 = vmatprep.subr.mxu0 0.0
        %2968 = vmatpush1.msra.mxu0 0.0
        %2969 = vmatprep.subr.mxu0 0.0
        %2970 = vmatpush1.msra.mxu0 0.0
        %2971 = vmatprep.subr.mxu0 0.0
        %2972 = vmatpush1.msra.mxu0 0.0
        %2973 = vmatprep.subr.mxu0 0.0
        %2974 = vmatpush1.msra.mxu0 0.0
        %2975 = vmatprep.subr.mxu0 0.0
        %2976 = vmatpush1.msra.mxu0 0.0
        %2977 = vmatprep.subr.mxu0 0.0
        %2978 = vmatpush1.msra.mxu0 0.0
        %2979 = vmatprep.subr.mxu0 0.0
        %2980 = vmatpush1.msra.mxu0 0.0
        %2981 = vmatprep.mubr.f32.mxu0 0.0
        %2982 = vmatmul.mubr.f32.gmra.mrb[0].mxu0 %v2915
        %v2983 = vpop.f32.mrb[0].mxu0
        %v2984 = vadd.f32 0.0, %v2983
        %v2985 = vpop.f32.mrb[0].mxu0
        %2986 = vdwg.mxu0
        %v2988 = vsel %vm2273, %v2898, 0
        %v2991 = vsel %vm2273, %v2903, 0
        %v2994 = vsel %vm2273, %v2984, 0
        %2996 = vmatprep.subr.mxu0 0.0
        %2997 = vmatpush1.xpose.msra.mxu0 %v2994
        %2998 = vmatprep.subr.mxu0 0.0
        %2999 = vmatpush1.xpose.msra.mxu0 0.0
        %3000 = vmatprep.subr.mxu0 0.0
        %3001 = vmatpush1.xpose.msra.mxu0 0.0
        %3002 = vmatprep.subr.mxu0 0.0
        %3003 = vmatpush1.xpose.msra.mxu0 0.0
        %3004 = vmatprep.subr.mxu0 0.0
        %3005 = vmatpush1.xpose.msra.mxu0 0.0
        %3006 = vmatprep.subr.mxu0 0.0
        %3007 = vmatpush1.xpose.msra.mxu0 0.0
        %3008 = vmatprep.subr.mxu0 0.0
        %3009 = vmatpush1.xpose.msra.mxu0 0.0
        %3010 = vmatprep.subr.mxu0 0.0
        %3011 = vmatpush1.xpose.msra.mxu0 0.0
        %3012 = vmatprep.subr.mxu0 0.0
        %3013 = vmatpush1.xpose.msra.mxu0 0.0
        %3014 = vmatprep.subr.mxu0 0.0
        %3015 = vmatpush1.xpose.msra.mxu0 0.0
        %3016 = vmatprep.subr.mxu0 0.0
        %3017 = vmatpush1.xpose.msra.mxu0 0.0
        %3018 = vmatprep.subr.mxu0 0.0
        %3019 = vmatpush1.xpose.msra.mxu0 0.0
        %3020 = vmatprep.subr.mxu0 0.0
        %3021 = vmatpush1.xpose.msra.mxu0 0.0
        %3022 = vmatprep.subr.mxu0 0.0
        %3023 = vmatpush1.xpose.msra.mxu0 0.0
        %3024 = vmatprep.subr.mxu0 0.0
        %3025 = vmatpush1.xpose.msra.mxu0 0.0
        %3026 = vmatprep.subr.mxu0 0.0
        %3027 = vmatpush1.xpose.msra.mxu0 0.0
        %3028 = vmatprep.subr.mxu0 0.0
        %3029 = vmatpush1.xpose.msra.mxu0 0.0
        %3030 = vmatprep.subr.mxu0 0.0
        %3031 = vmatpush1.xpose.msra.mxu0 0.0
        %3032 = vmatprep.subr.mxu0 0.0
        %3033 = vmatpush1.xpose.msra.mxu0 0.0
        %3034 = vmatprep.subr.mxu0 0.0
        %3035 = vmatpush1.xpose.msra.mxu0 0.0
        %3036 = vmatprep.subr.mxu0 0.0
        %3037 = vmatpush1.xpose.msra.mxu0 0.0
        %3038 = vmatprep.subr.mxu0 0.0
        %3039 = vmatpush1.xpose.msra.mxu0 0.0
        %3040 = vmatprep.subr.mxu0 0.0
        %3041 = vmatpush1.xpose.msra.mxu0 0.0
        %3042 = vmatprep.subr.mxu0 0.0
        %3043 = vmatpush1.xpose.msra.mxu0 0.0
        %3044 = vmatprep.subr.mxu0 0.0
        %3045 = vmatpush1.xpose.msra.mxu0 0.0
        %3046 = vmatprep.subr.mxu0 0.0
        %3047 = vmatpush1.xpose.msra.mxu0 0.0
        %3048 = vmatprep.subr.mxu0 0.0
        %3049 = vmatpush1.xpose.msra.mxu0 0.0
        %3050 = vmatprep.subr.mxu0 0.0
        %3051 = vmatpush1.xpose.msra.mxu0 0.0
        %3052 = vmatprep.subr.mxu0 0.0
        %3053 = vmatpush1.xpose.msra.mxu0 0.0
        %3054 = vmatprep.subr.mxu0 0.0
        %3055 = vmatpush1.xpose.msra.mxu0 0.0
        %3056 = vmatprep.subr.mxu0 0.0
        %3057 = vmatpush1.xpose.msra.mxu0 0.0
        %3058 = vmatprep.subr.mxu0 0.0
        %3059 = vmatpush1.xpose.msra.mxu0 0.0
        %3060 = vmatprep.mubr.f32.mxu0 0.0
        %3061 = vmatmul.mubr.f32.gmra.mrb[0].mxu0 %v2988
        %v3062 = vpop.f32.mrb[0].mxu0
        %v3063 = vadd.f32 0.0, %v3062
        %v3064 = vpop.f32.mrb[0].mxu0
        %3065 = vmatprep.mubr.f32.mxu0 0.0
        %3066 = vmatmul.mubr.f32.gmra.mrb[0].mxu0 %v2991
        %v3067 = vpop.f32.mrb[0].mxu0
        %v3068 = vadd.f32 0.0, %v3067
        %v3069 = vpop.f32.mrb[0].mxu0
        %3070 = vdwg.mxu0
        %v3071 = vmul.f32 %v3063, 0.17677669
        %v3072 = vmul.f32 %v3068, 0.17677669
        %v3074 = vlaneseq
        %v3075 = vshrl.u32 %v3074, 7
        %v3076 = vsub.s32 0, %v3075
        %v3077 = vrot.slane %v2118, %v3076
        %v3079 = vadd.f32 %v3071, %v3077
        %v3080 = vadd.f32 %v3072, %v3077
        %vm3081 = vcmask 64512
        %v3082 = vsel %vm3081, %v3079, -inf
        %3083 = vmax.xlane.f32.xlu0 %v3082
        %v3084 = vpop.xlane.xlu0 %3083
        %v3085 = vsel %vm3081, %v3080, -inf
        %3086 = vmax.xlane.f32.xlu0 %v3085
        %v3087 = vpop.xlane.xlu0 %3086
        %v3088 = vsub.f32 %v3079, %v3084
        %v3089 = vsub.f32 %v3080, %v3087
        %v3090 = vmul.f32 %v3088, 1.442695
        %v3091 = vpow.pop %v3090
        %v3092 = vmul.f32 %v3089, 1.442695
        %v3093 = vpow.pop %v3092
        %v3094 = vsel %vm3081, %v3091, 0.0
        %3095 = vadd.xlane.f32.xlu0 %v3094
        %v3096 = vpop.xlane.xlu0 %3095
        %v3097 = vsel %vm3081, %v3093, 0.0
        %3098 = vadd.xlane.f32.xlu0 %v3097
        %v3099 = vpop.xlane.xlu0 %3098
        %v3100 = vrcp.pop %v3096
        %v3101 = vrcp.pop %v3099
        %v3102 = vmul.f32 %v3091, %v3100
        %v3103 = vmul.f32 %v3093, %v3101
        %3104 = vrot.lane.b32.xlu0 %v2984, 64
        %v3105 = vpop.permute.xlu0 %3104
        %v3108 = vsel %vm3081, %v3102, 0
        %v3111 = vsel %vm3081, %v3103, 0
        %3113 = vmatprep.subr.mxu0 0.0
        %3114 = vmatpush1.msra.mxu0 %v3105
        %3115 = vmatprep.subr.mxu0 0.0
        %3116 = vmatpush1.msra.mxu0 0.0
        %3117 = vmatprep.subr.mxu0 0.0
        %3118 = vmatpush1.msra.mxu0 0.0
        %3119 = vmatprep.subr.mxu0 0.0
        %3120 = vmatpush1.msra.mxu0 0.0
        %3121 = vmatprep.subr.mxu0 0.0
        %3122 = vmatpush1.msra.mxu0 0.0
        %3123 = vmatprep.subr.mxu0 0.0
        %3124 = vmatpush1.msra.mxu0 0.0
        %3125 = vmatprep.subr.mxu0 0.0
        %3126 = vmatpush1.msra.mxu0 0.0
        %3127 = vmatprep.subr.mxu0 0.0
        %3128 = vmatpush1.msra.mxu0 0.0
        %3129 = vmatprep.subr.mxu0 0.0
        %3130 = vmatpush1.msra.mxu0 0.0
        %3131 = vmatprep.subr.mxu0 0.0
        %3132 = vmatpush1.msra.mxu0 0.0
        %3133 = vmatprep.subr.mxu0 0.0
        %3134 = vmatpush1.msra.mxu0 0.0
        %3135 = vmatprep.subr.mxu0 0.0
        %3136 = vmatpush1.msra.mxu0 0.0
        %3137 = vmatprep.subr.mxu0 0.0
        %3138 = vmatpush1.msra.mxu0 0.0
        %3139 = vmatprep.subr.mxu0 0.0
        %3140 = vmatpush1.msra.mxu0 0.0
        %3141 = vmatprep.subr.mxu0 0.0
        %3142 = vmatpush1.msra.mxu0 0.0
        %3143 = vmatprep.subr.mxu0 0.0
        %3144 = vmatpush1.msra.mxu0 0.0
        %3145 = vmatprep.subr.mxu0 0.0
        %3146 = vmatpush1.msra.mxu0 0.0
        %3147 = vmatprep.subr.mxu0 0.0
        %3148 = vmatpush1.msra.mxu0 0.0
        %3149 = vmatprep.subr.mxu0 0.0
        %3150 = vmatpush1.msra.mxu0 0.0
        %3151 = vmatprep.subr.mxu0 0.0
        %3152 = vmatpush1.msra.mxu0 0.0
        %3153 = vmatprep.subr.mxu0 0.0
        %3154 = vmatpush1.msra.mxu0 0.0
        %3155 = vmatprep.subr.mxu0 0.0
        %3156 = vmatpush1.msra.mxu0 0.0
        %3157 = vmatprep.subr.mxu0 0.0
        %3158 = vmatpush1.msra.mxu0 0.0
        %3159 = vmatprep.subr.mxu0 0.0
        %3160 = vmatpush1.msra.mxu0 0.0
        %3161 = vmatprep.subr.mxu0 0.0
        %3162 = vmatpush1.msra.mxu0 0.0
        %3163 = vmatprep.subr.mxu0 0.0
        %3164 = vmatpush1.msra.mxu0 0.0
        %3165 = vmatprep.subr.mxu0 0.0
        %3166 = vmatpush1.msra.mxu0 0.0
        %3167 = vmatprep.subr.mxu0 0.0
        %3168 = vmatpush1.msra.mxu0 0.0
        %3169 = vmatprep.subr.mxu0 0.0
        %3170 = vmatpush1.msra.mxu0 0.0
        %3171 = vmatprep.subr.mxu0 0.0
        %3172 = vmatpush1.msra.mxu0 0.0
        %3173 = vmatprep.subr.mxu0 0.0
        %3174 = vmatpush1.msra.mxu0 0.0
        %3175 = vmatprep.subr.mxu0 0.0
        %3176 = vmatpush1.msra.mxu0 0.0
        %3177 = vmatprep.mubr.f32.mxu0 0.0
        %3178 = vmatmul.mubr.f32.gmra.mrb[0].mxu0 %v3108
        %v3179 = vpop.f32.mrb[0].mxu0
        %v3180 = vadd.f32 0.0, %v3179
        %v3181 = vpop.f32.mrb[0].mxu0
        %3182 = vmatprep.mubr.f32.mxu0 0.0
        %3183 = vmatmul.mubr.f32.gmra.mrb[0].mxu0 %v3111
        %v3184 = vpop.f32.mrb[0].mxu0
        %v3185 = vadd.f32 0.0, %v3184
        %v3186 = vpop.f32.mrb[0].mxu0
        %3187 = vdwg.mxu0
        %3188 = vst.msk [vmem:[#allocation4] sm:$0xff] %vm2273, %v3180
        %3189 = vst.msk [vmem:[#allocation4 + $0x8] sm:$0xff] %vm2273, %v3185
        %3190 = vrot.lane.b32.xlu0 %v2898, 96
        %v3191 = vpop.permute.xlu0 %3190
        %3192 = vrot.lane.b32.xlu0 %v2903, 96
        %v3193 = vpop.permute.xlu0 %3192
        %3194 = vrot.lane.b32.xlu0 %v2984, 96
        %v3195 = vpop.permute.xlu0 %3194
        %v3196 = vsel %vm2273, %v3191, 0
        %v3198 = vsel %vm2273, %v3193, 0
        %v3200 = vsel %vm2273, %v3195, 0
        %3202 = vmatprep.subr.mxu0 0.0
        %3203 = vmatpush1.xpose.msra.mxu0 %v3200
        %3204 = vmatprep.subr.mxu0 0.0
        %3205 = vmatpush1.xpose.msra.mxu0 0.0
        %3206 = vmatprep.subr.mxu0 0.0
        %3207 = vmatpush1.xpose.msra.mxu0 0.0
        %3208 = vmatprep.subr.mxu0 0.0
        %3209 = vmatpush1.xpose.msra.mxu0 0.0
        %3210 = vmatprep.subr.mxu0 0.0
        %3211 = vmatpush1.xpose.msra.mxu0 0.0
        %3212 = vmatprep.subr.mxu0 0.0
        %3213 = vmatpush1.xpose.msra.mxu0 0.0
        %3214 = vmatprep.subr.mxu0 0.0
        %3215 = vmatpush1.xpose.msra.mxu0 0.0
        %3216 = vmatprep.subr.mxu0 0.0
        %3217 = vmatpush1.xpose.msra.mxu0 0.0
        %3218 = vmatprep.subr.mxu0 0.0
        %3219 = vmatpush1.xpose.msra.mxu0 0.0
        %3220 = vmatprep.subr.mxu0 0.0
        %3221 = vmatpush1.xpose.msra.mxu0 0.0
        %3222 = vmatprep.subr.mxu0 0.0
        %3223 = vmatpush1.xpose.msra.mxu0 0.0
        %3224 = vmatprep.subr.mxu0 0.0
        %3225 = vmatpush1.xpose.msra.mxu0 0.0
        %3226 = vmatprep.subr.mxu0 0.0
        %3227 = vmatpush1.xpose.msra.mxu0 0.0
        %3228 = vmatprep.subr.mxu0 0.0
        %3229 = vmatpush1.xpose.msra.mxu0 0.0
        %3230 = vmatprep.subr.mxu0 0.0
        %3231 = vmatpush1.xpose.msra.mxu0 0.0
        %3232 = vmatprep.subr.mxu0 0.0
        %3233 = vmatpush1.xpose.msra.mxu0 0.0
        %3234 = vmatprep.subr.mxu0 0.0
        %3235 = vmatpush1.xpose.msra.mxu0 0.0
        %3236 = vmatprep.subr.mxu0 0.0
        %3237 = vmatpush1.xpose.msra.mxu0 0.0
        %3238 = vmatprep.subr.mxu0 0.0
        %3239 = vmatpush1.xpose.msra.mxu0 0.0
        %3240 = vmatprep.subr.mxu0 0.0
        %3241 = vmatpush1.xpose.msra.mxu0 0.0
        %3242 = vmatprep.subr.mxu0 0.0
        %3243 = vmatpush1.xpose.msra.mxu0 0.0
        %3244 = vmatprep.subr.mxu0 0.0
        %3245 = vmatpush1.xpose.msra.mxu0 0.0
        %3246 = vmatprep.subr.mxu0 0.0
        %3247 = vmatpush1.xpose.msra.mxu0 0.0
        %3248 = vmatprep.subr.mxu0 0.0
        %3249 = vmatpush1.xpose.msra.mxu0 0.0
        %3250 = vmatprep.subr.mxu0 0.0
        %3251 = vmatpush1.xpose.msra.mxu0 0.0
        %3252 = vmatprep.subr.mxu0 0.0
        %3253 = vmatpush1.xpose.msra.mxu0 0.0
        %3254 = vmatprep.subr.mxu0 0.0
        %3255 = vmatpush1.xpose.msra.mxu0 0.0
        %3256 = vmatprep.subr.mxu0 0.0
        %3257 = vmatpush1.xpose.msra.mxu0 0.0
        %3258 = vmatprep.subr.mxu0 0.0
        %3259 = vmatpush1.xpose.msra.mxu0 0.0
        %3260 = vmatprep.subr.mxu0 0.0
        %3261 = vmatpush1.xpose.msra.mxu0 0.0
        %3262 = vmatprep.subr.mxu0 0.0
        %3263 = vmatpush1.xpose.msra.mxu0 0.0
        %3264 = vmatprep.subr.mxu0 0.0
        %3265 = vmatpush1.xpose.msra.mxu0 0.0
        %3266 = vmatprep.mubr.f32.mxu0 0.0
        %3267 = vmatmul.mubr.f32.gmra.mrb[0].mxu0 %v3196
        %v3268 = vpop.f32.mrb[0].mxu0
        %v3269 = vadd.f32 0.0, %v3268
        %v3270 = vpop.f32.mrb[0].mxu0
        %3271 = vmatprep.mubr.f32.mxu0 0.0
        %3272 = vmatmul.mubr.f32.gmra.mrb[0].mxu0 %v3198
        %v3273 = vpop.f32.mrb[0].mxu0
        %v3274 = vadd.f32 0.0, %v3273
        %v3275 = vpop.f32.mrb[0].mxu0
        %3276 = vdwg.mxu0
        %v3277 = vmul.f32 %v3269, 0.17677669
        %v3278 = vmul.f32 %v3274, 0.17677669
        %v3279 = vadd.f32 %v3277, %v3077
        %v3280 = vadd.f32 %v3278, %v3077
        %v3281 = vsel %vm3081, %v3279, -inf
        %3282 = vmax.xlane.f32.xlu0 %v3281
        %v3283 = vpop.xlane.xlu0 %3282
        %v3284 = vsel %vm3081, %v3280, -inf
        %3285 = vmax.xlane.f32.xlu0 %v3284
        %v3286 = vpop.xlane.xlu0 %3285
        %v3287 = vsub.f32 %v3279, %v3283
        %v3288 = vsub.f32 %v3280, %v3286
        %v3289 = vmul.f32 %v3287, 1.442695
        %v3290 = vpow.pop %v3289
        %v3291 = vmul.f32 %v3288, 1.442695
        %v3292 = vpow.pop %v3291
        %v3293 = vsel %vm3081, %v3290, 0.0
        %3294 = vadd.xlane.f32.xlu0 %v3293
        %v3295 = vpop.xlane.xlu0 %3294
        %v3296 = vsel %vm3081, %v3292, 0.0
        %3297 = vadd.xlane.f32.xlu0 %v3296
        %v3298 = vpop.xlane.xlu0 %3297
        %v3299 = vrcp.pop %v3295
        %v3300 = vrcp.pop %v3298
        %v3301 = vmul.f32 %v3290, %v3299
        %v3302 = vmul.f32 %v3292, %v3300
        %3303 = vrot.lane.b32.xlu0 %v2984, 32
        %v3304 = vpop.permute.xlu0 %3303
        %v3307 = vsel %vm3081, %v3301, 0
        %v3310 = vsel %vm3081, %v3302, 0
        %3312 = vmatprep.subr.mxu0 0.0
        %3313 = vmatpush1.msra.mxu0 %v3304
        %3314 = vmatprep.subr.mxu0 0.0
        %3315 = vmatpush1.msra.mxu0 0.0
        %3316 = vmatprep.subr.mxu0 0.0
        %3317 = vmatpush1.msra.mxu0 0.0
        %3318 = vmatprep.subr.mxu0 0.0
        %3319 = vmatpush1.msra.mxu0 0.0
        %3320 = vmatprep.subr.mxu0 0.0
        %3321 = vmatpush1.msra.mxu0 0.0
        %3322 = vmatprep.subr.mxu0 0.0
        %3323 = vmatpush1.msra.mxu0 0.0
        %3324 = vmatprep.subr.mxu0 0.0
        %3325 = vmatpush1.msra.mxu0 0.0
        %3326 = vmatprep.subr.mxu0 0.0
        %3327 = vmatpush1.msra.mxu0 0.0
        %3328 = vmatprep.subr.mxu0 0.0
        %3329 = vmatpush1.msra.mxu0 0.0
        %3330 = vmatprep.subr.mxu0 0.0
        %3331 = vmatpush1.msra.mxu0 0.0
        %3332 = vmatprep.subr.mxu0 0.0
        %3333 = vmatpush1.msra.mxu0 0.0
        %3334 = vmatprep.subr.mxu0 0.0
        %3335 = vmatpush1.msra.mxu0 0.0
        %3336 = vmatprep.subr.mxu0 0.0
        %3337 = vmatpush1.msra.mxu0 0.0
        %3338 = vmatprep.subr.mxu0 0.0
        %3339 = vmatpush1.msra.mxu0 0.0
        %3340 = vmatprep.subr.mxu0 0.0
        %3341 = vmatpush1.msra.mxu0 0.0
        %3342 = vmatprep.subr.mxu0 0.0
        %3343 = vmatpush1.msra.mxu0 0.0
        %3344 = vmatprep.subr.mxu0 0.0
        %3345 = vmatpush1.msra.mxu0 0.0
        %3346 = vmatprep.subr.mxu0 0.0
        %3347 = vmatpush1.msra.mxu0 0.0
        %3348 = vmatprep.subr.mxu0 0.0
        %3349 = vmatpush1.msra.mxu0 0.0
        %3350 = vmatprep.subr.mxu0 0.0
        %3351 = vmatpush1.msra.mxu0 0.0
        %3352 = vmatprep.subr.mxu0 0.0
        %3353 = vmatpush1.msra.mxu0 0.0
        %3354 = vmatprep.subr.mxu0 0.0
        %3355 = vmatpush1.msra.mxu0 0.0
        %3356 = vmatprep.subr.mxu0 0.0
        %3357 = vmatpush1.msra.mxu0 0.0
        %3358 = vmatprep.subr.mxu0 0.0
        %3359 = vmatpush1.msra.mxu0 0.0
        %3360 = vmatprep.subr.mxu0 0.0
        %3361 = vmatpush1.msra.mxu0 0.0
        %3362 = vmatprep.subr.mxu0 0.0
        %3363 = vmatpush1.msra.mxu0 0.0
        %3364 = vmatprep.subr.mxu0 0.0
        %3365 = vmatpush1.msra.mxu0 0.0
        %3366 = vmatprep.subr.mxu0 0.0
        %3367 = vmatpush1.msra.mxu0 0.0
        %3368 = vmatprep.subr.mxu0 0.0
        %3369 = vmatpush1.msra.mxu0 0.0
        %3370 = vmatprep.subr.mxu0 0.0
        %3371 = vmatpush1.msra.mxu0 0.0
        %3372 = vmatprep.subr.mxu0 0.0
        %3373 = vmatpush1.msra.mxu0 0.0
        %3374 = vmatprep.subr.mxu0 0.0
        %3375 = vmatpush1.msra.mxu0 0.0
        %3376 = vmatprep.mubr.f32.mxu0 0.0
        %3377 = vmatmul.mubr.f32.gmra.mrb[0].mxu0 %v3307
        %v3378 = vpop.f32.mrb[0].mxu0
        %v3379 = vadd.f32 0.0, %v3378
        %v3380 = vpop.f32.mrb[0].mxu0
        %3381 = vmatprep.mubr.f32.mxu0 0.0
        %3382 = vmatmul.mubr.f32.gmra.mrb[0].mxu0 %v3310
        %v3383 = vpop.f32.mrb[0].mxu0
        %v3384 = vadd.f32 0.0, %v3383
        %v3385 = vpop.f32.mrb[0].mxu0
        %3386 = vdwg.mxu0
        %3389 = vrot.lane.b32.xlu0 %v3379, 32
        %v3390 = vpop.permute.xlu0 %3389
        %3391 = vrot.lane.b32.xlu0 %v3384, 32
        %v3392 = vpop.permute.xlu0 %3391
        %3395 = vst.msk [vmem:[#allocation4] sm:$0xff] %vm2677, %v3390
        %3396 = vst.msk [vmem:[#allocation4 + $0x8] sm:$0xff] %vm2677, %v3392
        %v3397 = vld [vmem:[#allocation4] sm:$0xff]
        %v3398 = vld [vmem:[#allocation4 + $0x8] sm:$0xff]
        %v3399 = vld [vmem:[%s1628] sm:$0xff]
        %v3400 = vld [vmem:[%s1628 + $0x8] sm:$0xff]
        %v3401 = vld [vmem:[%s1628 + $0x10] sm:$0xff]
        %v3402 = vld [vmem:[%s1628 + $0x18] sm:$0xff]
        %v3403 = vld [vmem:[%s1628 + $0x20] sm:$0xff]
        %v3404 = vld [vmem:[%s1628 + $0x28] sm:$0xff]
        %v3405 = vld [vmem:[%s1628 + $0x30] sm:$0xff]
        %v3406 = vld [vmem:[%s1628 + $0x38] sm:$0xff]
        %v3408 = vsel %vm2124, %v3397, 0
        %v3411 = vsel %vm2124, %v3398, 0
        %3413 = vmatprep.subr.mxu0 0.0
        %3414 = vmatpush1.msra.mxu0 %v3399
        %3415 = vmatprep.subr.mxu0 0.0
        %3416 = vmatpush1.msra.mxu0 %v3400
        %3417 = vmatprep.subr.mxu0 0.0
        %3418 = vmatpush1.msra.mxu0 %v3401
        %3419 = vmatprep.subr.mxu0 0.0
        %3420 = vmatpush1.msra.mxu0 %v3402
        %3421 = vmatprep.subr.mxu0 0.0
        %3422 = vmatpush1.msra.mxu0 %v3403
        %3423 = vmatprep.subr.mxu0 0.0
        %3424 = vmatpush1.msra.mxu0 %v3404
        %3425 = vmatprep.subr.mxu0 0.0
        %3426 = vmatpush1.msra.mxu0 %v3405
        %3427 = vmatprep.subr.mxu0 0.0
        %3428 = vmatpush1.msra.mxu0 %v3406
        %3429 = vmatprep.subr.mxu0 0.0
        %3430 = vmatpush1.msra.mxu0 0.0
        %3431 = vmatprep.subr.mxu0 0.0
        %3432 = vmatpush1.msra.mxu0 0.0
        %3433 = vmatprep.subr.mxu0 0.0
        %3434 = vmatpush1.msra.mxu0 0.0
        %3435 = vmatprep.subr.mxu0 0.0
        %3436 = vmatpush1.msra.mxu0 0.0
        %3437 = vmatprep.subr.mxu0 0.0
        %3438 = vmatpush1.msra.mxu0 0.0
        %3439 = vmatprep.subr.mxu0 0.0
        %3440 = vmatpush1.msra.mxu0 0.0
        %3441 = vmatprep.subr.mxu0 0.0
        %3442 = vmatpush1.msra.mxu0 0.0
        %3443 = vmatprep.subr.mxu0 0.0
        %3444 = vmatpush1.msra.mxu0 0.0
        %3445 = vmatprep.subr.mxu0 0.0
        %3446 = vmatpush1.msra.mxu0 0.0
        %3447 = vmatprep.subr.mxu0 0.0
        %3448 = vmatpush1.msra.mxu0 0.0
        %3449 = vmatprep.subr.mxu0 0.0
        %3450 = vmatpush1.msra.mxu0 0.0
        %3451 = vmatprep.subr.mxu0 0.0
        %3452 = vmatpush1.msra.mxu0 0.0
        %3453 = vmatprep.subr.mxu0 0.0
        %3454 = vmatpush1.msra.mxu0 0.0
        %3455 = vmatprep.subr.mxu0 0.0
        %3456 = vmatpush1.msra.mxu0 0.0
        %3457 = vmatprep.subr.mxu0 0.0
        %3458 = vmatpush1.msra.mxu0 0.0
        %3459 = vmatprep.subr.mxu0 0.0
        %3460 = vmatpush1.msra.mxu0 0.0
        %3461 = vmatprep.subr.mxu0 0.0
        %3462 = vmatpush1.msra.mxu0 0.0
        %3463 = vmatprep.subr.mxu0 0.0
        %3464 = vmatpush1.msra.mxu0 0.0
        %3465 = vmatprep.subr.mxu0 0.0
        %3466 = vmatpush1.msra.mxu0 0.0
        %3467 = vmatprep.subr.mxu0 0.0
        %3468 = vmatpush1.msra.mxu0 0.0
        %3469 = vmatprep.subr.mxu0 0.0
        %3470 = vmatpush1.msra.mxu0 0.0
        %3471 = vmatprep.subr.mxu0 0.0
        %3472 = vmatpush1.msra.mxu0 0.0
        %3473 = vmatprep.subr.mxu0 0.0
        %3474 = vmatpush1.msra.mxu0 0.0
        %3475 = vmatprep.subr.mxu0 0.0
        %3476 = vmatpush1.msra.mxu0 0.0
        %3477 = vmatprep.mubr.f32.mxu0 0.0
        %3478 = vmatmul.mubr.f32.gmra.mrb[0].mxu0 %v3408
        %v3479 = vpop.f32.mrb[0].mxu0
        %v3480 = vadd.f32 0.0, %v3479
        %v3481 = vpop.f32.mrb[0].mxu0
        %3482 = vmatprep.mubr.f32.mxu0 0.0
        %3483 = vmatmul.mubr.f32.gmra.mrb[0].mxu0 %v3411
        %v3484 = vpop.f32.mrb[0].mxu0
        %v3485 = vadd.f32 0.0, %v3484
        %v3486 = vpop.f32.mrb[0].mxu0
        %3487 = vdwg.mxu0
        %v3488 = vadd.f32 %v2771, %v3480
        %v3489 = vadd.f32 %v2772, %v3485
        %v3490 = vld [vmem:[%s1374] sm:$0x1]
        %v3491 = vld [vmem:[%s1382] sm:$0x1]
        %v3492 = vsel %vm2124, %v3488, 0.0
        %3493 = vadd.xlane.f32.xlu0 %v3492
        %v3494 = vpop.xlane.xlu0 %3493
        %v3495 = vsel %vm2124, %v3489, 0.0
        %3496 = vadd.xlane.f32.xlu0 %v3495
        %v3497 = vpop.xlane.xlu0 %3496
        %v3498 = vmul.f32 %v3494, %v2131
        %v3499 = vmul.f32 %v3497, %v2131
        %v3500 = vsub.f32 %v3488, %v3498
        %v3501 = vsub.f32 %v3489, %v3499
        %v3502 = vmul.f32 %v3500, %v3500
        %v3503 = vmul.f32 %v3501, %v3501
        %v3504 = vsel %vm2124, %v3502, 0.0
        %3505 = vadd.xlane.f32.xlu0 %v3504
        %v3506 = vpop.xlane.xlu0 %3505
        %v3507 = vsel %vm2124, %v3503, 0.0
        %3508 = vadd.xlane.f32.xlu0 %v3507
        %v3509 = vpop.xlane.xlu0 %3508
        %v3510 = vmul.f32 %v3506, %v2131
        %v3511 = vmul.f32 %v3509, %v2131
        %v3512 = vadd.f32 %v3510, 1e-05
        %v3513 = vadd.f32 %v3511, 1e-05
        %v3514 = vrsqrt.pop %v3512
        %v3515 = vrsqrt.pop %v3513
        %v3516 = vmul.f32 %v3500, %v3514
        %v3517 = vmul.f32 %v3501, %v3515
        %v3519 = vlaneseq
        %v3520 = vshrl.u32 %v3519, 7
        %v3521 = vsub.s32 0, %v3520
        %v3522 = vrot.slane %v3490, %v3521
        %v3524 = vmul.f32 %v3516, %v3522
        %v3525 = vmul.f32 %v3517, %v3522
        %v3527 = vlaneseq
        %v3528 = vshrl.u32 %v3527, 7
        %v3529 = vsub.s32 0, %v3528
        %v3530 = vrot.slane %v3491, %v3529
        %v3532 = vadd.f32 %v3524, %v3530
        %v3533 = vadd.f32 %v3525, %v3530
        %v3534 = vld [vmem:[%s1633] sm:$0xff]
        %v3535 = vld [vmem:[%s1633 + $0x8] sm:$0xff]
        %v3536 = vld [vmem:[%s1633 + $0x10] sm:$0xff]
        %v3537 = vld [vmem:[%s1633 + $0x18] sm:$0xff]
        %v3538 = vld [vmem:[%s1633 + $0x20] sm:$0xff]
        %v3539 = vld [vmem:[%s1633 + $0x28] sm:$0xff]
        %v3540 = vld [vmem:[%s1633 + $0x30] sm:$0xff]
        %v3541 = vld [vmem:[%s1633 + $0x38] sm:$0xff]
        %v3542 = vld [vmem:[%s1633 + $0x40] sm:$0xff]
        %v3543 = vld [vmem:[%s1633 + $0x48] sm:$0xff]
        %v3544 = vld [vmem:[%s1633 + $0x50] sm:$0xff]
        %v3545 = vld [vmem:[%s1633 + $0x58] sm:$0xff]
        %v3546 = vld [vmem:[%s1633 + $0x60] sm:$0xff]
        %v3547 = vld [vmem:[%s1633 + $0x68] sm:$0xff]
        %v3548 = vld [vmem:[%s1633 + $0x70] sm:$0xff]
        %v3549 = vld [vmem:[%s1633 + $0x78] sm:$0xff]
        %v3550 = vld [vmem:[%s1391] sm:$0x3]
        %v3552 = vlaneseq
        %v3553 = vshrl.u32 %v3552, 7
        %v3554 = vsub.s32 0, %v3553
        %v3555 = vrot.slane %v3550, %v3554
        %v3556 = vlaneseq
        %v3557 = vshrl.u32 %v3556, 7
        %v3558 = vsub.s32 1, %v3557
        %v3559 = vrot.slane %v3550, %v3558
        %v3563 = vsel %vm2124, %v3532, 0
        %v3566 = vsel %vm2124, %v3533, 0
        %3568 = vmatprep.subr.mxu0 %v3535
        %3569 = vmatpush1.msra.mxu0 %v3534
        %3570 = vmatprep.subr.mxu0 %v3537
        %3571 = vmatpush1.msra.mxu0 %v3536
        %3572 = vmatprep.subr.mxu0 %v3539
        %3573 = vmatpush1.msra.mxu0 %v3538
        %3574 = vmatprep.subr.mxu0 %v3541
        %3575 = vmatpush1.msra.mxu0 %v3540
        %3576 = vmatprep.subr.mxu0 %v3543
        %3577 = vmatpush1.msra.mxu0 %v3542
        %3578 = vmatprep.subr.mxu0 %v3545
        %3579 = vmatpush1.msra.mxu0 %v3544
        %3580 = vmatprep.subr.mxu0 %v3547
        %3581 = vmatpush1.msra.mxu0 %v3546
        %3582 = vmatprep.subr.mxu0 %v3549
        %3583 = vmatpush1.msra.mxu0 %v3548
        %3584 = vmatprep.subr.mxu0 0.0
        %3585 = vmatpush1.msra.mxu0 0.0
        %3586 = vmatprep.subr.mxu0 0.0
        %3587 = vmatpush1.msra.mxu0 0.0
        %3588 = vmatprep.subr.mxu0 0.0
        %3589 = vmatpush1.msra.mxu0 0.0
        %3590 = vmatprep.subr.mxu0 0.0
        %3591 = vmatpush1.msra.mxu0 0.0
        %3592 = vmatprep.subr.mxu0 0.0
        %3593 = vmatpush1.msra.mxu0 0.0
        %3594 = vmatprep.subr.mxu0 0.0
        %3595 = vmatpush1.msra.mxu0 0.0
        %3596 = vmatprep.subr.mxu0 0.0
        %3597 = vmatpush1.msra.mxu0 0.0
        %3598 = vmatprep.subr.mxu0 0.0
        %3599 = vmatpush1.msra.mxu0 0.0
        %3600 = vmatprep.subr.mxu0 0.0
        %3601 = vmatpush1.msra.mxu0 0.0
        %3602 = vmatprep.subr.mxu0 0.0
        %3603 = vmatpush1.msra.mxu0 0.0
        %3604 = vmatprep.subr.mxu0 0.0
        %3605 = vmatpush1.msra.mxu0 0.0
        %3606 = vmatprep.subr.mxu0 0.0
        %3607 = vmatpush1.msra.mxu0 0.0
        %3608 = vmatprep.subr.mxu0 0.0
        %3609 = vmatpush1.msra.mxu0 0.0
        %3610 = vmatprep.subr.mxu0 0.0
        %3611 = vmatpush1.msra.mxu0 0.0
        %3612 = vmatprep.subr.mxu0 0.0
        %3613 = vmatpush1.msra.mxu0 0.0
        %3614 = vmatprep.subr.mxu0 0.0
        %3615 = vmatpush1.msra.mxu0 0.0
        %3616 = vmatprep.subr.mxu0 0.0
        %3617 = vmatpush1.msra.mxu0 0.0
        %3618 = vmatprep.subr.mxu0 0.0
        %3619 = vmatpush1.msra.mxu0 0.0
        %3620 = vmatprep.subr.mxu0 0.0
        %3621 = vmatpush1.msra.mxu0 0.0
        %3622 = vmatprep.subr.mxu0 0.0
        %3623 = vmatpush1.msra.mxu0 0.0
        %3624 = vmatprep.subr.mxu0 0.0
        %3625 = vmatpush1.msra.mxu0 0.0
        %3626 = vmatprep.subr.mxu0 0.0
        %3627 = vmatpush1.msra.mxu0 0.0
        %3628 = vmatprep.subr.mxu0 0.0
        %3629 = vmatpush1.msra.mxu0 0.0
        %3630 = vmatprep.subr.mxu0 0.0
        %3631 = vmatpush1.msra.mxu0 0.0
        %3632 = vmatprep.mubr.f32.mxu0 0.0
        %3633 = vmatmul.mubr.f32.gmra.mrb[0].mxu0 %v3563
        %v3634 = vpop.f32.mrb[0].mxu0
        %v3635 = vadd.f32 %v3555, %v3634
        %v3636 = vpop.f32.mrb[0].mxu0
        %v3637 = vadd.f32 %v3559, %v3636
        %3638 = vmatprep.mubr.f32.mxu0 0.0
        %3639 = vmatmul.mubr.f32.gmra.mrb[0].mxu0 %v3566
        %v3640 = vpop.f32.mrb[0].mxu0
        %v3641 = vadd.f32 %v3555, %v3640
        %v3642 = vpop.f32.mrb[0].mxu0
        %v3643 = vadd.f32 %v3559, %v3642
        %3644 = vdwg.mxu0
        %v3645 = vmul.f32 %v3635, %v3635
        %v3646 = vmul.f32 %v3637, %v3637
        %v3647 = vmul.f32 %v3641, %v3641
        %v3648 = vmul.f32 %v3643, %v3643
        %v3649 = vmul.f32 %v3635, %v3645
        %v3650 = vmul.f32 %v3637, %v3646
        %v3651 = vmul.f32 %v3641, %v3647
        %v3652 = vmul.f32 %v3643, %v3648
        %v3653 = vmul.f32 %v3649, 0.044715
        %v3654 = vmul.f32 %v3650, 0.044715
        %v3655 = vmul.f32 %v3651, 0.044715
        %v3656 = vmul.f32 %v3652, 0.044715
        %v3657 = vadd.f32 %v3635, %v3653
        %v3658 = vadd.f32 %v3637, %v3654
        %v3659 = vadd.f32 %v3641, %v3655
        %v3660 = vadd.f32 %v3643, %v3656
        %v3661 = vmul.f32 %v3657, 0.7978846
        %v3662 = vmul.f32 %v3658, 0.7978846
        %v3663 = vmul.f32 %v3659, 0.7978846
        %v3664 = vmul.f32 %v3660, 0.7978846
        %v3665 = vtanh.pop %v3661
        %v3666 = vtanh.pop %v3662
        %v3667 = vtanh.pop %v3663
        %v3668 = vtanh.pop %v3664
        %v3669 = vadd.f32 %v3665, 1.0
        %v3670 = vadd.f32 %v3666, 1.0
        %v3671 = vadd.f32 %v3667, 1.0
        %v3672 = vadd.f32 %v3668, 1.0
        %v3673 = vmul.f32 %v3669, 0.5
        %v3674 = vmul.f32 %v3670, 0.5
        %v3675 = vmul.f32 %v3671, 0.5
        %v3676 = vmul.f32 %v3672, 0.5
        %v3677 = vmul.f32 %v3635, %v3673
        %v3678 = vmul.f32 %v3637, %v3674
        %v3679 = vmul.f32 %v3641, %v3675
        %v3680 = vmul.f32 %v3643, %v3676
        %v3681 = vld [vmem:[%s1638] sm:$0xff]
        %v3682 = vld [vmem:[%s1638 + $0x8] sm:$0xff]
        %v3683 = vld [vmem:[%s1638 + $0x10] sm:$0xff]
        %v3684 = vld [vmem:[%s1638 + $0x18] sm:$0xff]
        %v3685 = vld [vmem:[%s1638 + $0x20] sm:$0xff]
        %v3686 = vld [vmem:[%s1638 + $0x28] sm:$0xff]
        %v3687 = vld [vmem:[%s1638 + $0x30] sm:$0xff]
        %v3688 = vld [vmem:[%s1638 + $0x38] sm:$0xff]
        %v3689 = vld [vmem:[%s1638 + $0x40] sm:$0xff]
        %v3690 = vld [vmem:[%s1638 + $0x48] sm:$0xff]
        %v3691 = vld [vmem:[%s1638 + $0x50] sm:$0xff]
        %v3692 = vld [vmem:[%s1638 + $0x58] sm:$0xff]
        %v3693 = vld [vmem:[%s1638 + $0x60] sm:$0xff]
        %v3694 = vld [vmem:[%s1638 + $0x68] sm:$0xff]
        %v3695 = vld [vmem:[%s1638 + $0x70] sm:$0xff]
        %v3696 = vld [vmem:[%s1638 + $0x78] sm:$0xff]
        %v3697 = vld [vmem:[%s1638 + $0x80] sm:$0xff]
        %v3698 = vld [vmem:[%s1638 + $0x88] sm:$0xff]
        %v3699 = vld [vmem:[%s1638 + $0x90] sm:$0xff]
        %v3700 = vld [vmem:[%s1638 + $0x98] sm:$0xff]
        %v3701 = vld [vmem:[%s1638 + $0xa0] sm:$0xff]
        %v3702 = vld [vmem:[%s1638 + $0xa8] sm:$0xff]
        %v3703 = vld [vmem:[%s1638 + $0xb0] sm:$0xff]
        %v3704 = vld [vmem:[%s1638 + $0xb8] sm:$0xff]
        %v3705 = vld [vmem:[%s1638 + $0xc0] sm:$0xff]
        %v3706 = vld [vmem:[%s1638 + $0xc8] sm:$0xff]
        %v3707 = vld [vmem:[%s1638 + $0xd0] sm:$0xff]
        %v3708 = vld [vmem:[%s1638 + $0xd8] sm:$0xff]
        %v3709 = vld [vmem:[%s1638 + $0xe0] sm:$0xff]
        %v3710 = vld [vmem:[%s1638 + $0xe8] sm:$0xff]
        %v3711 = vld [vmem:[%s1638 + $0xf0] sm:$0xff]
        %v3712 = vld [vmem:[%s1638 + $0xf8] sm:$0xff]
        %3713 = vmatprep.subr.mxu0 0.0
        %3714 = vmatpush1.msra.mxu0 %v3681
        %3715 = vmatprep.subr.mxu0 0.0
        %3716 = vmatpush1.msra.mxu0 %v3682
        %3717 = vmatprep.subr.mxu0 0.0
        %3718 = vmatpush1.msra.mxu0 %v3683
        %3719 = vmatprep.subr.mxu0 0.0
        %3720 = vmatpush1.msra.mxu0 %v3684
        %3721 = vmatprep.subr.mxu0 0.0
        %3722 = vmatpush1.msra.mxu0 %v3685
        %3723 = vmatprep.subr.mxu0 0.0
        %3724 = vmatpush1.msra.mxu0 %v3686
        %3725 = vmatprep.subr.mxu0 0.0
        %3726 = vmatpush1.msra.mxu0 %v3687
        %3727 = vmatprep.subr.mxu0 0.0
        %3728 = vmatpush1.msra.mxu0 %v3688
        %3729 = vmatprep.subr.mxu0 0.0
        %3730 = vmatpush1.msra.mxu0 %v3689
        %3731 = vmatprep.subr.mxu0 0.0
        %3732 = vmatpush1.msra.mxu0 %v3690
        %3733 = vmatprep.subr.mxu0 0.0
        %3734 = vmatpush1.msra.mxu0 %v3691
        %3735 = vmatprep.subr.mxu0 0.0
        %3736 = vmatpush1.msra.mxu0 %v3692
        %3737 = vmatprep.subr.mxu0 0.0
        %3738 = vmatpush1.msra.mxu0 %v3693
        %3739 = vmatprep.subr.mxu0 0.0
        %3740 = vmatpush1.msra.mxu0 %v3694
        %3741 = vmatprep.subr.mxu0 0.0
        %3742 = vmatpush1.msra.mxu0 %v3695
        %3743 = vmatprep.subr.mxu0 0.0
        %3744 = vmatpush1.msra.mxu0 %v3696
        %3745 = vmatprep.subr.mxu0 0.0
        %3746 = vmatpush1.msra.mxu0 %v3697
        %3747 = vmatprep.subr.mxu0 0.0
        %3748 = vmatpush1.msra.mxu0 %v3698
        %3749 = vmatprep.subr.mxu0 0.0
        %3750 = vmatpush1.msra.mxu0 %v3699
        %3751 = vmatprep.subr.mxu0 0.0
        %3752 = vmatpush1.msra.mxu0 %v3700
        %3753 = vmatprep.subr.mxu0 0.0
        %3754 = vmatpush1.msra.mxu0 %v3701
        %3755 = vmatprep.subr.mxu0 0.0
        %3756 = vmatpush1.msra.mxu0 %v3702
        %3757 = vmatprep.subr.mxu0 0.0
        %3758 = vmatpush1.msra.mxu0 %v3703
        %3759 = vmatprep.subr.mxu0 0.0
        %3760 = vmatpush1.msra.mxu0 %v3704
        %3761 = vmatprep.subr.mxu0 0.0
        %3762 = vmatpush1.msra.mxu0 %v3705
        %3763 = vmatprep.subr.mxu0 0.0
        %3764 = vmatpush1.msra.mxu0 %v3706
        %3765 = vmatprep.subr.mxu0 0.0
        %3766 = vmatpush1.msra.mxu0 %v3707
        %3767 = vmatprep.subr.mxu0 0.0
        %3768 = vmatpush1.msra.mxu0 %v3708
        %3769 = vmatprep.subr.mxu0 0.0
        %3770 = vmatpush1.msra.mxu0 %v3709
        %3771 = vmatprep.subr.mxu0 0.0
        %3772 = vmatpush1.msra.mxu0 %v3710
        %3773 = vmatprep.subr.mxu0 0.0
        %3774 = vmatpush1.msra.mxu0 %v3711
        %3775 = vmatprep.subr.mxu0 0.0
        %3776 = vmatpush1.msra.mxu0 %v3712
        %3777 = vmatprep.mubr.f32.mxu0 %v3678
        %3778 = vmatmul.mubr.f32.gmra.mrb[0].mxu0 %v3677
        %v3779 = vpop.f32.mrb[0].mxu0
        %v3780 = vadd.f32 0.0, %v3779
        %v3781 = vpop.f32.mrb[0].mxu0
        %3782 = vmatprep.mubr.f32.mxu0 %v3680
        %3783 = vmatmul.mubr.f32.gmra.mrb[0].mxu0 %v3679
        %v3784 = vpop.f32.mrb[0].mxu0
        %v3785 = vadd.f32 0.0, %v3784
        %v3786 = vpop.f32.mrb[0].mxu0
        %3787 = vdwg.mxu0
        %v3788 = vadd.f32 %v3488, %v3780
        %v3789 = vadd.f32 %v3489, %v3785
        %v3790 = vld [vmem:[%s1399] sm:$0x1]
        %v3792 = vlaneseq
        %v3793 = vshrl.u32 %v3792, 7
        %v3794 = vsub.s32 0, %v3793
        %v3795 = vrot.slane %v3790, %v3794
        %v3797 = vadd.f32 %v3788, %v3795
        %v3798 = vadd.f32 %v3789, %v3795
        %3799 = vst.msk [vmem:[#allocation2] sm:$0xff] %vm2124, %v3797
        %3800 = vst.msk [vmem:[#allocation2 + $0x8] sm:$0xff] %vm2124, %v3798
        %v3801 = vld [vmem:[%s1408] sm:$0xff]
        %v3802 = vld [vmem:[%s1408 + $0x8] sm:$0xff]
        %v3803 = vld [vmem:[%s1408 + $0x10] sm:$0xff]
        %v3804 = vld [vmem:[%s1408 + $0x18] sm:$0xff]
        %v3805 = vld [vmem:[%s1408 + $0x20] sm:$0xff]
        %v3806 = vld [vmem:[%s1408 + $0x28] sm:$0xff]
        %v3807 = vld [vmem:[%s1408 + $0x30] sm:$0xff]
        %v3808 = vld [vmem:[%s1408 + $0x38] sm:$0xff]
        %v3809 = vld [vmem:[%s1641] sm:$0x1]
        %v3811 = vlaneseq
        %v3812 = vshrl.u32 %v3811, 7
        %v3813 = vsub.s32 0, %v3812
        %v3814 = vrot.slane %v3809, %v3813
        %v3817 = vsel %vm2124, %v3797, 0
        %v3820 = vsel %vm2124, %v3798, 0
        %3822 = vmatprep.subr.mxu0 0.0
        %3823 = vmatpush1.msra.mxu0 %v3801
        %3824 = vmatprep.subr.mxu0 0.0
        %3825 = vmatpush1.msra.mxu0 %v3802
        %3826 = vmatprep.subr.mxu0 0.0
        %3827 = vmatpush1.msra.mxu0 %v3803
        %3828 = vmatprep.subr.mxu0 0.0
        %3829 = vmatpush1.msra.mxu0 %v3804
        %3830 = vmatprep.subr.mxu0 0.0
        %3831 = vmatpush1.msra.mxu0 %v3805
        %3832 = vmatprep.subr.mxu0 0.0
        %3833 = vmatpush1.msra.mxu0 %v3806
        %3834 = vmatprep.subr.mxu0 0.0
        %3835 = vmatpush1.msra.mxu0 %v3807
        %3836 = vmatprep.subr.mxu0 0.0
        %3837 = vmatpush1.msra.mxu0 %v3808
        %3838 = vmatprep.subr.mxu0 0.0
        %3839 = vmatpush1.msra.mxu0 0.0
        %3840 = vmatprep.subr.mxu0 0.0
        %3841 = vmatpush1.msra.mxu0 0.0
        %3842 = vmatprep.subr.mxu0 0.0
        %3843 = vmatpush1.msra.mxu0 0.0
        %3844 = vmatprep.subr.mxu0 0.0
        %3845 = vmatpush1.msra.mxu0 0.0
        %3846 = vmatprep.subr.mxu0 0.0
        %3847 = vmatpush1.msra.mxu0 0.0
        %3848 = vmatprep.subr.mxu0 0.0
        %3849 = vmatpush1.msra.mxu0 0.0
        %3850 = vmatprep.subr.mxu0 0.0
        %3851 = vmatpush1.msra.mxu0 0.0
        %3852 = vmatprep.subr.mxu0 0.0
        %3853 = vmatpush1.msra.mxu0 0.0
        %3854 = vmatprep.subr.mxu0 0.0
        %3855 = vmatpush1.msra.mxu0 0.0
        %3856 = vmatprep.subr.mxu0 0.0
        %3857 = vmatpush1.msra.mxu0 0.0
        %3858 = vmatprep.subr.mxu0 0.0
        %3859 = vmatpush1.msra.mxu0 0.0
        %3860 = vmatprep.subr.mxu0 0.0
        %3861 = vmatpush1.msra.mxu0 0.0
        %3862 = vmatprep.subr.mxu0 0.0
        %3863 = vmatpush1.msra.mxu0 0.0
        %3864 = vmatprep.subr.mxu0 0.0
        %3865 = vmatpush1.msra.mxu0 0.0
        %3866 = vmatprep.subr.mxu0 0.0
        %3867 = vmatpush1.msra.mxu0 0.0
        %3868 = vmatprep.subr.mxu0 0.0
        %3869 = vmatpush1.msra.mxu0 0.0
        %3870 = vmatprep.subr.mxu0 0.0
        %3871 = vmatpush1.msra.mxu0 0.0
        %3872 = vmatprep.subr.mxu0 0.0
        %3873 = vmatpush1.msra.mxu0 0.0
        %3874 = vmatprep.subr.mxu0 0.0
        %3875 = vmatpush1.msra.mxu0 0.0
        %3876 = vmatprep.subr.mxu0 0.0
        %3877 = vmatpush1.msra.mxu0 0.0
        %3878 = vmatprep.subr.mxu0 0.0
        %3879 = vmatpush1.msra.mxu0 0.0
        %3880 = vmatprep.subr.mxu0 0.0
        %3881 = vmatpush1.msra.mxu0 0.0
        %3882 = vmatprep.subr.mxu0 0.0
        %3883 = vmatpush1.msra.mxu0 0.0
        %3884 = vmatprep.subr.mxu0 0.0
        %3885 = vmatpush1.msra.mxu0 0.0
        %3886 = vmatprep.mubr.f32.mxu0 0.0
        %3887 = vmatmul.mubr.f32.gmra.mrb[0].mxu0 %v3817
        %v3888 = vpop.f32.mrb[0].mxu0
        %v3889 = vadd.f32 %v3814, %v3888
        %v3890 = vpop.f32.mrb[0].mxu0
        %3891 = vmatprep.mubr.f32.mxu0 0.0
        %3892 = vmatmul.mubr.f32.gmra.mrb[0].mxu0 %v3820
        %v3893 = vpop.f32.mrb[0].mxu0
        %v3894 = vadd.f32 %v3814, %v3893
        %v3895 = vpop.f32.mrb[0].mxu0
        %3896 = vdwg.mxu0
        %3897 = vst.msk [vmem:[%s1650] sm:$0xff] %vm2124, %v3889
        %3898 = vst.msk [vmem:[%s1650 + $0x8] sm:$0xff] %vm2124, %v3894
        %p3899 = scmp.lt.s32.totalorder %s101, 1
        %s3900 = scalar_select %p3899, %s101, 1
        %p3901 = scmp.lt.s32.totalorder %s100, 1
        %s3902 = scalar_select %p3901, %s100, 1
        %s3903 = smul.addr %s3902, 2
        %s3904 = smul.addr %s3900, 4
        %s3905 = sadd.s32 %s3903, %s3904
        %s3906 = smul.addr %s3905, 8
        %s3907 = scalar_lea.vmem %s65, %s3906
        // Predicated region
        $region225: #{fwd.2} parent=147 // pred_check
          %p3908 = pneg %p910
        $region226: #{fwd.2} parent=147 // pred_check_branch
          %3910 = sbr.rel (%p3908) target = $region228
        $region227: #{fwd.2} parent=147 // pred_region
          _
        $region228: #{fwd.2} parent=147 // pred_fallthru
          _
      $region148: #{fwd.2} parent=5 // pred_fallthru
        _
      %p3911 = scmp.le.s32.totalorder 2, %s91
      // Predicated region
      $region229: #{fwd.2} parent=5 // pred_check
        %p3912 = pneg %p3911
      $region230: #{fwd.2} parent=5 // pred_check_branch
        %3914 = sbr.rel (%p3912) target = $region232
      $region231: #{fwd.2} parent=5 // pred_region
        %s3915 = ssub.s32 %s91, 2
        // Predicated region
        $region233: #{fwd.2} parent=231 // pred_check
          %p3916 = pneg %p916
        $region234: #{fwd.2} parent=231 // pred_check_branch
          %3918 = sbr.rel (%p3916) target = $region236
        $region235: #{fwd.2} parent=231 // pred_region
          %p3919 = scmp.lt.s32.totalorder %s103, 1
          %s3920 = scalar_select %p3919, %s103, 1
          %p3921 = scmp.lt.s32.totalorder %s102, 1
          %s3922 = scalar_select %p3921, %s102, 1
          %s3923 = smul.addr %s3922, 2
          %s3924 = smul.addr %s3920, 4
          %s3925 = sadd.s32 %s3923, %s3924
          %s3926 = smul.addr %s3925, 8
          %s3927 = scalar_lea.vmem %s65, %s3926
        $region236: #{fwd.2} parent=231 // pred_fallthru
          _
      $region232: #{fwd.2} parent=5 // pred_fallthru
        _
    $region6: #{fwd.2} parent=1 // loop_footer
      %s95 = sadd.s32 1, %s91
    $region7: #{fwd.2} parent=1 // loop_footer_branch
      %90 = sbr.rel target = $region3
    $region8: #{fwd.2} parent=1 // loop_exit
      _
    %3928 = vsyncpa [#allocation6], 1
    %s3929 = scalar_lea.sflag [#allocation6], 1
    %3930 = vsyncpa %s3929, 1
    %3931 = vsyncpa [#allocation8], 1
    %3932 = vsyncpa [#allocation11], 1
    %3933 = vsyncpa [#allocation14], 1
    %3934 = vsyncpa [#allocation17], 1
    %3935 = vsyncpa [#allocation20], 1
    %s3936 = scalar_lea.sflag [#allocation20], 1
    %3937 = vsyncpa %s3936, 1
    %3938 = vsyncpa [#allocation23], 1
    %s3939 = scalar_lea.sflag [#allocation23], 1
    %3940 = vsyncpa %s3939, 1
    %3941 = vsyncpa [#allocation26], 1
    %s3942 = scalar_lea.sflag [#allocation26], 1
    %3943 = vsyncpa %s3942, 1
    %3944 = vsyncpa [#allocation29], 1
    %s3945 = scalar_lea.sflag [#allocation29], 1
    %3946 = vsyncpa %s3945, 1
    %3947 = vsyncpa [#allocation32], 1
    %s3948 = scalar_lea.sflag [#allocation32], 1
    %3949 = vsyncpa %s3948, 1

</llo_original>
